<compile_context>
chip_gen: v7x
topology: tpu7x:2x2x1
jax: 0.10.0
libtpu: 0.0.40
codegen_flags: <defaults>
</compile_context>

<pallas_src>
import jax
import jax.numpy as jnp
from jax.experimental import pallas as pl
from jax.experimental.pallas import tpu as pltpu

VISION_DIM = 512               # from the module: self.vision_dim = 512
FEAT_DIM = 2 * VISION_DIM      # vision encoder output / head & bottleneck input
BNECK_DIM = VISION_DIM // 2
CLASS_NUM = 12                 # config.class_num (typical AU count)
CLS_PAD = 128                  # lane-dense padded classifier width
KERNEL_MUL = 2.0               # MMD_loss defaults
KERNEL_NUM = 5
BN_EPS = 1e-5
TK = 2048                      # K-tile: 2048x1024 bf16 tile = 4 MiB, 8 MiB double-buffered
VMEM_LIMIT = 32 * 1024 * 1024  # explicit headroom; kernel uses ~11 MiB at TK=2048


def transfer_au_kernel(x_ref, wv_ref, bv_ref,
                       wh1_ref, bh1_ref, wh2_ref, bh2_ref,
                       wb_ref, bb_ref, bn_scale_ref, bn_shift_ref,
                       clf_ref, loss_ref, acc_ref):
    """Grid axis 0 tiles the flattened-input (K) axis of the encoder matmul."""
    k = pl.program_id(0)

    @pl.when(k == 0)
    def _init():
        acc_ref[...] = jnp.zeros_like(acc_ref)

    # --- synthetic vision encoder: (2B, tk) bf16 @ (tk, 1024) bf16 -> f32 acc ---
    acc_ref[...] += jnp.dot(x_ref[...], wv_ref[...],
                            preferred_element_type=jnp.float32)

    @pl.when(k == pl.num_programs(0) - 1)
    def _epilogue():
        f = acc_ref[...] + bv_ref[...]               # (2B, 1024) f32 features
        b = f.shape[0] // 2

        # --- head (source rows only): Linear -> ReLU -> Dropout(id) -> Linear ---
        f_src = f[:b, :].astype(jnp.bfloat16)        # f32 slice is (8,128)-aligned
        h = jnp.dot(f_src, wh1_ref[...], preferred_element_type=jnp.float32)
        h = jnp.maximum(h + bh1_ref[...], 0.0)
        clf = jnp.dot(h.astype(jnp.bfloat16), wh2_ref[...],
                      preferred_element_type=jnp.float32) + bh2_ref[...]
        clf_ref[...] = clf.astype(clf_ref.dtype)     # lane-dense (B, 128) store

        # --- bottleneck on source+target together:
        #     Linear -> BatchNorm1d(eval, pre-fused scale/shift) -> ReLU -> Dropout(id)
        z = jnp.dot(f.astype(jnp.bfloat16), wb_ref[...],
                    preferred_element_type=jnp.float32) + bb_ref[...]
        z = jnp.maximum(z * bn_scale_ref[...] + bn_shift_ref[...], 0.0)  # (2B, 256) f32

        # --- MMD loss: multi-bandwidth gaussian kernel on concat([xb, yb]) ---
        # Single Gram matmul; XX/YY/XY/YX are sub-blocks of the (2B, 2B) matrix.
        # Squared norms come from the Gram diagonal (no extra matmul / transpose).
        gram = jax.lax.dot_general(z, z, (((1,), (1,)), ((), ())),
                                   preferred_element_type=jnp.float32)   # (2B,2B)
        row = jax.lax.broadcasted_iota(jnp.int32, gram.shape, 0)
        col = jax.lax.broadcasted_iota(jnp.int32, gram.shape, 1)
        diag = jnp.where(row == col, gram, 0.0)
        r_col = jnp.sum(diag, axis=1, keepdims=True)                     # (2B, 1)
        r_row = jnp.sum(diag, axis=0, keepdims=True)                     # (1, 2B)
        d = jnp.maximum(r_col + r_row - 2.0 * gram, 0.0)

        n = 2 * b
        band = jnp.sum(d) / float(n * n - n)
        band = jnp.maximum(band, 1e-12)   # guard: identical src/tgt -> 0 bandwidth
        band = band / (KERNEL_MUL ** (KERNEL_NUM // 2))

        # exp(-d / (band*mul^i)) for i = 0..4 equals e^(2^(4-i)) with
        # e = exp(-d / (band*mul^4)) because mul == 2: one exp + 4 squarings.
        inv_bw_max = 1.0 / (band * (KERNEL_MUL ** (KERNEL_NUM - 1)))
        e = jnp.exp(-d * inv_bw_max)
        ksum = e
        for _ in range(KERNEL_NUM - 1):
            e = e * e
            ksum = ksum + e

        # mean(XX) + mean(YY) - mean(XY) - mean(YX) via a +/-1 block-sign mask.
        sign = jnp.where((row < b) == (col < b), 1.0, -1.0)
        loss = jnp.sum(ksum * sign) / float(b * b)
        loss_ref[0, 0] = loss


def prepare_params(params):
    """One-time weight prep OUTSIDE the jitted forward.

    Casting/padding wv per call reads the f32 weight and rewrites a full bf16
    copy -- roughly 2-3x the kernel's own HBM traffic for realistic d_in -- so
    it is done exactly once here, together with the BatchNorm fusion and the
    128-column classifier pad.
    """
    d_in = params['wv'].shape[0]
    d_pad = pl.cdiv(d_in, TK) * TK
    wv = params['wv']
    if d_pad != d_in:
        wv = jnp.pad(wv, ((0, d_pad - d_in), (0, 0)))   # zero rows contribute nothing

    bn_scale = params['gamma'] * jax.lax.rsqrt(params['rvar'] + BN_EPS)
    bn_shift = params['beta'] - params['rmean'] * bn_scale

    return {
        'wv':  wv.astype(jnp.bfloat16),
        'bv':  params['bv'],
        'wh1': params['wh1'].astype(jnp.bfloat16),
        'bh1': params['bh1'],
        'wh2': jnp.pad(params['wh2'],
                       ((0, 0), (0, CLS_PAD - CLASS_NUM))).astype(jnp.bfloat16),
        'bh2': jnp.pad(params['bh2'], ((0, 0), (0, CLS_PAD - CLASS_NUM))),
        'wb':  params['wb'].astype(jnp.bfloat16),
        'bb':  params['bb'],
        'bn_scale': bn_scale,
        'bn_shift': bn_shift,
    }


@jax.jit
def transfer_au_forward(source, target, p):
    B = source.shape[0]
    src = source.reshape(B, -1)
    tgt = target.reshape(B, -1)
    d_in = src.shape[1]

    # One combined (2B, d_in) activation matrix -> single pass over wv.
    x = jnp.concatenate([src, tgt], axis=0).astype(jnp.bfloat16)

    d_pad = p['wv'].shape[0]                 # already padded to a multiple of TK
    if d_pad != d_in:
        x = jnp.pad(x, ((0, 0), (0, d_pad - d_in)))
    nk = d_pad // TK

    def resident(shape):
        # Constant-index epilogue-only inputs: single-buffer them so the
        # ~1.7 MiB of head/bottleneck weights is not doubled by the pipeline.
        return pl.BlockSpec(shape, lambda k: (0,) * len(shape),
                            pipeline_mode=pl.Buffered(1))

    in_specs = [
        pl.BlockSpec((2 * B, TK), lambda k: (0, k)),        # x        (bf16, streamed)
        pl.BlockSpec((TK, FEAT_DIM), lambda k: (k, 0)),     # wv       (bf16, streamed)
        resident((1, FEAT_DIM)),                            # bv
        resident((FEAT_DIM, VISION_DIM)),                   # wh1      (bf16)
        resident((1, VISION_DIM)),                          # bh1
        resident((VISION_DIM, CLS_PAD)),                    # wh2      (bf16, padded)
        resident((1, CLS_PAD)),                             # bh2      (padded)
        resident((FEAT_DIM, BNECK_DIM)),                    # wb       (bf16)
        resident((1, BNECK_DIM)),                           # bb
        resident((1, BNECK_DIM)),                           # bn_scale
        resident((1, BNECK_DIM)),                           # bn_shift
    ]
    out_specs = (
        pl.BlockSpec((B, CLS_PAD), lambda k: (0, 0)),
        pl.BlockSpec((1, 1), lambda k: (0, 0),
                     memory_space=pltpu.MemorySpace.SMEM),
    )

    clf_pad, loss = pl.pallas_call(
        transfer_au_kernel,
        grid=(nk,),
        in_specs=in_specs,
        out_specs=out_specs,
        out_shape=(jax.ShapeDtypeStruct((B, CLS_PAD), jnp.float32),
                   jax.ShapeDtypeStruct((1, 1), jnp.float32)),
        scratch_shapes=[pltpu.VMEM((2 * B, FEAT_DIM), jnp.float32)],
        compiler_params=pltpu.CompilerParams(
            dimension_semantics=("arbitrary",),
            vmem_limit_bytes=VMEM_LIMIT),
    )(x, p['wv'], p['bv'], p['wh1'], p['bh1'], p['wh2'], p['bh2'],
      p['wb'], p['bb'], p['bn_scale'], p['bn_shift'])

    return {'source_clf': clf_pad[:, :CLASS_NUM],
            'transfer_loss': loss[0, 0]}


def init_params(key, d_in):
    ks = jax.random.split(key, 4)
    w = lambda k, i, o: jax.random.normal(k, (i, o), jnp.float32) * 0.02
    return {
        # synthetic vision encoder
        'wv':  w(ks[0], d_in, FEAT_DIM),
        'bv':  jnp.zeros((1, FEAT_DIM), jnp.float32),
        # head
        'wh1': w(ks[1], FEAT_DIM, VISION_DIM),
        'bh1': jnp.zeros((1, VISION_DIM), jnp.float32),
        'wh2': w(ks[2], VISION_DIM, CLASS_NUM),
        'bh2': jnp.zeros((1, CLASS_NUM), jnp.float32),
        # bottleneck linear + BatchNorm1d (eval stats)
        'wb':  w(ks[3], FEAT_DIM, BNECK_DIM),
        'bb':  jnp.zeros((1, BNECK_DIM), jnp.float32),
        'gamma': jnp.ones((1, BNECK_DIM), jnp.float32),
        'beta':  jnp.zeros((1, BNECK_DIM), jnp.float32),
        'rmean': jnp.zeros((1, BNECK_DIM), jnp.float32),
        'rvar':  jnp.ones((1, BNECK_DIM), jnp.float32),
    }


if __name__ == "__main__":
    key = jax.random.PRNGKey(0)
    kp, ksrc, ktgt = jax.random.split(key, 3)

    B, C, H, W = 8, 3, 16, 16              # small synthetic image shapes (NCHW)
    source = jax.random.normal(ksrc, (B, C, H, W), jnp.float32)
    target = jax.random.normal(ktgt, (B, C, H, W), jnp.float32)

    raw_params = init_params(kp, C * H * W)
    params = prepare_params(raw_params)    # one-time bf16 cast / pad / BN fusion
    params = jax.tree_util.tree_map(jax.block_until_ready, params)

    out = transfer_au_forward(source, target, params)
    jax.block_until_ready(out)
    assert out['source_clf'].shape == (B, CLASS_NUM)
    assert out['transfer_loss'].shape == ()
    print("KERNEL_OK")
</pallas_src>

<mosaic_0001>
module attributes {stable_mosaic.version = 11 : i64} {
  func.func @transfer_au_kernel(%arg0: i32, %arg1: memref<16x2048xbf16, #tpu.memory_space<vmem>>, %arg2: memref<2048x1024xbf16, #tpu.memory_space<vmem>>, %arg3: memref<1x1024xf32, #tpu.memory_space<vmem>>, %arg4: memref<1024x512xbf16, #tpu.memory_space<vmem>>, %arg5: memref<1x512xf32, #tpu.memory_space<vmem>>, %arg6: memref<512x128xbf16, #tpu.memory_space<vmem>>, %arg7: memref<1x128xf32, #tpu.memory_space<vmem>>, %arg8: memref<1024x256xbf16, #tpu.memory_space<vmem>>, %arg9: memref<1x256xf32, #tpu.memory_space<vmem>>, %arg10: memref<1x256xf32, #tpu.memory_space<vmem>>, %arg11: memref<1x256xf32, #tpu.memory_space<vmem>>, %arg12: memref<8x128xf32, #tpu.memory_space<vmem>>, %arg13: memref<1x1xf32, #tpu.memory_space<smem>>, %arg14: memref<16x1024xf32, #tpu.memory_space<vmem>>) attributes {dimension_semantics = [#tpu.dimension_semantics<arbitrary>], iteration_bounds = array<i64: 1>, scalar_prefetch = 0 : i64, scratch_operands = 1 : i64, tpu.core_type = #tpu.core_type<tc>, window_params = [{transform_indices = @transform_0, window_bounds = array<i64: 16, 2048>}, {transform_indices = @transform_1, window_bounds = array<i64: 2048, 1024>}, {pipeline_mode = #tpu.pipeline_mode<synchronous>, transform_indices = @transform_2, window_bounds = array<i64: 1, 1024>}, {pipeline_mode = #tpu.pipeline_mode<synchronous>, transform_indices = @transform_3, window_bounds = array<i64: 1024, 512>}, {pipeline_mode = #tpu.pipeline_mode<synchronous>, transform_indices = @transform_4, window_bounds = array<i64: 1, 512>}, {pipeline_mode = #tpu.pipeline_mode<synchronous>, transform_indices = @transform_5, window_bounds = array<i64: 512, 128>}, {pipeline_mode = #tpu.pipeline_mode<synchronous>, transform_indices = @transform_6, window_bounds = array<i64: 1, 128>}, {pipeline_mode = #tpu.pipeline_mode<synchronous>, transform_indices = @transform_7, window_bounds = array<i64: 1024, 256>}, {pipeline_mode = #tpu.pipeline_mode<synchronous>, transform_indices = @transform_8, window_bounds = array<i64: 1, 256>}, {pipeline_mode = #tpu.pipeline_mode<synchronous>, transform_indices = @transform_9, window_bounds = array<i64: 1, 256>}, {pipeline_mode = #tpu.pipeline_mode<synchronous>, transform_indices = @transform_10, window_bounds = array<i64: 1, 256>}, {pipeline_mode = #tpu.pipeline_mode<synchronous>, transform_indices = @transform_11, window_bounds = array<i64: 8, 128>}, {transform_indices = @transform_12, window_bounds = array<i64: 1, 1>}]} {
    %c0_i32 = arith.constant 0 : i32
    %0 = arith.cmpi eq, %arg0, %c0_i32 : i32
    %1 = arith.extui %0 : i1 to i32
    %c0_i32_0 = arith.constant 0 : i32
    %2 = arith.cmpi ne, %1, %c0_i32_0 : i32
    scf.if %2 {
      %cst_10 = arith.constant 0.000000e+00 : f32
      %12 = vector.broadcast %cst_10 : f32 to vector<16x1024xf32>
      %c0_11 = arith.constant 0 : index
      %c0_12 = arith.constant 0 : index
      %13 = vector.load %arg14[%c0_11, %c0_12] : memref<16x1024xf32, #tpu.memory_space<vmem>>, vector<16x1024xf32>
      tpu.vector_store %arg14[%c0_11, %c0_12], %12 {strides = array<i32>} : memref<16x1024xf32, #tpu.memory_space<vmem>>, vector<16x1024xf32>,
    } else {
    }
    %c0 = arith.constant 0 : index
    %c0_1 = arith.constant 0 : index
    %3 = vector.load %arg14[%c0, %c0_1] : memref<16x1024xf32, #tpu.memory_space<vmem>>, vector<16x1024xf32>
    %c0_2 = arith.constant 0 : index
    %c0_3 = arith.constant 0 : index
    %4 = vector.load %arg1[%c0_2, %c0_3] : memref<16x2048xbf16, #tpu.memory_space<vmem>>, vector<16x2048xbf16>
    %c0_4 = arith.constant 0 : index
    %c0_5 = arith.constant 0 : index
    %5 = vector.load %arg2[%c0_4, %c0_5] : memref<2048x1024xbf16, #tpu.memory_space<vmem>>, vector<2048x1024xbf16>
    %cst = arith.constant dense<0.000000e+00> : vector<16x1024xf32>
    %6 = tpu.matmul %4, %5, %cst {dimension_numbers = #tpu.dot_dimension_numbers<[1], [0], [0], [1], [0, 0, 1, 1], [], []>} : vector<16x2048xbf16>, vector<2048x1024xbf16>, vector<16x1024xf32> -> vector<16x1024xf32>
    %7 = arith.addf %3, %6 : vector<16x1024xf32>
    %c0_6 = arith.constant 0 : index
    %c0_7 = arith.constant 0 : index
    %8 = vector.load %arg14[%c0_6, %c0_7] : memref<16x1024xf32, #tpu.memory_space<vmem>>, vector<16x1024xf32>
    tpu.vector_store %arg14[%c0_6, %c0_7], %7 {strides = array<i32>} : memref<16x1024xf32, #tpu.memory_space<vmem>>, vector<16x1024xf32>,
    %c0_i32_8 = arith.constant 0 : i32
    %9 = arith.cmpi eq, %arg0, %c0_i32_8 : i32
    %10 = arith.extui %9 : i1 to i32
    %c0_i32_9 = arith.constant 0 : i32
    %11 = arith.cmpi ne, %10, %c0_i32_9 : i32
    scf.if %11 {
      %c0_10 = arith.constant 0 : index
      %c0_11 = arith.constant 0 : index
      %12 = vector.load %arg14[%c0_10, %c0_11] : memref<16x1024xf32, #tpu.memory_space<vmem>>, vector<16x1024xf32>
      %c0_12 = arith.constant 0 : index
      %c0_13 = arith.constant 0 : index
      %13 = vector.load %arg3[%c0_12, %c0_13] : memref<1x1024xf32, #tpu.memory_space<vmem>>, vector<1x1024xf32>
      %14 = vector.broadcast %13 : vector<1x1024xf32> to vector<16x1024xf32>
      %15 = arith.addf %12, %14 : vector<16x1024xf32>
      %16 = vector.extract_strided_slice %15 {offsets = [0, 0], sizes = [8, 1024], strides = [1, 1]} : vector<16x1024xf32> to vector<8x1024xf32>
      %17 = arith.truncf %16 : vector<8x1024xf32> to vector<8x1024xbf16>
      %c0_14 = arith.constant 0 : index
      %c0_15 = arith.constant 0 : index
      %18 = vector.load %arg4[%c0_14, %c0_15] : memref<1024x512xbf16, #tpu.memory_space<vmem>>, vector<1024x512xbf16>
      %cst_16 = arith.constant dense<0.000000e+00> : vector<8x512xf32>
      %19 = tpu.matmul %17, %18, %cst_16 {dimension_numbers = #tpu.dot_dimension_numbers<[1], [0], [0], [1], [0, 0, 1, 1], [], []>} : vector<8x1024xbf16>, vector<1024x512xbf16>, vector<8x512xf32> -> vector<8x512xf32>
      %c0_17 = arith.constant 0 : index
      %c0_18 = arith.constant 0 : index
      %20 = vector.load %arg5[%c0_17, %c0_18] : memref<1x512xf32, #tpu.memory_space<vmem>>, vector<1x512xf32>
      %21 = vector.broadcast %20 : vector<1x512xf32> to vector<8x512xf32>
      %22 = arith.addf %19, %21 : vector<8x512xf32>
      %cst_19 = arith.constant 0.000000e+00 : f32
      %23 = vector.broadcast %cst_19 : f32 to vector<8x512xf32>
      %24 = arith.maximumf %22, %23 : vector<8x512xf32>
      %25 = arith.truncf %24 : vector<8x512xf32> to vector<8x512xbf16>
      %c0_20 = arith.constant 0 : index
      %c0_21 = arith.constant 0 : index
      %26 = vector.load %arg6[%c0_20, %c0_21] : memref<512x128xbf16, #tpu.memory_space<vmem>>, vector<512x128xbf16>
      %cst_22 = arith.constant dense<0.000000e+00> : vector<8x128xf32>
      %27 = tpu.matmul %25, %26, %cst_22 {dimension_numbers = #tpu.dot_dimension_numbers<[1], [0], [0], [1], [0, 0, 1, 1], [], []>} : vector<8x512xbf16>, vector<512x128xbf16>, vector<8x128xf32> -> vector<8x128xf32>
      %c0_23 = arith.constant 0 : index
      %c0_24 = arith.constant 0 : index
      %28 = vector.load %arg7[%c0_23, %c0_24] : memref<1x128xf32, #tpu.memory_space<vmem>>, vector<1x128xf32>
      %29 = vector.broadcast %28 : vector<1x128xf32> to vector<8x128xf32>
      %30 = arith.addf %27, %29 : vector<8x128xf32>
      %c0_25 = arith.constant 0 : index
      %c0_26 = arith.constant 0 : index
      %31 = vector.load %arg12[%c0_25, %c0_26] : memref<8x128xf32, #tpu.memory_space<vmem>>, vector<8x128xf32>
      tpu.vector_store %arg12[%c0_25, %c0_26], %30 {strides = array<i32>} : memref<8x128xf32, #tpu.memory_space<vmem>>, vector<8x128xf32>,
      %32 = arith.truncf %15 : vector<16x1024xf32> to vector<16x1024xbf16>
      %c0_27 = arith.constant 0 : index
      %c0_28 = arith.constant 0 : index
      %33 = vector.load %arg8[%c0_27, %c0_28] : memref<1024x256xbf16, #tpu.memory_space<vmem>>, vector<1024x256xbf16>
      %cst_29 = arith.constant dense<0.000000e+00> : vector<16x256xf32>
      %34 = tpu.matmul %32, %33, %cst_29 {dimension_numbers = #tpu.dot_dimension_numbers<[1], [0], [0], [1], [0, 0, 1, 1], [], []>} : vector<16x1024xbf16>, vector<1024x256xbf16>, vector<16x256xf32> -> vector<16x256xf32>
      %c0_30 = arith.constant 0 : index
      %c0_31 = arith.constant 0 : index
      %35 = vector.load %arg9[%c0_30, %c0_31] : memref<1x256xf32, #tpu.memory_space<vmem>>, vector<1x256xf32>
      %36 = vector.broadcast %35 : vector<1x256xf32> to vector<16x256xf32>
      %37 = arith.addf %34, %36 : vector<16x256xf32>
      %c0_32 = arith.constant 0 : index
      %c0_33 = arith.constant 0 : index
      %38 = vector.load %arg10[%c0_32, %c0_33] : memref<1x256xf32, #tpu.memory_space<vmem>>, vector<1x256xf32>
      %39 = vector.broadcast %38 : vector<1x256xf32> to vector<16x256xf32>
      %40 = arith.mulf %37, %39 : vector<16x256xf32>
      %c0_34 = arith.constant 0 : index
      %c0_35 = arith.constant 0 : index
      %41 = vector.load %arg11[%c0_34, %c0_35] : memref<1x256xf32, #tpu.memory_space<vmem>>, vector<1x256xf32>
      %42 = vector.broadcast %41 : vector<1x256xf32> to vector<16x256xf32>
      %43 = arith.addf %40, %42 : vector<16x256xf32>
      %cst_36 = arith.constant 0.000000e+00 : f32
      %44 = vector.broadcast %cst_36 : f32 to vector<16x256xf32>
      %45 = arith.maximumf %43, %44 : vector<16x256xf32>
      %cst_37 = arith.constant dense<0.000000e+00> : vector<16x16xf32>
      %46 = tpu.matmul %45, %45, %cst_37 {dimension_numbers = #tpu.dot_dimension_numbers<[1], [1], [0], [0], [0, 0, 1, 0], [], []>} : vector<16x256xf32>, vector<16x256xf32>, vector<16x16xf32> -> vector<16x16xf32>
      %47 = tpu.iota {dimensions = array<i32: 0>} : vector<16x16xi32>
      %48 = tpu.iota {dimensions = array<i32: 1>} : vector<16x16xi32>
      %49 = arith.cmpi eq, %47, %48 : vector<16x16xi32>
      %cst_38 = arith.constant 0.000000e+00 : f32
      %50 = vector.broadcast %cst_38 : f32 to vector<16x16xf32>
      %51 = arith.select %49, %46, %50 : vector<16x16xi1>, vector<16x16xf32>
      %cst_39 = arith.constant dense<0.000000e+00> : vector<16xf32>
      %52 = vector.multi_reduction <add>, %51, %cst_39 [1] : vector<16x16xf32> to vector<16xf32>
      %53 = vector.shape_cast %52 : vector<16xf32> to vector<16x1xf32>
      %cst_40 = arith.constant dense<0.000000e+00> : vector<16xf32>
      %54 = vector.multi_reduction <add>, %51, %cst_40 [0] : vector<16x16xf32> to vector<16xf32>
      %55 = vector.shape_cast %54 : vector<16xf32> to vector<1x16xf32>
      %56 = vector.broadcast %53 : vector<16x1xf32> to vector<16x16xf32>
      %57 = vector.broadcast %55 : vector<1x16xf32> to vector<16x16xf32>
      %58 = arith.addf %56, %57 : vector<16x16xf32>
      %cst_41 = arith.constant 2.000000e+00 : f32
      %59 = vector.broadcast %cst_41 : f32 to vector<16x16xf32>
      %60 = arith.mulf %59, %46 : vector<16x16xf32>
      %61 = arith.subf %58, %60 : vector<16x16xf32>
      %cst_42 = arith.constant 0.000000e+00 : f32
      %62 = vector.broadcast %cst_42 : f32 to vector<16x16xf32>
      %63 = arith.maximumf %61, %62 : vector<16x16xf32>
      %64 = vector.shape_cast %63 : vector<16x16xf32> to vector<1x16x16xf32>
      %cst_43 = arith.constant dense<0.000000e+00> : vector<1xf32>
      %65 = vector.multi_reduction <add>, %64, %cst_43 [1, 2] : vector<1x16x16xf32> to vector<1xf32>
      %66 = vector.shape_cast %65 : vector<1xf32> to vector<1x1x1xf32>
      %67 = vector.extract %66[0, 0, 0] : f32 from vector<1x1x1xf32>
      %cst_44 = arith.constant 2.400000e+02 : f32
      %68 = arith.divf %67, %cst_44 : f32
      %cst_45 = arith.constant 9.99999996E-13 : f32
      %69 = arith.maximumf %68, %cst_45 : f32
      %cst_46 = arith.constant 4.000000e+00 : f32
      %70 = arith.divf %69, %cst_46 : f32
      %cst_47 = arith.constant 1.600000e+01 : f32
      %71 = arith.mulf %70, %cst_47 : f32
      %cst_48 = arith.constant 1.000000e+00 : f32
      %72 = arith.divf %cst_48, %71 : f32
      %cst_49 = arith.constant 0.000000e+00 : f32
      %73 = vector.broadcast %cst_49 : f32 to vector<16x16xf32>
      %74 = arith.subf %73, %63 : vector<16x16xf32>
      %75 = vector.broadcast %72 : f32 to vector<16x16xf32>
      %76 = arith.mulf %74, %75 : vector<16x16xf32>
      %77 = math.exp %76 : vector<16x16xf32>
      %78 = arith.mulf %77, %77 : vector<16x16xf32>
      %79 = arith.addf %77, %78 : vector<16x16xf32>
      %80 = arith.mulf %78, %78 : vector<16x16xf32>
      %81 = arith.addf %79, %80 : vector<16x16xf32>
      %82 = arith.mulf %80, %80 : vector<16x16xf32>
      %83 = arith.addf %81, %82 : vector<16x16xf32>
      %84 = arith.mulf %82, %82 : vector<16x16xf32>
      %85 = arith.addf %83, %84 : vector<16x16xf32>
      %c8_i32 = arith.constant 8 : i32
      %86 = vector.broadcast %c8_i32 : i32 to vector<16x16xi32>
      %87 = arith.cmpi slt, %47, %86 : vector<16x16xi32>
      %c8_i32_50 = arith.constant 8 : i32
      %88 = vector.broadcast %c8_i32_50 : i32 to vector<16x16xi32>
      %89 = arith.cmpi slt, %48, %88 : vector<16x16xi32>
      %90 = arith.xori %87, %89 : vector<16x16xi1>
      %cst_51 = arith.constant dense<true> : vector<16x16xi1>
      %91 = arith.xori %90, %cst_51 : vector<16x16xi1>
      %cst_52 = arith.constant 1.000000e+00 : f32
      %cst_53 = arith.constant -1.000000e+00 : f32
      %92 = vector.broadcast %cst_52 : f32 to vector<16x16xf32>
      %93 = vector.broadcast %cst_53 : f32 to vector<16x16xf32>
      %94 = arith.select %91, %92, %93 : vector<16x16xi1>, vector<16x16xf32>
      %95 = arith.mulf %85, %94 : vector<16x16xf32>
      %96 = vector.shape_cast %95 : vector<16x16xf32> to vector<1x16x16xf32>
      %cst_54 = arith.constant dense<0.000000e+00> : vector<1xf32>
      %97 = vector.multi_reduction <add>, %96, %cst_54 [1, 2] : vector<1x16x16xf32> to vector<1xf32>
      %98 = vector.shape_cast %97 : vector<1xf32> to vector<1x1x1xf32>
      %99 = vector.extract %98[0, 0, 0] : f32 from vector<1x1x1xf32>
      %cst_55 = arith.constant 6.400000e+01 : f32
      %100 = arith.divf %99, %cst_55 : f32
      %c0_56 = arith.constant 0 : index
      %c0_57 = arith.constant 0 : index
      %101 = memref.load %arg13[%c0_56, %c0_57] : memref<1x1xf32, #tpu.memory_space<smem>>
      memref.store %100, %arg13[%c0_56, %c0_57] : memref<1x1xf32, #tpu.memory_space<smem>>
    } else {
    }
    return
  }
  func.func @transform_0(%arg0: i32) -> (i32, i32) {
    %c0_i32 = arith.constant 0 : i32
    %c0_i32_0 = arith.constant 0 : i32
    return %c0_i32, %arg0 : i32, i32
  }
  func.func @transform_1(%arg0: i32) -> (i32, i32) {
    %c0_i32 = arith.constant 0 : i32
    %c0_i32_0 = arith.constant 0 : i32
    return %arg0, %c0_i32 : i32, i32
  }
  func.func @transform_2(%arg0: i32) -> (i32, i32) {
    %c0_i32 = arith.constant 0 : i32
    %c0_i32_0 = arith.constant 0 : i32
    %c0_i32_1 = arith.constant 0 : i32
    return %c0_i32, %c0_i32_0 : i32, i32
  }
  func.func @transform_3(%arg0: i32) -> (i32, i32) {
    %c0_i32 = arith.constant 0 : i32
    %c0_i32_0 = arith.constant 0 : i32
    %c0_i32_1 = arith.constant 0 : i32
    return %c0_i32, %c0_i32_0 : i32, i32
  }
  func.func @transform_4(%arg0: i32) -> (i32, i32) {
    %c0_i32 = arith.constant 0 : i32
    %c0_i32_0 = arith.constant 0 : i32
    %c0_i32_1 = arith.constant 0 : i32
    return %c0_i32, %c0_i32_0 : i32, i32
  }
  func.func @transform_5(%arg0: i32) -> (i32, i32) {
    %c0_i32 = arith.constant 0 : i32
    %c0_i32_0 = arith.constant 0 : i32
    %c0_i32_1 = arith.constant 0 : i32
    return %c0_i32, %c0_i32_0 : i32, i32
  }
  func.func @transform_6(%arg0: i32) -> (i32, i32) {
    %c0_i32 = arith.constant 0 : i32
    %c0_i32_0 = arith.constant 0 : i32
    %c0_i32_1 = arith.constant 0 : i32
    return %c0_i32, %c0_i32_0 : i32, i32
  }
  func.func @transform_7(%arg0: i32) -> (i32, i32) {
    %c0_i32 = arith.constant 0 : i32
    %c0_i32_0 = arith.constant 0 : i32
    %c0_i32_1 = arith.constant 0 : i32
    return %c0_i32, %c0_i32_0 : i32, i32
  }
  func.func @transform_8(%arg0: i32) -> (i32, i32) {
    %c0_i32 = arith.constant 0 : i32
    %c0_i32_0 = arith.constant 0 : i32
    %c0_i32_1 = arith.constant 0 : i32
    return %c0_i32, %c0_i32_0 : i32, i32
  }
  func.func @transform_9(%arg0: i32) -> (i32, i32) {
    %c0_i32 = arith.constant 0 : i32
    %c0_i32_0 = arith.constant 0 : i32
    %c0_i32_1 = arith.constant 0 : i32
    return %c0_i32, %c0_i32_0 : i32, i32
  }
  func.func @transform_10(%arg0: i32) -> (i32, i32) {
    %c0_i32 = arith.constant 0 : i32
    %c0_i32_0 = arith.constant 0 : i32
    %c0_i32_1 = arith.constant 0 : i32
    return %c0_i32, %c0_i32_0 : i32, i32
  }
  func.func @transform_11(%arg0: i32) -> (i32, i32) {
    %c0_i32 = arith.constant 0 : i32
    %c0_i32_0 = arith.constant 0 : i32
    %c0_i32_1 = arith.constant 0 : i32
    return %c0_i32, %c0_i32_0 : i32, i32
  }
  func.func @transform_12(%arg0: i32) -> (i32, i32) {
    %c0_i32 = arith.constant 0 : i32
    %c0_i32_0 = arith.constant 0 : i32
    %c0_i32_1 = arith.constant 0 : i32
    return %c0_i32, %c0_i32_0 : i32, i32
  }
}

</mosaic_0001>

<llo_original>
// kernel: transfer_au_forward.1
$region0: #{transfer_au_forward.1}
  #allocation0 [shape = 'u32[]', space=smem, size = 0x4, offset = 0x4, fixed_abs, tag = 'smem constant byte address 0x4 - core index']
  #allocation1 [shape = 'u32[144,128]{1,0:T(1,128)}', space=vmem, size = 0x12000, scoped, tag = 'internal scratch']
  #allocation2 [shape = 'f32[16,1024]{1,0:T(8,128)}', space=vmem, size = 0x10000, scoped, tag = 'scratch operand']
  %s0 = inlined_call_operand.vmem [shape: bf16[16,2048], index: 0, kind: input, shape index: {}]
  %s1 = inlined_call_operand.hbm [shape: bf16[2048,1024], index: 1, kind: input, shape index: {}]
  %s2 = inlined_call_operand.hbm [shape: f32[1,1024], index: 2, kind: input, shape index: {}]
  %s3 = inlined_call_operand.hbm [shape: bf16[1024,512], index: 3, kind: input, shape index: {}]
  %s4 = inlined_call_operand.hbm [shape: f32[1,512], index: 4, kind: input, shape index: {}]
  %s5 = inlined_call_operand.hbm [shape: bf16[512,128], index: 5, kind: input, shape index: {}]
  %s6 = inlined_call_operand.hbm [shape: f32[1,128], index: 6, kind: input, shape index: {}]
  %s7 = inlined_call_operand.hbm [shape: bf16[1024,256], index: 7, kind: input, shape index: {}]
  %s8 = inlined_call_operand.hbm [shape: f32[1,256], index: 8, kind: input, shape index: {}]
  %s9 = inlined_call_operand.hbm [shape: f32[1,256], index: 9, kind: input, shape index: {}]
  %s10 = inlined_call_operand.hbm [shape: f32[1,256], index: 10, kind: input, shape index: {}]
  %s11 = inlined_call_operand.hbm [shape: f32[8,128], index: 11, kind: output, shape index: {0}]
  %s12 = inlined_call_operand.hbm [shape: f32[1,1], index: 12, kind: output, shape index: {1}]
  %13 = xla_tuple %s11, %s12
  %s14 = sld [smem:[#allocation0]]
  $region110: #{transfer_au_forward.1} parent=0
    _
  %s16 = ssub.s32 1, %s14
  %s17 = scalar_select 0, %s16, %s14
  $region1: #{transfer_au_forward.1} parent=0
    #allocation3 [shape = 'u8[4194304]{0}', space=vmem, size = 0x400000, scoped, tag = 'input window, operand 1, single buffered']
    #allocation4 [shape = 's32[1]{0}', space=sflag, size = 0x4, scoped, tag = 'scoped memory for transfer_au_forward.1']
    #allocation5 [shape = 's32[1]{0}', space=sflag, size = 0x4, scoped, tag = 'scoped memory for transfer_au_forward.1']
    #allocation6 [shape = 's32[1]{0}', space=sflag, size = 0x4, scoped, tag = 'scoped memory for transfer_au_forward.1']
    #allocation7 [shape = 'u8[4096]{0}', space=vmem, size = 0x1000, scoped, tag = 'input window, operand 2, single buffered']
    #allocation8 [shape = 's32[1]{0}', space=sflag, size = 0x4, scoped, tag = 'scoped memory for transfer_au_forward.1']
    #allocation9 [shape = 'u8[1048576]{0}', space=vmem, size = 0x100000, scoped, tag = 'input window, operand 3, single buffered']
    #allocation10 [shape = 'u8[2048]{0}', space=vmem, size = 0x800, scoped, tag = 'input window, operand 4, single buffered']
    #allocation11 [shape = 's32[1]{0}', space=sflag, size = 0x4, scoped, tag = 'scoped memory for transfer_au_forward.1']
    #allocation12 [shape = 'u8[131072]{0}', space=vmem, size = 0x20000, scoped, tag = 'input window, operand 5, single buffered']
    #allocation13 [shape = 'u8[512]{0}', space=vmem, size = 0x400, scoped, tag = 'input window, operand 6, single buffered']
    #allocation14 [shape = 's32[1]{0}', space=sflag, size = 0x4, scoped, tag = 'scoped memory for transfer_au_forward.1']
    #allocation15 [shape = 'u8[524288]{0}', space=vmem, size = 0x80000, scoped, tag = 'input window, operand 7, single buffered']
    #allocation16 [shape = 'u8[1024]{0}', space=vmem, size = 0x400, scoped, tag = 'input window, operand 8, single buffered']
    #allocation17 [shape = 's32[1]{0}', space=sflag, size = 0x4, scoped, tag = 'scoped memory for transfer_au_forward.1']
    #allocation18 [shape = 'u8[1024]{0}', space=vmem, size = 0x400, scoped, tag = 'input window, operand 9, single buffered']
    #allocation19 [shape = 'u8[1024]{0}', space=vmem, size = 0x400, scoped, tag = 'input window, operand 10, single buffered']
    #allocation20 [shape = 's32[1]{0}', space=sflag, size = 0x4, scoped, tag = 'scoped memory for transfer_au_forward.1']
    #allocation21 [shape = 'u8[4096]{0}', space=vmem, size = 0x1000, scoped, tag = 'output window, operand 0, single buffered']
    #allocation22 [shape = 'u8[512]{0}', space=smem, size = 0x200, scoped, tag = 'output window, operand 1, single buffered']
    %18 = vsyncpa [#allocation4], 0
    %19 = vsyncpa [#allocation8], 0
    %20 = vsyncpa [#allocation11], 0
    %21 = vsyncpa [#allocation14], 0
    %22 = vsyncpa [#allocation17], 0
    %23 = vsyncpa [#allocation20], 0
    %24 = vsyncpa [#allocation5], 0
    %25 = vsyncpa [#allocation6], 0
    // Predicated region
    $region2: #{transfer_au_forward.1} parent=1 // pred_check
      _
    $region3: #{transfer_au_forward.1} parent=1 // pred_check_branch
      %27 = sbr.rel (0) target = $region5
    $region4: #{transfer_au_forward.1} parent=1 // pred_region
      _
    $region5: #{transfer_au_forward.1} parent=1 // pred_fallthru
      _
    // Predicated region
    $region6: #{transfer_au_forward.1} parent=1 // pred_check
      _
    $region7: #{transfer_au_forward.1} parent=1 // pred_check_branch
      %29 = sbr.rel (0) target = $region9
    $region8: #{transfer_au_forward.1} parent=1 // pred_region
      %s31 = ssub.s32 131072, 131072
      %32 = vsyncadd [#allocation4], %s31
      %s33 = sshll.u32 [#allocation3], 4
      %s34 = int_to_ptr.vmem [resolvable:$true] %s33
      %39 = dma.hbm_to_vmem [thread:$0]  %s1, 131072, %s34, [#allocation4], 512, 512, 32
    $region9: #{transfer_au_forward.1} parent=1 // pred_fallthru
      _
    // Predicated region
    $region10: #{transfer_au_forward.1} parent=1 // pred_check
      _
    $region11: #{transfer_au_forward.1} parent=1 // pred_check_branch
      %41 = sbr.rel (0) target = $region13
    $region12: #{transfer_au_forward.1} parent=1 // pred_region
      %s43 = ssub.s32 128, 128
      %44 = vsyncadd [#allocation8], %s43
      %s46 = sshll.u32 [#allocation7], 4
      %s47 = int_to_ptr.vmem [resolvable:$true] %s46
      %49 = dma.hbm_to_vmem [thread:$0]  %s2, 128, %s47, [#allocation8]
    $region13: #{transfer_au_forward.1} parent=1 // pred_fallthru
      _
    // Predicated region
    $region14: #{transfer_au_forward.1} parent=1 // pred_check
      _
    $region15: #{transfer_au_forward.1} parent=1 // pred_check_branch
      %51 = sbr.rel (0) target = $region17
    $region16: #{transfer_au_forward.1} parent=1 // pred_region
      %s53 = ssub.s32 32768, 32768
      %54 = vsyncadd [#allocation8], %s53
      %s55 = sshll.u32 [#allocation9], 4
      %s56 = int_to_ptr.vmem [resolvable:$true] %s55
      %61 = dma.hbm_to_vmem [thread:$0]  %s3, 32768, %s56, [#allocation8], 256, 256, 16
    $region17: #{transfer_au_forward.1} parent=1 // pred_fallthru
      _
    // Predicated region
    $region18: #{transfer_au_forward.1} parent=1 // pred_check
      _
    $region19: #{transfer_au_forward.1} parent=1 // pred_check_branch
      %63 = sbr.rel (0) target = $region21
    $region20: #{transfer_au_forward.1} parent=1 // pred_region
      %s65 = ssub.s32 64, 64
      %66 = vsyncadd [#allocation11], %s65
      %s68 = sshll.u32 [#allocation10], 4
      %s69 = int_to_ptr.vmem [resolvable:$true] %s68
      %71 = dma.hbm_to_vmem [thread:$0]  %s4, 64, %s69, [#allocation11]
    $region21: #{transfer_au_forward.1} parent=1 // pred_fallthru
      _
    // Predicated region
    $region22: #{transfer_au_forward.1} parent=1 // pred_check
      _
    $region23: #{transfer_au_forward.1} parent=1 // pred_check_branch
      %73 = sbr.rel (0) target = $region25
    $region24: #{transfer_au_forward.1} parent=1 // pred_region
      %s75 = ssub.s32 4096, 4096
      %76 = vsyncadd [#allocation11], %s75
      %s77 = sshll.u32 [#allocation12], 4
      %s78 = int_to_ptr.vmem [resolvable:$true] %s77
      %83 = dma.hbm_to_vmem [thread:$0]  %s5, 4096, %s78, [#allocation11], 64, 64, 4
    $region25: #{transfer_au_forward.1} parent=1 // pred_fallthru
      _
    // Predicated region
    $region26: #{transfer_au_forward.1} parent=1 // pred_check
      _
    $region27: #{transfer_au_forward.1} parent=1 // pred_check_branch
      %85 = sbr.rel (0) target = $region29
    $region28: #{transfer_au_forward.1} parent=1 // pred_region
      %s87 = ssub.s32 16, 16
      %88 = vsyncadd [#allocation14], %s87
      %s90 = sshll.u32 [#allocation13], 4
      %s91 = int_to_ptr.vmem [resolvable:$true] %s90
      %93 = dma.hbm_to_vmem [thread:$0]  %s6, 16, %s91, [#allocation14]
    $region29: #{transfer_au_forward.1} parent=1 // pred_fallthru
      _
    // Predicated region
    $region30: #{transfer_au_forward.1} parent=1 // pred_check
      _
    $region31: #{transfer_au_forward.1} parent=1 // pred_check_branch
      %95 = sbr.rel (0) target = $region33
    $region32: #{transfer_au_forward.1} parent=1 // pred_region
      %s97 = ssub.s32 16384, 16384
      %98 = vsyncadd [#allocation14], %s97
      %s99 = sshll.u32 [#allocation15], 4
      %s100 = int_to_ptr.vmem [resolvable:$true] %s99
      %105 = dma.hbm_to_vmem [thread:$0]  %s7, 16384, %s100, [#allocation14], 128, 128, 8
    $region33: #{transfer_au_forward.1} parent=1 // pred_fallthru
      _
    // Predicated region
    $region34: #{transfer_au_forward.1} parent=1 // pred_check
      _
    $region35: #{transfer_au_forward.1} parent=1 // pred_check_branch
      %107 = sbr.rel (0) target = $region37
    $region36: #{transfer_au_forward.1} parent=1 // pred_region
      %s109 = ssub.s32 32, 32
      %110 = vsyncadd [#allocation17], %s109
      %s112 = sshll.u32 [#allocation16], 4
      %s113 = int_to_ptr.vmem [resolvable:$true] %s112
      %115 = dma.hbm_to_vmem [thread:$0]  %s8, 32, %s113, [#allocation17]
    $region37: #{transfer_au_forward.1} parent=1 // pred_fallthru
      _
    // Predicated region
    $region38: #{transfer_au_forward.1} parent=1 // pred_check
      _
    $region39: #{transfer_au_forward.1} parent=1 // pred_check_branch
      %117 = sbr.rel (0) target = $region41
    $region40: #{transfer_au_forward.1} parent=1 // pred_region
      %s119 = ssub.s32 32, 32
      %120 = vsyncadd [#allocation17], %s119
      %s122 = sshll.u32 [#allocation18], 4
      %s123 = int_to_ptr.vmem [resolvable:$true] %s122
      %125 = dma.hbm_to_vmem [thread:$0]  %s9, 32, %s123, [#allocation17]
    $region41: #{transfer_au_forward.1} parent=1 // pred_fallthru
      _
    // Predicated region
    $region42: #{transfer_au_forward.1} parent=1 // pred_check
      _
    $region43: #{transfer_au_forward.1} parent=1 // pred_check_branch
      %127 = sbr.rel (0) target = $region45
    $region44: #{transfer_au_forward.1} parent=1 // pred_region
      %s129 = ssub.s32 32, 32
      %130 = vsyncadd [#allocation20], %s129
      %s132 = sshll.u32 [#allocation19], 4
      %s133 = int_to_ptr.vmem [resolvable:$true] %s132
      %135 = dma.hbm_to_vmem [thread:$0]  %s10, 32, %s133, [#allocation20]
    $region45: #{transfer_au_forward.1} parent=1 // pred_fallthru
      _
    // Predicated region
    $region46: #{transfer_au_forward.1} parent=1 // pred_check
      _
    $region47: #{transfer_au_forward.1} parent=1 // pred_check_branch
      %137 = sbr.rel (0) target = $region49
    $region48: #{transfer_au_forward.1} parent=1 // pred_region
      %138 = dma.done [#allocation4], 131072
    $region49: #{transfer_au_forward.1} parent=1 // pred_fallthru
      _
    // Predicated region
    $region50: #{transfer_au_forward.1} parent=1 // pred_check
      _
    $region51: #{transfer_au_forward.1} parent=1 // pred_check_branch
      %140 = sbr.rel (0) target = $region53
    $region52: #{transfer_au_forward.1} parent=1 // pred_region
      %141 = dma.done [#allocation8], 128
    $region53: #{transfer_au_forward.1} parent=1 // pred_fallthru
      _
    // Predicated region
    $region54: #{transfer_au_forward.1} parent=1 // pred_check
      _
    $region55: #{transfer_au_forward.1} parent=1 // pred_check_branch
      %143 = sbr.rel (0) target = $region57
    $region56: #{transfer_au_forward.1} parent=1 // pred_region
      %144 = dma.done [#allocation8], 32768
    $region57: #{transfer_au_forward.1} parent=1 // pred_fallthru
      _
    // Predicated region
    $region58: #{transfer_au_forward.1} parent=1 // pred_check
      _
    $region59: #{transfer_au_forward.1} parent=1 // pred_check_branch
      %146 = sbr.rel (0) target = $region61
    $region60: #{transfer_au_forward.1} parent=1 // pred_region
      %147 = dma.done [#allocation11], 64
    $region61: #{transfer_au_forward.1} parent=1 // pred_fallthru
      _
    // Predicated region
    $region62: #{transfer_au_forward.1} parent=1 // pred_check
      _
    $region63: #{transfer_au_forward.1} parent=1 // pred_check_branch
      %149 = sbr.rel (0) target = $region65
    $region64: #{transfer_au_forward.1} parent=1 // pred_region
      %150 = dma.done [#allocation11], 4096
    $region65: #{transfer_au_forward.1} parent=1 // pred_fallthru
      _
    // Predicated region
    $region66: #{transfer_au_forward.1} parent=1 // pred_check
      _
    $region67: #{transfer_au_forward.1} parent=1 // pred_check_branch
      %152 = sbr.rel (0) target = $region69
    $region68: #{transfer_au_forward.1} parent=1 // pred_region
      %153 = dma.done [#allocation14], 16
    $region69: #{transfer_au_forward.1} parent=1 // pred_fallthru
      _
    // Predicated region
    $region70: #{transfer_au_forward.1} parent=1 // pred_check
      _
    $region71: #{transfer_au_forward.1} parent=1 // pred_check_branch
      %155 = sbr.rel (0) target = $region73
    $region72: #{transfer_au_forward.1} parent=1 // pred_region
      %156 = dma.done [#allocation14], 16384
    $region73: #{transfer_au_forward.1} parent=1 // pred_fallthru
      _
    // Predicated region
    $region74: #{transfer_au_forward.1} parent=1 // pred_check
      _
    $region75: #{transfer_au_forward.1} parent=1 // pred_check_branch
      %158 = sbr.rel (0) target = $region77
    $region76: #{transfer_au_forward.1} parent=1 // pred_region
      %159 = dma.done [#allocation17], 32
    $region77: #{transfer_au_forward.1} parent=1 // pred_fallthru
      _
    // Predicated region
    $region78: #{transfer_au_forward.1} parent=1 // pred_check
      _
    $region79: #{transfer_au_forward.1} parent=1 // pred_check_branch
      %161 = sbr.rel (0) target = $region81
    $region80: #{transfer_au_forward.1} parent=1 // pred_region
      %162 = dma.done [#allocation17], 32
    $region81: #{transfer_au_forward.1} parent=1 // pred_fallthru
      _
    // Predicated region
    $region82: #{transfer_au_forward.1} parent=1 // pred_check
      _
    $region83: #{transfer_au_forward.1} parent=1 // pred_check_branch
      %164 = sbr.rel (0) target = $region85
    $region84: #{transfer_au_forward.1} parent=1 // pred_region
      %165 = dma.done [#allocation20], 32
    $region85: #{transfer_au_forward.1} parent=1 // pred_fallthru
      _
    %p167 = scmp.eq.s32.totalorder 0, 0
    // Predicated region
    $region86: #{transfer_au_forward.1} parent=1 // pred_check
      %p168 = pneg %p167
    $region87: #{transfer_au_forward.1} parent=1 // pred_check_branch
      %170 = sbr.rel (%p168) target = $region89
    $region88: #{transfer_au_forward.1} parent=1 // pred_region
      %171 = vst [vmem:[#allocation2] sm:$0xff] 0.0
      %172 = vst [vmem:[#allocation2 + $0x8] sm:$0xff] 0.0
      %173 = vst [vmem:[#allocation2 + $0x10] sm:$0xff] 0.0
      %174 = vst [vmem:[#allocation2 + $0x18] sm:$0xff] 0.0
      %175 = vst [vmem:[#allocation2 + $0x20] sm:$0xff] 0.0
      %176 = vst [vmem:[#allocation2 + $0x28] sm:$0xff] 0.0
      %177 = vst [vmem:[#allocation2 + $0x30] sm:$0xff] 0.0
      %178 = vst [vmem:[#allocation2 + $0x38] sm:$0xff] 0.0
      %179 = vst [vmem:[#allocation2 + $0x40] sm:$0xff] 0.0
      %180 = vst [vmem:[#allocation2 + $0x48] sm:$0xff] 0.0
      %181 = vst [vmem:[#allocation2 + $0x50] sm:$0xff] 0.0
      %182 = vst [vmem:[#allocation2 + $0x58] sm:$0xff] 0.0
      %183 = vst [vmem:[#allocation2 + $0x60] sm:$0xff] 0.0
      %184 = vst [vmem:[#allocation2 + $0x68] sm:$0xff] 0.0
      %185 = vst [vmem:[#allocation2 + $0x70] sm:$0xff] 0.0
      %186 = vst [vmem:[#allocation2 + $0x78] sm:$0xff] 0.0
    $region89: #{transfer_au_forward.1} parent=1 // pred_fallthru
      _
    %v187 = vld [vmem:[#allocation2] sm:$0xff]
    %v188 = vld [vmem:[#allocation2 + $0x8] sm:$0xff]
    %v189 = vld [vmem:[#allocation2 + $0x10] sm:$0xff]
    %v190 = vld [vmem:[#allocation2 + $0x18] sm:$0xff]
    %v191 = vld [vmem:[#allocation2 + $0x20] sm:$0xff]
    %v192 = vld [vmem:[#allocation2 + $0x28] sm:$0xff]
    %v193 = vld [vmem:[#allocation2 + $0x30] sm:$0xff]
    %v194 = vld [vmem:[#allocation2 + $0x38] sm:$0xff]
    %v195 = vld [vmem:[#allocation2 + $0x40] sm:$0xff]
    %v196 = vld [vmem:[#allocation2 + $0x48] sm:$0xff]
    %v197 = vld [vmem:[#allocation2 + $0x50] sm:$0xff]
    %v198 = vld [vmem:[#allocation2 + $0x58] sm:$0xff]
    %v199 = vld [vmem:[#allocation2 + $0x60] sm:$0xff]
    %v200 = vld [vmem:[#allocation2 + $0x68] sm:$0xff]
    %v201 = vld [vmem:[#allocation2 + $0x70] sm:$0xff]
    %v202 = vld [vmem:[#allocation2 + $0x78] sm:$0xff]
    %v203 = vld [vmem:[%s0] sm:$0xff]
    %v204 = vld [vmem:[%s0 + $0x8] sm:$0xff]
    %v205 = vld [vmem:[%s0 + $0x10] sm:$0xff]
    %v206 = vld [vmem:[%s0 + $0x18] sm:$0xff]
    %v207 = vld [vmem:[%s0 + $0x20] sm:$0xff]
    %v208 = vld [vmem:[%s0 + $0x28] sm:$0xff]
    %v209 = vld [vmem:[%s0 + $0x30] sm:$0xff]
    %v210 = vld [vmem:[%s0 + $0x38] sm:$0xff]
    %v211 = vld [vmem:[%s0 + $0x40] sm:$0xff]
    %v212 = vld [vmem:[%s0 + $0x48] sm:$0xff]
    %v213 = vld [vmem:[%s0 + $0x50] sm:$0xff]
    %v214 = vld [vmem:[%s0 + $0x58] sm:$0xff]
    %v215 = vld [vmem:[%s0 + $0x60] sm:$0xff]
    %v216 = vld [vmem:[%s0 + $0x68] sm:$0xff]
    %v217 = vld [vmem:[%s0 + $0x70] sm:$0xff]
    %v218 = vld [vmem:[%s0 + $0x78] sm:$0xff]
    %v219 = vld [vmem:[#allocation3] sm:$0xff]
    %v220 = vld [vmem:[#allocation3 + $0x8] sm:$0xff]
    %v221 = vld [vmem:[#allocation3 + $0x10] sm:$0xff]
    %v222 = vld [vmem:[#allocation3 + $0x18] sm:$0xff]
    %v223 = vld [vmem:[#allocation3 + $0x20] sm:$0xff]
    %v224 = vld [vmem:[#allocation3 + $0x28] sm:$0xff]
    %v225 = vld [vmem:[#allocation3 + $0x30] sm:$0xff]
    %v226 = vld [vmem:[#allocation3 + $0x38] sm:$0xff]
    %v227 = vld [vmem:[#allocation3 + $0x40] sm:$0xff]
    %v228 = vld [vmem:[#allocation3 + $0x48] sm:$0xff]
    %v229 = vld [vmem:[#allocation3 + $0x50] sm:$0xff]
    %v230 = vld [vmem:[#allocation3 + $0x58] sm:$0xff]
    %v231 = vld [vmem:[#allocation3 + $0x60] sm:$0xff]
    %v232 = vld [vmem:[#allocation3 + $0x68] sm:$0xff]
    %v233 = vld [vmem:[#allocation3 + $0x70] sm:$0xff]
    %v234 = vld [vmem:[#allocation3 + $0x78] sm:$0xff]
    %v235 = vld [vmem:[#allocation3 + $0x80] sm:$0xff]
    %v236 = vld [vmem:[#allocation3 + $0x88] sm:$0xff]
    %v237 = vld [vmem:[#allocation3 + $0x90] sm:$0xff]
    %v238 = vld [vmem:[#allocation3 + $0x98] sm:$0xff]
    %v239 = vld [vmem:[#allocation3 + $0xa0] sm:$0xff]
    %v240 = vld [vmem:[#allocation3 + $0xa8] sm:$0xff]
    %v241 = vld [vmem:[#allocation3 + $0xb0] sm:$0xff]
    %v242 = vld [vmem:[#allocation3 + $0xb8] sm:$0xff]
    %v243 = vld [vmem:[#allocation3 + $0xc0] sm:$0xff]
    %v244 = vld [vmem:[#allocation3 + $0xc8] sm:$0xff]
    %v245 = vld [vmem:[#allocation3 + $0xd0] sm:$0xff]
    %v246 = vld [vmem:[#allocation3 + $0xd8] sm:$0xff]
    %v247 = vld [vmem:[#allocation3 + $0xe0] sm:$0xff]
    %v248 = vld [vmem:[#allocation3 + $0xe8] sm:$0xff]
    %v249 = vld [vmem:[#allocation3 + $0xf0] sm:$0xff]
    %v250 = vld [vmem:[#allocation3 + $0xf8] sm:$0xff]
    %v251 = vld [vmem:[#allocation3 + $0x100] sm:$0xff]
    %v252 = vld [vmem:[#allocation3 + $0x108] sm:$0xff]
    %v253 = vld [vmem:[#allocation3 + $0x110] sm:$0xff]
    %v254 = vld [vmem:[#allocation3 + $0x118] sm:$0xff]
    %v255 = vld [vmem:[#allocation3 + $0x120] sm:$0xff]
    %v256 = vld [vmem:[#allocation3 + $0x128] sm:$0xff]
    %v257 = vld [vmem:[#allocation3 + $0x130] sm:$0xff]
    %v258 = vld [vmem:[#allocation3 + $0x138] sm:$0xff]
    %v259 = vld [vmem:[#allocation3 + $0x140] sm:$0xff]
    %v260 = vld [vmem:[#allocation3 + $0x148] sm:$0xff]
    %v261 = vld [vmem:[#allocation3 + $0x150] sm:$0xff]
    %v262 = vld [vmem:[#allocation3 + $0x158] sm:$0xff]
    %v263 = vld [vmem:[#allocation3 + $0x160] sm:$0xff]
    %v264 = vld [vmem:[#allocation3 + $0x168] sm:$0xff]
    %v265 = vld [vmem:[#allocation3 + $0x170] sm:$0xff]
    %v266 = vld [vmem:[#allocation3 + $0x178] sm:$0xff]
    %v267 = vld [vmem:[#allocation3 + $0x180] sm:$0xff]
    %v268 = vld [vmem:[#allocation3 + $0x188] sm:$0xff]
    %v269 = vld [vmem:[#allocation3 + $0x190] sm:$0xff]
    %v270 = vld [vmem:[#allocation3 + $0x198] sm:$0xff]
    %v271 = vld [vmem:[#allocation3 + $0x1a0] sm:$0xff]
    %v272 = vld [vmem:[#allocation3 + $0x1a8] sm:$0xff]
    %v273 = vld [vmem:[#allocation3 + $0x1b0] sm:$0xff]
    %v274 = vld [vmem:[#allocation3 + $0x1b8] sm:$0xff]
    %v275 = vld [vmem:[#allocation3 + $0x1c0] sm:$0xff]
    %v276 = vld [vmem:[#allocation3 + $0x1c8] sm:$0xff]
    %v277 = vld [vmem:[#allocation3 + $0x1d0] sm:$0xff]
    %v278 = vld [vmem:[#allocation3 + $0x1d8] sm:$0xff]
    %v279 = vld [vmem:[#allocation3 + $0x1e0] sm:$0xff]
    %v280 = vld [vmem:[#allocation3 + $0x1e8] sm:$0xff]
    %v281 = vld [vmem:[#allocation3 + $0x1f0] sm:$0xff]
    %v282 = vld [vmem:[#allocation3 + $0x1f8] sm:$0xff]
    %v283 = vld [vmem:[#allocation3 + $0x200] sm:$0xff]
    %v284 = vld [vmem:[#allocation3 + $0x208] sm:$0xff]
    %v285 = vld [vmem:[#allocation3 + $0x210] sm:$0xff]
    %v286 = vld [vmem:[#allocation3 + $0x218] sm:$0xff]
    %v287 = vld [vmem:[#allocation3 + $0x220] sm:$0xff]
    %v288 = vld [vmem:[#allocation3 + $0x228] sm:$0xff]
    %v289 = vld [vmem:[#allocation3 + $0x230] sm:$0xff]
    %v290 = vld [vmem:[#allocation3 + $0x238] sm:$0xff]
    %v291 = vld [vmem:[#allocation3 + $0x240] sm:$0xff]
    %v292 = vld [vmem:[#allocation3 + $0x248] sm:$0xff]
    %v293 = vld [vmem:[#allocation3 + $0x250] sm:$0xff]
    %v294 = vld [vmem:[#allocation3 + $0x258] sm:$0xff]
    %v295 = vld [vmem:[#allocation3 + $0x260] sm:$0xff]
    %v296 = vld [vmem:[#allocation3 + $0x268] sm:$0xff]
    %v297 = vld [vmem:[#allocation3 + $0x270] sm:$0xff]
    %v298 = vld [vmem:[#allocation3 + $0x278] sm:$0xff]
    %v299 = vld [vmem:[#allocation3 + $0x280] sm:$0xff]
    %v300 = vld [vmem:[#allocation3 + $0x288] sm:$0xff]
    %v301 = vld [vmem:[#allocation3 + $0x290] sm:$0xff]
    %v302 = vld [vmem:[#allocation3 + $0x298] sm:$0xff]
    %v303 = vld [vmem:[#allocation3 + $0x2a0] sm:$0xff]
    %v304 = vld [vmem:[#allocation3 + $0x2a8] sm:$0xff]
    %v305 = vld [vmem:[#allocation3 + $0x2b0] sm:$0xff]
    %v306 = vld [vmem:[#allocation3 + $0x2b8] sm:$0xff]
    %v307 = vld [vmem:[#allocation3 + $0x2c0] sm:$0xff]
    %v308 = vld [vmem:[#allocation3 + $0x2c8] sm:$0xff]
    %v309 = vld [vmem:[#allocation3 + $0x2d0] sm:$0xff]
    %v310 = vld [vmem:[#allocation3 + $0x2d8] sm:$0xff]
    %v311 = vld [vmem:[#allocation3 + $0x2e0] sm:$0xff]
    %v312 = vld [vmem:[#allocation3 + $0x2e8] sm:$0xff]
    %v313 = vld [vmem:[#allocation3 + $0x2f0] sm:$0xff]
    %v314 = vld [vmem:[#allocation3 + $0x2f8] sm:$0xff]
    %v315 = vld [vmem:[#allocation3 + $0x300] sm:$0xff]
    %v316 = vld [vmem:[#allocation3 + $0x308] sm:$0xff]
    %v317 = vld [vmem:[#allocation3 + $0x310] sm:$0xff]
    %v318 = vld [vmem:[#allocation3 + $0x318] sm:$0xff]
    %v319 = vld [vmem:[#allocation3 + $0x320] sm:$0xff]
    %v320 = vld [vmem:[#allocation3 + $0x328] sm:$0xff]
    %v321 = vld [vmem:[#allocation3 + $0x330] sm:$0xff]
    %v322 = vld [vmem:[#allocation3 + $0x338] sm:$0xff]
    %v323 = vld [vmem:[#allocation3 + $0x340] sm:$0xff]
    %v324 = vld [vmem:[#allocation3 + $0x348] sm:$0xff]
    %v325 = vld [vmem:[#allocation3 + $0x350] sm:$0xff]
    %v326 = vld [vmem:[#allocation3 + $0x358] sm:$0xff]
    %v327 = vld [vmem:[#allocation3 + $0x360] sm:$0xff]
    %v328 = vld [vmem:[#allocation3 + $0x368] sm:$0xff]
    %v329 = vld [vmem:[#allocation3 + $0x370] sm:$0xff]
    %v330 = vld [vmem:[#allocation3 + $0x378] sm:$0xff]
    %v331 = vld [vmem:[#allocation3 + $0x380] sm:$0xff]
    %v332 = vld [vmem:[#allocation3 + $0x388] sm:$0xff]
    %v333 = vld [vmem:[#allocation3 + $0x390] sm:$0xff]
    %v334 = vld [vmem:[#allocation3 + $0x398] sm:$0xff]
    %v335 = vld [vmem:[#allocation3 + $0x3a0] sm:$0xff]
    %v336 = vld [vmem:[#allocation3 + $0x3a8] sm:$0xff]
    %v337 = vld [vmem:[#allocation3 + $0x3b0] sm:$0xff]
    %v338 = vld [vmem:[#allocation3 + $0x3b8] sm:$0xff]
    %v339 = vld [vmem:[#allocation3 + $0x3c0] sm:$0xff]
    %v340 = vld [vmem:[#allocation3 + $0x3c8] sm:$0xff]
    %v341 = vld [vmem:[#allocation3 + $0x3d0] sm:$0xff]
    %v342 = vld [vmem:[#allocation3 + $0x3d8] sm:$0xff]
    %v343 = vld [vmem:[#allocation3 + $0x3e0] sm:$0xff]
    %v344 = vld [vmem:[#allocation3 + $0x3e8] sm:$0xff]
    %v345 = vld [vmem:[#allocation3 + $0x3f0] sm:$0xff]
    %v346 = vld [vmem:[#allocation3 + $0x3f8] sm:$0xff]
    %v347 = vld [vmem:[#allocation3 + $0x400] sm:$0xff]
    %v348 = vld [vmem:[#allocation3 + $0x408] sm:$0xff]
    %v349 = vld [vmem:[#allocation3 + $0x410] sm:$0xff]
    %v350 = vld [vmem:[#allocation3 + $0x418] sm:$0xff]
    %v351 = vld [vmem:[#allocation3 + $0x420] sm:$0xff]
    %v352 = vld [vmem:[#allocation3 + $0x428] sm:$0xff]
    %v353 = vld [vmem:[#allocation3 + $0x430] sm:$0xff]
    %v354 = vld [vmem:[#allocation3 + $0x438] sm:$0xff]
    %v355 = vld [vmem:[#allocation3 + $0x440] sm:$0xff]
    %v356 = vld [vmem:[#allocation3 + $0x448] sm:$0xff]
    %v357 = vld [vmem:[#allocation3 + $0x450] sm:$0xff]
    %v358 = vld [vmem:[#allocation3 + $0x458] sm:$0xff]
    %v359 = vld [vmem:[#allocation3 + $0x460] sm:$0xff]
    %v360 = vld [vmem:[#allocation3 + $0x468] sm:$0xff]
    %v361 = vld [vmem:[#allocation3 + $0x470] sm:$0xff]
    %v362 = vld [vmem:[#allocation3 + $0x478] sm:$0xff]
    %v363 = vld [vmem:[#allocation3 + $0x480] sm:$0xff]
    %v364 = vld [vmem:[#allocation3 + $0x488] sm:$0xff]
    %v365 = vld [vmem:[#allocation3 + $0x490] sm:$0xff]
    %v366 = vld [vmem:[#allocation3 + $0x498] sm:$0xff]
    %v367 = vld [vmem:[#allocation3 + $0x4a0] sm:$0xff]
    %v368 = vld [vmem:[#allocation3 + $0x4a8] sm:$0xff]
    %v369 = vld [vmem:[#allocation3 + $0x4b0] sm:$0xff]
    %v370 = vld [vmem:[#allocation3 + $0x4b8] sm:$0xff]
    %v371 = vld [vmem:[#allocation3 + $0x4c0] sm:$0xff]
    %v372 = vld [vmem:[#allocation3 + $0x4c8] sm:$0xff]
    %v373 = vld [vmem:[#allocation3 + $0x4d0] sm:$0xff]
    %v374 = vld [vmem:[#allocation3 + $0x4d8] sm:$0xff]
    %v375 = vld [vmem:[#allocation3 + $0x4e0] sm:$0xff]
    %v376 = vld [vmem:[#allocation3 + $0x4e8] sm:$0xff]
    %v377 = vld [vmem:[#allocation3 + $0x4f0] sm:$0xff]
    %v378 = vld [vmem:[#allocation3 + $0x4f8] sm:$0xff]
    %v379 = vld [vmem:[#allocation3 + $0x500] sm:$0xff]
    %v380 = vld [vmem:[#allocation3 + $0x508] sm:$0xff]
    %v381 = vld [vmem:[#allocation3 + $0x510] sm:$0xff]
    %v382 = vld [vmem:[#allocation3 + $0x518] sm:$0xff]
    %v383 = vld [vmem:[#allocation3 + $0x520] sm:$0xff]
    %v384 = vld [vmem:[#allocation3 + $0x528] sm:$0xff]
    %v385 = vld [vmem:[#allocation3 + $0x530] sm:$0xff]
    %v386 = vld [vmem:[#allocation3 + $0x538] sm:$0xff]
    %v387 = vld [vmem:[#allocation3 + $0x540] sm:$0xff]
    %v388 = vld [vmem:[#allocation3 + $0x548] sm:$0xff]
    %v389 = vld [vmem:[#allocation3 + $0x550] sm:$0xff]
    %v390 = vld [vmem:[#allocation3 + $0x558] sm:$0xff]
    %v391 = vld [vmem:[#allocation3 + $0x560] sm:$0xff]
    %v392 = vld [vmem:[#allocation3 + $0x568] sm:$0xff]
    %v393 = vld [vmem:[#allocation3 + $0x570] sm:$0xff]
    %v394 = vld [vmem:[#allocation3 + $0x578] sm:$0xff]
    %v395 = vld [vmem:[#allocation3 + $0x580] sm:$0xff]
    %v396 = vld [vmem:[#allocation3 + $0x588] sm:$0xff]
    %v397 = vld [vmem:[#allocation3 + $0x590] sm:$0xff]
    %v398 = vld [vmem:[#allocation3 + $0x598] sm:$0xff]
    %v399 = vld [vmem:[#allocation3 + $0x5a0] sm:$0xff]
    %v400 = vld [vmem:[#allocation3 + $0x5a8] sm:$0xff]
    %v401 = vld [vmem:[#allocation3 + $0x5b0] sm:$0xff]
    %v402 = vld [vmem:[#allocation3 + $0x5b8] sm:$0xff]
    %v403 = vld [vmem:[#allocation3 + $0x5c0] sm:$0xff]
    %v404 = vld [vmem:[#allocation3 + $0x5c8] sm:$0xff]
    %v405 = vld [vmem:[#allocation3 + $0x5d0] sm:$0xff]
    %v406 = vld [vmem:[#allocation3 + $0x5d8] sm:$0xff]
    %v407 = vld [vmem:[#allocation3 + $0x5e0] sm:$0xff]
    %v408 = vld [vmem:[#allocation3 + $0x5e8] sm:$0xff]
    %v409 = vld [vmem:[#allocation3 + $0x5f0] sm:$0xff]
    %v410 = vld [vmem:[#allocation3 + $0x5f8] sm:$0xff]
    %v411 = vld [vmem:[#allocation3 + $0x600] sm:$0xff]
    %v412 = vld [vmem:[#allocation3 + $0x608] sm:$0xff]
    %v413 = vld [vmem:[#allocation3 + $0x610] sm:$0xff]
    %v414 = vld [vmem:[#allocation3 + $0x618] sm:$0xff]
    %v415 = vld [vmem:[#allocation3 + $0x620] sm:$0xff]
    %v416 = vld [vmem:[#allocation3 + $0x628] sm:$0xff]
    %v417 = vld [vmem:[#allocation3 + $0x630] sm:$0xff]
    %v418 = vld [vmem:[#allocation3 + $0x638] sm:$0xff]
    %v419 = vld [vmem:[#allocation3 + $0x640] sm:$0xff]
    %v420 = vld [vmem:[#allocation3 + $0x648] sm:$0xff]
    %v421 = vld [vmem:[#allocation3 + $0x650] sm:$0xff]
    %v422 = vld [vmem:[#allocation3 + $0x658] sm:$0xff]
    %v423 = vld [vmem:[#allocation3 + $0x660] sm:$0xff]
    %v424 = vld [vmem:[#allocation3 + $0x668] sm:$0xff]
    %v425 = vld [vmem:[#allocation3 + $0x670] sm:$0xff]
    %v426 = vld [vmem:[#allocation3 + $0x678] sm:$0xff]
    %v427 = vld [vmem:[#allocation3 + $0x680] sm:$0xff]
    %v428 = vld [vmem:[#allocation3 + $0x688] sm:$0xff]
    %v429 = vld [vmem:[#allocation3 + $0x690] sm:$0xff]
    %v430 = vld [vmem:[#allocation3 + $0x698] sm:$0xff]
    %v431 = vld [vmem:[#allocation3 + $0x6a0] sm:$0xff]
    %v432 = vld [vmem:[#allocation3 + $0x6a8] sm:$0xff]
    %v433 = vld [vmem:[#allocation3 + $0x6b0] sm:$0xff]
    %v434 = vld [vmem:[#allocation3 + $0x6b8] sm:$0xff]
    %v435 = vld [vmem:[#allocation3 + $0x6c0] sm:$0xff]
    %v436 = vld [vmem:[#allocation3 + $0x6c8] sm:$0xff]
    %v437 = vld [vmem:[#allocation3 + $0x6d0] sm:$0xff]
    %v438 = vld [vmem:[#allocation3 + $0x6d8] sm:$0xff]
    %v439 = vld [vmem:[#allocation3 + $0x6e0] sm:$0xff]
    %v440 = vld [vmem:[#allocation3 + $0x6e8] sm:$0xff]
    %v441 = vld [vmem:[#allocation3 + $0x6f0] sm:$0xff]
    %v442 = vld [vmem:[#allocation3 + $0x6f8] sm:$0xff]
    %v443 = vld [vmem:[#allocation3 + $0x700] sm:$0xff]
    %v444 = vld [vmem:[#allocation3 + $0x708] sm:$0xff]
    %v445 = vld [vmem:[#allocation3 + $0x710] sm:$0xff]
    %v446 = vld [vmem:[#allocation3 + $0x718] sm:$0xff]
    %v447 = vld [vmem:[#allocation3 + $0x720] sm:$0xff]
    %v448 = vld [vmem:[#allocation3 + $0x728] sm:$0xff]
    %v449 = vld [vmem:[#allocation3 + $0x730] sm:$0xff]
    %v450 = vld [vmem:[#allocation3 + $0x738] sm:$0xff]
    %v451 = vld [vmem:[#allocation3 + $0x740] sm:$0xff]
    %v452 = vld [vmem:[#allocation3 + $0x748] sm:$0xff]
    %v453 = vld [vmem:[#allocation3 + $0x750] sm:$0xff]
    %v454 = vld [vmem:[#allocation3 + $0x758] sm:$0xff]
    %v455 = vld [vmem:[#allocation3 + $0x760] sm:$0xff]
    %v456 = vld [vmem:[#allocation3 + $0x768] sm:$0xff]
    %v457 = vld [vmem:[#allocation3 + $0x770] sm:$0xff]
    %v458 = vld [vmem:[#allocation3 + $0x778] sm:$0xff]
    %v459 = vld [vmem:[#allocation3 + $0x780] sm:$0xff]
    %v460 = vld [vmem:[#allocation3 + $0x788] sm:$0xff]
    %v461 = vld [vmem:[#allocation3 + $0x790] sm:$0xff]
    %v462 = vld [vmem:[#allocation3 + $0x798] sm:$0xff]
    %v463 = vld [vmem:[#allocation3 + $0x7a0] sm:$0xff]
    %v464 = vld [vmem:[#allocation3 + $0x7a8] sm:$0xff]
    %v465 = vld [vmem:[#allocation3 + $0x7b0] sm:$0xff]
    %v466 = vld [vmem:[#allocation3 + $0x7b8] sm:$0xff]
    %v467 = vld [vmem:[#allocation3 + $0x7c0] sm:$0xff]
    %v468 = vld [vmem:[#allocation3 + $0x7c8] sm:$0xff]
    %v469 = vld [vmem:[#allocation3 + $0x7d0] sm:$0xff]
    %v470 = vld [vmem:[#allocation3 + $0x7d8] sm:$0xff]
    %v471 = vld [vmem:[#allocation3 + $0x7e0] sm:$0xff]
    %v472 = vld [vmem:[#allocation3 + $0x7e8] sm:$0xff]
    %v473 = vld [vmem:[#allocation3 + $0x7f0] sm:$0xff]
    %v474 = vld [vmem:[#allocation3 + $0x7f8] sm:$0xff]
    %v475 = vld [vmem:[#allocation3 + $0x800] sm:$0xff]
    %v476 = vld [vmem:[#allocation3 + $0x808] sm:$0xff]
    %v477 = vld [vmem:[#allocation3 + $0x810] sm:$0xff]
    %v478 = vld [vmem:[#allocation3 + $0x818] sm:$0xff]
    %v479 = vld [vmem:[#allocation3 + $0x820] sm:$0xff]
    %v480 = vld [vmem:[#allocation3 + $0x828] sm:$0xff]
    %v481 = vld [vmem:[#allocation3 + $0x830] sm:$0xff]
    %v482 = vld [vmem:[#allocation3 + $0x838] sm:$0xff]
    %v483 = vld [vmem:[#allocation3 + $0x840] sm:$0xff]
    %v484 = vld [vmem:[#allocation3 + $0x848] sm:$0xff]
    %v485 = vld [vmem:[#allocation3 + $0x850] sm:$0xff]
    %v486 = vld [vmem:[#allocation3 + $0x858] sm:$0xff]
    %v487 = vld [vmem:[#allocation3 + $0x860] sm:$0xff]
    %v488 = vld [vmem:[#allocation3 + $0x868] sm:$0xff]
    %v489 = vld [vmem:[#allocation3 + $0x870] sm:$0xff]
    %v490 = vld [vmem:[#allocation3 + $0x878] sm:$0xff]
    %v491 = vld [vmem:[#allocation3 + $0x880] sm:$0xff]
    %v492 = vld [vmem:[#allocation3 + $0x888] sm:$0xff]
    %v493 = vld [vmem:[#allocation3 + $0x890] sm:$0xff]
    %v494 = vld [vmem:[#allocation3 + $0x898] sm:$0xff]
    %v495 = vld [vmem:[#allocation3 + $0x8a0] sm:$0xff]
    %v496 = vld [vmem:[#allocation3 + $0x8a8] sm:$0xff]
    %v497 = vld [vmem:[#allocation3 + $0x8b0] sm:$0xff]
    %v498 = vld [vmem:[#allocation3 + $0x8b8] sm:$0xff]
    %v499 = vld [vmem:[#allocation3 + $0x8c0] sm:$0xff]
    %v500 = vld [vmem:[#allocation3 + $0x8c8] sm:$0xff]
    %v501 = vld [vmem:[#allocation3 + $0x8d0] sm:$0xff]
    %v502 = vld [vmem:[#allocation3 + $0x8d8] sm:$0xff]
    %v503 = vld [vmem:[#allocation3 + $0x8e0] sm:$0xff]
    %v504 = vld [vmem:[#allocation3 + $0x8e8] sm:$0xff]
    %v505 = vld [vmem:[#allocation3 + $0x8f0] sm:$0xff]
    %v506 = vld [vmem:[#allocation3 + $0x8f8] sm:$0xff]
    %v507 = vld [vmem:[#allocation3 + $0x900] sm:$0xff]
    %v508 = vld [vmem:[#allocation3 + $0x908] sm:$0xff]
    %v509 = vld [vmem:[#allocation3 + $0x910] sm:$0xff]
    %v510 = vld [vmem:[#allocation3 + $0x918] sm:$0xff]
    %v511 = vld [vmem:[#allocation3 + $0x920] sm:$0xff]
    %v512 = vld [vmem:[#allocation3 + $0x928] sm:$0xff]
    %v513 = vld [vmem:[#allocation3 + $0x930] sm:$0xff]
    %v514 = vld [vmem:[#allocation3 + $0x938] sm:$0xff]
    %v515 = vld [vmem:[#allocation3 + $0x940] sm:$0xff]
    %v516 = vld [vmem:[#allocation3 + $0x948] sm:$0xff]
    %v517 = vld [vmem:[#allocation3 + $0x950] sm:$0xff]
    %v518 = vld [vmem:[#allocation3 + $0x958] sm:$0xff]
    %v519 = vld [vmem:[#allocation3 + $0x960] sm:$0xff]
    %v520 = vld [vmem:[#allocation3 + $0x968] sm:$0xff]
    %v521 = vld [vmem:[#allocation3 + $0x970] sm:$0xff]
    %v522 = vld [vmem:[#allocation3 + $0x978] sm:$0xff]
    %v523 = vld [vmem:[#allocation3 + $0x980] sm:$0xff]
    %v524 = vld [vmem:[#allocation3 + $0x988] sm:$0xff]
    %v525 = vld [vmem:[#allocation3 + $0x990] sm:$0xff]
    %v526 = vld [vmem:[#allocation3 + $0x998] sm:$0xff]
    %v527 = vld [vmem:[#allocation3 + $0x9a0] sm:$0xff]
    %v528 = vld [vmem:[#allocation3 + $0x9a8] sm:$0xff]
    %v529 = vld [vmem:[#allocation3 + $0x9b0] sm:$0xff]
    %v530 = vld [vmem:[#allocation3 + $0x9b8] sm:$0xff]
    %v531 = vld [vmem:[#allocation3 + $0x9c0] sm:$0xff]
    %v532 = vld [vmem:[#allocation3 + $0x9c8] sm:$0xff]
    %v533 = vld [vmem:[#allocation3 + $0x9d0] sm:$0xff]
    %v534 = vld [vmem:[#allocation3 + $0x9d8] sm:$0xff]
    %v535 = vld [vmem:[#allocation3 + $0x9e0] sm:$0xff]
    %v536 = vld [vmem:[#allocation3 + $0x9e8] sm:$0xff]
    %v537 = vld [vmem:[#allocation3 + $0x9f0] sm:$0xff]
    %v538 = vld [vmem:[#allocation3 + $0x9f8] sm:$0xff]
    %v539 = vld [vmem:[#allocation3 + $0xa00] sm:$0xff]
    %v540 = vld [vmem:[#allocation3 + $0xa08] sm:$0xff]
    %v541 = vld [vmem:[#allocation3 + $0xa10] sm:$0xff]
    %v542 = vld [vmem:[#allocation3 + $0xa18] sm:$0xff]
    %v543 = vld [vmem:[#allocation3 + $0xa20] sm:$0xff]
    %v544 = vld [vmem:[#allocation3 + $0xa28] sm:$0xff]
    %v545 = vld [vmem:[#allocation3 + $0xa30] sm:$0xff]
    %v546 = vld [vmem:[#allocation3 + $0xa38] sm:$0xff]
    %v547 = vld [vmem:[#allocation3 + $0xa40] sm:$0xff]
    %v548 = vld [vmem:[#allocation3 + $0xa48] sm:$0xff]
    %v549 = vld [vmem:[#allocation3 + $0xa50] sm:$0xff]
    %v550 = vld [vmem:[#allocation3 + $0xa58] sm:$0xff]
    %v551 = vld [vmem:[#allocation3 + $0xa60] sm:$0xff]
    %v552 = vld [vmem:[#allocation3 + $0xa68] sm:$0xff]
    %v553 = vld [vmem:[#allocation3 + $0xa70] sm:$0xff]
    %v554 = vld [vmem:[#allocation3 + $0xa78] sm:$0xff]
    %v555 = vld [vmem:[#allocation3 + $0xa80] sm:$0xff]
    %v556 = vld [vmem:[#allocation3 + $0xa88] sm:$0xff]
    %v557 = vld [vmem:[#allocation3 + $0xa90] sm:$0xff]
    %v558 = vld [vmem:[#allocation3 + $0xa98] sm:$0xff]
    %v559 = vld [vmem:[#allocation3 + $0xaa0] sm:$0xff]
    %v560 = vld [vmem:[#allocation3 + $0xaa8] sm:$0xff]
    %v561 = vld [vmem:[#allocation3 + $0xab0] sm:$0xff]
    %v562 = vld [vmem:[#allocation3 + $0xab8] sm:$0xff]
    %v563 = vld [vmem:[#allocation3 + $0xac0] sm:$0xff]
    %v564 = vld [vmem:[#allocation3 + $0xac8] sm:$0xff]
    %v565 = vld [vmem:[#allocation3 + $0xad0] sm:$0xff]
    %v566 = vld [vmem:[#allocation3 + $0xad8] sm:$0xff]
    %v567 = vld [vmem:[#allocation3 + $0xae0] sm:$0xff]
    %v568 = vld [vmem:[#allocation3 + $0xae8] sm:$0xff]
    %v569 = vld [vmem:[#allocation3 + $0xaf0] sm:$0xff]
    %v570 = vld [vmem:[#allocation3 + $0xaf8] sm:$0xff]
    %v571 = vld [vmem:[#allocation3 + $0xb00] sm:$0xff]
    %v572 = vld [vmem:[#allocation3 + $0xb08] sm:$0xff]
    %v573 = vld [vmem:[#allocation3 + $0xb10] sm:$0xff]
    %v574 = vld [vmem:[#allocation3 + $0xb18] sm:$0xff]
    %v575 = vld [vmem:[#allocation3 + $0xb20] sm:$0xff]
    %v576 = vld [vmem:[#allocation3 + $0xb28] sm:$0xff]
    %v577 = vld [vmem:[#allocation3 + $0xb30] sm:$0xff]
    %v578 = vld [vmem:[#allocation3 + $0xb38] sm:$0xff]
    %v579 = vld [vmem:[#allocation3 + $0xb40] sm:$0xff]
    %v580 = vld [vmem:[#allocation3 + $0xb48] sm:$0xff]
    %v581 = vld [vmem:[#allocation3 + $0xb50] sm:$0xff]
    %v582 = vld [vmem:[#allocation3 + $0xb58] sm:$0xff]
    %v583 = vld [vmem:[#allocation3 + $0xb60] sm:$0xff]
    %v584 = vld [vmem:[#allocation3 + $0xb68] sm:$0xff]
    %v585 = vld [vmem:[#allocation3 + $0xb70] sm:$0xff]
    %v586 = vld [vmem:[#allocation3 + $0xb78] sm:$0xff]
    %v587 = vld [vmem:[#allocation3 + $0xb80] sm:$0xff]
    %v588 = vld [vmem:[#allocation3 + $0xb88] sm:$0xff]
    %v589 = vld [vmem:[#allocation3 + $0xb90] sm:$0xff]
    %v590 = vld [vmem:[#allocation3 + $0xb98] sm:$0xff]
    %v591 = vld [vmem:[#allocation3 + $0xba0] sm:$0xff]
    %v592 = vld [vmem:[#allocation3 + $0xba8] sm:$0xff]
    %v593 = vld [vmem:[#allocation3 + $0xbb0] sm:$0xff]
    %v594 = vld [vmem:[#allocation3 + $0xbb8] sm:$0xff]
    %v595 = vld [vmem:[#allocation3 + $0xbc0] sm:$0xff]
    %v596 = vld [vmem:[#allocation3 + $0xbc8] sm:$0xff]
    %v597 = vld [vmem:[#allocation3 + $0xbd0] sm:$0xff]
    %v598 = vld [vmem:[#allocation3 + $0xbd8] sm:$0xff]
    %v599 = vld [vmem:[#allocation3 + $0xbe0] sm:$0xff]
    %v600 = vld [vmem:[#allocation3 + $0xbe8] sm:$0xff]
    %v601 = vld [vmem:[#allocation3 + $0xbf0] sm:$0xff]
    %v602 = vld [vmem:[#allocation3 + $0xbf8] sm:$0xff]
    %v603 = vld [vmem:[#allocation3 + $0xc00] sm:$0xff]
    %v604 = vld [vmem:[#allocation3 + $0xc08] sm:$0xff]
    %v605 = vld [vmem:[#allocation3 + $0xc10] sm:$0xff]
    %v606 = vld [vmem:[#allocation3 + $0xc18] sm:$0xff]
    %v607 = vld [vmem:[#allocation3 + $0xc20] sm:$0xff]
    %v608 = vld [vmem:[#allocation3 + $0xc28] sm:$0xff]
    %v609 = vld [vmem:[#allocation3 + $0xc30] sm:$0xff]
    %v610 = vld [vmem:[#allocation3 + $0xc38] sm:$0xff]
    %v611 = vld [vmem:[#allocation3 + $0xc40] sm:$0xff]
    %v612 = vld [vmem:[#allocation3 + $0xc48] sm:$0xff]
    %v613 = vld [vmem:[#allocation3 + $0xc50] sm:$0xff]
    %v614 = vld [vmem:[#allocation3 + $0xc58] sm:$0xff]
    %v615 = vld [vmem:[#allocation3 + $0xc60] sm:$0xff]
    %v616 = vld [vmem:[#allocation3 + $0xc68] sm:$0xff]
    %v617 = vld [vmem:[#allocation3 + $0xc70] sm:$0xff]
    %v618 = vld [vmem:[#allocation3 + $0xc78] sm:$0xff]
    %v619 = vld [vmem:[#allocation3 + $0xc80] sm:$0xff]
    %v620 = vld [vmem:[#allocation3 + $0xc88] sm:$0xff]
    %v621 = vld [vmem:[#allocation3 + $0xc90] sm:$0xff]
    %v622 = vld [vmem:[#allocation3 + $0xc98] sm:$0xff]
    %v623 = vld [vmem:[#allocation3 + $0xca0] sm:$0xff]
    %v624 = vld [vmem:[#allocation3 + $0xca8] sm:$0xff]
    %v625 = vld [vmem:[#allocation3 + $0xcb0] sm:$0xff]
    %v626 = vld [vmem:[#allocation3 + $0xcb8] sm:$0xff]
    %v627 = vld [vmem:[#allocation3 + $0xcc0] sm:$0xff]
    %v628 = vld [vmem:[#allocation3 + $0xcc8] sm:$0xff]
    %v629 = vld [vmem:[#allocation3 + $0xcd0] sm:$0xff]
    %v630 = vld [vmem:[#allocation3 + $0xcd8] sm:$0xff]
    %v631 = vld [vmem:[#allocation3 + $0xce0] sm:$0xff]
    %v632 = vld [vmem:[#allocation3 + $0xce8] sm:$0xff]
    %v633 = vld [vmem:[#allocation3 + $0xcf0] sm:$0xff]
    %v634 = vld [vmem:[#allocation3 + $0xcf8] sm:$0xff]
    %v635 = vld [vmem:[#allocation3 + $0xd00] sm:$0xff]
    %v636 = vld [vmem:[#allocation3 + $0xd08] sm:$0xff]
    %v637 = vld [vmem:[#allocation3 + $0xd10] sm:$0xff]
    %v638 = vld [vmem:[#allocation3 + $0xd18] sm:$0xff]
    %v639 = vld [vmem:[#allocation3 + $0xd20] sm:$0xff]
    %v640 = vld [vmem:[#allocation3 + $0xd28] sm:$0xff]
    %v641 = vld [vmem:[#allocation3 + $0xd30] sm:$0xff]
    %v642 = vld [vmem:[#allocation3 + $0xd38] sm:$0xff]
    %v643 = vld [vmem:[#allocation3 + $0xd40] sm:$0xff]
    %v644 = vld [vmem:[#allocation3 + $0xd48] sm:$0xff]
    %v645 = vld [vmem:[#allocation3 + $0xd50] sm:$0xff]
    %v646 = vld [vmem:[#allocation3 + $0xd58] sm:$0xff]
    %v647 = vld [vmem:[#allocation3 + $0xd60] sm:$0xff]
    %v648 = vld [vmem:[#allocation3 + $0xd68] sm:$0xff]
    %v649 = vld [vmem:[#allocation3 + $0xd70] sm:$0xff]
    %v650 = vld [vmem:[#allocation3 + $0xd78] sm:$0xff]
    %v651 = vld [vmem:[#allocation3 + $0xd80] sm:$0xff]
    %v652 = vld [vmem:[#allocation3 + $0xd88] sm:$0xff]
    %v653 = vld [vmem:[#allocation3 + $0xd90] sm:$0xff]
    %v654 = vld [vmem:[#allocation3 + $0xd98] sm:$0xff]
    %v655 = vld [vmem:[#allocation3 + $0xda0] sm:$0xff]
    %v656 = vld [vmem:[#allocation3 + $0xda8] sm:$0xff]
    %v657 = vld [vmem:[#allocation3 + $0xdb0] sm:$0xff]
    %v658 = vld [vmem:[#allocation3 + $0xdb8] sm:$0xff]
    %v659 = vld [vmem:[#allocation3 + $0xdc0] sm:$0xff]
    %v660 = vld [vmem:[#allocation3 + $0xdc8] sm:$0xff]
    %v661 = vld [vmem:[#allocation3 + $0xdd0] sm:$0xff]
    %v662 = vld [vmem:[#allocation3 + $0xdd8] sm:$0xff]
    %v663 = vld [vmem:[#allocation3 + $0xde0] sm:$0xff]
    %v664 = vld [vmem:[#allocation3 + $0xde8] sm:$0xff]
    %v665 = vld [vmem:[#allocation3 + $0xdf0] sm:$0xff]
    %v666 = vld [vmem:[#allocation3 + $0xdf8] sm:$0xff]
    %v667 = vld [vmem:[#allocation3 + $0xe00] sm:$0xff]
    %v668 = vld [vmem:[#allocation3 + $0xe08] sm:$0xff]
    %v669 = vld [vmem:[#allocation3 + $0xe10] sm:$0xff]
    %v670 = vld [vmem:[#allocation3 + $0xe18] sm:$0xff]
    %v671 = vld [vmem:[#allocation3 + $0xe20] sm:$0xff]
    %v672 = vld [vmem:[#allocation3 + $0xe28] sm:$0xff]
    %v673 = vld [vmem:[#allocation3 + $0xe30] sm:$0xff]
    %v674 = vld [vmem:[#allocation3 + $0xe38] sm:$0xff]
    %v675 = vld [vmem:[#allocation3 + $0xe40] sm:$0xff]
    %v676 = vld [vmem:[#allocation3 + $0xe48] sm:$0xff]
    %v677 = vld [vmem:[#allocation3 + $0xe50] sm:$0xff]
    %v678 = vld [vmem:[#allocation3 + $0xe58] sm:$0xff]
    %v679 = vld [vmem:[#allocation3 + $0xe60] sm:$0xff]
    %v680 = vld [vmem:[#allocation3 + $0xe68] sm:$0xff]
    %v681 = vld [vmem:[#allocation3 + $0xe70] sm:$0xff]
    %v682 = vld [vmem:[#allocation3 + $0xe78] sm:$0xff]
    %v683 = vld [vmem:[#allocation3 + $0xe80] sm:$0xff]
    %v684 = vld [vmem:[#allocation3 + $0xe88] sm:$0xff]
    %v685 = vld [vmem:[#allocation3 + $0xe90] sm:$0xff]
    %v686 = vld [vmem:[#allocation3 + $0xe98] sm:$0xff]
    %v687 = vld [vmem:[#allocation3 + $0xea0] sm:$0xff]
    %v688 = vld [vmem:[#allocation3 + $0xea8] sm:$0xff]
    %v689 = vld [vmem:[#allocation3 + $0xeb0] sm:$0xff]
    %v690 = vld [vmem:[#allocation3 + $0xeb8] sm:$0xff]
    %v691 = vld [vmem:[#allocation3 + $0xec0] sm:$0xff]
    %v692 = vld [vmem:[#allocation3 + $0xec8] sm:$0xff]
    %v693 = vld [vmem:[#allocation3 + $0xed0] sm:$0xff]
    %v694 = vld [vmem:[#allocation3 + $0xed8] sm:$0xff]
    %v695 = vld [vmem:[#allocation3 + $0xee0] sm:$0xff]
    %v696 = vld [vmem:[#allocation3 + $0xee8] sm:$0xff]
    %v697 = vld [vmem:[#allocation3 + $0xef0] sm:$0xff]
    %v698 = vld [vmem:[#allocation3 + $0xef8] sm:$0xff]
    %v699 = vld [vmem:[#allocation3 + $0xf00] sm:$0xff]
    %v700 = vld [vmem:[#allocation3 + $0xf08] sm:$0xff]
    %v701 = vld [vmem:[#allocation3 + $0xf10] sm:$0xff]
    %v702 = vld [vmem:[#allocation3 + $0xf18] sm:$0xff]
    %v703 = vld [vmem:[#allocation3 + $0xf20] sm:$0xff]
    %v704 = vld [vmem:[#allocation3 + $0xf28] sm:$0xff]
    %v705 = vld [vmem:[#allocation3 + $0xf30] sm:$0xff]
    %v706 = vld [vmem:[#allocation3 + $0xf38] sm:$0xff]
    %v707 = vld [vmem:[#allocation3 + $0xf40] sm:$0xff]
    %v708 = vld [vmem:[#allocation3 + $0xf48] sm:$0xff]
    %v709 = vld [vmem:[#allocation3 + $0xf50] sm:$0xff]
    %v710 = vld [vmem:[#allocation3 + $0xf58] sm:$0xff]
    %v711 = vld [vmem:[#allocation3 + $0xf60] sm:$0xff]
    %v712 = vld [vmem:[#allocation3 + $0xf68] sm:$0xff]
    %v713 = vld [vmem:[#allocation3 + $0xf70] sm:$0xff]
    %v714 = vld [vmem:[#allocation3 + $0xf78] sm:$0xff]
    %v715 = vld [vmem:[#allocation3 + $0xf80] sm:$0xff]
    %v716 = vld [vmem:[#allocation3 + $0xf88] sm:$0xff]
    %v717 = vld [vmem:[#allocation3 + $0xf90] sm:$0xff]
    %v718 = vld [vmem:[#allocation3 + $0xf98] sm:$0xff]
    %v719 = vld [vmem:[#allocation3 + $0xfa0] sm:$0xff]
    %v720 = vld [vmem:[#allocation3 + $0xfa8] sm:$0xff]
    %v721 = vld [vmem:[#allocation3 + $0xfb0] sm:$0xff]
    %v722 = vld [vmem:[#allocation3 + $0xfb8] sm:$0xff]
    %v723 = vld [vmem:[#allocation3 + $0xfc0] sm:$0xff]
    %v724 = vld [vmem:[#allocation3 + $0xfc8] sm:$0xff]
    %v725 = vld [vmem:[#allocation3 + $0xfd0] sm:$0xff]
    %v726 = vld [vmem:[#allocation3 + $0xfd8] sm:$0xff]
    %v727 = vld [vmem:[#allocation3 + $0xfe0] sm:$0xff]
    %v728 = vld [vmem:[#allocation3 + $0xfe8] sm:$0xff]
    %v729 = vld [vmem:[#allocation3 + $0xff0] sm:$0xff]
    %v730 = vld [vmem:[#allocation3 + $0xff8] sm:$0xff]
    %v731 = vld [vmem:[#allocation3 + $0x1000] sm:$0xff]
    %v732 = vld [vmem:[#allocation3 + $0x1008] sm:$0xff]
    %v733 = vld [vmem:[#allocation3 + $0x1010] sm:$0xff]
    %v734 = vld [vmem:[#allocation3 + $0x1018] sm:$0xff]
    %v735 = vld [vmem:[#allocation3 + $0x1020] sm:$0xff]
    %v736 = vld [vmem:[#allocation3 + $0x1028] sm:$0xff]
    %v737 = vld [vmem:[#allocation3 + $0x1030] sm:$0xff]
    %v738 = vld [vmem:[#allocation3 + $0x1038] sm:$0xff]
    %v739 = vld [vmem:[#allocation3 + $0x1040] sm:$0xff]
    %v740 = vld [vmem:[#allocation3 + $0x1048] sm:$0xff]
    %v741 = vld [vmem:[#allocation3 + $0x1050] sm:$0xff]
    %v742 = vld [vmem:[#allocation3 + $0x1058] sm:$0xff]
    %v743 = vld [vmem:[#allocation3 + $0x1060] sm:$0xff]
    %v744 = vld [vmem:[#allocation3 + $0x1068] sm:$0xff]
    %v745 = vld [vmem:[#allocation3 + $0x1070] sm:$0xff]
    %v746 = vld [vmem:[#allocation3 + $0x1078] sm:$0xff]
    %v747 = vld [vmem:[#allocation3 + $0x1080] sm:$0xff]
    %v748 = vld [vmem:[#allocation3 + $0x1088] sm:$0xff]
    %v749 = vld [vmem:[#allocation3 + $0x1090] sm:$0xff]
    %v750 = vld [vmem:[#allocation3 + $0x1098] sm:$0xff]
    %v751 = vld [vmem:[#allocation3 + $0x10a0] sm:$0xff]
    %v752 = vld [vmem:[#allocation3 + $0x10a8] sm:$0xff]
    %v753 = vld [vmem:[#allocation3 + $0x10b0] sm:$0xff]
    %v754 = vld [vmem:[#allocation3 + $0x10b8] sm:$0xff]
    %v755 = vld [vmem:[#allocation3 + $0x10c0] sm:$0xff]
    %v756 = vld [vmem:[#allocation3 + $0x10c8] sm:$0xff]
    %v757 = vld [vmem:[#allocation3 + $0x10d0] sm:$0xff]
    %v758 = vld [vmem:[#allocation3 + $0x10d8] sm:$0xff]
    %v759 = vld [vmem:[#allocation3 + $0x10e0] sm:$0xff]
    %v760 = vld [vmem:[#allocation3 + $0x10e8] sm:$0xff]
    %v761 = vld [vmem:[#allocation3 + $0x10f0] sm:$0xff]
    %v762 = vld [vmem:[#allocation3 + $0x10f8] sm:$0xff]
    %v763 = vld [vmem:[#allocation3 + $0x1100] sm:$0xff]
    %v764 = vld [vmem:[#allocation3 + $0x1108] sm:$0xff]
    %v765 = vld [vmem:[#allocation3 + $0x1110] sm:$0xff]
    %v766 = vld [vmem:[#allocation3 + $0x1118] sm:$0xff]
    %v767 = vld [vmem:[#allocation3 + $0x1120] sm:$0xff]
    %v768 = vld [vmem:[#allocation3 + $0x1128] sm:$0xff]
    %v769 = vld [vmem:[#allocation3 + $0x1130] sm:$0xff]
    %v770 = vld [vmem:[#allocation3 + $0x1138] sm:$0xff]
    %v771 = vld [vmem:[#allocation3 + $0x1140] sm:$0xff]
    %v772 = vld [vmem:[#allocation3 + $0x1148] sm:$0xff]
    %v773 = vld [vmem:[#allocation3 + $0x1150] sm:$0xff]
    %v774 = vld [vmem:[#allocation3 + $0x1158] sm:$0xff]
    %v775 = vld [vmem:[#allocation3 + $0x1160] sm:$0xff]
    %v776 = vld [vmem:[#allocation3 + $0x1168] sm:$0xff]
    %v777 = vld [vmem:[#allocation3 + $0x1170] sm:$0xff]
    %v778 = vld [vmem:[#allocation3 + $0x1178] sm:$0xff]
    %v779 = vld [vmem:[#allocation3 + $0x1180] sm:$0xff]
    %v780 = vld [vmem:[#allocation3 + $0x1188] sm:$0xff]
    %v781 = vld [vmem:[#allocation3 + $0x1190] sm:$0xff]
    %v782 = vld [vmem:[#allocation3 + $0x1198] sm:$0xff]
    %v783 = vld [vmem:[#allocation3 + $0x11a0] sm:$0xff]
    %v784 = vld [vmem:[#allocation3 + $0x11a8] sm:$0xff]
    %v785 = vld [vmem:[#allocation3 + $0x11b0] sm:$0xff]
    %v786 = vld [vmem:[#allocation3 + $0x11b8] sm:$0xff]
    %v787 = vld [vmem:[#allocation3 + $0x11c0] sm:$0xff]
    %v788 = vld [vmem:[#allocation3 + $0x11c8] sm:$0xff]
    %v789 = vld [vmem:[#allocation3 + $0x11d0] sm:$0xff]
    %v790 = vld [vmem:[#allocation3 + $0x11d8] sm:$0xff]
    %v791 = vld [vmem:[#allocation3 + $0x11e0] sm:$0xff]
    %v792 = vld [vmem:[#allocation3 + $0x11e8] sm:$0xff]
    %v793 = vld [vmem:[#allocation3 + $0x11f0] sm:$0xff]
    %v794 = vld [vmem:[#allocation3 + $0x11f8] sm:$0xff]
    %v795 = vld [vmem:[#allocation3 + $0x1200] sm:$0xff]
    %v796 = vld [vmem:[#allocation3 + $0x1208] sm:$0xff]
    %v797 = vld [vmem:[#allocation3 + $0x1210] sm:$0xff]
    %v798 = vld [vmem:[#allocation3 + $0x1218] sm:$0xff]
    %v799 = vld [vmem:[#allocation3 + $0x1220] sm:$0xff]
    %v800 = vld [vmem:[#allocation3 + $0x1228] sm:$0xff]
    %v801 = vld [vmem:[#allocation3 + $0x1230] sm:$0xff]
    %v802 = vld [vmem:[#allocation3 + $0x1238] sm:$0xff]
    %v803 = vld [vmem:[#allocation3 + $0x1240] sm:$0xff]
    %v804 = vld [vmem:[#allocation3 + $0x1248] sm:$0xff]
    %v805 = vld [vmem:[#allocation3 + $0x1250] sm:$0xff]
    %v806 = vld [vmem:[#allocation3 + $0x1258] sm:$0xff]
    %v807 = vld [vmem:[#allocation3 + $0x1260] sm:$0xff]
    %v808 = vld [vmem:[#allocation3 + $0x1268] sm:$0xff]
    %v809 = vld [vmem:[#allocation3 + $0x1270] sm:$0xff]
    %v810 = vld [vmem:[#allocation3 + $0x1278] sm:$0xff]
    %v811 = vld [vmem:[#allocation3 + $0x1280] sm:$0xff]
    %v812 = vld [vmem:[#allocation3 + $0x1288] sm:$0xff]
    %v813 = vld [vmem:[#allocation3 + $0x1290] sm:$0xff]
    %v814 = vld [vmem:[#allocation3 + $0x1298] sm:$0xff]
    %v815 = vld [vmem:[#allocation3 + $0x12a0] sm:$0xff]
    %v816 = vld [vmem:[#allocation3 + $0x12a8] sm:$0xff]
    %v817 = vld [vmem:[#allocation3 + $0x12b0] sm:$0xff]
    %v818 = vld [vmem:[#allocation3 + $0x12b8] sm:$0xff]
    %v819 = vld [vmem:[#allocation3 + $0x12c0] sm:$0xff]
    %v820 = vld [vmem:[#allocation3 + $0x12c8] sm:$0xff]
    %v821 = vld [vmem:[#allocation3 + $0x12d0] sm:$0xff]
    %v822 = vld [vmem:[#allocation3 + $0x12d8] sm:$0xff]
    %v823 = vld [vmem:[#allocation3 + $0x12e0] sm:$0xff]
    %v824 = vld [vmem:[#allocation3 + $0x12e8] sm:$0xff]
    %v825 = vld [vmem:[#allocation3 + $0x12f0] sm:$0xff]
    %v826 = vld [vmem:[#allocation3 + $0x12f8] sm:$0xff]
    %v827 = vld [vmem:[#allocation3 + $0x1300] sm:$0xff]
    %v828 = vld [vmem:[#allocation3 + $0x1308] sm:$0xff]
    %v829 = vld [vmem:[#allocation3 + $0x1310] sm:$0xff]
    %v830 = vld [vmem:[#allocation3 + $0x1318] sm:$0xff]
    %v831 = vld [vmem:[#allocation3 + $0x1320] sm:$0xff]
    %v832 = vld [vmem:[#allocation3 + $0x1328] sm:$0xff]
    %v833 = vld [vmem:[#allocation3 + $0x1330] sm:$0xff]
    %v834 = vld [vmem:[#allocation3 + $0x1338] sm:$0xff]
    %v835 = vld [vmem:[#allocation3 + $0x1340] sm:$0xff]
    %v836 = vld [vmem:[#allocation3 + $0x1348] sm:$0xff]
    %v837 = vld [vmem:[#allocation3 + $0x1350] sm:$0xff]
    %v838 = vld [vmem:[#allocation3 + $0x1358] sm:$0xff]
    %v839 = vld [vmem:[#allocation3 + $0x1360] sm:$0xff]
    %v840 = vld [vmem:[#allocation3 + $0x1368] sm:$0xff]
    %v841 = vld [vmem:[#allocation3 + $0x1370] sm:$0xff]
    %v842 = vld [vmem:[#allocation3 + $0x1378] sm:$0xff]
    %v843 = vld [vmem:[#allocation3 + $0x1380] sm:$0xff]
    %v844 = vld [vmem:[#allocation3 + $0x1388] sm:$0xff]
    %v845 = vld [vmem:[#allocation3 + $0x1390] sm:$0xff]
    %v846 = vld [vmem:[#allocation3 + $0x1398] sm:$0xff]
    %v847 = vld [vmem:[#allocation3 + $0x13a0] sm:$0xff]
    %v848 = vld [vmem:[#allocation3 + $0x13a8] sm:$0xff]
    %v849 = vld [vmem:[#allocation3 + $0x13b0] sm:$0xff]
    %v850 = vld [vmem:[#allocation3 + $0x13b8] sm:$0xff]
    %v851 = vld [vmem:[#allocation3 + $0x13c0] sm:$0xff]
    %v852 = vld [vmem:[#allocation3 + $0x13c8] sm:$0xff]
    %v853 = vld [vmem:[#allocation3 + $0x13d0] sm:$0xff]
    %v854 = vld [vmem:[#allocation3 + $0x13d8] sm:$0xff]
    %v855 = vld [vmem:[#allocation3 + $0x13e0] sm:$0xff]
    %v856 = vld [vmem:[#allocation3 + $0x13e8] sm:$0xff]
    %v857 = vld [vmem:[#allocation3 + $0x13f0] sm:$0xff]
    %v858 = vld [vmem:[#allocation3 + $0x13f8] sm:$0xff]
    %v859 = vld [vmem:[#allocation3 + $0x1400] sm:$0xff]
    %v860 = vld [vmem:[#allocation3 + $0x1408] sm:$0xff]
    %v861 = vld [vmem:[#allocation3 + $0x1410] sm:$0xff]
    %v862 = vld [vmem:[#allocation3 + $0x1418] sm:$0xff]
    %v863 = vld [vmem:[#allocation3 + $0x1420] sm:$0xff]
    %v864 = vld [vmem:[#allocation3 + $0x1428] sm:$0xff]
    %v865 = vld [vmem:[#allocation3 + $0x1430] sm:$0xff]
    %v866 = vld [vmem:[#allocation3 + $0x1438] sm:$0xff]
    %v867 = vld [vmem:[#allocation3 + $0x1440] sm:$0xff]
    %v868 = vld [vmem:[#allocation3 + $0x1448] sm:$0xff]
    %v869 = vld [vmem:[#allocation3 + $0x1450] sm:$0xff]
    %v870 = vld [vmem:[#allocation3 + $0x1458] sm:$0xff]
    %v871 = vld [vmem:[#allocation3 + $0x1460] sm:$0xff]
    %v872 = vld [vmem:[#allocation3 + $0x1468] sm:$0xff]
    %v873 = vld [vmem:[#allocation3 + $0x1470] sm:$0xff]
    %v874 = vld [vmem:[#allocation3 + $0x1478] sm:$0xff]
    %v875 = vld [vmem:[#allocation3 + $0x1480] sm:$0xff]
    %v876 = vld [vmem:[#allocation3 + $0x1488] sm:$0xff]
    %v877 = vld [vmem:[#allocation3 + $0x1490] sm:$0xff]
    %v878 = vld [vmem:[#allocation3 + $0x1498] sm:$0xff]
    %v879 = vld [vmem:[#allocation3 + $0x14a0] sm:$0xff]
    %v880 = vld [vmem:[#allocation3 + $0x14a8] sm:$0xff]
    %v881 = vld [vmem:[#allocation3 + $0x14b0] sm:$0xff]
    %v882 = vld [vmem:[#allocation3 + $0x14b8] sm:$0xff]
    %v883 = vld [vmem:[#allocation3 + $0x14c0] sm:$0xff]
    %v884 = vld [vmem:[#allocation3 + $0x14c8] sm:$0xff]
    %v885 = vld [vmem:[#allocation3 + $0x14d0] sm:$0xff]
    %v886 = vld [vmem:[#allocation3 + $0x14d8] sm:$0xff]
    %v887 = vld [vmem:[#allocation3 + $0x14e0] sm:$0xff]
    %v888 = vld [vmem:[#allocation3 + $0x14e8] sm:$0xff]
    %v889 = vld [vmem:[#allocation3 + $0x14f0] sm:$0xff]
    %v890 = vld [vmem:[#allocation3 + $0x14f8] sm:$0xff]
    %v891 = vld [vmem:[#allocation3 + $0x1500] sm:$0xff]
    %v892 = vld [vmem:[#allocation3 + $0x1508] sm:$0xff]
    %v893 = vld [vmem:[#allocation3 + $0x1510] sm:$0xff]
    %v894 = vld [vmem:[#allocation3 + $0x1518] sm:$0xff]
    %v895 = vld [vmem:[#allocation3 + $0x1520] sm:$0xff]
    %v896 = vld [vmem:[#allocation3 + $0x1528] sm:$0xff]
    %v897 = vld [vmem:[#allocation3 + $0x1530] sm:$0xff]
    %v898 = vld [vmem:[#allocation3 + $0x1538] sm:$0xff]
    %v899 = vld [vmem:[#allocation3 + $0x1540] sm:$0xff]
    %v900 = vld [vmem:[#allocation3 + $0x1548] sm:$0xff]
    %v901 = vld [vmem:[#allocation3 + $0x1550] sm:$0xff]
    %v902 = vld [vmem:[#allocation3 + $0x1558] sm:$0xff]
    %v903 = vld [vmem:[#allocation3 + $0x1560] sm:$0xff]
    %v904 = vld [vmem:[#allocation3 + $0x1568] sm:$0xff]
    %v905 = vld [vmem:[#allocation3 + $0x1570] sm:$0xff]
    %v906 = vld [vmem:[#allocation3 + $0x1578] sm:$0xff]
    %v907 = vld [vmem:[#allocation3 + $0x1580] sm:$0xff]
    %v908 = vld [vmem:[#allocation3 + $0x1588] sm:$0xff]
    %v909 = vld [vmem:[#allocation3 + $0x1590] sm:$0xff]
    %v910 = vld [vmem:[#allocation3 + $0x1598] sm:$0xff]
    %v911 = vld [vmem:[#allocation3 + $0x15a0] sm:$0xff]
    %v912 = vld [vmem:[#allocation3 + $0x15a8] sm:$0xff]
    %v913 = vld [vmem:[#allocation3 + $0x15b0] sm:$0xff]
    %v914 = vld [vmem:[#allocation3 + $0x15b8] sm:$0xff]
    %v915 = vld [vmem:[#allocation3 + $0x15c0] sm:$0xff]
    %v916 = vld [vmem:[#allocation3 + $0x15c8] sm:$0xff]
    %v917 = vld [vmem:[#allocation3 + $0x15d0] sm:$0xff]
    %v918 = vld [vmem:[#allocation3 + $0x15d8] sm:$0xff]
    %v919 = vld [vmem:[#allocation3 + $0x15e0] sm:$0xff]
    %v920 = vld [vmem:[#allocation3 + $0x15e8] sm:$0xff]
    %v921 = vld [vmem:[#allocation3 + $0x15f0] sm:$0xff]
    %v922 = vld [vmem:[#allocation3 + $0x15f8] sm:$0xff]
    %v923 = vld [vmem:[#allocation3 + $0x1600] sm:$0xff]
    %v924 = vld [vmem:[#allocation3 + $0x1608] sm:$0xff]
    %v925 = vld [vmem:[#allocation3 + $0x1610] sm:$0xff]
    %v926 = vld [vmem:[#allocation3 + $0x1618] sm:$0xff]
    %v927 = vld [vmem:[#allocation3 + $0x1620] sm:$0xff]
    %v928 = vld [vmem:[#allocation3 + $0x1628] sm:$0xff]
    %v929 = vld [vmem:[#allocation3 + $0x1630] sm:$0xff]
    %v930 = vld [vmem:[#allocation3 + $0x1638] sm:$0xff]
    %v931 = vld [vmem:[#allocation3 + $0x1640] sm:$0xff]
    %v932 = vld [vmem:[#allocation3 + $0x1648] sm:$0xff]
    %v933 = vld [vmem:[#allocation3 + $0x1650] sm:$0xff]
    %v934 = vld [vmem:[#allocation3 + $0x1658] sm:$0xff]
    %v935 = vld [vmem:[#allocation3 + $0x1660] sm:$0xff]
    %v936 = vld [vmem:[#allocation3 + $0x1668] sm:$0xff]
    %v937 = vld [vmem:[#allocation3 + $0x1670] sm:$0xff]
    %v938 = vld [vmem:[#allocation3 + $0x1678] sm:$0xff]
    %v939 = vld [vmem:[#allocation3 + $0x1680] sm:$0xff]
    %v940 = vld [vmem:[#allocation3 + $0x1688] sm:$0xff]
    %v941 = vld [vmem:[#allocation3 + $0x1690] sm:$0xff]
    %v942 = vld [vmem:[#allocation3 + $0x1698] sm:$0xff]
    %v943 = vld [vmem:[#allocation3 + $0x16a0] sm:$0xff]
    %v944 = vld [vmem:[#allocation3 + $0x16a8] sm:$0xff]
    %v945 = vld [vmem:[#allocation3 + $0x16b0] sm:$0xff]
    %v946 = vld [vmem:[#allocation3 + $0x16b8] sm:$0xff]
    %v947 = vld [vmem:[#allocation3 + $0x16c0] sm:$0xff]
    %v948 = vld [vmem:[#allocation3 + $0x16c8] sm:$0xff]
    %v949 = vld [vmem:[#allocation3 + $0x16d0] sm:$0xff]
    %v950 = vld [vmem:[#allocation3 + $0x16d8] sm:$0xff]
    %v951 = vld [vmem:[#allocation3 + $0x16e0] sm:$0xff]
    %v952 = vld [vmem:[#allocation3 + $0x16e8] sm:$0xff]
    %v953 = vld [vmem:[#allocation3 + $0x16f0] sm:$0xff]
    %v954 = vld [vmem:[#allocation3 + $0x16f8] sm:$0xff]
    %v955 = vld [vmem:[#allocation3 + $0x1700] sm:$0xff]
    %v956 = vld [vmem:[#allocation3 + $0x1708] sm:$0xff]
    %v957 = vld [vmem:[#allocation3 + $0x1710] sm:$0xff]
    %v958 = vld [vmem:[#allocation3 + $0x1718] sm:$0xff]
    %v959 = vld [vmem:[#allocation3 + $0x1720] sm:$0xff]
    %v960 = vld [vmem:[#allocation3 + $0x1728] sm:$0xff]
    %v961 = vld [vmem:[#allocation3 + $0x1730] sm:$0xff]
    %v962 = vld [vmem:[#allocation3 + $0x1738] sm:$0xff]
    %v963 = vld [vmem:[#allocation3 + $0x1740] sm:$0xff]
    %v964 = vld [vmem:[#allocation3 + $0x1748] sm:$0xff]
    %v965 = vld [vmem:[#allocation3 + $0x1750] sm:$0xff]
    %v966 = vld [vmem:[#allocation3 + $0x1758] sm:$0xff]
    %v967 = vld [vmem:[#allocation3 + $0x1760] sm:$0xff]
    %v968 = vld [vmem:[#allocation3 + $0x1768] sm:$0xff]
    %v969 = vld [vmem:[#allocation3 + $0x1770] sm:$0xff]
    %v970 = vld [vmem:[#allocation3 + $0x1778] sm:$0xff]
    %v971 = vld [vmem:[#allocation3 + $0x1780] sm:$0xff]
    %v972 = vld [vmem:[#allocation3 + $0x1788] sm:$0xff]
    %v973 = vld [vmem:[#allocation3 + $0x1790] sm:$0xff]
    %v974 = vld [vmem:[#allocation3 + $0x1798] sm:$0xff]
    %v975 = vld [vmem:[#allocation3 + $0x17a0] sm:$0xff]
    %v976 = vld [vmem:[#allocation3 + $0x17a8] sm:$0xff]
    %v977 = vld [vmem:[#allocation3 + $0x17b0] sm:$0xff]
    %v978 = vld [vmem:[#allocation3 + $0x17b8] sm:$0xff]
    %v979 = vld [vmem:[#allocation3 + $0x17c0] sm:$0xff]
    %v980 = vld [vmem:[#allocation3 + $0x17c8] sm:$0xff]
    %v981 = vld [vmem:[#allocation3 + $0x17d0] sm:$0xff]
    %v982 = vld [vmem:[#allocation3 + $0x17d8] sm:$0xff]
    %v983 = vld [vmem:[#allocation3 + $0x17e0] sm:$0xff]
    %v984 = vld [vmem:[#allocation3 + $0x17e8] sm:$0xff]
    %v985 = vld [vmem:[#allocation3 + $0x17f0] sm:$0xff]
    %v986 = vld [vmem:[#allocation3 + $0x17f8] sm:$0xff]
    %v987 = vld [vmem:[#allocation3 + $0x1800] sm:$0xff]
    %v988 = vld [vmem:[#allocation3 + $0x1808] sm:$0xff]
    %v989 = vld [vmem:[#allocation3 + $0x1810] sm:$0xff]
    %v990 = vld [vmem:[#allocation3 + $0x1818] sm:$0xff]
    %v991 = vld [vmem:[#allocation3 + $0x1820] sm:$0xff]
    %v992 = vld [vmem:[#allocation3 + $0x1828] sm:$0xff]
    %v993 = vld [vmem:[#allocation3 + $0x1830] sm:$0xff]
    %v994 = vld [vmem:[#allocation3 + $0x1838] sm:$0xff]
    %v995 = vld [vmem:[#allocation3 + $0x1840] sm:$0xff]
    %v996 = vld [vmem:[#allocation3 + $0x1848] sm:$0xff]
    %v997 = vld [vmem:[#allocation3 + $0x1850] sm:$0xff]
    %v998 = vld [vmem:[#allocation3 + $0x1858] sm:$0xff]
    %v999 = vld [vmem:[#allocation3 + $0x1860] sm:$0xff]
    %v1000 = vld [vmem:[#allocation3 + $0x1868] sm:$0xff]
    %v1001 = vld [vmem:[#allocation3 + $0x1870] sm:$0xff]
    %v1002 = vld [vmem:[#allocation3 + $0x1878] sm:$0xff]
    %v1003 = vld [vmem:[#allocation3 + $0x1880] sm:$0xff]
    %v1004 = vld [vmem:[#allocation3 + $0x1888] sm:$0xff]
    %v1005 = vld [vmem:[#allocation3 + $0x1890] sm:$0xff]
    %v1006 = vld [vmem:[#allocation3 + $0x1898] sm:$0xff]
    %v1007 = vld [vmem:[#allocation3 + $0x18a0] sm:$0xff]
    %v1008 = vld [vmem:[#allocation3 + $0x18a8] sm:$0xff]
    %v1009 = vld [vmem:[#allocation3 + $0x18b0] sm:$0xff]
    %v1010 = vld [vmem:[#allocation3 + $0x18b8] sm:$0xff]
    %v1011 = vld [vmem:[#allocation3 + $0x18c0] sm:$0xff]
    %v1012 = vld [vmem:[#allocation3 + $0x18c8] sm:$0xff]
    %v1013 = vld [vmem:[#allocation3 + $0x18d0] sm:$0xff]
    %v1014 = vld [vmem:[#allocation3 + $0x18d8] sm:$0xff]
    %v1015 = vld [vmem:[#allocation3 + $0x18e0] sm:$0xff]
    %v1016 = vld [vmem:[#allocation3 + $0x18e8] sm:$0xff]
    %v1017 = vld [vmem:[#allocation3 + $0x18f0] sm:$0xff]
    %v1018 = vld [vmem:[#allocation3 + $0x18f8] sm:$0xff]
    %v1019 = vld [vmem:[#allocation3 + $0x1900] sm:$0xff]
    %v1020 = vld [vmem:[#allocation3 + $0x1908] sm:$0xff]
    %v1021 = vld [vmem:[#allocation3 + $0x1910] sm:$0xff]
    %v1022 = vld [vmem:[#allocation3 + $0x1918] sm:$0xff]
    %v1023 = vld [vmem:[#allocation3 + $0x1920] sm:$0xff]
    %v1024 = vld [vmem:[#allocation3 + $0x1928] sm:$0xff]
    %v1025 = vld [vmem:[#allocation3 + $0x1930] sm:$0xff]
    %v1026 = vld [vmem:[#allocation3 + $0x1938] sm:$0xff]
    %v1027 = vld [vmem:[#allocation3 + $0x1940] sm:$0xff]
    %v1028 = vld [vmem:[#allocation3 + $0x1948] sm:$0xff]
    %v1029 = vld [vmem:[#allocation3 + $0x1950] sm:$0xff]
    %v1030 = vld [vmem:[#allocation3 + $0x1958] sm:$0xff]
    %v1031 = vld [vmem:[#allocation3 + $0x1960] sm:$0xff]
    %v1032 = vld [vmem:[#allocation3 + $0x1968] sm:$0xff]
    %v1033 = vld [vmem:[#allocation3 + $0x1970] sm:$0xff]
    %v1034 = vld [vmem:[#allocation3 + $0x1978] sm:$0xff]
    %v1035 = vld [vmem:[#allocation3 + $0x1980] sm:$0xff]
    %v1036 = vld [vmem:[#allocation3 + $0x1988] sm:$0xff]
    %v1037 = vld [vmem:[#allocation3 + $0x1990] sm:$0xff]
    %v1038 = vld [vmem:[#allocation3 + $0x1998] sm:$0xff]
    %v1039 = vld [vmem:[#allocation3 + $0x19a0] sm:$0xff]
    %v1040 = vld [vmem:[#allocation3 + $0x19a8] sm:$0xff]
    %v1041 = vld [vmem:[#allocation3 + $0x19b0] sm:$0xff]
    %v1042 = vld [vmem:[#allocation3 + $0x19b8] sm:$0xff]
    %v1043 = vld [vmem:[#allocation3 + $0x19c0] sm:$0xff]
    %v1044 = vld [vmem:[#allocation3 + $0x19c8] sm:$0xff]
    %v1045 = vld [vmem:[#allocation3 + $0x19d0] sm:$0xff]
    %v1046 = vld [vmem:[#allocation3 + $0x19d8] sm:$0xff]
    %v1047 = vld [vmem:[#allocation3 + $0x19e0] sm:$0xff]
    %v1048 = vld [vmem:[#allocation3 + $0x19e8] sm:$0xff]
    %v1049 = vld [vmem:[#allocation3 + $0x19f0] sm:$0xff]
    %v1050 = vld [vmem:[#allocation3 + $0x19f8] sm:$0xff]
    %v1051 = vld [vmem:[#allocation3 + $0x1a00] sm:$0xff]
    %v1052 = vld [vmem:[#allocation3 + $0x1a08] sm:$0xff]
    %v1053 = vld [vmem:[#allocation3 + $0x1a10] sm:$0xff]
    %v1054 = vld [vmem:[#allocation3 + $0x1a18] sm:$0xff]
    %v1055 = vld [vmem:[#allocation3 + $0x1a20] sm:$0xff]
    %v1056 = vld [vmem:[#allocation3 + $0x1a28] sm:$0xff]
    %v1057 = vld [vmem:[#allocation3 + $0x1a30] sm:$0xff]
    %v1058 = vld [vmem:[#allocation3 + $0x1a38] sm:$0xff]
    %v1059 = vld [vmem:[#allocation3 + $0x1a40] sm:$0xff]
    %v1060 = vld [vmem:[#allocation3 + $0x1a48] sm:$0xff]
    %v1061 = vld [vmem:[#allocation3 + $0x1a50] sm:$0xff]
    %v1062 = vld [vmem:[#allocation3 + $0x1a58] sm:$0xff]
    %v1063 = vld [vmem:[#allocation3 + $0x1a60] sm:$0xff]
    %v1064 = vld [vmem:[#allocation3 + $0x1a68] sm:$0xff]
    %v1065 = vld [vmem:[#allocation3 + $0x1a70] sm:$0xff]
    %v1066 = vld [vmem:[#allocation3 + $0x1a78] sm:$0xff]
    %v1067 = vld [vmem:[#allocation3 + $0x1a80] sm:$0xff]
    %v1068 = vld [vmem:[#allocation3 + $0x1a88] sm:$0xff]
    %v1069 = vld [vmem:[#allocation3 + $0x1a90] sm:$0xff]
    %v1070 = vld [vmem:[#allocation3 + $0x1a98] sm:$0xff]
    %v1071 = vld [vmem:[#allocation3 + $0x1aa0] sm:$0xff]
    %v1072 = vld [vmem:[#allocation3 + $0x1aa8] sm:$0xff]
    %v1073 = vld [vmem:[#allocation3 + $0x1ab0] sm:$0xff]
    %v1074 = vld [vmem:[#allocation3 + $0x1ab8] sm:$0xff]
    %v1075 = vld [vmem:[#allocation3 + $0x1ac0] sm:$0xff]
    %v1076 = vld [vmem:[#allocation3 + $0x1ac8] sm:$0xff]
    %v1077 = vld [vmem:[#allocation3 + $0x1ad0] sm:$0xff]
    %v1078 = vld [vmem:[#allocation3 + $0x1ad8] sm:$0xff]
    %v1079 = vld [vmem:[#allocation3 + $0x1ae0] sm:$0xff]
    %v1080 = vld [vmem:[#allocation3 + $0x1ae8] sm:$0xff]
    %v1081 = vld [vmem:[#allocation3 + $0x1af0] sm:$0xff]
    %v1082 = vld [vmem:[#allocation3 + $0x1af8] sm:$0xff]
    %v1083 = vld [vmem:[#allocation3 + $0x1b00] sm:$0xff]
    %v1084 = vld [vmem:[#allocation3 + $0x1b08] sm:$0xff]
    %v1085 = vld [vmem:[#allocation3 + $0x1b10] sm:$0xff]
    %v1086 = vld [vmem:[#allocation3 + $0x1b18] sm:$0xff]
    %v1087 = vld [vmem:[#allocation3 + $0x1b20] sm:$0xff]
    %v1088 = vld [vmem:[#allocation3 + $0x1b28] sm:$0xff]
    %v1089 = vld [vmem:[#allocation3 + $0x1b30] sm:$0xff]
    %v1090 = vld [vmem:[#allocation3 + $0x1b38] sm:$0xff]
    %v1091 = vld [vmem:[#allocation3 + $0x1b40] sm:$0xff]
    %v1092 = vld [vmem:[#allocation3 + $0x1b48] sm:$0xff]
    %v1093 = vld [vmem:[#allocation3 + $0x1b50] sm:$0xff]
    %v1094 = vld [vmem:[#allocation3 + $0x1b58] sm:$0xff]
    %v1095 = vld [vmem:[#allocation3 + $0x1b60] sm:$0xff]
    %v1096 = vld [vmem:[#allocation3 + $0x1b68] sm:$0xff]
    %v1097 = vld [vmem:[#allocation3 + $0x1b70] sm:$0xff]
    %v1098 = vld [vmem:[#allocation3 + $0x1b78] sm:$0xff]
    %v1099 = vld [vmem:[#allocation3 + $0x1b80] sm:$0xff]
    %v1100 = vld [vmem:[#allocation3 + $0x1b88] sm:$0xff]
    %v1101 = vld [vmem:[#allocation3 + $0x1b90] sm:$0xff]
    %v1102 = vld [vmem:[#allocation3 + $0x1b98] sm:$0xff]
    %v1103 = vld [vmem:[#allocation3 + $0x1ba0] sm:$0xff]
    %v1104 = vld [vmem:[#allocation3 + $0x1ba8] sm:$0xff]
    %v1105 = vld [vmem:[#allocation3 + $0x1bb0] sm:$0xff]
    %v1106 = vld [vmem:[#allocation3 + $0x1bb8] sm:$0xff]
    %v1107 = vld [vmem:[#allocation3 + $0x1bc0] sm:$0xff]
    %v1108 = vld [vmem:[#allocation3 + $0x1bc8] sm:$0xff]
    %v1109 = vld [vmem:[#allocation3 + $0x1bd0] sm:$0xff]
    %v1110 = vld [vmem:[#allocation3 + $0x1bd8] sm:$0xff]
    %v1111 = vld [vmem:[#allocation3 + $0x1be0] sm:$0xff]
    %v1112 = vld [vmem:[#allocation3 + $0x1be8] sm:$0xff]
    %v1113 = vld [vmem:[#allocation3 + $0x1bf0] sm:$0xff]
    %v1114 = vld [vmem:[#allocation3 + $0x1bf8] sm:$0xff]
    %v1115 = vld [vmem:[#allocation3 + $0x1c00] sm:$0xff]
    %v1116 = vld [vmem:[#allocation3 + $0x1c08] sm:$0xff]
    %v1117 = vld [vmem:[#allocation3 + $0x1c10] sm:$0xff]
    %v1118 = vld [vmem:[#allocation3 + $0x1c18] sm:$0xff]
    %v1119 = vld [vmem:[#allocation3 + $0x1c20] sm:$0xff]
    %v1120 = vld [vmem:[#allocation3 + $0x1c28] sm:$0xff]
    %v1121 = vld [vmem:[#allocation3 + $0x1c30] sm:$0xff]
    %v1122 = vld [vmem:[#allocation3 + $0x1c38] sm:$0xff]
    %v1123 = vld [vmem:[#allocation3 + $0x1c40] sm:$0xff]
    %v1124 = vld [vmem:[#allocation3 + $0x1c48] sm:$0xff]
    %v1125 = vld [vmem:[#allocation3 + $0x1c50] sm:$0xff]
    %v1126 = vld [vmem:[#allocation3 + $0x1c58] sm:$0xff]
    %v1127 = vld [vmem:[#allocation3 + $0x1c60] sm:$0xff]
    %v1128 = vld [vmem:[#allocation3 + $0x1c68] sm:$0xff]
    %v1129 = vld [vmem:[#allocation3 + $0x1c70] sm:$0xff]
    %v1130 = vld [vmem:[#allocation3 + $0x1c78] sm:$0xff]
    %v1131 = vld [vmem:[#allocation3 + $0x1c80] sm:$0xff]
    %v1132 = vld [vmem:[#allocation3 + $0x1c88] sm:$0xff]
    %v1133 = vld [vmem:[#allocation3 + $0x1c90] sm:$0xff]
    %v1134 = vld [vmem:[#allocation3 + $0x1c98] sm:$0xff]
    %v1135 = vld [vmem:[#allocation3 + $0x1ca0] sm:$0xff]
    %v1136 = vld [vmem:[#allocation3 + $0x1ca8] sm:$0xff]
    %v1137 = vld [vmem:[#allocation3 + $0x1cb0] sm:$0xff]
    %v1138 = vld [vmem:[#allocation3 + $0x1cb8] sm:$0xff]
    %v1139 = vld [vmem:[#allocation3 + $0x1cc0] sm:$0xff]
    %v1140 = vld [vmem:[#allocation3 + $0x1cc8] sm:$0xff]
    %v1141 = vld [vmem:[#allocation3 + $0x1cd0] sm:$0xff]
    %v1142 = vld [vmem:[#allocation3 + $0x1cd8] sm:$0xff]
    %v1143 = vld [vmem:[#allocation3 + $0x1ce0] sm:$0xff]
    %v1144 = vld [vmem:[#allocation3 + $0x1ce8] sm:$0xff]
    %v1145 = vld [vmem:[#allocation3 + $0x1cf0] sm:$0xff]
    %v1146 = vld [vmem:[#allocation3 + $0x1cf8] sm:$0xff]
    %v1147 = vld [vmem:[#allocation3 + $0x1d00] sm:$0xff]
    %v1148 = vld [vmem:[#allocation3 + $0x1d08] sm:$0xff]
    %v1149 = vld [vmem:[#allocation3 + $0x1d10] sm:$0xff]
    %v1150 = vld [vmem:[#allocation3 + $0x1d18] sm:$0xff]
    %v1151 = vld [vmem:[#allocation3 + $0x1d20] sm:$0xff]
    %v1152 = vld [vmem:[#allocation3 + $0x1d28] sm:$0xff]
    %v1153 = vld [vmem:[#allocation3 + $0x1d30] sm:$0xff]
    %v1154 = vld [vmem:[#allocation3 + $0x1d38] sm:$0xff]
    %v1155 = vld [vmem:[#allocation3 + $0x1d40] sm:$0xff]
    %v1156 = vld [vmem:[#allocation3 + $0x1d48] sm:$0xff]
    %v1157 = vld [vmem:[#allocation3 + $0x1d50] sm:$0xff]
    %v1158 = vld [vmem:[#allocation3 + $0x1d58] sm:$0xff]
    %v1159 = vld [vmem:[#allocation3 + $0x1d60] sm:$0xff]
    %v1160 = vld [vmem:[#allocation3 + $0x1d68] sm:$0xff]
    %v1161 = vld [vmem:[#allocation3 + $0x1d70] sm:$0xff]
    %v1162 = vld [vmem:[#allocation3 + $0x1d78] sm:$0xff]
    %v1163 = vld [vmem:[#allocation3 + $0x1d80] sm:$0xff]
    %v1164 = vld [vmem:[#allocation3 + $0x1d88] sm:$0xff]
    %v1165 = vld [vmem:[#allocation3 + $0x1d90] sm:$0xff]
    %v1166 = vld [vmem:[#allocation3 + $0x1d98] sm:$0xff]
    %v1167 = vld [vmem:[#allocation3 + $0x1da0] sm:$0xff]
    %v1168 = vld [vmem:[#allocation3 + $0x1da8] sm:$0xff]
    %v1169 = vld [vmem:[#allocation3 + $0x1db0] sm:$0xff]
    %v1170 = vld [vmem:[#allocation3 + $0x1db8] sm:$0xff]
    %v1171 = vld [vmem:[#allocation3 + $0x1dc0] sm:$0xff]
    %v1172 = vld [vmem:[#allocation3 + $0x1dc8] sm:$0xff]
    %v1173 = vld [vmem:[#allocation3 + $0x1dd0] sm:$0xff]
    %v1174 = vld [vmem:[#allocation3 + $0x1dd8] sm:$0xff]
    %v1175 = vld [vmem:[#allocation3 + $0x1de0] sm:$0xff]
    %v1176 = vld [vmem:[#allocation3 + $0x1de8] sm:$0xff]
    %v1177 = vld [vmem:[#allocation3 + $0x1df0] sm:$0xff]
    %v1178 = vld [vmem:[#allocation3 + $0x1df8] sm:$0xff]
    %v1179 = vld [vmem:[#allocation3 + $0x1e00] sm:$0xff]
    %v1180 = vld [vmem:[#allocation3 + $0x1e08] sm:$0xff]
    %v1181 = vld [vmem:[#allocation3 + $0x1e10] sm:$0xff]
    %v1182 = vld [vmem:[#allocation3 + $0x1e18] sm:$0xff]
    %v1183 = vld [vmem:[#allocation3 + $0x1e20] sm:$0xff]
    %v1184 = vld [vmem:[#allocation3 + $0x1e28] sm:$0xff]
    %v1185 = vld [vmem:[#allocation3 + $0x1e30] sm:$0xff]
    %v1186 = vld [vmem:[#allocation3 + $0x1e38] sm:$0xff]
    %v1187 = vld [vmem:[#allocation3 + $0x1e40] sm:$0xff]
    %v1188 = vld [vmem:[#allocation3 + $0x1e48] sm:$0xff]
    %v1189 = vld [vmem:[#allocation3 + $0x1e50] sm:$0xff]
    %v1190 = vld [vmem:[#allocation3 + $0x1e58] sm:$0xff]
    %v1191 = vld [vmem:[#allocation3 + $0x1e60] sm:$0xff]
    %v1192 = vld [vmem:[#allocation3 + $0x1e68] sm:$0xff]
    %v1193 = vld [vmem:[#allocation3 + $0x1e70] sm:$0xff]
    %v1194 = vld [vmem:[#allocation3 + $0x1e78] sm:$0xff]
    %v1195 = vld [vmem:[#allocation3 + $0x1e80] sm:$0xff]
    %v1196 = vld [vmem:[#allocation3 + $0x1e88] sm:$0xff]
    %v1197 = vld [vmem:[#allocation3 + $0x1e90] sm:$0xff]
    %v1198 = vld [vmem:[#allocation3 + $0x1e98] sm:$0xff]
    %v1199 = vld [vmem:[#allocation3 + $0x1ea0] sm:$0xff]
    %v1200 = vld [vmem:[#allocation3 + $0x1ea8] sm:$0xff]
    %v1201 = vld [vmem:[#allocation3 + $0x1eb0] sm:$0xff]
    %v1202 = vld [vmem:[#allocation3 + $0x1eb8] sm:$0xff]
    %v1203 = vld [vmem:[#allocation3 + $0x1ec0] sm:$0xff]
    %v1204 = vld [vmem:[#allocation3 + $0x1ec8] sm:$0xff]
    %v1205 = vld [vmem:[#allocation3 + $0x1ed0] sm:$0xff]
    %v1206 = vld [vmem:[#allocation3 + $0x1ed8] sm:$0xff]
    %v1207 = vld [vmem:[#allocation3 + $0x1ee0] sm:$0xff]
    %v1208 = vld [vmem:[#allocation3 + $0x1ee8] sm:$0xff]
    %v1209 = vld [vmem:[#allocation3 + $0x1ef0] sm:$0xff]
    %v1210 = vld [vmem:[#allocation3 + $0x1ef8] sm:$0xff]
    %v1211 = vld [vmem:[#allocation3 + $0x1f00] sm:$0xff]
    %v1212 = vld [vmem:[#allocation3 + $0x1f08] sm:$0xff]
    %v1213 = vld [vmem:[#allocation3 + $0x1f10] sm:$0xff]
    %v1214 = vld [vmem:[#allocation3 + $0x1f18] sm:$0xff]
    %v1215 = vld [vmem:[#allocation3 + $0x1f20] sm:$0xff]
    %v1216 = vld [vmem:[#allocation3 + $0x1f28] sm:$0xff]
    %v1217 = vld [vmem:[#allocation3 + $0x1f30] sm:$0xff]
    %v1218 = vld [vmem:[#allocation3 + $0x1f38] sm:$0xff]
    %v1219 = vld [vmem:[#allocation3 + $0x1f40] sm:$0xff]
    %v1220 = vld [vmem:[#allocation3 + $0x1f48] sm:$0xff]
    %v1221 = vld [vmem:[#allocation3 + $0x1f50] sm:$0xff]
    %v1222 = vld [vmem:[#allocation3 + $0x1f58] sm:$0xff]
    %v1223 = vld [vmem:[#allocation3 + $0x1f60] sm:$0xff]
    %v1224 = vld [vmem:[#allocation3 + $0x1f68] sm:$0xff]
    %v1225 = vld [vmem:[#allocation3 + $0x1f70] sm:$0xff]
    %v1226 = vld [vmem:[#allocation3 + $0x1f78] sm:$0xff]
    %v1227 = vld [vmem:[#allocation3 + $0x1f80] sm:$0xff]
    %v1228 = vld [vmem:[#allocation3 + $0x1f88] sm:$0xff]
    %v1229 = vld [vmem:[#allocation3 + $0x1f90] sm:$0xff]
    %v1230 = vld [vmem:[#allocation3 + $0x1f98] sm:$0xff]
    %v1231 = vld [vmem:[#allocation3 + $0x1fa0] sm:$0xff]
    %v1232 = vld [vmem:[#allocation3 + $0x1fa8] sm:$0xff]
    %v1233 = vld [vmem:[#allocation3 + $0x1fb0] sm:$0xff]
    %v1234 = vld [vmem:[#allocation3 + $0x1fb8] sm:$0xff]
    %v1235 = vld [vmem:[#allocation3 + $0x1fc0] sm:$0xff]
    %v1236 = vld [vmem:[#allocation3 + $0x1fc8] sm:$0xff]
    %v1237 = vld [vmem:[#allocation3 + $0x1fd0] sm:$0xff]
    %v1238 = vld [vmem:[#allocation3 + $0x1fd8] sm:$0xff]
    %v1239 = vld [vmem:[#allocation3 + $0x1fe0] sm:$0xff]
    %v1240 = vld [vmem:[#allocation3 + $0x1fe8] sm:$0xff]
    %v1241 = vld [vmem:[#allocation3 + $0x1ff0] sm:$0xff]
    %v1242 = vld [vmem:[#allocation3 + $0x1ff8] sm:$0xff]
    %v1259 = vunpack.c.l.b16 %v203
    %v1260 = vunpack.c.h.b16 %v203
    %v1261 = vunpack.c.l.b16 %v204
    %v1262 = vunpack.c.h.b16 %v204
    %v1263 = vunpack.c.l.b16 %v205
    %v1264 = vunpack.c.h.b16 %v205
    %v1265 = vunpack.c.l.b16 %v206
    %v1266 = vunpack.c.h.b16 %v206
    %v1267 = vunpack.c.l.b16 %v207
    %v1268 = vunpack.c.h.b16 %v207
    %v1269 = vunpack.c.l.b16 %v208
    %v1270 = vunpack.c.h.b16 %v208
    %v1271 = vunpack.c.l.b16 %v209
    %v1272 = vunpack.c.h.b16 %v209
    %v1273 = vunpack.c.l.b16 %v210
    %v1274 = vunpack.c.h.b16 %v210
    %v1275 = vunpack.c.l.b16 %v211
    %v1276 = vunpack.c.h.b16 %v211
    %v1277 = vunpack.c.l.b16 %v212
    %v1278 = vunpack.c.h.b16 %v212
    %v1279 = vunpack.c.l.b16 %v213
    %v1280 = vunpack.c.h.b16 %v213
    %v1281 = vunpack.c.l.b16 %v214
    %v1282 = vunpack.c.h.b16 %v214
    %v1283 = vunpack.c.l.b16 %v215
    %v1284 = vunpack.c.h.b16 %v215
    %v1285 = vunpack.c.l.b16 %v216
    %v1286 = vunpack.c.h.b16 %v216
    %v1287 = vunpack.c.l.b16 %v217
    %v1288 = vunpack.c.h.b16 %v217
    %v1289 = vunpack.c.l.b16 %v218
    %v1290 = vunpack.c.h.b16 %v218
    %v1291 = vpack.c.b16 %v1275, %v1259
    %v1292 = vpack.c.b16 %v1276, %v1260
    %v1293 = vpack.c.b16 %v1277, %v1261
    %v1294 = vpack.c.b16 %v1278, %v1262
    %v1295 = vpack.c.b16 %v1279, %v1263
    %v1296 = vpack.c.b16 %v1280, %v1264
    %v1297 = vpack.c.b16 %v1281, %v1265
    %v1298 = vpack.c.b16 %v1282, %v1266
    %v1299 = vpack.c.b16 %v1283, %v1267
    %v1300 = vpack.c.b16 %v1284, %v1268
    %v1301 = vpack.c.b16 %v1285, %v1269
    %v1302 = vpack.c.b16 %v1286, %v1270
    %v1303 = vpack.c.b16 %v1287, %v1271
    %v1304 = vpack.c.b16 %v1288, %v1272
    %v1305 = vpack.c.b16 %v1289, %v1273
    %v1306 = vpack.c.b16 %v1290, %v1274
    %v2347 = vunpack.c.l.b16 %v219
    %v2348 = vunpack.c.h.b16 %v219
    %v2349 = vunpack.c.l.b16 %v220
    %v2350 = vunpack.c.h.b16 %v220
    %v2351 = vunpack.c.l.b16 %v221
    %v2352 = vunpack.c.h.b16 %v221
    %v2353 = vunpack.c.l.b16 %v222
    %v2354 = vunpack.c.h.b16 %v222
    %v2355 = vunpack.c.l.b16 %v223
    %v2356 = vunpack.c.h.b16 %v223
    %v2357 = vunpack.c.l.b16 %v224
    %v2358 = vunpack.c.h.b16 %v224
    %v2359 = vunpack.c.l.b16 %v225
    %v2360 = vunpack.c.h.b16 %v225
    %v2361 = vunpack.c.l.b16 %v226
    %v2362 = vunpack.c.h.b16 %v226
    %v2363 = vunpack.c.l.b16 %v227
    %v2364 = vunpack.c.h.b16 %v227
    %v2365 = vunpack.c.l.b16 %v228
    %v2366 = vunpack.c.h.b16 %v228
    %v2367 = vunpack.c.l.b16 %v229
    %v2368 = vunpack.c.h.b16 %v229
    %v2369 = vunpack.c.l.b16 %v230
    %v2370 = vunpack.c.h.b16 %v230
    %v2371 = vunpack.c.l.b16 %v231
    %v2372 = vunpack.c.h.b16 %v231
    %v2373 = vunpack.c.l.b16 %v232
    %v2374 = vunpack.c.h.b16 %v232
    %v2375 = vunpack.c.l.b16 %v233
    %v2376 = vunpack.c.h.b16 %v233
    %v2377 = vunpack.c.l.b16 %v234
    %v2378 = vunpack.c.h.b16 %v234
    %v2379 = vunpack.c.l.b16 %v235
    %v2380 = vunpack.c.h.b16 %v235
    %v2381 = vunpack.c.l.b16 %v236
    %v2382 = vunpack.c.h.b16 %v236
    %v2383 = vunpack.c.l.b16 %v237
    %v2384 = vunpack.c.h.b16 %v237
    %v2385 = vunpack.c.l.b16 %v238
    %v2386 = vunpack.c.h.b16 %v238
    %v2387 = vunpack.c.l.b16 %v239
    %v2388 = vunpack.c.h.b16 %v239
    %v2389 = vunpack.c.l.b16 %v240
    %v2390 = vunpack.c.h.b16 %v240
    %v2391 = vunpack.c.l.b16 %v241
    %v2392 = vunpack.c.h.b16 %v241
    %v2393 = vunpack.c.l.b16 %v242
    %v2394 = vunpack.c.h.b16 %v242
    %v2395 = vunpack.c.l.b16 %v243
    %v2396 = vunpack.c.h.b16 %v243
    %v2397 = vunpack.c.l.b16 %v244
    %v2398 = vunpack.c.h.b16 %v244
    %v2399 = vunpack.c.l.b16 %v245
    %v2400 = vunpack.c.h.b16 %v245
    %v2401 = vunpack.c.l.b16 %v246
    %v2402 = vunpack.c.h.b16 %v246
    %v2403 = vunpack.c.l.b16 %v247
    %v2404 = vunpack.c.h.b16 %v247
    %v2405 = vunpack.c.l.b16 %v248
    %v2406 = vunpack.c.h.b16 %v248
    %v2407 = vunpack.c.l.b16 %v249
    %v2408 = vunpack.c.h.b16 %v249
    %v2409 = vunpack.c.l.b16 %v250
    %v2410 = vunpack.c.h.b16 %v250
    %v2411 = vunpack.c.l.b16 %v251
    %v2412 = vunpack.c.h.b16 %v251
    %v2413 = vunpack.c.l.b16 %v252
    %v2414 = vunpack.c.h.b16 %v252
    %v2415 = vunpack.c.l.b16 %v253
    %v2416 = vunpack.c.h.b16 %v253
    %v2417 = vunpack.c.l.b16 %v254
    %v2418 = vunpack.c.h.b16 %v254
    %v2419 = vunpack.c.l.b16 %v255
    %v2420 = vunpack.c.h.b16 %v255
    %v2421 = vunpack.c.l.b16 %v256
    %v2422 = vunpack.c.h.b16 %v256
    %v2423 = vunpack.c.l.b16 %v257
    %v2424 = vunpack.c.h.b16 %v257
    %v2425 = vunpack.c.l.b16 %v258
    %v2426 = vunpack.c.h.b16 %v258
    %v2427 = vunpack.c.l.b16 %v259
    %v2428 = vunpack.c.h.b16 %v259
    %v2429 = vunpack.c.l.b16 %v260
    %v2430 = vunpack.c.h.b16 %v260
    %v2431 = vunpack.c.l.b16 %v261
    %v2432 = vunpack.c.h.b16 %v261
    %v2433 = vunpack.c.l.b16 %v262
    %v2434 = vunpack.c.h.b16 %v262
    %v2435 = vunpack.c.l.b16 %v263
    %v2436 = vunpack.c.h.b16 %v263
    %v2437 = vunpack.c.l.b16 %v264
    %v2438 = vunpack.c.h.b16 %v264
    %v2439 = vunpack.c.l.b16 %v265
    %v2440 = vunpack.c.h.b16 %v265
    %v2441 = vunpack.c.l.b16 %v266
    %v2442 = vunpack.c.h.b16 %v266
    %v2443 = vunpack.c.l.b16 %v267
    %v2444 = vunpack.c.h.b16 %v267
    %v2445 = vunpack.c.l.b16 %v268
    %v2446 = vunpack.c.h.b16 %v268
    %v2447 = vunpack.c.l.b16 %v269
    %v2448 = vunpack.c.h.b16 %v269
    %v2449 = vunpack.c.l.b16 %v270
    %v2450 = vunpack.c.h.b16 %v270
    %v2451 = vunpack.c.l.b16 %v271
    %v2452 = vunpack.c.h.b16 %v271
    %v2453 = vunpack.c.l.b16 %v272
    %v2454 = vunpack.c.h.b16 %v272
    %v2455 = vunpack.c.l.b16 %v273
    %v2456 = vunpack.c.h.b16 %v273
    %v2457 = vunpack.c.l.b16 %v274
    %v2458 = vunpack.c.h.b16 %v274
    %v2459 = vunpack.c.l.b16 %v275
    %v2460 = vunpack.c.h.b16 %v275
    %v2461 = vunpack.c.l.b16 %v276
    %v2462 = vunpack.c.h.b16 %v276
    %v2463 = vunpack.c.l.b16 %v277
    %v2464 = vunpack.c.h.b16 %v277
    %v2465 = vunpack.c.l.b16 %v278
    %v2466 = vunpack.c.h.b16 %v278
    %v2467 = vunpack.c.l.b16 %v279
    %v2468 = vunpack.c.h.b16 %v279
    %v2469 = vunpack.c.l.b16 %v280
    %v2470 = vunpack.c.h.b16 %v280
    %v2471 = vunpack.c.l.b16 %v281
    %v2472 = vunpack.c.h.b16 %v281
    %v2473 = vunpack.c.l.b16 %v282
    %v2474 = vunpack.c.h.b16 %v282
    %v2475 = vunpack.c.l.b16 %v283
    %v2476 = vunpack.c.h.b16 %v283
    %v2477 = vunpack.c.l.b16 %v284
    %v2478 = vunpack.c.h.b16 %v284
    %v2479 = vunpack.c.l.b16 %v285
    %v2480 = vunpack.c.h.b16 %v285
    %v2481 = vunpack.c.l.b16 %v286
    %v2482 = vunpack.c.h.b16 %v286
    %v2483 = vunpack.c.l.b16 %v287
    %v2484 = vunpack.c.h.b16 %v287
    %v2485 = vunpack.c.l.b16 %v288
    %v2486 = vunpack.c.h.b16 %v288
    %v2487 = vunpack.c.l.b16 %v289
    %v2488 = vunpack.c.h.b16 %v289
    %v2489 = vunpack.c.l.b16 %v290
    %v2490 = vunpack.c.h.b16 %v290
    %v2491 = vunpack.c.l.b16 %v291
    %v2492 = vunpack.c.h.b16 %v291
    %v2493 = vunpack.c.l.b16 %v292
    %v2494 = vunpack.c.h.b16 %v292
    %v2495 = vunpack.c.l.b16 %v293
    %v2496 = vunpack.c.h.b16 %v293
    %v2497 = vunpack.c.l.b16 %v294
    %v2498 = vunpack.c.h.b16 %v294
    %v2499 = vunpack.c.l.b16 %v295
    %v2500 = vunpack.c.h.b16 %v295
    %v2501 = vunpack.c.l.b16 %v296
    %v2502 = vunpack.c.h.b16 %v296
    %v2503 = vunpack.c.l.b16 %v297
    %v2504 = vunpack.c.h.b16 %v297
    %v2505 = vunpack.c.l.b16 %v298
    %v2506 = vunpack.c.h.b16 %v298
    %v2507 = vunpack.c.l.b16 %v299
    %v2508 = vunpack.c.h.b16 %v299
    %v2509 = vunpack.c.l.b16 %v300
    %v2510 = vunpack.c.h.b16 %v300
    %v2511 = vunpack.c.l.b16 %v301
    %v2512 = vunpack.c.h.b16 %v301
    %v2513 = vunpack.c.l.b16 %v302
    %v2514 = vunpack.c.h.b16 %v302
    %v2515 = vunpack.c.l.b16 %v303
    %v2516 = vunpack.c.h.b16 %v303
    %v2517 = vunpack.c.l.b16 %v304
    %v2518 = vunpack.c.h.b16 %v304
    %v2519 = vunpack.c.l.b16 %v305
    %v2520 = vunpack.c.h.b16 %v305
    %v2521 = vunpack.c.l.b16 %v306
    %v2522 = vunpack.c.h.b16 %v306
    %v2523 = vunpack.c.l.b16 %v307
    %v2524 = vunpack.c.h.b16 %v307
    %v2525 = vunpack.c.l.b16 %v308
    %v2526 = vunpack.c.h.b16 %v308
    %v2527 = vunpack.c.l.b16 %v309
    %v2528 = vunpack.c.h.b16 %v309
    %v2529 = vunpack.c.l.b16 %v310
    %v2530 = vunpack.c.h.b16 %v310
    %v2531 = vunpack.c.l.b16 %v311
    %v2532 = vunpack.c.h.b16 %v311
    %v2533 = vunpack.c.l.b16 %v312
    %v2534 = vunpack.c.h.b16 %v312
    %v2535 = vunpack.c.l.b16 %v313
    %v2536 = vunpack.c.h.b16 %v313
    %v2537 = vunpack.c.l.b16 %v314
    %v2538 = vunpack.c.h.b16 %v314
    %v2539 = vunpack.c.l.b16 %v315
    %v2540 = vunpack.c.h.b16 %v315
    %v2541 = vunpack.c.l.b16 %v316
    %v2542 = vunpack.c.h.b16 %v316
    %v2543 = vunpack.c.l.b16 %v317
    %v2544 = vunpack.c.h.b16 %v317
    %v2545 = vunpack.c.l.b16 %v318
    %v2546 = vunpack.c.h.b16 %v318
    %v2547 = vunpack.c.l.b16 %v319
    %v2548 = vunpack.c.h.b16 %v319
    %v2549 = vunpack.c.l.b16 %v320
    %v2550 = vunpack.c.h.b16 %v320
    %v2551 = vunpack.c.l.b16 %v321
    %v2552 = vunpack.c.h.b16 %v321
    %v2553 = vunpack.c.l.b16 %v322
    %v2554 = vunpack.c.h.b16 %v322
    %v2555 = vunpack.c.l.b16 %v323
    %v2556 = vunpack.c.h.b16 %v323
    %v2557 = vunpack.c.l.b16 %v324
    %v2558 = vunpack.c.h.b16 %v324
    %v2559 = vunpack.c.l.b16 %v325
    %v2560 = vunpack.c.h.b16 %v325
    %v2561 = vunpack.c.l.b16 %v326
    %v2562 = vunpack.c.h.b16 %v326
    %v2563 = vunpack.c.l.b16 %v327
    %v2564 = vunpack.c.h.b16 %v327
    %v2565 = vunpack.c.l.b16 %v328
    %v2566 = vunpack.c.h.b16 %v328
    %v2567 = vunpack.c.l.b16 %v329
    %v2568 = vunpack.c.h.b16 %v329
    %v2569 = vunpack.c.l.b16 %v330
    %v2570 = vunpack.c.h.b16 %v330
    %v2571 = vunpack.c.l.b16 %v331
    %v2572 = vunpack.c.h.b16 %v331
    %v2573 = vunpack.c.l.b16 %v332
    %v2574 = vunpack.c.h.b16 %v332
    %v2575 = vunpack.c.l.b16 %v333
    %v2576 = vunpack.c.h.b16 %v333
    %v2577 = vunpack.c.l.b16 %v334
    %v2578 = vunpack.c.h.b16 %v334
    %v2579 = vunpack.c.l.b16 %v335
    %v2580 = vunpack.c.h.b16 %v335
    %v2581 = vunpack.c.l.b16 %v336
    %v2582 = vunpack.c.h.b16 %v336
    %v2583 = vunpack.c.l.b16 %v337
    %v2584 = vunpack.c.h.b16 %v337
    %v2585 = vunpack.c.l.b16 %v338
    %v2586 = vunpack.c.h.b16 %v338
    %v2587 = vunpack.c.l.b16 %v339
    %v2588 = vunpack.c.h.b16 %v339
    %v2589 = vunpack.c.l.b16 %v340
    %v2590 = vunpack.c.h.b16 %v340
    %v2591 = vunpack.c.l.b16 %v341
    %v2592 = vunpack.c.h.b16 %v341
    %v2593 = vunpack.c.l.b16 %v342
    %v2594 = vunpack.c.h.b16 %v342
    %v2595 = vunpack.c.l.b16 %v343
    %v2596 = vunpack.c.h.b16 %v343
    %v2597 = vunpack.c.l.b16 %v344
    %v2598 = vunpack.c.h.b16 %v344
    %v2599 = vunpack.c.l.b16 %v345
    %v2600 = vunpack.c.h.b16 %v345
    %v2601 = vunpack.c.l.b16 %v346
    %v2602 = vunpack.c.h.b16 %v346
    %v2603 = vunpack.c.l.b16 %v347
    %v2604 = vunpack.c.h.b16 %v347
    %v2605 = vunpack.c.l.b16 %v348
    %v2606 = vunpack.c.h.b16 %v348
    %v2607 = vunpack.c.l.b16 %v349
    %v2608 = vunpack.c.h.b16 %v349
    %v2609 = vunpack.c.l.b16 %v350
    %v2610 = vunpack.c.h.b16 %v350
    %v2611 = vunpack.c.l.b16 %v351
    %v2612 = vunpack.c.h.b16 %v351
    %v2613 = vunpack.c.l.b16 %v352
    %v2614 = vunpack.c.h.b16 %v352
    %v2615 = vunpack.c.l.b16 %v353
    %v2616 = vunpack.c.h.b16 %v353
    %v2617 = vunpack.c.l.b16 %v354
    %v2618 = vunpack.c.h.b16 %v354
    %v2619 = vunpack.c.l.b16 %v355
    %v2620 = vunpack.c.h.b16 %v355
    %v2621 = vunpack.c.l.b16 %v356
    %v2622 = vunpack.c.h.b16 %v356
    %v2623 = vunpack.c.l.b16 %v357
    %v2624 = vunpack.c.h.b16 %v357
    %v2625 = vunpack.c.l.b16 %v358
    %v2626 = vunpack.c.h.b16 %v358
    %v2627 = vunpack.c.l.b16 %v359
    %v2628 = vunpack.c.h.b16 %v359
    %v2629 = vunpack.c.l.b16 %v360
    %v2630 = vunpack.c.h.b16 %v360
    %v2631 = vunpack.c.l.b16 %v361
    %v2632 = vunpack.c.h.b16 %v361
    %v2633 = vunpack.c.l.b16 %v362
    %v2634 = vunpack.c.h.b16 %v362
    %v2635 = vunpack.c.l.b16 %v363
    %v2636 = vunpack.c.h.b16 %v363
    %v2637 = vunpack.c.l.b16 %v364
    %v2638 = vunpack.c.h.b16 %v364
    %v2639 = vunpack.c.l.b16 %v365
    %v2640 = vunpack.c.h.b16 %v365
    %v2641 = vunpack.c.l.b16 %v366
    %v2642 = vunpack.c.h.b16 %v366
    %v2643 = vunpack.c.l.b16 %v367
    %v2644 = vunpack.c.h.b16 %v367
    %v2645 = vunpack.c.l.b16 %v368
    %v2646 = vunpack.c.h.b16 %v368
    %v2647 = vunpack.c.l.b16 %v369
    %v2648 = vunpack.c.h.b16 %v369
    %v2649 = vunpack.c.l.b16 %v370
    %v2650 = vunpack.c.h.b16 %v370
    %v2651 = vunpack.c.l.b16 %v371
    %v2652 = vunpack.c.h.b16 %v371
    %v2653 = vunpack.c.l.b16 %v372
    %v2654 = vunpack.c.h.b16 %v372
    %v2655 = vunpack.c.l.b16 %v373
    %v2656 = vunpack.c.h.b16 %v373
    %v2657 = vunpack.c.l.b16 %v374
    %v2658 = vunpack.c.h.b16 %v374
    %v2659 = vunpack.c.l.b16 %v375
    %v2660 = vunpack.c.h.b16 %v375
    %v2661 = vunpack.c.l.b16 %v376
    %v2662 = vunpack.c.h.b16 %v376
    %v2663 = vunpack.c.l.b16 %v377
    %v2664 = vunpack.c.h.b16 %v377
    %v2665 = vunpack.c.l.b16 %v378
    %v2666 = vunpack.c.h.b16 %v378
    %v2667 = vunpack.c.l.b16 %v379
    %v2668 = vunpack.c.h.b16 %v379
    %v2669 = vunpack.c.l.b16 %v380
    %v2670 = vunpack.c.h.b16 %v380
    %v2671 = vunpack.c.l.b16 %v381
    %v2672 = vunpack.c.h.b16 %v381
    %v2673 = vunpack.c.l.b16 %v382
    %v2674 = vunpack.c.h.b16 %v382
    %v2675 = vunpack.c.l.b16 %v383
    %v2676 = vunpack.c.h.b16 %v383
    %v2677 = vunpack.c.l.b16 %v384
    %v2678 = vunpack.c.h.b16 %v384
    %v2679 = vunpack.c.l.b16 %v385
    %v2680 = vunpack.c.h.b16 %v385
    %v2681 = vunpack.c.l.b16 %v386
    %v2682 = vunpack.c.h.b16 %v386
    %v2683 = vunpack.c.l.b16 %v387
    %v2684 = vunpack.c.h.b16 %v387
    %v2685 = vunpack.c.l.b16 %v388
    %v2686 = vunpack.c.h.b16 %v388
    %v2687 = vunpack.c.l.b16 %v389
    %v2688 = vunpack.c.h.b16 %v389
    %v2689 = vunpack.c.l.b16 %v390
    %v2690 = vunpack.c.h.b16 %v390
    %v2691 = vunpack.c.l.b16 %v391
    %v2692 = vunpack.c.h.b16 %v391
    %v2693 = vunpack.c.l.b16 %v392
    %v2694 = vunpack.c.h.b16 %v392
    %v2695 = vunpack.c.l.b16 %v393
    %v2696 = vunpack.c.h.b16 %v393
    %v2697 = vunpack.c.l.b16 %v394
    %v2698 = vunpack.c.h.b16 %v394
    %v2699 = vunpack.c.l.b16 %v395
    %v2700 = vunpack.c.h.b16 %v395
    %v2701 = vunpack.c.l.b16 %v396
    %v2702 = vunpack.c.h.b16 %v396
    %v2703 = vunpack.c.l.b16 %v397
    %v2704 = vunpack.c.h.b16 %v397
    %v2705 = vunpack.c.l.b16 %v398
    %v2706 = vunpack.c.h.b16 %v398
    %v2707 = vunpack.c.l.b16 %v399
    %v2708 = vunpack.c.h.b16 %v399
    %v2709 = vunpack.c.l.b16 %v400
    %v2710 = vunpack.c.h.b16 %v400
    %v2711 = vunpack.c.l.b16 %v401
    %v2712 = vunpack.c.h.b16 %v401
    %v2713 = vunpack.c.l.b16 %v402
    %v2714 = vunpack.c.h.b16 %v402
    %v2715 = vunpack.c.l.b16 %v403
    %v2716 = vunpack.c.h.b16 %v403
    %v2717 = vunpack.c.l.b16 %v404
    %v2718 = vunpack.c.h.b16 %v404
    %v2719 = vunpack.c.l.b16 %v405
    %v2720 = vunpack.c.h.b16 %v405
    %v2721 = vunpack.c.l.b16 %v406
    %v2722 = vunpack.c.h.b16 %v406
    %v2723 = vunpack.c.l.b16 %v407
    %v2724 = vunpack.c.h.b16 %v407
    %v2725 = vunpack.c.l.b16 %v408
    %v2726 = vunpack.c.h.b16 %v408
    %v2727 = vunpack.c.l.b16 %v409
    %v2728 = vunpack.c.h.b16 %v409
    %v2729 = vunpack.c.l.b16 %v410
    %v2730 = vunpack.c.h.b16 %v410
    %v2731 = vunpack.c.l.b16 %v411
    %v2732 = vunpack.c.h.b16 %v411
    %v2733 = vunpack.c.l.b16 %v412
    %v2734 = vunpack.c.h.b16 %v412
    %v2735 = vunpack.c.l.b16 %v413
    %v2736 = vunpack.c.h.b16 %v413
    %v2737 = vunpack.c.l.b16 %v414
    %v2738 = vunpack.c.h.b16 %v414
    %v2739 = vunpack.c.l.b16 %v415
    %v2740 = vunpack.c.h.b16 %v415
    %v2741 = vunpack.c.l.b16 %v416
    %v2742 = vunpack.c.h.b16 %v416
    %v2743 = vunpack.c.l.b16 %v417
    %v2744 = vunpack.c.h.b16 %v417
    %v2745 = vunpack.c.l.b16 %v418
    %v2746 = vunpack.c.h.b16 %v418
    %v2747 = vunpack.c.l.b16 %v419
    %v2748 = vunpack.c.h.b16 %v419
    %v2749 = vunpack.c.l.b16 %v420
    %v2750 = vunpack.c.h.b16 %v420
    %v2751 = vunpack.c.l.b16 %v421
    %v2752 = vunpack.c.h.b16 %v421
    %v2753 = vunpack.c.l.b16 %v422
    %v2754 = vunpack.c.h.b16 %v422
    %v2755 = vunpack.c.l.b16 %v423
    %v2756 = vunpack.c.h.b16 %v423
    %v2757 = vunpack.c.l.b16 %v424
    %v2758 = vunpack.c.h.b16 %v424
    %v2759 = vunpack.c.l.b16 %v425
    %v2760 = vunpack.c.h.b16 %v425
    %v2761 = vunpack.c.l.b16 %v426
    %v2762 = vunpack.c.h.b16 %v426
    %v2763 = vunpack.c.l.b16 %v427
    %v2764 = vunpack.c.h.b16 %v427
    %v2765 = vunpack.c.l.b16 %v428
    %v2766 = vunpack.c.h.b16 %v428
    %v2767 = vunpack.c.l.b16 %v429
    %v2768 = vunpack.c.h.b16 %v429
    %v2769 = vunpack.c.l.b16 %v430
    %v2770 = vunpack.c.h.b16 %v430
    %v2771 = vunpack.c.l.b16 %v431
    %v2772 = vunpack.c.h.b16 %v431
    %v2773 = vunpack.c.l.b16 %v432
    %v2774 = vunpack.c.h.b16 %v432
    %v2775 = vunpack.c.l.b16 %v433
    %v2776 = vunpack.c.h.b16 %v433
    %v2777 = vunpack.c.l.b16 %v434
    %v2778 = vunpack.c.h.b16 %v434
    %v2779 = vunpack.c.l.b16 %v435
    %v2780 = vunpack.c.h.b16 %v435
    %v2781 = vunpack.c.l.b16 %v436
    %v2782 = vunpack.c.h.b16 %v436
    %v2783 = vunpack.c.l.b16 %v437
    %v2784 = vunpack.c.h.b16 %v437
    %v2785 = vunpack.c.l.b16 %v438
    %v2786 = vunpack.c.h.b16 %v438
    %v2787 = vunpack.c.l.b16 %v439
    %v2788 = vunpack.c.h.b16 %v439
    %v2789 = vunpack.c.l.b16 %v440
    %v2790 = vunpack.c.h.b16 %v440
    %v2791 = vunpack.c.l.b16 %v441
    %v2792 = vunpack.c.h.b16 %v441
    %v2793 = vunpack.c.l.b16 %v442
    %v2794 = vunpack.c.h.b16 %v442
    %v2795 = vunpack.c.l.b16 %v443
    %v2796 = vunpack.c.h.b16 %v443
    %v2797 = vunpack.c.l.b16 %v444
    %v2798 = vunpack.c.h.b16 %v444
    %v2799 = vunpack.c.l.b16 %v445
    %v2800 = vunpack.c.h.b16 %v445
    %v2801 = vunpack.c.l.b16 %v446
    %v2802 = vunpack.c.h.b16 %v446
    %v2803 = vunpack.c.l.b16 %v447
    %v2804 = vunpack.c.h.b16 %v447
    %v2805 = vunpack.c.l.b16 %v448
    %v2806 = vunpack.c.h.b16 %v448
    %v2807 = vunpack.c.l.b16 %v449
    %v2808 = vunpack.c.h.b16 %v449
    %v2809 = vunpack.c.l.b16 %v450
    %v2810 = vunpack.c.h.b16 %v450
    %v2811 = vunpack.c.l.b16 %v451
    %v2812 = vunpack.c.h.b16 %v451
    %v2813 = vunpack.c.l.b16 %v452
    %v2814 = vunpack.c.h.b16 %v452
    %v2815 = vunpack.c.l.b16 %v453
    %v2816 = vunpack.c.h.b16 %v453
    %v2817 = vunpack.c.l.b16 %v454
    %v2818 = vunpack.c.h.b16 %v454
    %v2819 = vunpack.c.l.b16 %v455
    %v2820 = vunpack.c.h.b16 %v455
    %v2821 = vunpack.c.l.b16 %v456
    %v2822 = vunpack.c.h.b16 %v456
    %v2823 = vunpack.c.l.b16 %v457
    %v2824 = vunpack.c.h.b16 %v457
    %v2825 = vunpack.c.l.b16 %v458
    %v2826 = vunpack.c.h.b16 %v458
    %v2827 = vunpack.c.l.b16 %v459
    %v2828 = vunpack.c.h.b16 %v459
    %v2829 = vunpack.c.l.b16 %v460
    %v2830 = vunpack.c.h.b16 %v460
    %v2831 = vunpack.c.l.b16 %v461
    %v2832 = vunpack.c.h.b16 %v461
    %v2833 = vunpack.c.l.b16 %v462
    %v2834 = vunpack.c.h.b16 %v462
    %v2835 = vunpack.c.l.b16 %v463
    %v2836 = vunpack.c.h.b16 %v463
    %v2837 = vunpack.c.l.b16 %v464
    %v2838 = vunpack.c.h.b16 %v464
    %v2839 = vunpack.c.l.b16 %v465
    %v2840 = vunpack.c.h.b16 %v465
    %v2841 = vunpack.c.l.b16 %v466
    %v2842 = vunpack.c.h.b16 %v466
    %v2843 = vunpack.c.l.b16 %v467
    %v2844 = vunpack.c.h.b16 %v467
    %v2845 = vunpack.c.l.b16 %v468
    %v2846 = vunpack.c.h.b16 %v468
    %v2847 = vunpack.c.l.b16 %v469
    %v2848 = vunpack.c.h.b16 %v469
    %v2849 = vunpack.c.l.b16 %v470
    %v2850 = vunpack.c.h.b16 %v470
    %v2851 = vunpack.c.l.b16 %v471
    %v2852 = vunpack.c.h.b16 %v471
    %v2853 = vunpack.c.l.b16 %v472
    %v2854 = vunpack.c.h.b16 %v472
    %v2855 = vunpack.c.l.b16 %v473
    %v2856 = vunpack.c.h.b16 %v473
    %v2857 = vunpack.c.l.b16 %v474
    %v2858 = vunpack.c.h.b16 %v474
    %v2859 = vunpack.c.l.b16 %v475
    %v2860 = vunpack.c.h.b16 %v475
    %v2861 = vunpack.c.l.b16 %v476
    %v2862 = vunpack.c.h.b16 %v476
    %v2863 = vunpack.c.l.b16 %v477
    %v2864 = vunpack.c.h.b16 %v477
    %v2865 = vunpack.c.l.b16 %v478
    %v2866 = vunpack.c.h.b16 %v478
    %v2867 = vunpack.c.l.b16 %v479
    %v2868 = vunpack.c.h.b16 %v479
    %v2869 = vunpack.c.l.b16 %v480
    %v2870 = vunpack.c.h.b16 %v480
    %v2871 = vunpack.c.l.b16 %v481
    %v2872 = vunpack.c.h.b16 %v481
    %v2873 = vunpack.c.l.b16 %v482
    %v2874 = vunpack.c.h.b16 %v482
    %v2875 = vunpack.c.l.b16 %v483
    %v2876 = vunpack.c.h.b16 %v483
    %v2877 = vunpack.c.l.b16 %v484
    %v2878 = vunpack.c.h.b16 %v484
    %v2879 = vunpack.c.l.b16 %v485
    %v2880 = vunpack.c.h.b16 %v485
    %v2881 = vunpack.c.l.b16 %v486
    %v2882 = vunpack.c.h.b16 %v486
    %v2883 = vunpack.c.l.b16 %v487
    %v2884 = vunpack.c.h.b16 %v487
    %v2885 = vunpack.c.l.b16 %v488
    %v2886 = vunpack.c.h.b16 %v488
    %v2887 = vunpack.c.l.b16 %v489
    %v2888 = vunpack.c.h.b16 %v489
    %v2889 = vunpack.c.l.b16 %v490
    %v2890 = vunpack.c.h.b16 %v490
    %v2891 = vunpack.c.l.b16 %v491
    %v2892 = vunpack.c.h.b16 %v491
    %v2893 = vunpack.c.l.b16 %v492
    %v2894 = vunpack.c.h.b16 %v492
    %v2895 = vunpack.c.l.b16 %v493
    %v2896 = vunpack.c.h.b16 %v493
    %v2897 = vunpack.c.l.b16 %v494
    %v2898 = vunpack.c.h.b16 %v494
    %v2899 = vunpack.c.l.b16 %v495
    %v2900 = vunpack.c.h.b16 %v495
    %v2901 = vunpack.c.l.b16 %v496
    %v2902 = vunpack.c.h.b16 %v496
    %v2903 = vunpack.c.l.b16 %v497
    %v2904 = vunpack.c.h.b16 %v497
    %v2905 = vunpack.c.l.b16 %v498
    %v2906 = vunpack.c.h.b16 %v498
    %v2907 = vunpack.c.l.b16 %v499
    %v2908 = vunpack.c.h.b16 %v499
    %v2909 = vunpack.c.l.b16 %v500
    %v2910 = vunpack.c.h.b16 %v500
    %v2911 = vunpack.c.l.b16 %v501
    %v2912 = vunpack.c.h.b16 %v501
    %v2913 = vunpack.c.l.b16 %v502
    %v2914 = vunpack.c.h.b16 %v502
    %v2915 = vunpack.c.l.b16 %v503
    %v2916 = vunpack.c.h.b16 %v503
    %v2917 = vunpack.c.l.b16 %v504
    %v2918 = vunpack.c.h.b16 %v504
    %v2919 = vunpack.c.l.b16 %v505
    %v2920 = vunpack.c.h.b16 %v505
    %v2921 = vunpack.c.l.b16 %v506
    %v2922 = vunpack.c.h.b16 %v506
    %v2923 = vunpack.c.l.b16 %v507
    %v2924 = vunpack.c.h.b16 %v507
    %v2925 = vunpack.c.l.b16 %v508
    %v2926 = vunpack.c.h.b16 %v508
    %v2927 = vunpack.c.l.b16 %v509
    %v2928 = vunpack.c.h.b16 %v509
    %v2929 = vunpack.c.l.b16 %v510
    %v2930 = vunpack.c.h.b16 %v510
    %v2931 = vunpack.c.l.b16 %v511
    %v2932 = vunpack.c.h.b16 %v511
    %v2933 = vunpack.c.l.b16 %v512
    %v2934 = vunpack.c.h.b16 %v512
    %v2935 = vunpack.c.l.b16 %v513
    %v2936 = vunpack.c.h.b16 %v513
    %v2937 = vunpack.c.l.b16 %v514
    %v2938 = vunpack.c.h.b16 %v514
    %v2939 = vunpack.c.l.b16 %v515
    %v2940 = vunpack.c.h.b16 %v515
    %v2941 = vunpack.c.l.b16 %v516
    %v2942 = vunpack.c.h.b16 %v516
    %v2943 = vunpack.c.l.b16 %v517
    %v2944 = vunpack.c.h.b16 %v517
    %v2945 = vunpack.c.l.b16 %v518
    %v2946 = vunpack.c.h.b16 %v518
    %v2947 = vunpack.c.l.b16 %v519
    %v2948 = vunpack.c.h.b16 %v519
    %v2949 = vunpack.c.l.b16 %v520
    %v2950 = vunpack.c.h.b16 %v520
    %v2951 = vunpack.c.l.b16 %v521
    %v2952 = vunpack.c.h.b16 %v521
    %v2953 = vunpack.c.l.b16 %v522
    %v2954 = vunpack.c.h.b16 %v522
    %v2955 = vunpack.c.l.b16 %v523
    %v2956 = vunpack.c.h.b16 %v523
    %v2957 = vunpack.c.l.b16 %v524
    %v2958 = vunpack.c.h.b16 %v524
    %v2959 = vunpack.c.l.b16 %v525
    %v2960 = vunpack.c.h.b16 %v525
    %v2961 = vunpack.c.l.b16 %v526
    %v2962 = vunpack.c.h.b16 %v526
    %v2963 = vunpack.c.l.b16 %v527
    %v2964 = vunpack.c.h.b16 %v527
    %v2965 = vunpack.c.l.b16 %v528
    %v2966 = vunpack.c.h.b16 %v528
    %v2967 = vunpack.c.l.b16 %v529
    %v2968 = vunpack.c.h.b16 %v529
    %v2969 = vunpack.c.l.b16 %v530
    %v2970 = vunpack.c.h.b16 %v530
    %v2971 = vunpack.c.l.b16 %v531
    %v2972 = vunpack.c.h.b16 %v531
    %v2973 = vunpack.c.l.b16 %v532
    %v2974 = vunpack.c.h.b16 %v532
    %v2975 = vunpack.c.l.b16 %v533
    %v2976 = vunpack.c.h.b16 %v533
    %v2977 = vunpack.c.l.b16 %v534
    %v2978 = vunpack.c.h.b16 %v534
    %v2979 = vunpack.c.l.b16 %v535
    %v2980 = vunpack.c.h.b16 %v535
    %v2981 = vunpack.c.l.b16 %v536
    %v2982 = vunpack.c.h.b16 %v536
    %v2983 = vunpack.c.l.b16 %v537
    %v2984 = vunpack.c.h.b16 %v537
    %v2985 = vunpack.c.l.b16 %v538
    %v2986 = vunpack.c.h.b16 %v538
    %v2987 = vunpack.c.l.b16 %v539
    %v2988 = vunpack.c.h.b16 %v539
    %v2989 = vunpack.c.l.b16 %v540
    %v2990 = vunpack.c.h.b16 %v540
    %v2991 = vunpack.c.l.b16 %v541
    %v2992 = vunpack.c.h.b16 %v541
    %v2993 = vunpack.c.l.b16 %v542
    %v2994 = vunpack.c.h.b16 %v542
    %v2995 = vunpack.c.l.b16 %v543
    %v2996 = vunpack.c.h.b16 %v543
    %v2997 = vunpack.c.l.b16 %v544
    %v2998 = vunpack.c.h.b16 %v544
    %v2999 = vunpack.c.l.b16 %v545
    %v3000 = vunpack.c.h.b16 %v545
    %v3001 = vunpack.c.l.b16 %v546
    %v3002 = vunpack.c.h.b16 %v546
    %v3003 = vunpack.c.l.b16 %v547
    %v3004 = vunpack.c.h.b16 %v547
    %v3005 = vunpack.c.l.b16 %v548
    %v3006 = vunpack.c.h.b16 %v548
    %v3007 = vunpack.c.l.b16 %v549
    %v3008 = vunpack.c.h.b16 %v549
    %v3009 = vunpack.c.l.b16 %v550
    %v3010 = vunpack.c.h.b16 %v550
    %v3011 = vunpack.c.l.b16 %v551
    %v3012 = vunpack.c.h.b16 %v551
    %v3013 = vunpack.c.l.b16 %v552
    %v3014 = vunpack.c.h.b16 %v552
    %v3015 = vunpack.c.l.b16 %v553
    %v3016 = vunpack.c.h.b16 %v553
    %v3017 = vunpack.c.l.b16 %v554
    %v3018 = vunpack.c.h.b16 %v554
    %v3019 = vunpack.c.l.b16 %v555
    %v3020 = vunpack.c.h.b16 %v555
    %v3021 = vunpack.c.l.b16 %v556
    %v3022 = vunpack.c.h.b16 %v556
    %v3023 = vunpack.c.l.b16 %v557
    %v3024 = vunpack.c.h.b16 %v557
    %v3025 = vunpack.c.l.b16 %v558
    %v3026 = vunpack.c.h.b16 %v558
    %v3027 = vunpack.c.l.b16 %v559
    %v3028 = vunpack.c.h.b16 %v559
    %v3029 = vunpack.c.l.b16 %v560
    %v3030 = vunpack.c.h.b16 %v560
    %v3031 = vunpack.c.l.b16 %v561
    %v3032 = vunpack.c.h.b16 %v561
    %v3033 = vunpack.c.l.b16 %v562
    %v3034 = vunpack.c.h.b16 %v562
    %v3035 = vunpack.c.l.b16 %v563
    %v3036 = vunpack.c.h.b16 %v563
    %v3037 = vunpack.c.l.b16 %v564
    %v3038 = vunpack.c.h.b16 %v564
    %v3039 = vunpack.c.l.b16 %v565
    %v3040 = vunpack.c.h.b16 %v565
    %v3041 = vunpack.c.l.b16 %v566
    %v3042 = vunpack.c.h.b16 %v566
    %v3043 = vunpack.c.l.b16 %v567
    %v3044 = vunpack.c.h.b16 %v567
    %v3045 = vunpack.c.l.b16 %v568
    %v3046 = vunpack.c.h.b16 %v568
    %v3047 = vunpack.c.l.b16 %v569
    %v3048 = vunpack.c.h.b16 %v569
    %v3049 = vunpack.c.l.b16 %v570
    %v3050 = vunpack.c.h.b16 %v570
    %v3051 = vunpack.c.l.b16 %v571
    %v3052 = vunpack.c.h.b16 %v571
    %v3053 = vunpack.c.l.b16 %v572
    %v3054 = vunpack.c.h.b16 %v572
    %v3055 = vunpack.c.l.b16 %v573
    %v3056 = vunpack.c.h.b16 %v573
    %v3057 = vunpack.c.l.b16 %v574
    %v3058 = vunpack.c.h.b16 %v574
    %v3059 = vunpack.c.l.b16 %v575
    %v3060 = vunpack.c.h.b16 %v575
    %v3061 = vunpack.c.l.b16 %v576
    %v3062 = vunpack.c.h.b16 %v576
    %v3063 = vunpack.c.l.b16 %v577
    %v3064 = vunpack.c.h.b16 %v577
    %v3065 = vunpack.c.l.b16 %v578
    %v3066 = vunpack.c.h.b16 %v578
    %v3067 = vunpack.c.l.b16 %v579
    %v3068 = vunpack.c.h.b16 %v579
    %v3069 = vunpack.c.l.b16 %v580
    %v3070 = vunpack.c.h.b16 %v580
    %v3071 = vunpack.c.l.b16 %v581
    %v3072 = vunpack.c.h.b16 %v581
    %v3073 = vunpack.c.l.b16 %v582
    %v3074 = vunpack.c.h.b16 %v582
    %v3075 = vunpack.c.l.b16 %v583
    %v3076 = vunpack.c.h.b16 %v583
    %v3077 = vunpack.c.l.b16 %v584
    %v3078 = vunpack.c.h.b16 %v584
    %v3079 = vunpack.c.l.b16 %v585
    %v3080 = vunpack.c.h.b16 %v585
    %v3081 = vunpack.c.l.b16 %v586
    %v3082 = vunpack.c.h.b16 %v586
    %v3083 = vunpack.c.l.b16 %v587
    %v3084 = vunpack.c.h.b16 %v587
    %v3085 = vunpack.c.l.b16 %v588
    %v3086 = vunpack.c.h.b16 %v588
    %v3087 = vunpack.c.l.b16 %v589
    %v3088 = vunpack.c.h.b16 %v589
    %v3089 = vunpack.c.l.b16 %v590
    %v3090 = vunpack.c.h.b16 %v590
    %v3091 = vunpack.c.l.b16 %v591
    %v3092 = vunpack.c.h.b16 %v591
    %v3093 = vunpack.c.l.b16 %v592
    %v3094 = vunpack.c.h.b16 %v592
    %v3095 = vunpack.c.l.b16 %v593
    %v3096 = vunpack.c.h.b16 %v593
    %v3097 = vunpack.c.l.b16 %v594
    %v3098 = vunpack.c.h.b16 %v594
    %v3099 = vunpack.c.l.b16 %v595
    %v3100 = vunpack.c.h.b16 %v595
    %v3101 = vunpack.c.l.b16 %v596
    %v3102 = vunpack.c.h.b16 %v596
    %v3103 = vunpack.c.l.b16 %v597
    %v3104 = vunpack.c.h.b16 %v597
    %v3105 = vunpack.c.l.b16 %v598
    %v3106 = vunpack.c.h.b16 %v598
    %v3107 = vunpack.c.l.b16 %v599
    %v3108 = vunpack.c.h.b16 %v599
    %v3109 = vunpack.c.l.b16 %v600
    %v3110 = vunpack.c.h.b16 %v600
    %v3111 = vunpack.c.l.b16 %v601
    %v3112 = vunpack.c.h.b16 %v601
    %v3113 = vunpack.c.l.b16 %v602
    %v3114 = vunpack.c.h.b16 %v602
    %v3115 = vunpack.c.l.b16 %v603
    %v3116 = vunpack.c.h.b16 %v603
    %v3117 = vunpack.c.l.b16 %v604
    %v3118 = vunpack.c.h.b16 %v604
    %v3119 = vunpack.c.l.b16 %v605
    %v3120 = vunpack.c.h.b16 %v605
    %v3121 = vunpack.c.l.b16 %v606
    %v3122 = vunpack.c.h.b16 %v606
    %v3123 = vunpack.c.l.b16 %v607
    %v3124 = vunpack.c.h.b16 %v607
    %v3125 = vunpack.c.l.b16 %v608
    %v3126 = vunpack.c.h.b16 %v608
    %v3127 = vunpack.c.l.b16 %v609
    %v3128 = vunpack.c.h.b16 %v609
    %v3129 = vunpack.c.l.b16 %v610
    %v3130 = vunpack.c.h.b16 %v610
    %v3131 = vunpack.c.l.b16 %v611
    %v3132 = vunpack.c.h.b16 %v611
    %v3133 = vunpack.c.l.b16 %v612
    %v3134 = vunpack.c.h.b16 %v612
    %v3135 = vunpack.c.l.b16 %v613
    %v3136 = vunpack.c.h.b16 %v613
    %v3137 = vunpack.c.l.b16 %v614
    %v3138 = vunpack.c.h.b16 %v614
    %v3139 = vunpack.c.l.b16 %v615
    %v3140 = vunpack.c.h.b16 %v615
    %v3141 = vunpack.c.l.b16 %v616
    %v3142 = vunpack.c.h.b16 %v616
    %v3143 = vunpack.c.l.b16 %v617
    %v3144 = vunpack.c.h.b16 %v617
    %v3145 = vunpack.c.l.b16 %v618
    %v3146 = vunpack.c.h.b16 %v618
    %v3147 = vunpack.c.l.b16 %v619
    %v3148 = vunpack.c.h.b16 %v619
    %v3149 = vunpack.c.l.b16 %v620
    %v3150 = vunpack.c.h.b16 %v620
    %v3151 = vunpack.c.l.b16 %v621
    %v3152 = vunpack.c.h.b16 %v621
    %v3153 = vunpack.c.l.b16 %v622
    %v3154 = vunpack.c.h.b16 %v622
    %v3155 = vunpack.c.l.b16 %v623
    %v3156 = vunpack.c.h.b16 %v623
    %v3157 = vunpack.c.l.b16 %v624
    %v3158 = vunpack.c.h.b16 %v624
    %v3159 = vunpack.c.l.b16 %v625
    %v3160 = vunpack.c.h.b16 %v625
    %v3161 = vunpack.c.l.b16 %v626
    %v3162 = vunpack.c.h.b16 %v626
    %v3163 = vunpack.c.l.b16 %v627
    %v3164 = vunpack.c.h.b16 %v627
    %v3165 = vunpack.c.l.b16 %v628
    %v3166 = vunpack.c.h.b16 %v628
    %v3167 = vunpack.c.l.b16 %v629
    %v3168 = vunpack.c.h.b16 %v629
    %v3169 = vunpack.c.l.b16 %v630
    %v3170 = vunpack.c.h.b16 %v630
    %v3171 = vunpack.c.l.b16 %v631
    %v3172 = vunpack.c.h.b16 %v631
    %v3173 = vunpack.c.l.b16 %v632
    %v3174 = vunpack.c.h.b16 %v632
    %v3175 = vunpack.c.l.b16 %v633
    %v3176 = vunpack.c.h.b16 %v633
    %v3177 = vunpack.c.l.b16 %v634
    %v3178 = vunpack.c.h.b16 %v634
    %v3179 = vunpack.c.l.b16 %v635
    %v3180 = vunpack.c.h.b16 %v635
    %v3181 = vunpack.c.l.b16 %v636
    %v3182 = vunpack.c.h.b16 %v636
    %v3183 = vunpack.c.l.b16 %v637
    %v3184 = vunpack.c.h.b16 %v637
    %v3185 = vunpack.c.l.b16 %v638
    %v3186 = vunpack.c.h.b16 %v638
    %v3187 = vunpack.c.l.b16 %v639
    %v3188 = vunpack.c.h.b16 %v639
    %v3189 = vunpack.c.l.b16 %v640
    %v3190 = vunpack.c.h.b16 %v640
    %v3191 = vunpack.c.l.b16 %v641
    %v3192 = vunpack.c.h.b16 %v641
    %v3193 = vunpack.c.l.b16 %v642
    %v3194 = vunpack.c.h.b16 %v642
    %v3195 = vunpack.c.l.b16 %v643
    %v3196 = vunpack.c.h.b16 %v643
    %v3197 = vunpack.c.l.b16 %v644
    %v3198 = vunpack.c.h.b16 %v644
    %v3199 = vunpack.c.l.b16 %v645
    %v3200 = vunpack.c.h.b16 %v645
    %v3201 = vunpack.c.l.b16 %v646
    %v3202 = vunpack.c.h.b16 %v646
    %v3203 = vunpack.c.l.b16 %v647
    %v3204 = vunpack.c.h.b16 %v647
    %v3205 = vunpack.c.l.b16 %v648
    %v3206 = vunpack.c.h.b16 %v648
    %v3207 = vunpack.c.l.b16 %v649
    %v3208 = vunpack.c.h.b16 %v649
    %v3209 = vunpack.c.l.b16 %v650
    %v3210 = vunpack.c.h.b16 %v650
    %v3211 = vunpack.c.l.b16 %v651
    %v3212 = vunpack.c.h.b16 %v651
    %v3213 = vunpack.c.l.b16 %v652
    %v3214 = vunpack.c.h.b16 %v652
    %v3215 = vunpack.c.l.b16 %v653
    %v3216 = vunpack.c.h.b16 %v653
    %v3217 = vunpack.c.l.b16 %v654
    %v3218 = vunpack.c.h.b16 %v654
    %v3219 = vunpack.c.l.b16 %v655
    %v3220 = vunpack.c.h.b16 %v655
    %v3221 = vunpack.c.l.b16 %v656
    %v3222 = vunpack.c.h.b16 %v656
    %v3223 = vunpack.c.l.b16 %v657
    %v3224 = vunpack.c.h.b16 %v657
    %v3225 = vunpack.c.l.b16 %v658
    %v3226 = vunpack.c.h.b16 %v658
    %v3227 = vunpack.c.l.b16 %v659
    %v3228 = vunpack.c.h.b16 %v659
    %v3229 = vunpack.c.l.b16 %v660
    %v3230 = vunpack.c.h.b16 %v660
    %v3231 = vunpack.c.l.b16 %v661
    %v3232 = vunpack.c.h.b16 %v661
    %v3233 = vunpack.c.l.b16 %v662
    %v3234 = vunpack.c.h.b16 %v662
    %v3235 = vunpack.c.l.b16 %v663
    %v3236 = vunpack.c.h.b16 %v663
    %v3237 = vunpack.c.l.b16 %v664
    %v3238 = vunpack.c.h.b16 %v664
    %v3239 = vunpack.c.l.b16 %v665
    %v3240 = vunpack.c.h.b16 %v665
    %v3241 = vunpack.c.l.b16 %v666
    %v3242 = vunpack.c.h.b16 %v666
    %v3243 = vunpack.c.l.b16 %v667
    %v3244 = vunpack.c.h.b16 %v667
    %v3245 = vunpack.c.l.b16 %v668
    %v3246 = vunpack.c.h.b16 %v668
    %v3247 = vunpack.c.l.b16 %v669
    %v3248 = vunpack.c.h.b16 %v669
    %v3249 = vunpack.c.l.b16 %v670
    %v3250 = vunpack.c.h.b16 %v670
    %v3251 = vunpack.c.l.b16 %v671
    %v3252 = vunpack.c.h.b16 %v671
    %v3253 = vunpack.c.l.b16 %v672
    %v3254 = vunpack.c.h.b16 %v672
    %v3255 = vunpack.c.l.b16 %v673
    %v3256 = vunpack.c.h.b16 %v673
    %v3257 = vunpack.c.l.b16 %v674
    %v3258 = vunpack.c.h.b16 %v674
    %v3259 = vunpack.c.l.b16 %v675
    %v3260 = vunpack.c.h.b16 %v675
    %v3261 = vunpack.c.l.b16 %v676
    %v3262 = vunpack.c.h.b16 %v676
    %v3263 = vunpack.c.l.b16 %v677
    %v3264 = vunpack.c.h.b16 %v677
    %v3265 = vunpack.c.l.b16 %v678
    %v3266 = vunpack.c.h.b16 %v678
    %v3267 = vunpack.c.l.b16 %v679
    %v3268 = vunpack.c.h.b16 %v679
    %v3269 = vunpack.c.l.b16 %v680
    %v3270 = vunpack.c.h.b16 %v680
    %v3271 = vunpack.c.l.b16 %v681
    %v3272 = vunpack.c.h.b16 %v681
    %v3273 = vunpack.c.l.b16 %v682
    %v3274 = vunpack.c.h.b16 %v682
    %v3275 = vunpack.c.l.b16 %v683
    %v3276 = vunpack.c.h.b16 %v683
    %v3277 = vunpack.c.l.b16 %v684
    %v3278 = vunpack.c.h.b16 %v684
    %v3279 = vunpack.c.l.b16 %v685
    %v3280 = vunpack.c.h.b16 %v685
    %v3281 = vunpack.c.l.b16 %v686
    %v3282 = vunpack.c.h.b16 %v686
    %v3283 = vunpack.c.l.b16 %v687
    %v3284 = vunpack.c.h.b16 %v687
    %v3285 = vunpack.c.l.b16 %v688
    %v3286 = vunpack.c.h.b16 %v688
    %v3287 = vunpack.c.l.b16 %v689
    %v3288 = vunpack.c.h.b16 %v689
    %v3289 = vunpack.c.l.b16 %v690
    %v3290 = vunpack.c.h.b16 %v690
    %v3291 = vunpack.c.l.b16 %v691
    %v3292 = vunpack.c.h.b16 %v691
    %v3293 = vunpack.c.l.b16 %v692
    %v3294 = vunpack.c.h.b16 %v692
    %v3295 = vunpack.c.l.b16 %v693
    %v3296 = vunpack.c.h.b16 %v693
    %v3297 = vunpack.c.l.b16 %v694
    %v3298 = vunpack.c.h.b16 %v694
    %v3299 = vunpack.c.l.b16 %v695
    %v3300 = vunpack.c.h.b16 %v695
    %v3301 = vunpack.c.l.b16 %v696
    %v3302 = vunpack.c.h.b16 %v696
    %v3303 = vunpack.c.l.b16 %v697
    %v3304 = vunpack.c.h.b16 %v697
    %v3305 = vunpack.c.l.b16 %v698
    %v3306 = vunpack.c.h.b16 %v698
    %v3307 = vunpack.c.l.b16 %v699
    %v3308 = vunpack.c.h.b16 %v699
    %v3309 = vunpack.c.l.b16 %v700
    %v3310 = vunpack.c.h.b16 %v700
    %v3311 = vunpack.c.l.b16 %v701
    %v3312 = vunpack.c.h.b16 %v701
    %v3313 = vunpack.c.l.b16 %v702
    %v3314 = vunpack.c.h.b16 %v702
    %v3315 = vunpack.c.l.b16 %v703
    %v3316 = vunpack.c.h.b16 %v703
    %v3317 = vunpack.c.l.b16 %v704
    %v3318 = vunpack.c.h.b16 %v704
    %v3319 = vunpack.c.l.b16 %v705
    %v3320 = vunpack.c.h.b16 %v705
    %v3321 = vunpack.c.l.b16 %v706
    %v3322 = vunpack.c.h.b16 %v706
    %v3323 = vunpack.c.l.b16 %v707
    %v3324 = vunpack.c.h.b16 %v707
    %v3325 = vunpack.c.l.b16 %v708
    %v3326 = vunpack.c.h.b16 %v708
    %v3327 = vunpack.c.l.b16 %v709
    %v3328 = vunpack.c.h.b16 %v709
    %v3329 = vunpack.c.l.b16 %v710
    %v3330 = vunpack.c.h.b16 %v710
    %v3331 = vunpack.c.l.b16 %v711
    %v3332 = vunpack.c.h.b16 %v711
    %v3333 = vunpack.c.l.b16 %v712
    %v3334 = vunpack.c.h.b16 %v712
    %v3335 = vunpack.c.l.b16 %v713
    %v3336 = vunpack.c.h.b16 %v713
    %v3337 = vunpack.c.l.b16 %v714
    %v3338 = vunpack.c.h.b16 %v714
    %v3339 = vunpack.c.l.b16 %v715
    %v3340 = vunpack.c.h.b16 %v715
    %v3341 = vunpack.c.l.b16 %v716
    %v3342 = vunpack.c.h.b16 %v716
    %v3343 = vunpack.c.l.b16 %v717
    %v3344 = vunpack.c.h.b16 %v717
    %v3345 = vunpack.c.l.b16 %v718
    %v3346 = vunpack.c.h.b16 %v718
    %v3347 = vunpack.c.l.b16 %v719
    %v3348 = vunpack.c.h.b16 %v719
    %v3349 = vunpack.c.l.b16 %v720
    %v3350 = vunpack.c.h.b16 %v720
    %v3351 = vunpack.c.l.b16 %v721
    %v3352 = vunpack.c.h.b16 %v721
    %v3353 = vunpack.c.l.b16 %v722
    %v3354 = vunpack.c.h.b16 %v722
    %v3355 = vunpack.c.l.b16 %v723
    %v3356 = vunpack.c.h.b16 %v723
    %v3357 = vunpack.c.l.b16 %v724
    %v3358 = vunpack.c.h.b16 %v724
    %v3359 = vunpack.c.l.b16 %v725
    %v3360 = vunpack.c.h.b16 %v725
    %v3361 = vunpack.c.l.b16 %v726
    %v3362 = vunpack.c.h.b16 %v726
    %v3363 = vunpack.c.l.b16 %v727
    %v3364 = vunpack.c.h.b16 %v727
    %v3365 = vunpack.c.l.b16 %v728
    %v3366 = vunpack.c.h.b16 %v728
    %v3367 = vunpack.c.l.b16 %v729
    %v3368 = vunpack.c.h.b16 %v729
    %v3369 = vunpack.c.l.b16 %v730
    %v3370 = vunpack.c.h.b16 %v730
    %v3371 = vunpack.c.l.b16 %v731
    %v3372 = vunpack.c.h.b16 %v731
    %v3373 = vunpack.c.l.b16 %v732
    %v3374 = vunpack.c.h.b16 %v732
    %v3375 = vunpack.c.l.b16 %v733
    %v3376 = vunpack.c.h.b16 %v733
    %v3377 = vunpack.c.l.b16 %v734
    %v3378 = vunpack.c.h.b16 %v734
    %v3379 = vunpack.c.l.b16 %v735
    %v3380 = vunpack.c.h.b16 %v735
    %v3381 = vunpack.c.l.b16 %v736
    %v3382 = vunpack.c.h.b16 %v736
    %v3383 = vunpack.c.l.b16 %v737
    %v3384 = vunpack.c.h.b16 %v737
    %v3385 = vunpack.c.l.b16 %v738
    %v3386 = vunpack.c.h.b16 %v738
    %v3387 = vunpack.c.l.b16 %v739
    %v3388 = vunpack.c.h.b16 %v739
    %v3389 = vunpack.c.l.b16 %v740
    %v3390 = vunpack.c.h.b16 %v740
    %v3391 = vunpack.c.l.b16 %v741
    %v3392 = vunpack.c.h.b16 %v741
    %v3393 = vunpack.c.l.b16 %v742
    %v3394 = vunpack.c.h.b16 %v742
    %v3395 = vunpack.c.l.b16 %v743
    %v3396 = vunpack.c.h.b16 %v743
    %v3397 = vunpack.c.l.b16 %v744
    %v3398 = vunpack.c.h.b16 %v744
    %v3399 = vunpack.c.l.b16 %v745
    %v3400 = vunpack.c.h.b16 %v745
    %v3401 = vunpack.c.l.b16 %v746
    %v3402 = vunpack.c.h.b16 %v746
    %v3403 = vunpack.c.l.b16 %v747
    %v3404 = vunpack.c.h.b16 %v747
    %v3405 = vunpack.c.l.b16 %v748
    %v3406 = vunpack.c.h.b16 %v748
    %v3407 = vunpack.c.l.b16 %v749
    %v3408 = vunpack.c.h.b16 %v749
    %v3409 = vunpack.c.l.b16 %v750
    %v3410 = vunpack.c.h.b16 %v750
    %v3411 = vunpack.c.l.b16 %v751
    %v3412 = vunpack.c.h.b16 %v751
    %v3413 = vunpack.c.l.b16 %v752
    %v3414 = vunpack.c.h.b16 %v752
    %v3415 = vunpack.c.l.b16 %v753
    %v3416 = vunpack.c.h.b16 %v753
    %v3417 = vunpack.c.l.b16 %v754
    %v3418 = vunpack.c.h.b16 %v754
    %v3419 = vunpack.c.l.b16 %v755
    %v3420 = vunpack.c.h.b16 %v755
    %v3421 = vunpack.c.l.b16 %v756
    %v3422 = vunpack.c.h.b16 %v756
    %v3423 = vunpack.c.l.b16 %v757
    %v3424 = vunpack.c.h.b16 %v757
    %v3425 = vunpack.c.l.b16 %v758
    %v3426 = vunpack.c.h.b16 %v758
    %v3427 = vunpack.c.l.b16 %v759
    %v3428 = vunpack.c.h.b16 %v759
    %v3429 = vunpack.c.l.b16 %v760
    %v3430 = vunpack.c.h.b16 %v760
    %v3431 = vunpack.c.l.b16 %v761
    %v3432 = vunpack.c.h.b16 %v761
    %v3433 = vunpack.c.l.b16 %v762
    %v3434 = vunpack.c.h.b16 %v762
    %v3435 = vunpack.c.l.b16 %v763
    %v3436 = vunpack.c.h.b16 %v763
    %v3437 = vunpack.c.l.b16 %v764
    %v3438 = vunpack.c.h.b16 %v764
    %v3439 = vunpack.c.l.b16 %v765
    %v3440 = vunpack.c.h.b16 %v765
    %v3441 = vunpack.c.l.b16 %v766
    %v3442 = vunpack.c.h.b16 %v766
    %v3443 = vunpack.c.l.b16 %v767
    %v3444 = vunpack.c.h.b16 %v767
    %v3445 = vunpack.c.l.b16 %v768
    %v3446 = vunpack.c.h.b16 %v768
    %v3447 = vunpack.c.l.b16 %v769
    %v3448 = vunpack.c.h.b16 %v769
    %v3449 = vunpack.c.l.b16 %v770
    %v3450 = vunpack.c.h.b16 %v770
    %v3451 = vunpack.c.l.b16 %v771
    %v3452 = vunpack.c.h.b16 %v771
    %v3453 = vunpack.c.l.b16 %v772
    %v3454 = vunpack.c.h.b16 %v772
    %v3455 = vunpack.c.l.b16 %v773
    %v3456 = vunpack.c.h.b16 %v773
    %v3457 = vunpack.c.l.b16 %v774
    %v3458 = vunpack.c.h.b16 %v774
    %v3459 = vunpack.c.l.b16 %v775
    %v3460 = vunpack.c.h.b16 %v775
    %v3461 = vunpack.c.l.b16 %v776
    %v3462 = vunpack.c.h.b16 %v776
    %v3463 = vunpack.c.l.b16 %v777
    %v3464 = vunpack.c.h.b16 %v777
    %v3465 = vunpack.c.l.b16 %v778
    %v3466 = vunpack.c.h.b16 %v778
    %v3467 = vunpack.c.l.b16 %v779
    %v3468 = vunpack.c.h.b16 %v779
    %v3469 = vunpack.c.l.b16 %v780
    %v3470 = vunpack.c.h.b16 %v780
    %v3471 = vunpack.c.l.b16 %v781
    %v3472 = vunpack.c.h.b16 %v781
    %v3473 = vunpack.c.l.b16 %v782
    %v3474 = vunpack.c.h.b16 %v782
    %v3475 = vunpack.c.l.b16 %v783
    %v3476 = vunpack.c.h.b16 %v783
    %v3477 = vunpack.c.l.b16 %v784
    %v3478 = vunpack.c.h.b16 %v784
    %v3479 = vunpack.c.l.b16 %v785
    %v3480 = vunpack.c.h.b16 %v785
    %v3481 = vunpack.c.l.b16 %v786
    %v3482 = vunpack.c.h.b16 %v786
    %v3483 = vunpack.c.l.b16 %v787
    %v3484 = vunpack.c.h.b16 %v787
    %v3485 = vunpack.c.l.b16 %v788
    %v3486 = vunpack.c.h.b16 %v788
    %v3487 = vunpack.c.l.b16 %v789
    %v3488 = vunpack.c.h.b16 %v789
    %v3489 = vunpack.c.l.b16 %v790
    %v3490 = vunpack.c.h.b16 %v790
    %v3491 = vunpack.c.l.b16 %v791
    %v3492 = vunpack.c.h.b16 %v791
    %v3493 = vunpack.c.l.b16 %v792
    %v3494 = vunpack.c.h.b16 %v792
    %v3495 = vunpack.c.l.b16 %v793
    %v3496 = vunpack.c.h.b16 %v793
    %v3497 = vunpack.c.l.b16 %v794
    %v3498 = vunpack.c.h.b16 %v794
    %v3499 = vunpack.c.l.b16 %v795
    %v3500 = vunpack.c.h.b16 %v795
    %v3501 = vunpack.c.l.b16 %v796
    %v3502 = vunpack.c.h.b16 %v796
    %v3503 = vunpack.c.l.b16 %v797
    %v3504 = vunpack.c.h.b16 %v797
    %v3505 = vunpack.c.l.b16 %v798
    %v3506 = vunpack.c.h.b16 %v798
    %v3507 = vunpack.c.l.b16 %v799
    %v3508 = vunpack.c.h.b16 %v799
    %v3509 = vunpack.c.l.b16 %v800
    %v3510 = vunpack.c.h.b16 %v800
    %v3511 = vunpack.c.l.b16 %v801
    %v3512 = vunpack.c.h.b16 %v801
    %v3513 = vunpack.c.l.b16 %v802
    %v3514 = vunpack.c.h.b16 %v802
    %v3515 = vunpack.c.l.b16 %v803
    %v3516 = vunpack.c.h.b16 %v803
    %v3517 = vunpack.c.l.b16 %v804
    %v3518 = vunpack.c.h.b16 %v804
    %v3519 = vunpack.c.l.b16 %v805
    %v3520 = vunpack.c.h.b16 %v805
    %v3521 = vunpack.c.l.b16 %v806
    %v3522 = vunpack.c.h.b16 %v806
    %v3523 = vunpack.c.l.b16 %v807
    %v3524 = vunpack.c.h.b16 %v807
    %v3525 = vunpack.c.l.b16 %v808
    %v3526 = vunpack.c.h.b16 %v808
    %v3527 = vunpack.c.l.b16 %v809
    %v3528 = vunpack.c.h.b16 %v809
    %v3529 = vunpack.c.l.b16 %v810
    %v3530 = vunpack.c.h.b16 %v810
    %v3531 = vunpack.c.l.b16 %v811
    %v3532 = vunpack.c.h.b16 %v811
    %v3533 = vunpack.c.l.b16 %v812
    %v3534 = vunpack.c.h.b16 %v812
    %v3535 = vunpack.c.l.b16 %v813
    %v3536 = vunpack.c.h.b16 %v813
    %v3537 = vunpack.c.l.b16 %v814
    %v3538 = vunpack.c.h.b16 %v814
    %v3539 = vunpack.c.l.b16 %v815
    %v3540 = vunpack.c.h.b16 %v815
    %v3541 = vunpack.c.l.b16 %v816
    %v3542 = vunpack.c.h.b16 %v816
    %v3543 = vunpack.c.l.b16 %v817
    %v3544 = vunpack.c.h.b16 %v817
    %v3545 = vunpack.c.l.b16 %v818
    %v3546 = vunpack.c.h.b16 %v818
    %v3547 = vunpack.c.l.b16 %v819
    %v3548 = vunpack.c.h.b16 %v819
    %v3549 = vunpack.c.l.b16 %v820
    %v3550 = vunpack.c.h.b16 %v820
    %v3551 = vunpack.c.l.b16 %v821
    %v3552 = vunpack.c.h.b16 %v821
    %v3553 = vunpack.c.l.b16 %v822
    %v3554 = vunpack.c.h.b16 %v822
    %v3555 = vunpack.c.l.b16 %v823
    %v3556 = vunpack.c.h.b16 %v823
    %v3557 = vunpack.c.l.b16 %v824
    %v3558 = vunpack.c.h.b16 %v824
    %v3559 = vunpack.c.l.b16 %v825
    %v3560 = vunpack.c.h.b16 %v825
    %v3561 = vunpack.c.l.b16 %v826
    %v3562 = vunpack.c.h.b16 %v826
    %v3563 = vunpack.c.l.b16 %v827
    %v3564 = vunpack.c.h.b16 %v827
    %v3565 = vunpack.c.l.b16 %v828
    %v3566 = vunpack.c.h.b16 %v828
    %v3567 = vunpack.c.l.b16 %v829
    %v3568 = vunpack.c.h.b16 %v829
    %v3569 = vunpack.c.l.b16 %v830
    %v3570 = vunpack.c.h.b16 %v830
    %v3571 = vunpack.c.l.b16 %v831
    %v3572 = vunpack.c.h.b16 %v831
    %v3573 = vunpack.c.l.b16 %v832
    %v3574 = vunpack.c.h.b16 %v832
    %v3575 = vunpack.c.l.b16 %v833
    %v3576 = vunpack.c.h.b16 %v833
    %v3577 = vunpack.c.l.b16 %v834
    %v3578 = vunpack.c.h.b16 %v834
    %v3579 = vunpack.c.l.b16 %v835
    %v3580 = vunpack.c.h.b16 %v835
    %v3581 = vunpack.c.l.b16 %v836
    %v3582 = vunpack.c.h.b16 %v836
    %v3583 = vunpack.c.l.b16 %v837
    %v3584 = vunpack.c.h.b16 %v837
    %v3585 = vunpack.c.l.b16 %v838
    %v3586 = vunpack.c.h.b16 %v838
    %v3587 = vunpack.c.l.b16 %v839
    %v3588 = vunpack.c.h.b16 %v839
    %v3589 = vunpack.c.l.b16 %v840
    %v3590 = vunpack.c.h.b16 %v840
    %v3591 = vunpack.c.l.b16 %v841
    %v3592 = vunpack.c.h.b16 %v841
    %v3593 = vunpack.c.l.b16 %v842
    %v3594 = vunpack.c.h.b16 %v842
    %v3595 = vunpack.c.l.b16 %v843
    %v3596 = vunpack.c.h.b16 %v843
    %v3597 = vunpack.c.l.b16 %v844
    %v3598 = vunpack.c.h.b16 %v844
    %v3599 = vunpack.c.l.b16 %v845
    %v3600 = vunpack.c.h.b16 %v845
    %v3601 = vunpack.c.l.b16 %v846
    %v3602 = vunpack.c.h.b16 %v846
    %v3603 = vunpack.c.l.b16 %v847
    %v3604 = vunpack.c.h.b16 %v847
    %v3605 = vunpack.c.l.b16 %v848
    %v3606 = vunpack.c.h.b16 %v848
    %v3607 = vunpack.c.l.b16 %v849
    %v3608 = vunpack.c.h.b16 %v849
    %v3609 = vunpack.c.l.b16 %v850
    %v3610 = vunpack.c.h.b16 %v850
    %v3611 = vunpack.c.l.b16 %v851
    %v3612 = vunpack.c.h.b16 %v851
    %v3613 = vunpack.c.l.b16 %v852
    %v3614 = vunpack.c.h.b16 %v852
    %v3615 = vunpack.c.l.b16 %v853
    %v3616 = vunpack.c.h.b16 %v853
    %v3617 = vunpack.c.l.b16 %v854
    %v3618 = vunpack.c.h.b16 %v854
    %v3619 = vunpack.c.l.b16 %v855
    %v3620 = vunpack.c.h.b16 %v855
    %v3621 = vunpack.c.l.b16 %v856
    %v3622 = vunpack.c.h.b16 %v856
    %v3623 = vunpack.c.l.b16 %v857
    %v3624 = vunpack.c.h.b16 %v857
    %v3625 = vunpack.c.l.b16 %v858
    %v3626 = vunpack.c.h.b16 %v858
    %v3627 = vunpack.c.l.b16 %v859
    %v3628 = vunpack.c.h.b16 %v859
    %v3629 = vunpack.c.l.b16 %v860
    %v3630 = vunpack.c.h.b16 %v860
    %v3631 = vunpack.c.l.b16 %v861
    %v3632 = vunpack.c.h.b16 %v861
    %v3633 = vunpack.c.l.b16 %v862
    %v3634 = vunpack.c.h.b16 %v862
    %v3635 = vunpack.c.l.b16 %v863
    %v3636 = vunpack.c.h.b16 %v863
    %v3637 = vunpack.c.l.b16 %v864
    %v3638 = vunpack.c.h.b16 %v864
    %v3639 = vunpack.c.l.b16 %v865
    %v3640 = vunpack.c.h.b16 %v865
    %v3641 = vunpack.c.l.b16 %v866
    %v3642 = vunpack.c.h.b16 %v866
    %v3643 = vunpack.c.l.b16 %v867
    %v3644 = vunpack.c.h.b16 %v867
    %v3645 = vunpack.c.l.b16 %v868
    %v3646 = vunpack.c.h.b16 %v868
    %v3647 = vunpack.c.l.b16 %v869
    %v3648 = vunpack.c.h.b16 %v869
    %v3649 = vunpack.c.l.b16 %v870
    %v3650 = vunpack.c.h.b16 %v870
    %v3651 = vunpack.c.l.b16 %v871
    %v3652 = vunpack.c.h.b16 %v871
    %v3653 = vunpack.c.l.b16 %v872
    %v3654 = vunpack.c.h.b16 %v872
    %v3655 = vunpack.c.l.b16 %v873
    %v3656 = vunpack.c.h.b16 %v873
    %v3657 = vunpack.c.l.b16 %v874
    %v3658 = vunpack.c.h.b16 %v874
    %v3659 = vunpack.c.l.b16 %v875
    %v3660 = vunpack.c.h.b16 %v875
    %v3661 = vunpack.c.l.b16 %v876
    %v3662 = vunpack.c.h.b16 %v876
    %v3663 = vunpack.c.l.b16 %v877
    %v3664 = vunpack.c.h.b16 %v877
    %v3665 = vunpack.c.l.b16 %v878
    %v3666 = vunpack.c.h.b16 %v878
    %v3667 = vunpack.c.l.b16 %v879
    %v3668 = vunpack.c.h.b16 %v879
    %v3669 = vunpack.c.l.b16 %v880
    %v3670 = vunpack.c.h.b16 %v880
    %v3671 = vunpack.c.l.b16 %v881
    %v3672 = vunpack.c.h.b16 %v881
    %v3673 = vunpack.c.l.b16 %v882
    %v3674 = vunpack.c.h.b16 %v882
    %v3675 = vunpack.c.l.b16 %v883
    %v3676 = vunpack.c.h.b16 %v883
    %v3677 = vunpack.c.l.b16 %v884
    %v3678 = vunpack.c.h.b16 %v884
    %v3679 = vunpack.c.l.b16 %v885
    %v3680 = vunpack.c.h.b16 %v885
    %v3681 = vunpack.c.l.b16 %v886
    %v3682 = vunpack.c.h.b16 %v886
    %v3683 = vunpack.c.l.b16 %v887
    %v3684 = vunpack.c.h.b16 %v887
    %v3685 = vunpack.c.l.b16 %v888
    %v3686 = vunpack.c.h.b16 %v888
    %v3687 = vunpack.c.l.b16 %v889
    %v3688 = vunpack.c.h.b16 %v889
    %v3689 = vunpack.c.l.b16 %v890
    %v3690 = vunpack.c.h.b16 %v890
    %v3691 = vunpack.c.l.b16 %v891
    %v3692 = vunpack.c.h.b16 %v891
    %v3693 = vunpack.c.l.b16 %v892
    %v3694 = vunpack.c.h.b16 %v892
    %v3695 = vunpack.c.l.b16 %v893
    %v3696 = vunpack.c.h.b16 %v893
    %v3697 = vunpack.c.l.b16 %v894
    %v3698 = vunpack.c.h.b16 %v894
    %v3699 = vunpack.c.l.b16 %v895
    %v3700 = vunpack.c.h.b16 %v895
    %v3701 = vunpack.c.l.b16 %v896
    %v3702 = vunpack.c.h.b16 %v896
    %v3703 = vunpack.c.l.b16 %v897
    %v3704 = vunpack.c.h.b16 %v897
    %v3705 = vunpack.c.l.b16 %v898
    %v3706 = vunpack.c.h.b16 %v898
    %v3707 = vunpack.c.l.b16 %v899
    %v3708 = vunpack.c.h.b16 %v899
    %v3709 = vunpack.c.l.b16 %v900
    %v3710 = vunpack.c.h.b16 %v900
    %v3711 = vunpack.c.l.b16 %v901
    %v3712 = vunpack.c.h.b16 %v901
    %v3713 = vunpack.c.l.b16 %v902
    %v3714 = vunpack.c.h.b16 %v902
    %v3715 = vunpack.c.l.b16 %v903
    %v3716 = vunpack.c.h.b16 %v903
    %v3717 = vunpack.c.l.b16 %v904
    %v3718 = vunpack.c.h.b16 %v904
    %v3719 = vunpack.c.l.b16 %v905
    %v3720 = vunpack.c.h.b16 %v905
    %v3721 = vunpack.c.l.b16 %v906
    %v3722 = vunpack.c.h.b16 %v906
    %v3723 = vunpack.c.l.b16 %v907
    %v3724 = vunpack.c.h.b16 %v907
    %v3725 = vunpack.c.l.b16 %v908
    %v3726 = vunpack.c.h.b16 %v908
    %v3727 = vunpack.c.l.b16 %v909
    %v3728 = vunpack.c.h.b16 %v909
    %v3729 = vunpack.c.l.b16 %v910
    %v3730 = vunpack.c.h.b16 %v910
    %v3731 = vunpack.c.l.b16 %v911
    %v3732 = vunpack.c.h.b16 %v911
    %v3733 = vunpack.c.l.b16 %v912
    %v3734 = vunpack.c.h.b16 %v912
    %v3735 = vunpack.c.l.b16 %v913
    %v3736 = vunpack.c.h.b16 %v913
    %v3737 = vunpack.c.l.b16 %v914
    %v3738 = vunpack.c.h.b16 %v914
    %v3739 = vunpack.c.l.b16 %v915
    %v3740 = vunpack.c.h.b16 %v915
    %v3741 = vunpack.c.l.b16 %v916
    %v3742 = vunpack.c.h.b16 %v916
    %v3743 = vunpack.c.l.b16 %v917
    %v3744 = vunpack.c.h.b16 %v917
    %v3745 = vunpack.c.l.b16 %v918
    %v3746 = vunpack.c.h.b16 %v918
    %v3747 = vunpack.c.l.b16 %v919
    %v3748 = vunpack.c.h.b16 %v919
    %v3749 = vunpack.c.l.b16 %v920
    %v3750 = vunpack.c.h.b16 %v920
    %v3751 = vunpack.c.l.b16 %v921
    %v3752 = vunpack.c.h.b16 %v921
    %v3753 = vunpack.c.l.b16 %v922
    %v3754 = vunpack.c.h.b16 %v922
    %v3755 = vunpack.c.l.b16 %v923
    %v3756 = vunpack.c.h.b16 %v923
    %v3757 = vunpack.c.l.b16 %v924
    %v3758 = vunpack.c.h.b16 %v924
    %v3759 = vunpack.c.l.b16 %v925
    %v3760 = vunpack.c.h.b16 %v925
    %v3761 = vunpack.c.l.b16 %v926
    %v3762 = vunpack.c.h.b16 %v926
    %v3763 = vunpack.c.l.b16 %v927
    %v3764 = vunpack.c.h.b16 %v927
    %v3765 = vunpack.c.l.b16 %v928
    %v3766 = vunpack.c.h.b16 %v928
    %v3767 = vunpack.c.l.b16 %v929
    %v3768 = vunpack.c.h.b16 %v929
    %v3769 = vunpack.c.l.b16 %v930
    %v3770 = vunpack.c.h.b16 %v930
    %v3771 = vunpack.c.l.b16 %v931
    %v3772 = vunpack.c.h.b16 %v931
    %v3773 = vunpack.c.l.b16 %v932
    %v3774 = vunpack.c.h.b16 %v932
    %v3775 = vunpack.c.l.b16 %v933
    %v3776 = vunpack.c.h.b16 %v933
    %v3777 = vunpack.c.l.b16 %v934
    %v3778 = vunpack.c.h.b16 %v934
    %v3779 = vunpack.c.l.b16 %v935
    %v3780 = vunpack.c.h.b16 %v935
    %v3781 = vunpack.c.l.b16 %v936
    %v3782 = vunpack.c.h.b16 %v936
    %v3783 = vunpack.c.l.b16 %v937
    %v3784 = vunpack.c.h.b16 %v937
    %v3785 = vunpack.c.l.b16 %v938
    %v3786 = vunpack.c.h.b16 %v938
    %v3787 = vunpack.c.l.b16 %v939
    %v3788 = vunpack.c.h.b16 %v939
    %v3789 = vunpack.c.l.b16 %v940
    %v3790 = vunpack.c.h.b16 %v940
    %v3791 = vunpack.c.l.b16 %v941
    %v3792 = vunpack.c.h.b16 %v941
    %v3793 = vunpack.c.l.b16 %v942
    %v3794 = vunpack.c.h.b16 %v942
    %v3795 = vunpack.c.l.b16 %v943
    %v3796 = vunpack.c.h.b16 %v943
    %v3797 = vunpack.c.l.b16 %v944
    %v3798 = vunpack.c.h.b16 %v944
    %v3799 = vunpack.c.l.b16 %v945
    %v3800 = vunpack.c.h.b16 %v945
    %v3801 = vunpack.c.l.b16 %v946
    %v3802 = vunpack.c.h.b16 %v946
    %v3803 = vunpack.c.l.b16 %v947
    %v3804 = vunpack.c.h.b16 %v947
    %v3805 = vunpack.c.l.b16 %v948
    %v3806 = vunpack.c.h.b16 %v948
    %v3807 = vunpack.c.l.b16 %v949
    %v3808 = vunpack.c.h.b16 %v949
    %v3809 = vunpack.c.l.b16 %v950
    %v3810 = vunpack.c.h.b16 %v950
    %v3811 = vunpack.c.l.b16 %v951
    %v3812 = vunpack.c.h.b16 %v951
    %v3813 = vunpack.c.l.b16 %v952
    %v3814 = vunpack.c.h.b16 %v952
    %v3815 = vunpack.c.l.b16 %v953
    %v3816 = vunpack.c.h.b16 %v953
    %v3817 = vunpack.c.l.b16 %v954
    %v3818 = vunpack.c.h.b16 %v954
    %v3819 = vunpack.c.l.b16 %v955
    %v3820 = vunpack.c.h.b16 %v955
    %v3821 = vunpack.c.l.b16 %v956
    %v3822 = vunpack.c.h.b16 %v956
    %v3823 = vunpack.c.l.b16 %v957
    %v3824 = vunpack.c.h.b16 %v957
    %v3825 = vunpack.c.l.b16 %v958
    %v3826 = vunpack.c.h.b16 %v958
    %v3827 = vunpack.c.l.b16 %v959
    %v3828 = vunpack.c.h.b16 %v959
    %v3829 = vunpack.c.l.b16 %v960
    %v3830 = vunpack.c.h.b16 %v960
    %v3831 = vunpack.c.l.b16 %v961
    %v3832 = vunpack.c.h.b16 %v961
    %v3833 = vunpack.c.l.b16 %v962
    %v3834 = vunpack.c.h.b16 %v962
    %v3835 = vunpack.c.l.b16 %v963
    %v3836 = vunpack.c.h.b16 %v963
    %v3837 = vunpack.c.l.b16 %v964
    %v3838 = vunpack.c.h.b16 %v964
    %v3839 = vunpack.c.l.b16 %v965
    %v3840 = vunpack.c.h.b16 %v965
    %v3841 = vunpack.c.l.b16 %v966
    %v3842 = vunpack.c.h.b16 %v966
    %v3843 = vunpack.c.l.b16 %v967
    %v3844 = vunpack.c.h.b16 %v967
    %v3845 = vunpack.c.l.b16 %v968
    %v3846 = vunpack.c.h.b16 %v968
    %v3847 = vunpack.c.l.b16 %v969
    %v3848 = vunpack.c.h.b16 %v969
    %v3849 = vunpack.c.l.b16 %v970
    %v3850 = vunpack.c.h.b16 %v970
    %v3851 = vunpack.c.l.b16 %v971
    %v3852 = vunpack.c.h.b16 %v971
    %v3853 = vunpack.c.l.b16 %v972
    %v3854 = vunpack.c.h.b16 %v972
    %v3855 = vunpack.c.l.b16 %v973
    %v3856 = vunpack.c.h.b16 %v973
    %v3857 = vunpack.c.l.b16 %v974
    %v3858 = vunpack.c.h.b16 %v974
    %v3859 = vunpack.c.l.b16 %v975
    %v3860 = vunpack.c.h.b16 %v975
    %v3861 = vunpack.c.l.b16 %v976
    %v3862 = vunpack.c.h.b16 %v976
    %v3863 = vunpack.c.l.b16 %v977
    %v3864 = vunpack.c.h.b16 %v977
    %v3865 = vunpack.c.l.b16 %v978
    %v3866 = vunpack.c.h.b16 %v978
    %v3867 = vunpack.c.l.b16 %v979
    %v3868 = vunpack.c.h.b16 %v979
    %v3869 = vunpack.c.l.b16 %v980
    %v3870 = vunpack.c.h.b16 %v980
    %v3871 = vunpack.c.l.b16 %v981
    %v3872 = vunpack.c.h.b16 %v981
    %v3873 = vunpack.c.l.b16 %v982
    %v3874 = vunpack.c.h.b16 %v982
    %v3875 = vunpack.c.l.b16 %v983
    %v3876 = vunpack.c.h.b16 %v983
    %v3877 = vunpack.c.l.b16 %v984
    %v3878 = vunpack.c.h.b16 %v984
    %v3879 = vunpack.c.l.b16 %v985
    %v3880 = vunpack.c.h.b16 %v985
    %v3881 = vunpack.c.l.b16 %v986
    %v3882 = vunpack.c.h.b16 %v986
    %v3883 = vunpack.c.l.b16 %v987
    %v3884 = vunpack.c.h.b16 %v987
    %v3885 = vunpack.c.l.b16 %v988
    %v3886 = vunpack.c.h.b16 %v988
    %v3887 = vunpack.c.l.b16 %v989
    %v3888 = vunpack.c.h.b16 %v989
    %v3889 = vunpack.c.l.b16 %v990
    %v3890 = vunpack.c.h.b16 %v990
    %v3891 = vunpack.c.l.b16 %v991
    %v3892 = vunpack.c.h.b16 %v991
    %v3893 = vunpack.c.l.b16 %v992
    %v3894 = vunpack.c.h.b16 %v992
    %v3895 = vunpack.c.l.b16 %v993
    %v3896 = vunpack.c.h.b16 %v993
    %v3897 = vunpack.c.l.b16 %v994
    %v3898 = vunpack.c.h.b16 %v994
    %v3899 = vunpack.c.l.b16 %v995
    %v3900 = vunpack.c.h.b16 %v995
    %v3901 = vunpack.c.l.b16 %v996
    %v3902 = vunpack.c.h.b16 %v996
    %v3903 = vunpack.c.l.b16 %v997
    %v3904 = vunpack.c.h.b16 %v997
    %v3905 = vunpack.c.l.b16 %v998
    %v3906 = vunpack.c.h.b16 %v998
    %v3907 = vunpack.c.l.b16 %v999
    %v3908 = vunpack.c.h.b16 %v999
    %v3909 = vunpack.c.l.b16 %v1000
    %v3910 = vunpack.c.h.b16 %v1000
    %v3911 = vunpack.c.l.b16 %v1001
    %v3912 = vunpack.c.h.b16 %v1001
    %v3913 = vunpack.c.l.b16 %v1002
    %v3914 = vunpack.c.h.b16 %v1002
    %v3915 = vunpack.c.l.b16 %v1003
    %v3916 = vunpack.c.h.b16 %v1003
    %v3917 = vunpack.c.l.b16 %v1004
    %v3918 = vunpack.c.h.b16 %v1004
    %v3919 = vunpack.c.l.b16 %v1005
    %v3920 = vunpack.c.h.b16 %v1005
    %v3921 = vunpack.c.l.b16 %v1006
    %v3922 = vunpack.c.h.b16 %v1006
    %v3923 = vunpack.c.l.b16 %v1007
    %v3924 = vunpack.c.h.b16 %v1007
    %v3925 = vunpack.c.l.b16 %v1008
    %v3926 = vunpack.c.h.b16 %v1008
    %v3927 = vunpack.c.l.b16 %v1009
    %v3928 = vunpack.c.h.b16 %v1009
    %v3929 = vunpack.c.l.b16 %v1010
    %v3930 = vunpack.c.h.b16 %v1010
    %v3931 = vunpack.c.l.b16 %v1011
    %v3932 = vunpack.c.h.b16 %v1011
    %v3933 = vunpack.c.l.b16 %v1012
    %v3934 = vunpack.c.h.b16 %v1012
    %v3935 = vunpack.c.l.b16 %v1013
    %v3936 = vunpack.c.h.b16 %v1013
    %v3937 = vunpack.c.l.b16 %v1014
    %v3938 = vunpack.c.h.b16 %v1014
    %v3939 = vunpack.c.l.b16 %v1015
    %v3940 = vunpack.c.h.b16 %v1015
    %v3941 = vunpack.c.l.b16 %v1016
    %v3942 = vunpack.c.h.b16 %v1016
    %v3943 = vunpack.c.l.b16 %v1017
    %v3944 = vunpack.c.h.b16 %v1017
    %v3945 = vunpack.c.l.b16 %v1018
    %v3946 = vunpack.c.h.b16 %v1018
    %v3947 = vunpack.c.l.b16 %v1019
    %v3948 = vunpack.c.h.b16 %v1019
    %v3949 = vunpack.c.l.b16 %v1020
    %v3950 = vunpack.c.h.b16 %v1020
    %v3951 = vunpack.c.l.b16 %v1021
    %v3952 = vunpack.c.h.b16 %v1021
    %v3953 = vunpack.c.l.b16 %v1022
    %v3954 = vunpack.c.h.b16 %v1022
    %v3955 = vunpack.c.l.b16 %v1023
    %v3956 = vunpack.c.h.b16 %v1023
    %v3957 = vunpack.c.l.b16 %v1024
    %v3958 = vunpack.c.h.b16 %v1024
    %v3959 = vunpack.c.l.b16 %v1025
    %v3960 = vunpack.c.h.b16 %v1025
    %v3961 = vunpack.c.l.b16 %v1026
    %v3962 = vunpack.c.h.b16 %v1026
    %v3963 = vunpack.c.l.b16 %v1027
    %v3964 = vunpack.c.h.b16 %v1027
    %v3965 = vunpack.c.l.b16 %v1028
    %v3966 = vunpack.c.h.b16 %v1028
    %v3967 = vunpack.c.l.b16 %v1029
    %v3968 = vunpack.c.h.b16 %v1029
    %v3969 = vunpack.c.l.b16 %v1030
    %v3970 = vunpack.c.h.b16 %v1030
    %v3971 = vunpack.c.l.b16 %v1031
    %v3972 = vunpack.c.h.b16 %v1031
    %v3973 = vunpack.c.l.b16 %v1032
    %v3974 = vunpack.c.h.b16 %v1032
    %v3975 = vunpack.c.l.b16 %v1033
    %v3976 = vunpack.c.h.b16 %v1033
    %v3977 = vunpack.c.l.b16 %v1034
    %v3978 = vunpack.c.h.b16 %v1034
    %v3979 = vunpack.c.l.b16 %v1035
    %v3980 = vunpack.c.h.b16 %v1035
    %v3981 = vunpack.c.l.b16 %v1036
    %v3982 = vunpack.c.h.b16 %v1036
    %v3983 = vunpack.c.l.b16 %v1037
    %v3984 = vunpack.c.h.b16 %v1037
    %v3985 = vunpack.c.l.b16 %v1038
    %v3986 = vunpack.c.h.b16 %v1038
    %v3987 = vunpack.c.l.b16 %v1039
    %v3988 = vunpack.c.h.b16 %v1039
    %v3989 = vunpack.c.l.b16 %v1040
    %v3990 = vunpack.c.h.b16 %v1040
    %v3991 = vunpack.c.l.b16 %v1041
    %v3992 = vunpack.c.h.b16 %v1041
    %v3993 = vunpack.c.l.b16 %v1042
    %v3994 = vunpack.c.h.b16 %v1042
    %v3995 = vunpack.c.l.b16 %v1043
    %v3996 = vunpack.c.h.b16 %v1043
    %v3997 = vunpack.c.l.b16 %v1044
    %v3998 = vunpack.c.h.b16 %v1044
    %v3999 = vunpack.c.l.b16 %v1045
    %v4000 = vunpack.c.h.b16 %v1045
    %v4001 = vunpack.c.l.b16 %v1046
    %v4002 = vunpack.c.h.b16 %v1046
    %v4003 = vunpack.c.l.b16 %v1047
    %v4004 = vunpack.c.h.b16 %v1047
    %v4005 = vunpack.c.l.b16 %v1048
    %v4006 = vunpack.c.h.b16 %v1048
    %v4007 = vunpack.c.l.b16 %v1049
    %v4008 = vunpack.c.h.b16 %v1049
    %v4009 = vunpack.c.l.b16 %v1050
    %v4010 = vunpack.c.h.b16 %v1050
    %v4011 = vunpack.c.l.b16 %v1051
    %v4012 = vunpack.c.h.b16 %v1051
    %v4013 = vunpack.c.l.b16 %v1052
    %v4014 = vunpack.c.h.b16 %v1052
    %v4015 = vunpack.c.l.b16 %v1053
    %v4016 = vunpack.c.h.b16 %v1053
    %v4017 = vunpack.c.l.b16 %v1054
    %v4018 = vunpack.c.h.b16 %v1054
    %v4019 = vunpack.c.l.b16 %v1055
    %v4020 = vunpack.c.h.b16 %v1055
    %v4021 = vunpack.c.l.b16 %v1056
    %v4022 = vunpack.c.h.b16 %v1056
    %v4023 = vunpack.c.l.b16 %v1057
    %v4024 = vunpack.c.h.b16 %v1057
    %v4025 = vunpack.c.l.b16 %v1058
    %v4026 = vunpack.c.h.b16 %v1058
    %v4027 = vunpack.c.l.b16 %v1059
    %v4028 = vunpack.c.h.b16 %v1059
    %v4029 = vunpack.c.l.b16 %v1060
    %v4030 = vunpack.c.h.b16 %v1060
    %v4031 = vunpack.c.l.b16 %v1061
    %v4032 = vunpack.c.h.b16 %v1061
    %v4033 = vunpack.c.l.b16 %v1062
    %v4034 = vunpack.c.h.b16 %v1062
    %v4035 = vunpack.c.l.b16 %v1063
    %v4036 = vunpack.c.h.b16 %v1063
    %v4037 = vunpack.c.l.b16 %v1064
    %v4038 = vunpack.c.h.b16 %v1064
    %v4039 = vunpack.c.l.b16 %v1065
    %v4040 = vunpack.c.h.b16 %v1065
    %v4041 = vunpack.c.l.b16 %v1066
    %v4042 = vunpack.c.h.b16 %v1066
    %v4043 = vunpack.c.l.b16 %v1067
    %v4044 = vunpack.c.h.b16 %v1067
    %v4045 = vunpack.c.l.b16 %v1068
    %v4046 = vunpack.c.h.b16 %v1068
    %v4047 = vunpack.c.l.b16 %v1069
    %v4048 = vunpack.c.h.b16 %v1069
    %v4049 = vunpack.c.l.b16 %v1070
    %v4050 = vunpack.c.h.b16 %v1070
    %v4051 = vunpack.c.l.b16 %v1071
    %v4052 = vunpack.c.h.b16 %v1071
    %v4053 = vunpack.c.l.b16 %v1072
    %v4054 = vunpack.c.h.b16 %v1072
    %v4055 = vunpack.c.l.b16 %v1073
    %v4056 = vunpack.c.h.b16 %v1073
    %v4057 = vunpack.c.l.b16 %v1074
    %v4058 = vunpack.c.h.b16 %v1074
    %v4059 = vunpack.c.l.b16 %v1075
    %v4060 = vunpack.c.h.b16 %v1075
    %v4061 = vunpack.c.l.b16 %v1076
    %v4062 = vunpack.c.h.b16 %v1076
    %v4063 = vunpack.c.l.b16 %v1077
    %v4064 = vunpack.c.h.b16 %v1077
    %v4065 = vunpack.c.l.b16 %v1078
    %v4066 = vunpack.c.h.b16 %v1078
    %v4067 = vunpack.c.l.b16 %v1079
    %v4068 = vunpack.c.h.b16 %v1079
    %v4069 = vunpack.c.l.b16 %v1080
    %v4070 = vunpack.c.h.b16 %v1080
    %v4071 = vunpack.c.l.b16 %v1081
    %v4072 = vunpack.c.h.b16 %v1081
    %v4073 = vunpack.c.l.b16 %v1082
    %v4074 = vunpack.c.h.b16 %v1082
    %v4075 = vunpack.c.l.b16 %v1083
    %v4076 = vunpack.c.h.b16 %v1083
    %v4077 = vunpack.c.l.b16 %v1084
    %v4078 = vunpack.c.h.b16 %v1084
    %v4079 = vunpack.c.l.b16 %v1085
    %v4080 = vunpack.c.h.b16 %v1085
    %v4081 = vunpack.c.l.b16 %v1086
    %v4082 = vunpack.c.h.b16 %v1086
    %v4083 = vunpack.c.l.b16 %v1087
    %v4084 = vunpack.c.h.b16 %v1087
    %v4085 = vunpack.c.l.b16 %v1088
    %v4086 = vunpack.c.h.b16 %v1088
    %v4087 = vunpack.c.l.b16 %v1089
    %v4088 = vunpack.c.h.b16 %v1089
    %v4089 = vunpack.c.l.b16 %v1090
    %v4090 = vunpack.c.h.b16 %v1090
    %v4091 = vunpack.c.l.b16 %v1091
    %v4092 = vunpack.c.h.b16 %v1091
    %v4093 = vunpack.c.l.b16 %v1092
    %v4094 = vunpack.c.h.b16 %v1092
    %v4095 = vunpack.c.l.b16 %v1093
    %v4096 = vunpack.c.h.b16 %v1093
    %v4097 = vunpack.c.l.b16 %v1094
    %v4098 = vunpack.c.h.b16 %v1094
    %v4099 = vunpack.c.l.b16 %v1095
    %v4100 = vunpack.c.h.b16 %v1095
    %v4101 = vunpack.c.l.b16 %v1096
    %v4102 = vunpack.c.h.b16 %v1096
    %v4103 = vunpack.c.l.b16 %v1097
    %v4104 = vunpack.c.h.b16 %v1097
    %v4105 = vunpack.c.l.b16 %v1098
    %v4106 = vunpack.c.h.b16 %v1098
    %v4107 = vunpack.c.l.b16 %v1099
    %v4108 = vunpack.c.h.b16 %v1099
    %v4109 = vunpack.c.l.b16 %v1100
    %v4110 = vunpack.c.h.b16 %v1100
    %v4111 = vunpack.c.l.b16 %v1101
    %v4112 = vunpack.c.h.b16 %v1101
    %v4113 = vunpack.c.l.b16 %v1102
    %v4114 = vunpack.c.h.b16 %v1102
    %v4115 = vunpack.c.l.b16 %v1103
    %v4116 = vunpack.c.h.b16 %v1103
    %v4117 = vunpack.c.l.b16 %v1104
    %v4118 = vunpack.c.h.b16 %v1104
    %v4119 = vunpack.c.l.b16 %v1105
    %v4120 = vunpack.c.h.b16 %v1105
    %v4121 = vunpack.c.l.b16 %v1106
    %v4122 = vunpack.c.h.b16 %v1106
    %v4123 = vunpack.c.l.b16 %v1107
    %v4124 = vunpack.c.h.b16 %v1107
    %v4125 = vunpack.c.l.b16 %v1108
    %v4126 = vunpack.c.h.b16 %v1108
    %v4127 = vunpack.c.l.b16 %v1109
    %v4128 = vunpack.c.h.b16 %v1109
    %v4129 = vunpack.c.l.b16 %v1110
    %v4130 = vunpack.c.h.b16 %v1110
    %v4131 = vunpack.c.l.b16 %v1111
    %v4132 = vunpack.c.h.b16 %v1111
    %v4133 = vunpack.c.l.b16 %v1112
    %v4134 = vunpack.c.h.b16 %v1112
    %v4135 = vunpack.c.l.b16 %v1113
    %v4136 = vunpack.c.h.b16 %v1113
    %v4137 = vunpack.c.l.b16 %v1114
    %v4138 = vunpack.c.h.b16 %v1114
    %v4139 = vunpack.c.l.b16 %v1115
    %v4140 = vunpack.c.h.b16 %v1115
    %v4141 = vunpack.c.l.b16 %v1116
    %v4142 = vunpack.c.h.b16 %v1116
    %v4143 = vunpack.c.l.b16 %v1117
    %v4144 = vunpack.c.h.b16 %v1117
    %v4145 = vunpack.c.l.b16 %v1118
    %v4146 = vunpack.c.h.b16 %v1118
    %v4147 = vunpack.c.l.b16 %v1119
    %v4148 = vunpack.c.h.b16 %v1119
    %v4149 = vunpack.c.l.b16 %v1120
    %v4150 = vunpack.c.h.b16 %v1120
    %v4151 = vunpack.c.l.b16 %v1121
    %v4152 = vunpack.c.h.b16 %v1121
    %v4153 = vunpack.c.l.b16 %v1122
    %v4154 = vunpack.c.h.b16 %v1122
    %v4155 = vunpack.c.l.b16 %v1123
    %v4156 = vunpack.c.h.b16 %v1123
    %v4157 = vunpack.c.l.b16 %v1124
    %v4158 = vunpack.c.h.b16 %v1124
    %v4159 = vunpack.c.l.b16 %v1125
    %v4160 = vunpack.c.h.b16 %v1125
    %v4161 = vunpack.c.l.b16 %v1126
    %v4162 = vunpack.c.h.b16 %v1126
    %v4163 = vunpack.c.l.b16 %v1127
    %v4164 = vunpack.c.h.b16 %v1127
    %v4165 = vunpack.c.l.b16 %v1128
    %v4166 = vunpack.c.h.b16 %v1128
    %v4167 = vunpack.c.l.b16 %v1129
    %v4168 = vunpack.c.h.b16 %v1129
    %v4169 = vunpack.c.l.b16 %v1130
    %v4170 = vunpack.c.h.b16 %v1130
    %v4171 = vunpack.c.l.b16 %v1131
    %v4172 = vunpack.c.h.b16 %v1131
    %v4173 = vunpack.c.l.b16 %v1132
    %v4174 = vunpack.c.h.b16 %v1132
    %v4175 = vunpack.c.l.b16 %v1133
    %v4176 = vunpack.c.h.b16 %v1133
    %v4177 = vunpack.c.l.b16 %v1134
    %v4178 = vunpack.c.h.b16 %v1134
    %v4179 = vunpack.c.l.b16 %v1135
    %v4180 = vunpack.c.h.b16 %v1135
    %v4181 = vunpack.c.l.b16 %v1136
    %v4182 = vunpack.c.h.b16 %v1136
    %v4183 = vunpack.c.l.b16 %v1137
    %v4184 = vunpack.c.h.b16 %v1137
    %v4185 = vunpack.c.l.b16 %v1138
    %v4186 = vunpack.c.h.b16 %v1138
    %v4187 = vunpack.c.l.b16 %v1139
    %v4188 = vunpack.c.h.b16 %v1139
    %v4189 = vunpack.c.l.b16 %v1140
    %v4190 = vunpack.c.h.b16 %v1140
    %v4191 = vunpack.c.l.b16 %v1141
    %v4192 = vunpack.c.h.b16 %v1141
    %v4193 = vunpack.c.l.b16 %v1142
    %v4194 = vunpack.c.h.b16 %v1142
    %v4195 = vunpack.c.l.b16 %v1143
    %v4196 = vunpack.c.h.b16 %v1143
    %v4197 = vunpack.c.l.b16 %v1144
    %v4198 = vunpack.c.h.b16 %v1144
    %v4199 = vunpack.c.l.b16 %v1145
    %v4200 = vunpack.c.h.b16 %v1145
    %v4201 = vunpack.c.l.b16 %v1146
    %v4202 = vunpack.c.h.b16 %v1146
    %v4203 = vunpack.c.l.b16 %v1147
    %v4204 = vunpack.c.h.b16 %v1147
    %v4205 = vunpack.c.l.b16 %v1148
    %v4206 = vunpack.c.h.b16 %v1148
    %v4207 = vunpack.c.l.b16 %v1149
    %v4208 = vunpack.c.h.b16 %v1149
    %v4209 = vunpack.c.l.b16 %v1150
    %v4210 = vunpack.c.h.b16 %v1150
    %v4211 = vunpack.c.l.b16 %v1151
    %v4212 = vunpack.c.h.b16 %v1151
    %v4213 = vunpack.c.l.b16 %v1152
    %v4214 = vunpack.c.h.b16 %v1152
    %v4215 = vunpack.c.l.b16 %v1153
    %v4216 = vunpack.c.h.b16 %v1153
    %v4217 = vunpack.c.l.b16 %v1154
    %v4218 = vunpack.c.h.b16 %v1154
    %v4219 = vunpack.c.l.b16 %v1155
    %v4220 = vunpack.c.h.b16 %v1155
    %v4221 = vunpack.c.l.b16 %v1156
    %v4222 = vunpack.c.h.b16 %v1156
    %v4223 = vunpack.c.l.b16 %v1157
    %v4224 = vunpack.c.h.b16 %v1157
    %v4225 = vunpack.c.l.b16 %v1158
    %v4226 = vunpack.c.h.b16 %v1158
    %v4227 = vunpack.c.l.b16 %v1159
    %v4228 = vunpack.c.h.b16 %v1159
    %v4229 = vunpack.c.l.b16 %v1160
    %v4230 = vunpack.c.h.b16 %v1160
    %v4231 = vunpack.c.l.b16 %v1161
    %v4232 = vunpack.c.h.b16 %v1161
    %v4233 = vunpack.c.l.b16 %v1162
    %v4234 = vunpack.c.h.b16 %v1162
    %v4235 = vunpack.c.l.b16 %v1163
    %v4236 = vunpack.c.h.b16 %v1163
    %v4237 = vunpack.c.l.b16 %v1164
    %v4238 = vunpack.c.h.b16 %v1164
    %v4239 = vunpack.c.l.b16 %v1165
    %v4240 = vunpack.c.h.b16 %v1165
    %v4241 = vunpack.c.l.b16 %v1166
    %v4242 = vunpack.c.h.b16 %v1166
    %v4243 = vunpack.c.l.b16 %v1167
    %v4244 = vunpack.c.h.b16 %v1167
    %v4245 = vunpack.c.l.b16 %v1168
    %v4246 = vunpack.c.h.b16 %v1168
    %v4247 = vunpack.c.l.b16 %v1169
    %v4248 = vunpack.c.h.b16 %v1169
    %v4249 = vunpack.c.l.b16 %v1170
    %v4250 = vunpack.c.h.b16 %v1170
    %v4251 = vunpack.c.l.b16 %v1171
    %v4252 = vunpack.c.h.b16 %v1171
    %v4253 = vunpack.c.l.b16 %v1172
    %v4254 = vunpack.c.h.b16 %v1172
    %v4255 = vunpack.c.l.b16 %v1173
    %v4256 = vunpack.c.h.b16 %v1173
    %v4257 = vunpack.c.l.b16 %v1174
    %v4258 = vunpack.c.h.b16 %v1174
    %v4259 = vunpack.c.l.b16 %v1175
    %v4260 = vunpack.c.h.b16 %v1175
    %v4261 = vunpack.c.l.b16 %v1176
    %v4262 = vunpack.c.h.b16 %v1176
    %v4263 = vunpack.c.l.b16 %v1177
    %v4264 = vunpack.c.h.b16 %v1177
    %v4265 = vunpack.c.l.b16 %v1178
    %v4266 = vunpack.c.h.b16 %v1178
    %v4267 = vunpack.c.l.b16 %v1179
    %v4268 = vunpack.c.h.b16 %v1179
    %v4269 = vunpack.c.l.b16 %v1180
    %v4270 = vunpack.c.h.b16 %v1180
    %v4271 = vunpack.c.l.b16 %v1181
    %v4272 = vunpack.c.h.b16 %v1181
    %v4273 = vunpack.c.l.b16 %v1182
    %v4274 = vunpack.c.h.b16 %v1182
    %v4275 = vunpack.c.l.b16 %v1183
    %v4276 = vunpack.c.h.b16 %v1183
    %v4277 = vunpack.c.l.b16 %v1184
    %v4278 = vunpack.c.h.b16 %v1184
    %v4279 = vunpack.c.l.b16 %v1185
    %v4280 = vunpack.c.h.b16 %v1185
    %v4281 = vunpack.c.l.b16 %v1186
    %v4282 = vunpack.c.h.b16 %v1186
    %v4283 = vunpack.c.l.b16 %v1187
    %v4284 = vunpack.c.h.b16 %v1187
    %v4285 = vunpack.c.l.b16 %v1188
    %v4286 = vunpack.c.h.b16 %v1188
    %v4287 = vunpack.c.l.b16 %v1189
    %v4288 = vunpack.c.h.b16 %v1189
    %v4289 = vunpack.c.l.b16 %v1190
    %v4290 = vunpack.c.h.b16 %v1190
    %v4291 = vunpack.c.l.b16 %v1191
    %v4292 = vunpack.c.h.b16 %v1191
    %v4293 = vunpack.c.l.b16 %v1192
    %v4294 = vunpack.c.h.b16 %v1192
    %v4295 = vunpack.c.l.b16 %v1193
    %v4296 = vunpack.c.h.b16 %v1193
    %v4297 = vunpack.c.l.b16 %v1194
    %v4298 = vunpack.c.h.b16 %v1194
    %v4299 = vunpack.c.l.b16 %v1195
    %v4300 = vunpack.c.h.b16 %v1195
    %v4301 = vunpack.c.l.b16 %v1196
    %v4302 = vunpack.c.h.b16 %v1196
    %v4303 = vunpack.c.l.b16 %v1197
    %v4304 = vunpack.c.h.b16 %v1197
    %v4305 = vunpack.c.l.b16 %v1198
    %v4306 = vunpack.c.h.b16 %v1198
    %v4307 = vunpack.c.l.b16 %v1199
    %v4308 = vunpack.c.h.b16 %v1199
    %v4309 = vunpack.c.l.b16 %v1200
    %v4310 = vunpack.c.h.b16 %v1200
    %v4311 = vunpack.c.l.b16 %v1201
    %v4312 = vunpack.c.h.b16 %v1201
    %v4313 = vunpack.c.l.b16 %v1202
    %v4314 = vunpack.c.h.b16 %v1202
    %v4315 = vunpack.c.l.b16 %v1203
    %v4316 = vunpack.c.h.b16 %v1203
    %v4317 = vunpack.c.l.b16 %v1204
    %v4318 = vunpack.c.h.b16 %v1204
    %v4319 = vunpack.c.l.b16 %v1205
    %v4320 = vunpack.c.h.b16 %v1205
    %v4321 = vunpack.c.l.b16 %v1206
    %v4322 = vunpack.c.h.b16 %v1206
    %v4323 = vunpack.c.l.b16 %v1207
    %v4324 = vunpack.c.h.b16 %v1207
    %v4325 = vunpack.c.l.b16 %v1208
    %v4326 = vunpack.c.h.b16 %v1208
    %v4327 = vunpack.c.l.b16 %v1209
    %v4328 = vunpack.c.h.b16 %v1209
    %v4329 = vunpack.c.l.b16 %v1210
    %v4330 = vunpack.c.h.b16 %v1210
    %v4331 = vunpack.c.l.b16 %v1211
    %v4332 = vunpack.c.h.b16 %v1211
    %v4333 = vunpack.c.l.b16 %v1212
    %v4334 = vunpack.c.h.b16 %v1212
    %v4335 = vunpack.c.l.b16 %v1213
    %v4336 = vunpack.c.h.b16 %v1213
    %v4337 = vunpack.c.l.b16 %v1214
    %v4338 = vunpack.c.h.b16 %v1214
    %v4339 = vunpack.c.l.b16 %v1215
    %v4340 = vunpack.c.h.b16 %v1215
    %v4341 = vunpack.c.l.b16 %v1216
    %v4342 = vunpack.c.h.b16 %v1216
    %v4343 = vunpack.c.l.b16 %v1217
    %v4344 = vunpack.c.h.b16 %v1217
    %v4345 = vunpack.c.l.b16 %v1218
    %v4346 = vunpack.c.h.b16 %v1218
    %v4347 = vunpack.c.l.b16 %v1219
    %v4348 = vunpack.c.h.b16 %v1219
    %v4349 = vunpack.c.l.b16 %v1220
    %v4350 = vunpack.c.h.b16 %v1220
    %v4351 = vunpack.c.l.b16 %v1221
    %v4352 = vunpack.c.h.b16 %v1221
    %v4353 = vunpack.c.l.b16 %v1222
    %v4354 = vunpack.c.h.b16 %v1222
    %v4355 = vunpack.c.l.b16 %v1223
    %v4356 = vunpack.c.h.b16 %v1223
    %v4357 = vunpack.c.l.b16 %v1224
    %v4358 = vunpack.c.h.b16 %v1224
    %v4359 = vunpack.c.l.b16 %v1225
    %v4360 = vunpack.c.h.b16 %v1225
    %v4361 = vunpack.c.l.b16 %v1226
    %v4362 = vunpack.c.h.b16 %v1226
    %v4363 = vunpack.c.l.b16 %v1227
    %v4364 = vunpack.c.h.b16 %v1227
    %v4365 = vunpack.c.l.b16 %v1228
    %v4366 = vunpack.c.h.b16 %v1228
    %v4367 = vunpack.c.l.b16 %v1229
    %v4368 = vunpack.c.h.b16 %v1229
    %v4369 = vunpack.c.l.b16 %v1230
    %v4370 = vunpack.c.h.b16 %v1230
    %v4371 = vunpack.c.l.b16 %v1231
    %v4372 = vunpack.c.h.b16 %v1231
    %v4373 = vunpack.c.l.b16 %v1232
    %v4374 = vunpack.c.h.b16 %v1232
    %v4375 = vunpack.c.l.b16 %v1233
    %v4376 = vunpack.c.h.b16 %v1233
    %v4377 = vunpack.c.l.b16 %v1234
    %v4378 = vunpack.c.h.b16 %v1234
    %v4379 = vunpack.c.l.b16 %v1235
    %v4380 = vunpack.c.h.b16 %v1235
    %v4381 = vunpack.c.l.b16 %v1236
    %v4382 = vunpack.c.h.b16 %v1236
    %v4383 = vunpack.c.l.b16 %v1237
    %v4384 = vunpack.c.h.b16 %v1237
    %v4385 = vunpack.c.l.b16 %v1238
    %v4386 = vunpack.c.h.b16 %v1238
    %v4387 = vunpack.c.l.b16 %v1239
    %v4388 = vunpack.c.h.b16 %v1239
    %v4389 = vunpack.c.l.b16 %v1240
    %v4390 = vunpack.c.h.b16 %v1240
    %v4391 = vunpack.c.l.b16 %v1241
    %v4392 = vunpack.c.h.b16 %v1241
    %v4393 = vunpack.c.l.b16 %v1242
    %v4394 = vunpack.c.h.b16 %v1242
    %v4395 = vpack.c.b16 %v2355, %v2347
    %v4396 = vpack.c.b16 %v2356, %v2348
    %v4397 = vpack.c.b16 %v2357, %v2349
    %v4398 = vpack.c.b16 %v2358, %v2350
    %v4399 = vpack.c.b16 %v2359, %v2351
    %v4400 = vpack.c.b16 %v2360, %v2352
    %v4401 = vpack.c.b16 %v2361, %v2353
    %v4402 = vpack.c.b16 %v2362, %v2354
    %v4403 = vpack.c.b16 %v2371, %v2363
    %v4404 = vpack.c.b16 %v2372, %v2364
    %v4405 = vpack.c.b16 %v2373, %v2365
    %v4406 = vpack.c.b16 %v2374, %v2366
    %v4407 = vpack.c.b16 %v2375, %v2367
    %v4408 = vpack.c.b16 %v2376, %v2368
    %v4409 = vpack.c.b16 %v2377, %v2369
    %v4410 = vpack.c.b16 %v2378, %v2370
    %v4411 = vpack.c.b16 %v2387, %v2379
    %v4412 = vpack.c.b16 %v2388, %v2380
    %v4413 = vpack.c.b16 %v2389, %v2381
    %v4414 = vpack.c.b16 %v2390, %v2382
    %v4415 = vpack.c.b16 %v2391, %v2383
    %v4416 = vpack.c.b16 %v2392, %v2384
    %v4417 = vpack.c.b16 %v2393, %v2385
    %v4418 = vpack.c.b16 %v2394, %v2386
    %v4419 = vpack.c.b16 %v2403, %v2395
    %v4420 = vpack.c.b16 %v2404, %v2396
    %v4421 = vpack.c.b16 %v2405, %v2397
    %v4422 = vpack.c.b16 %v2406, %v2398
    %v4423 = vpack.c.b16 %v2407, %v2399
    %v4424 = vpack.c.b16 %v2408, %v2400
    %v4425 = vpack.c.b16 %v2409, %v2401
    %v4426 = vpack.c.b16 %v2410, %v2402
    %v4427 = vpack.c.b16 %v2419, %v2411
    %v4428 = vpack.c.b16 %v2420, %v2412
    %v4429 = vpack.c.b16 %v2421, %v2413
    %v4430 = vpack.c.b16 %v2422, %v2414
    %v4431 = vpack.c.b16 %v2423, %v2415
    %v4432 = vpack.c.b16 %v2424, %v2416
    %v4433 = vpack.c.b16 %v2425, %v2417
    %v4434 = vpack.c.b16 %v2426, %v2418
    %v4435 = vpack.c.b16 %v2435, %v2427
    %v4436 = vpack.c.b16 %v2436, %v2428
    %v4437 = vpack.c.b16 %v2437, %v2429
    %v4438 = vpack.c.b16 %v2438, %v2430
    %v4439 = vpack.c.b16 %v2439, %v2431
    %v4440 = vpack.c.b16 %v2440, %v2432
    %v4441 = vpack.c.b16 %v2441, %v2433
    %v4442 = vpack.c.b16 %v2442, %v2434
    %v4443 = vpack.c.b16 %v2451, %v2443
    %v4444 = vpack.c.b16 %v2452, %v2444
    %v4445 = vpack.c.b16 %v2453, %v2445
    %v4446 = vpack.c.b16 %v2454, %v2446
    %v4447 = vpack.c.b16 %v2455, %v2447
    %v4448 = vpack.c.b16 %v2456, %v2448
    %v4449 = vpack.c.b16 %v2457, %v2449
    %v4450 = vpack.c.b16 %v2458, %v2450
    %v4451 = vpack.c.b16 %v2467, %v2459
    %v4452 = vpack.c.b16 %v2468, %v2460
    %v4453 = vpack.c.b16 %v2469, %v2461
    %v4454 = vpack.c.b16 %v2470, %v2462
    %v4455 = vpack.c.b16 %v2471, %v2463
    %v4456 = vpack.c.b16 %v2472, %v2464
    %v4457 = vpack.c.b16 %v2473, %v2465
    %v4458 = vpack.c.b16 %v2474, %v2466
    %v4459 = vpack.c.b16 %v2483, %v2475
    %v4460 = vpack.c.b16 %v2484, %v2476
    %v4461 = vpack.c.b16 %v2485, %v2477
    %v4462 = vpack.c.b16 %v2486, %v2478
    %v4463 = vpack.c.b16 %v2487, %v2479
    %v4464 = vpack.c.b16 %v2488, %v2480
    %v4465 = vpack.c.b16 %v2489, %v2481
    %v4466 = vpack.c.b16 %v2490, %v2482
    %v4467 = vpack.c.b16 %v2499, %v2491
    %v4468 = vpack.c.b16 %v2500, %v2492
    %v4469 = vpack.c.b16 %v2501, %v2493
    %v4470 = vpack.c.b16 %v2502, %v2494
    %v4471 = vpack.c.b16 %v2503, %v2495
    %v4472 = vpack.c.b16 %v2504, %v2496
    %v4473 = vpack.c.b16 %v2505, %v2497
    %v4474 = vpack.c.b16 %v2506, %v2498
    %v4475 = vpack.c.b16 %v2515, %v2507
    %v4476 = vpack.c.b16 %v2516, %v2508
    %v4477 = vpack.c.b16 %v2517, %v2509
    %v4478 = vpack.c.b16 %v2518, %v2510
    %v4479 = vpack.c.b16 %v2519, %v2511
    %v4480 = vpack.c.b16 %v2520, %v2512
    %v4481 = vpack.c.b16 %v2521, %v2513
    %v4482 = vpack.c.b16 %v2522, %v2514
    %v4483 = vpack.c.b16 %v2531, %v2523
    %v4484 = vpack.c.b16 %v2532, %v2524
    %v4485 = vpack.c.b16 %v2533, %v2525
    %v4486 = vpack.c.b16 %v2534, %v2526
    %v4487 = vpack.c.b16 %v2535, %v2527
    %v4488 = vpack.c.b16 %v2536, %v2528
    %v4489 = vpack.c.b16 %v2537, %v2529
    %v4490 = vpack.c.b16 %v2538, %v2530
    %v4491 = vpack.c.b16 %v2547, %v2539
    %v4492 = vpack.c.b16 %v2548, %v2540
    %v4493 = vpack.c.b16 %v2549, %v2541
    %v4494 = vpack.c.b16 %v2550, %v2542
    %v4495 = vpack.c.b16 %v2551, %v2543
    %v4496 = vpack.c.b16 %v2552, %v2544
    %v4497 = vpack.c.b16 %v2553, %v2545
    %v4498 = vpack.c.b16 %v2554, %v2546
    %v4499 = vpack.c.b16 %v2563, %v2555
    %v4500 = vpack.c.b16 %v2564, %v2556
    %v4501 = vpack.c.b16 %v2565, %v2557
    %v4502 = vpack.c.b16 %v2566, %v2558
    %v4503 = vpack.c.b16 %v2567, %v2559
    %v4504 = vpack.c.b16 %v2568, %v2560
    %v4505 = vpack.c.b16 %v2569, %v2561
    %v4506 = vpack.c.b16 %v2570, %v2562
    %v4507 = vpack.c.b16 %v2579, %v2571
    %v4508 = vpack.c.b16 %v2580, %v2572
    %v4509 = vpack.c.b16 %v2581, %v2573
    %v4510 = vpack.c.b16 %v2582, %v2574
    %v4511 = vpack.c.b16 %v2583, %v2575
    %v4512 = vpack.c.b16 %v2584, %v2576
    %v4513 = vpack.c.b16 %v2585, %v2577
    %v4514 = vpack.c.b16 %v2586, %v2578
    %v4515 = vpack.c.b16 %v2595, %v2587
    %v4516 = vpack.c.b16 %v2596, %v2588
    %v4517 = vpack.c.b16 %v2597, %v2589
    %v4518 = vpack.c.b16 %v2598, %v2590
    %v4519 = vpack.c.b16 %v2599, %v2591
    %v4520 = vpack.c.b16 %v2600, %v2592
    %v4521 = vpack.c.b16 %v2601, %v2593
    %v4522 = vpack.c.b16 %v2602, %v2594
    %v4523 = vpack.c.b16 %v2611, %v2603
    %v4524 = vpack.c.b16 %v2612, %v2604
    %v4525 = vpack.c.b16 %v2613, %v2605
    %v4526 = vpack.c.b16 %v2614, %v2606
    %v4527 = vpack.c.b16 %v2615, %v2607
    %v4528 = vpack.c.b16 %v2616, %v2608
    %v4529 = vpack.c.b16 %v2617, %v2609
    %v4530 = vpack.c.b16 %v2618, %v2610
    %v4531 = vpack.c.b16 %v2627, %v2619
    %v4532 = vpack.c.b16 %v2628, %v2620
    %v4533 = vpack.c.b16 %v2629, %v2621
    %v4534 = vpack.c.b16 %v2630, %v2622
    %v4535 = vpack.c.b16 %v2631, %v2623
    %v4536 = vpack.c.b16 %v2632, %v2624
    %v4537 = vpack.c.b16 %v2633, %v2625
    %v4538 = vpack.c.b16 %v2634, %v2626
    %v4539 = vpack.c.b16 %v2643, %v2635
    %v4540 = vpack.c.b16 %v2644, %v2636
    %v4541 = vpack.c.b16 %v2645, %v2637
    %v4542 = vpack.c.b16 %v2646, %v2638
    %v4543 = vpack.c.b16 %v2647, %v2639
    %v4544 = vpack.c.b16 %v2648, %v2640
    %v4545 = vpack.c.b16 %v2649, %v2641
    %v4546 = vpack.c.b16 %v2650, %v2642
    %v4547 = vpack.c.b16 %v2659, %v2651
    %v4548 = vpack.c.b16 %v2660, %v2652
    %v4549 = vpack.c.b16 %v2661, %v2653
    %v4550 = vpack.c.b16 %v2662, %v2654
    %v4551 = vpack.c.b16 %v2663, %v2655
    %v4552 = vpack.c.b16 %v2664, %v2656
    %v4553 = vpack.c.b16 %v2665, %v2657
    %v4554 = vpack.c.b16 %v2666, %v2658
    %v4555 = vpack.c.b16 %v2675, %v2667
    %v4556 = vpack.c.b16 %v2676, %v2668
    %v4557 = vpack.c.b16 %v2677, %v2669
    %v4558 = vpack.c.b16 %v2678, %v2670
    %v4559 = vpack.c.b16 %v2679, %v2671
    %v4560 = vpack.c.b16 %v2680, %v2672
    %v4561 = vpack.c.b16 %v2681, %v2673
    %v4562 = vpack.c.b16 %v2682, %v2674
    %v4563 = vpack.c.b16 %v2691, %v2683
    %v4564 = vpack.c.b16 %v2692, %v2684
    %v4565 = vpack.c.b16 %v2693, %v2685
    %v4566 = vpack.c.b16 %v2694, %v2686
    %v4567 = vpack.c.b16 %v2695, %v2687
    %v4568 = vpack.c.b16 %v2696, %v2688
    %v4569 = vpack.c.b16 %v2697, %v2689
    %v4570 = vpack.c.b16 %v2698, %v2690
    %v4571 = vpack.c.b16 %v2707, %v2699
    %v4572 = vpack.c.b16 %v2708, %v2700
    %v4573 = vpack.c.b16 %v2709, %v2701
    %v4574 = vpack.c.b16 %v2710, %v2702
    %v4575 = vpack.c.b16 %v2711, %v2703
    %v4576 = vpack.c.b16 %v2712, %v2704
    %v4577 = vpack.c.b16 %v2713, %v2705
    %v4578 = vpack.c.b16 %v2714, %v2706
    %v4579 = vpack.c.b16 %v2723, %v2715
    %v4580 = vpack.c.b16 %v2724, %v2716
    %v4581 = vpack.c.b16 %v2725, %v2717
    %v4582 = vpack.c.b16 %v2726, %v2718
    %v4583 = vpack.c.b16 %v2727, %v2719
    %v4584 = vpack.c.b16 %v2728, %v2720
    %v4585 = vpack.c.b16 %v2729, %v2721
    %v4586 = vpack.c.b16 %v2730, %v2722
    %v4587 = vpack.c.b16 %v2739, %v2731
    %v4588 = vpack.c.b16 %v2740, %v2732
    %v4589 = vpack.c.b16 %v2741, %v2733
    %v4590 = vpack.c.b16 %v2742, %v2734
    %v4591 = vpack.c.b16 %v2743, %v2735
    %v4592 = vpack.c.b16 %v2744, %v2736
    %v4593 = vpack.c.b16 %v2745, %v2737
    %v4594 = vpack.c.b16 %v2746, %v2738
    %v4595 = vpack.c.b16 %v2755, %v2747
    %v4596 = vpack.c.b16 %v2756, %v2748
    %v4597 = vpack.c.b16 %v2757, %v2749
    %v4598 = vpack.c.b16 %v2758, %v2750
    %v4599 = vpack.c.b16 %v2759, %v2751
    %v4600 = vpack.c.b16 %v2760, %v2752
    %v4601 = vpack.c.b16 %v2761, %v2753
    %v4602 = vpack.c.b16 %v2762, %v2754
    %v4603 = vpack.c.b16 %v2771, %v2763
    %v4604 = vpack.c.b16 %v2772, %v2764
    %v4605 = vpack.c.b16 %v2773, %v2765
    %v4606 = vpack.c.b16 %v2774, %v2766
    %v4607 = vpack.c.b16 %v2775, %v2767
    %v4608 = vpack.c.b16 %v2776, %v2768
    %v4609 = vpack.c.b16 %v2777, %v2769
    %v4610 = vpack.c.b16 %v2778, %v2770
    %v4611 = vpack.c.b16 %v2787, %v2779
    %v4612 = vpack.c.b16 %v2788, %v2780
    %v4613 = vpack.c.b16 %v2789, %v2781
    %v4614 = vpack.c.b16 %v2790, %v2782
    %v4615 = vpack.c.b16 %v2791, %v2783
    %v4616 = vpack.c.b16 %v2792, %v2784
    %v4617 = vpack.c.b16 %v2793, %v2785
    %v4618 = vpack.c.b16 %v2794, %v2786
    %v4619 = vpack.c.b16 %v2803, %v2795
    %v4620 = vpack.c.b16 %v2804, %v2796
    %v4621 = vpack.c.b16 %v2805, %v2797
    %v4622 = vpack.c.b16 %v2806, %v2798
    %v4623 = vpack.c.b16 %v2807, %v2799
    %v4624 = vpack.c.b16 %v2808, %v2800
    %v4625 = vpack.c.b16 %v2809, %v2801
    %v4626 = vpack.c.b16 %v2810, %v2802
    %v4627 = vpack.c.b16 %v2819, %v2811
    %v4628 = vpack.c.b16 %v2820, %v2812
    %v4629 = vpack.c.b16 %v2821, %v2813
    %v4630 = vpack.c.b16 %v2822, %v2814
    %v4631 = vpack.c.b16 %v2823, %v2815
    %v4632 = vpack.c.b16 %v2824, %v2816
    %v4633 = vpack.c.b16 %v2825, %v2817
    %v4634 = vpack.c.b16 %v2826, %v2818
    %v4635 = vpack.c.b16 %v2835, %v2827
    %v4636 = vpack.c.b16 %v2836, %v2828
    %v4637 = vpack.c.b16 %v2837, %v2829
    %v4638 = vpack.c.b16 %v2838, %v2830
    %v4639 = vpack.c.b16 %v2839, %v2831
    %v4640 = vpack.c.b16 %v2840, %v2832
    %v4641 = vpack.c.b16 %v2841, %v2833
    %v4642 = vpack.c.b16 %v2842, %v2834
    %v4643 = vpack.c.b16 %v2851, %v2843
    %v4644 = vpack.c.b16 %v2852, %v2844
    %v4645 = vpack.c.b16 %v2853, %v2845
    %v4646 = vpack.c.b16 %v2854, %v2846
    %v4647 = vpack.c.b16 %v2855, %v2847
    %v4648 = vpack.c.b16 %v2856, %v2848
    %v4649 = vpack.c.b16 %v2857, %v2849
    %v4650 = vpack.c.b16 %v2858, %v2850
    %v4651 = vpack.c.b16 %v2867, %v2859
    %v4652 = vpack.c.b16 %v2868, %v2860
    %v4653 = vpack.c.b16 %v2869, %v2861
    %v4654 = vpack.c.b16 %v2870, %v2862
    %v4655 = vpack.c.b16 %v2871, %v2863
    %v4656 = vpack.c.b16 %v2872, %v2864
    %v4657 = vpack.c.b16 %v2873, %v2865
    %v4658 = vpack.c.b16 %v2874, %v2866
    %v4659 = vpack.c.b16 %v2883, %v2875
    %v4660 = vpack.c.b16 %v2884, %v2876
    %v4661 = vpack.c.b16 %v2885, %v2877
    %v4662 = vpack.c.b16 %v2886, %v2878
    %v4663 = vpack.c.b16 %v2887, %v2879
    %v4664 = vpack.c.b16 %v2888, %v2880
    %v4665 = vpack.c.b16 %v2889, %v2881
    %v4666 = vpack.c.b16 %v2890, %v2882
    %v4667 = vpack.c.b16 %v2899, %v2891
    %v4668 = vpack.c.b16 %v2900, %v2892
    %v4669 = vpack.c.b16 %v2901, %v2893
    %v4670 = vpack.c.b16 %v2902, %v2894
    %v4671 = vpack.c.b16 %v2903, %v2895
    %v4672 = vpack.c.b16 %v2904, %v2896
    %v4673 = vpack.c.b16 %v2905, %v2897
    %v4674 = vpack.c.b16 %v2906, %v2898
    %v4675 = vpack.c.b16 %v2915, %v2907
    %v4676 = vpack.c.b16 %v2916, %v2908
    %v4677 = vpack.c.b16 %v2917, %v2909
    %v4678 = vpack.c.b16 %v2918, %v2910
    %v4679 = vpack.c.b16 %v2919, %v2911
    %v4680 = vpack.c.b16 %v2920, %v2912
    %v4681 = vpack.c.b16 %v2921, %v2913
    %v4682 = vpack.c.b16 %v2922, %v2914
    %v4683 = vpack.c.b16 %v2931, %v2923
    %v4684 = vpack.c.b16 %v2932, %v2924
    %v4685 = vpack.c.b16 %v2933, %v2925
    %v4686 = vpack.c.b16 %v2934, %v2926
    %v4687 = vpack.c.b16 %v2935, %v2927
    %v4688 = vpack.c.b16 %v2936, %v2928
    %v4689 = vpack.c.b16 %v2937, %v2929
    %v4690 = vpack.c.b16 %v2938, %v2930
    %v4691 = vpack.c.b16 %v2947, %v2939
    %v4692 = vpack.c.b16 %v2948, %v2940
    %v4693 = vpack.c.b16 %v2949, %v2941
    %v4694 = vpack.c.b16 %v2950, %v2942
    %v4695 = vpack.c.b16 %v2951, %v2943
    %v4696 = vpack.c.b16 %v2952, %v2944
    %v4697 = vpack.c.b16 %v2953, %v2945
    %v4698 = vpack.c.b16 %v2954, %v2946
    %v4699 = vpack.c.b16 %v2963, %v2955
    %v4700 = vpack.c.b16 %v2964, %v2956
    %v4701 = vpack.c.b16 %v2965, %v2957
    %v4702 = vpack.c.b16 %v2966, %v2958
    %v4703 = vpack.c.b16 %v2967, %v2959
    %v4704 = vpack.c.b16 %v2968, %v2960
    %v4705 = vpack.c.b16 %v2969, %v2961
    %v4706 = vpack.c.b16 %v2970, %v2962
    %v4707 = vpack.c.b16 %v2979, %v2971
    %v4708 = vpack.c.b16 %v2980, %v2972
    %v4709 = vpack.c.b16 %v2981, %v2973
    %v4710 = vpack.c.b16 %v2982, %v2974
    %v4711 = vpack.c.b16 %v2983, %v2975
    %v4712 = vpack.c.b16 %v2984, %v2976
    %v4713 = vpack.c.b16 %v2985, %v2977
    %v4714 = vpack.c.b16 %v2986, %v2978
    %v4715 = vpack.c.b16 %v2995, %v2987
    %v4716 = vpack.c.b16 %v2996, %v2988
    %v4717 = vpack.c.b16 %v2997, %v2989
    %v4718 = vpack.c.b16 %v2998, %v2990
    %v4719 = vpack.c.b16 %v2999, %v2991
    %v4720 = vpack.c.b16 %v3000, %v2992
    %v4721 = vpack.c.b16 %v3001, %v2993
    %v4722 = vpack.c.b16 %v3002, %v2994
    %v4723 = vpack.c.b16 %v3011, %v3003
    %v4724 = vpack.c.b16 %v3012, %v3004
    %v4725 = vpack.c.b16 %v3013, %v3005
    %v4726 = vpack.c.b16 %v3014, %v3006
    %v4727 = vpack.c.b16 %v3015, %v3007
    %v4728 = vpack.c.b16 %v3016, %v3008
    %v4729 = vpack.c.b16 %v3017, %v3009
    %v4730 = vpack.c.b16 %v3018, %v3010
    %v4731 = vpack.c.b16 %v3027, %v3019
    %v4732 = vpack.c.b16 %v3028, %v3020
    %v4733 = vpack.c.b16 %v3029, %v3021
    %v4734 = vpack.c.b16 %v3030, %v3022
    %v4735 = vpack.c.b16 %v3031, %v3023
    %v4736 = vpack.c.b16 %v3032, %v3024
    %v4737 = vpack.c.b16 %v3033, %v3025
    %v4738 = vpack.c.b16 %v3034, %v3026
    %v4739 = vpack.c.b16 %v3043, %v3035
    %v4740 = vpack.c.b16 %v3044, %v3036
    %v4741 = vpack.c.b16 %v3045, %v3037
    %v4742 = vpack.c.b16 %v3046, %v3038
    %v4743 = vpack.c.b16 %v3047, %v3039
    %v4744 = vpack.c.b16 %v3048, %v3040
    %v4745 = vpack.c.b16 %v3049, %v3041
    %v4746 = vpack.c.b16 %v3050, %v3042
    %v4747 = vpack.c.b16 %v3059, %v3051
    %v4748 = vpack.c.b16 %v3060, %v3052
    %v4749 = vpack.c.b16 %v3061, %v3053
    %v4750 = vpack.c.b16 %v3062, %v3054
    %v4751 = vpack.c.b16 %v3063, %v3055
    %v4752 = vpack.c.b16 %v3064, %v3056
    %v4753 = vpack.c.b16 %v3065, %v3057
    %v4754 = vpack.c.b16 %v3066, %v3058
    %v4755 = vpack.c.b16 %v3075, %v3067
    %v4756 = vpack.c.b16 %v3076, %v3068
    %v4757 = vpack.c.b16 %v3077, %v3069
    %v4758 = vpack.c.b16 %v3078, %v3070
    %v4759 = vpack.c.b16 %v3079, %v3071
    %v4760 = vpack.c.b16 %v3080, %v3072
    %v4761 = vpack.c.b16 %v3081, %v3073
    %v4762 = vpack.c.b16 %v3082, %v3074
    %v4763 = vpack.c.b16 %v3091, %v3083
    %v4764 = vpack.c.b16 %v3092, %v3084
    %v4765 = vpack.c.b16 %v3093, %v3085
    %v4766 = vpack.c.b16 %v3094, %v3086
    %v4767 = vpack.c.b16 %v3095, %v3087
    %v4768 = vpack.c.b16 %v3096, %v3088
    %v4769 = vpack.c.b16 %v3097, %v3089
    %v4770 = vpack.c.b16 %v3098, %v3090
    %v4771 = vpack.c.b16 %v3107, %v3099
    %v4772 = vpack.c.b16 %v3108, %v3100
    %v4773 = vpack.c.b16 %v3109, %v3101
    %v4774 = vpack.c.b16 %v3110, %v3102
    %v4775 = vpack.c.b16 %v3111, %v3103
    %v4776 = vpack.c.b16 %v3112, %v3104
    %v4777 = vpack.c.b16 %v3113, %v3105
    %v4778 = vpack.c.b16 %v3114, %v3106
    %v4779 = vpack.c.b16 %v3123, %v3115
    %v4780 = vpack.c.b16 %v3124, %v3116
    %v4781 = vpack.c.b16 %v3125, %v3117
    %v4782 = vpack.c.b16 %v3126, %v3118
    %v4783 = vpack.c.b16 %v3127, %v3119
    %v4784 = vpack.c.b16 %v3128, %v3120
    %v4785 = vpack.c.b16 %v3129, %v3121
    %v4786 = vpack.c.b16 %v3130, %v3122
    %v4787 = vpack.c.b16 %v3139, %v3131
    %v4788 = vpack.c.b16 %v3140, %v3132
    %v4789 = vpack.c.b16 %v3141, %v3133
    %v4790 = vpack.c.b16 %v3142, %v3134
    %v4791 = vpack.c.b16 %v3143, %v3135
    %v4792 = vpack.c.b16 %v3144, %v3136
    %v4793 = vpack.c.b16 %v3145, %v3137
    %v4794 = vpack.c.b16 %v3146, %v3138
    %v4795 = vpack.c.b16 %v3155, %v3147
    %v4796 = vpack.c.b16 %v3156, %v3148
    %v4797 = vpack.c.b16 %v3157, %v3149
    %v4798 = vpack.c.b16 %v3158, %v3150
    %v4799 = vpack.c.b16 %v3159, %v3151
    %v4800 = vpack.c.b16 %v3160, %v3152
    %v4801 = vpack.c.b16 %v3161, %v3153
    %v4802 = vpack.c.b16 %v3162, %v3154
    %v4803 = vpack.c.b16 %v3171, %v3163
    %v4804 = vpack.c.b16 %v3172, %v3164
    %v4805 = vpack.c.b16 %v3173, %v3165
    %v4806 = vpack.c.b16 %v3174, %v3166
    %v4807 = vpack.c.b16 %v3175, %v3167
    %v4808 = vpack.c.b16 %v3176, %v3168
    %v4809 = vpack.c.b16 %v3177, %v3169
    %v4810 = vpack.c.b16 %v3178, %v3170
    %v4811 = vpack.c.b16 %v3187, %v3179
    %v4812 = vpack.c.b16 %v3188, %v3180
    %v4813 = vpack.c.b16 %v3189, %v3181
    %v4814 = vpack.c.b16 %v3190, %v3182
    %v4815 = vpack.c.b16 %v3191, %v3183
    %v4816 = vpack.c.b16 %v3192, %v3184
    %v4817 = vpack.c.b16 %v3193, %v3185
    %v4818 = vpack.c.b16 %v3194, %v3186
    %v4819 = vpack.c.b16 %v3203, %v3195
    %v4820 = vpack.c.b16 %v3204, %v3196
    %v4821 = vpack.c.b16 %v3205, %v3197
    %v4822 = vpack.c.b16 %v3206, %v3198
    %v4823 = vpack.c.b16 %v3207, %v3199
    %v4824 = vpack.c.b16 %v3208, %v3200
    %v4825 = vpack.c.b16 %v3209, %v3201
    %v4826 = vpack.c.b16 %v3210, %v3202
    %v4827 = vpack.c.b16 %v3219, %v3211
    %v4828 = vpack.c.b16 %v3220, %v3212
    %v4829 = vpack.c.b16 %v3221, %v3213
    %v4830 = vpack.c.b16 %v3222, %v3214
    %v4831 = vpack.c.b16 %v3223, %v3215
    %v4832 = vpack.c.b16 %v3224, %v3216
    %v4833 = vpack.c.b16 %v3225, %v3217
    %v4834 = vpack.c.b16 %v3226, %v3218
    %v4835 = vpack.c.b16 %v3235, %v3227
    %v4836 = vpack.c.b16 %v3236, %v3228
    %v4837 = vpack.c.b16 %v3237, %v3229
    %v4838 = vpack.c.b16 %v3238, %v3230
    %v4839 = vpack.c.b16 %v3239, %v3231
    %v4840 = vpack.c.b16 %v3240, %v3232
    %v4841 = vpack.c.b16 %v3241, %v3233
    %v4842 = vpack.c.b16 %v3242, %v3234
    %v4843 = vpack.c.b16 %v3251, %v3243
    %v4844 = vpack.c.b16 %v3252, %v3244
    %v4845 = vpack.c.b16 %v3253, %v3245
    %v4846 = vpack.c.b16 %v3254, %v3246
    %v4847 = vpack.c.b16 %v3255, %v3247
    %v4848 = vpack.c.b16 %v3256, %v3248
    %v4849 = vpack.c.b16 %v3257, %v3249
    %v4850 = vpack.c.b16 %v3258, %v3250
    %v4851 = vpack.c.b16 %v3267, %v3259
    %v4852 = vpack.c.b16 %v3268, %v3260
    %v4853 = vpack.c.b16 %v3269, %v3261
    %v4854 = vpack.c.b16 %v3270, %v3262
    %v4855 = vpack.c.b16 %v3271, %v3263
    %v4856 = vpack.c.b16 %v3272, %v3264
    %v4857 = vpack.c.b16 %v3273, %v3265
    %v4858 = vpack.c.b16 %v3274, %v3266
    %v4859 = vpack.c.b16 %v3283, %v3275
    %v4860 = vpack.c.b16 %v3284, %v3276
    %v4861 = vpack.c.b16 %v3285, %v3277
    %v4862 = vpack.c.b16 %v3286, %v3278
    %v4863 = vpack.c.b16 %v3287, %v3279
    %v4864 = vpack.c.b16 %v3288, %v3280
    %v4865 = vpack.c.b16 %v3289, %v3281
    %v4866 = vpack.c.b16 %v3290, %v3282
    %v4867 = vpack.c.b16 %v3299, %v3291
    %v4868 = vpack.c.b16 %v3300, %v3292
    %v4869 = vpack.c.b16 %v3301, %v3293
    %v4870 = vpack.c.b16 %v3302, %v3294
    %v4871 = vpack.c.b16 %v3303, %v3295
    %v4872 = vpack.c.b16 %v3304, %v3296
    %v4873 = vpack.c.b16 %v3305, %v3297
    %v4874 = vpack.c.b16 %v3306, %v3298
    %v4875 = vpack.c.b16 %v3315, %v3307
    %v4876 = vpack.c.b16 %v3316, %v3308
    %v4877 = vpack.c.b16 %v3317, %v3309
    %v4878 = vpack.c.b16 %v3318, %v3310
    %v4879 = vpack.c.b16 %v3319, %v3311
    %v4880 = vpack.c.b16 %v3320, %v3312
    %v4881 = vpack.c.b16 %v3321, %v3313
    %v4882 = vpack.c.b16 %v3322, %v3314
    %v4883 = vpack.c.b16 %v3331, %v3323
    %v4884 = vpack.c.b16 %v3332, %v3324
    %v4885 = vpack.c.b16 %v3333, %v3325
    %v4886 = vpack.c.b16 %v3334, %v3326
    %v4887 = vpack.c.b16 %v3335, %v3327
    %v4888 = vpack.c.b16 %v3336, %v3328
    %v4889 = vpack.c.b16 %v3337, %v3329
    %v4890 = vpack.c.b16 %v3338, %v3330
    %v4891 = vpack.c.b16 %v3347, %v3339
    %v4892 = vpack.c.b16 %v3348, %v3340
    %v4893 = vpack.c.b16 %v3349, %v3341
    %v4894 = vpack.c.b16 %v3350, %v3342
    %v4895 = vpack.c.b16 %v3351, %v3343
    %v4896 = vpack.c.b16 %v3352, %v3344
    %v4897 = vpack.c.b16 %v3353, %v3345
    %v4898 = vpack.c.b16 %v3354, %v3346
    %v4899 = vpack.c.b16 %v3363, %v3355
    %v4900 = vpack.c.b16 %v3364, %v3356
    %v4901 = vpack.c.b16 %v3365, %v3357
    %v4902 = vpack.c.b16 %v3366, %v3358
    %v4903 = vpack.c.b16 %v3367, %v3359
    %v4904 = vpack.c.b16 %v3368, %v3360
    %v4905 = vpack.c.b16 %v3369, %v3361
    %v4906 = vpack.c.b16 %v3370, %v3362
    %v4907 = vpack.c.b16 %v3379, %v3371
    %v4908 = vpack.c.b16 %v3380, %v3372
    %v4909 = vpack.c.b16 %v3381, %v3373
    %v4910 = vpack.c.b16 %v3382, %v3374
    %v4911 = vpack.c.b16 %v3383, %v3375
    %v4912 = vpack.c.b16 %v3384, %v3376
    %v4913 = vpack.c.b16 %v3385, %v3377
    %v4914 = vpack.c.b16 %v3386, %v3378
    %v4915 = vpack.c.b16 %v3395, %v3387
    %v4916 = vpack.c.b16 %v3396, %v3388
    %v4917 = vpack.c.b16 %v3397, %v3389
    %v4918 = vpack.c.b16 %v3398, %v3390
    %v4919 = vpack.c.b16 %v3399, %v3391
    %v4920 = vpack.c.b16 %v3400, %v3392
    %v4921 = vpack.c.b16 %v3401, %v3393
    %v4922 = vpack.c.b16 %v3402, %v3394
    %v4923 = vpack.c.b16 %v3411, %v3403
    %v4924 = vpack.c.b16 %v3412, %v3404
    %v4925 = vpack.c.b16 %v3413, %v3405
    %v4926 = vpack.c.b16 %v3414, %v3406
    %v4927 = vpack.c.b16 %v3415, %v3407
    %v4928 = vpack.c.b16 %v3416, %v3408
    %v4929 = vpack.c.b16 %v3417, %v3409
    %v4930 = vpack.c.b16 %v3418, %v3410
    %v4931 = vpack.c.b16 %v3427, %v3419
    %v4932 = vpack.c.b16 %v3428, %v3420
    %v4933 = vpack.c.b16 %v3429, %v3421
    %v4934 = vpack.c.b16 %v3430, %v3422
    %v4935 = vpack.c.b16 %v3431, %v3423
    %v4936 = vpack.c.b16 %v3432, %v3424
    %v4937 = vpack.c.b16 %v3433, %v3425
    %v4938 = vpack.c.b16 %v3434, %v3426
    %v4939 = vpack.c.b16 %v3443, %v3435
    %v4940 = vpack.c.b16 %v3444, %v3436
    %v4941 = vpack.c.b16 %v3445, %v3437
    %v4942 = vpack.c.b16 %v3446, %v3438
    %v4943 = vpack.c.b16 %v3447, %v3439
    %v4944 = vpack.c.b16 %v3448, %v3440
    %v4945 = vpack.c.b16 %v3449, %v3441
    %v4946 = vpack.c.b16 %v3450, %v3442
    %v4947 = vpack.c.b16 %v3459, %v3451
    %v4948 = vpack.c.b16 %v3460, %v3452
    %v4949 = vpack.c.b16 %v3461, %v3453
    %v4950 = vpack.c.b16 %v3462, %v3454
    %v4951 = vpack.c.b16 %v3463, %v3455
    %v4952 = vpack.c.b16 %v3464, %v3456
    %v4953 = vpack.c.b16 %v3465, %v3457
    %v4954 = vpack.c.b16 %v3466, %v3458
    %v4955 = vpack.c.b16 %v3475, %v3467
    %v4956 = vpack.c.b16 %v3476, %v3468
    %v4957 = vpack.c.b16 %v3477, %v3469
    %v4958 = vpack.c.b16 %v3478, %v3470
    %v4959 = vpack.c.b16 %v3479, %v3471
    %v4960 = vpack.c.b16 %v3480, %v3472
    %v4961 = vpack.c.b16 %v3481, %v3473
    %v4962 = vpack.c.b16 %v3482, %v3474
    %v4963 = vpack.c.b16 %v3491, %v3483
    %v4964 = vpack.c.b16 %v3492, %v3484
    %v4965 = vpack.c.b16 %v3493, %v3485
    %v4966 = vpack.c.b16 %v3494, %v3486
    %v4967 = vpack.c.b16 %v3495, %v3487
    %v4968 = vpack.c.b16 %v3496, %v3488
    %v4969 = vpack.c.b16 %v3497, %v3489
    %v4970 = vpack.c.b16 %v3498, %v3490
    %v4971 = vpack.c.b16 %v3507, %v3499
    %v4972 = vpack.c.b16 %v3508, %v3500
    %v4973 = vpack.c.b16 %v3509, %v3501
    %v4974 = vpack.c.b16 %v3510, %v3502
    %v4975 = vpack.c.b16 %v3511, %v3503
    %v4976 = vpack.c.b16 %v3512, %v3504
    %v4977 = vpack.c.b16 %v3513, %v3505
    %v4978 = vpack.c.b16 %v3514, %v3506
    %v4979 = vpack.c.b16 %v3523, %v3515
    %v4980 = vpack.c.b16 %v3524, %v3516
    %v4981 = vpack.c.b16 %v3525, %v3517
    %v4982 = vpack.c.b16 %v3526, %v3518
    %v4983 = vpack.c.b16 %v3527, %v3519
    %v4984 = vpack.c.b16 %v3528, %v3520
    %v4985 = vpack.c.b16 %v3529, %v3521
    %v4986 = vpack.c.b16 %v3530, %v3522
    %v4987 = vpack.c.b16 %v3539, %v3531
    %v4988 = vpack.c.b16 %v3540, %v3532
    %v4989 = vpack.c.b16 %v3541, %v3533
    %v4990 = vpack.c.b16 %v3542, %v3534
    %v4991 = vpack.c.b16 %v3543, %v3535
    %v4992 = vpack.c.b16 %v3544, %v3536
    %v4993 = vpack.c.b16 %v3545, %v3537
    %v4994 = vpack.c.b16 %v3546, %v3538
    %v4995 = vpack.c.b16 %v3555, %v3547
    %v4996 = vpack.c.b16 %v3556, %v3548
    %v4997 = vpack.c.b16 %v3557, %v3549
    %v4998 = vpack.c.b16 %v3558, %v3550
    %v4999 = vpack.c.b16 %v3559, %v3551
    %v5000 = vpack.c.b16 %v3560, %v3552
    %v5001 = vpack.c.b16 %v3561, %v3553
    %v5002 = vpack.c.b16 %v3562, %v3554
    %v5003 = vpack.c.b16 %v3571, %v3563
    %v5004 = vpack.c.b16 %v3572, %v3564
    %v5005 = vpack.c.b16 %v3573, %v3565
    %v5006 = vpack.c.b16 %v3574, %v3566
    %v5007 = vpack.c.b16 %v3575, %v3567
    %v5008 = vpack.c.b16 %v3576, %v3568
    %v5009 = vpack.c.b16 %v3577, %v3569
    %v5010 = vpack.c.b16 %v3578, %v3570
    %v5011 = vpack.c.b16 %v3587, %v3579
    %v5012 = vpack.c.b16 %v3588, %v3580
    %v5013 = vpack.c.b16 %v3589, %v3581
    %v5014 = vpack.c.b16 %v3590, %v3582
    %v5015 = vpack.c.b16 %v3591, %v3583
    %v5016 = vpack.c.b16 %v3592, %v3584
    %v5017 = vpack.c.b16 %v3593, %v3585
    %v5018 = vpack.c.b16 %v3594, %v3586
    %v5019 = vpack.c.b16 %v3603, %v3595
    %v5020 = vpack.c.b16 %v3604, %v3596
    %v5021 = vpack.c.b16 %v3605, %v3597
    %v5022 = vpack.c.b16 %v3606, %v3598
    %v5023 = vpack.c.b16 %v3607, %v3599
    %v5024 = vpack.c.b16 %v3608, %v3600
    %v5025 = vpack.c.b16 %v3609, %v3601
    %v5026 = vpack.c.b16 %v3610, %v3602
    %v5027 = vpack.c.b16 %v3619, %v3611
    %v5028 = vpack.c.b16 %v3620, %v3612
    %v5029 = vpack.c.b16 %v3621, %v3613
    %v5030 = vpack.c.b16 %v3622, %v3614
    %v5031 = vpack.c.b16 %v3623, %v3615
    %v5032 = vpack.c.b16 %v3624, %v3616
    %v5033 = vpack.c.b16 %v3625, %v3617
    %v5034 = vpack.c.b16 %v3626, %v3618
    %v5035 = vpack.c.b16 %v3635, %v3627
    %v5036 = vpack.c.b16 %v3636, %v3628
    %v5037 = vpack.c.b16 %v3637, %v3629
    %v5038 = vpack.c.b16 %v3638, %v3630
    %v5039 = vpack.c.b16 %v3639, %v3631
    %v5040 = vpack.c.b16 %v3640, %v3632
    %v5041 = vpack.c.b16 %v3641, %v3633
    %v5042 = vpack.c.b16 %v3642, %v3634
    %v5043 = vpack.c.b16 %v3651, %v3643
    %v5044 = vpack.c.b16 %v3652, %v3644
    %v5045 = vpack.c.b16 %v3653, %v3645
    %v5046 = vpack.c.b16 %v3654, %v3646
    %v5047 = vpack.c.b16 %v3655, %v3647
    %v5048 = vpack.c.b16 %v3656, %v3648
    %v5049 = vpack.c.b16 %v3657, %v3649
    %v5050 = vpack.c.b16 %v3658, %v3650
    %v5051 = vpack.c.b16 %v3667, %v3659
    %v5052 = vpack.c.b16 %v3668, %v3660
    %v5053 = vpack.c.b16 %v3669, %v3661
    %v5054 = vpack.c.b16 %v3670, %v3662
    %v5055 = vpack.c.b16 %v3671, %v3663
    %v5056 = vpack.c.b16 %v3672, %v3664
    %v5057 = vpack.c.b16 %v3673, %v3665
    %v5058 = vpack.c.b16 %v3674, %v3666
    %v5059 = vpack.c.b16 %v3683, %v3675
    %v5060 = vpack.c.b16 %v3684, %v3676
    %v5061 = vpack.c.b16 %v3685, %v3677
    %v5062 = vpack.c.b16 %v3686, %v3678
    %v5063 = vpack.c.b16 %v3687, %v3679
    %v5064 = vpack.c.b16 %v3688, %v3680
    %v5065 = vpack.c.b16 %v3689, %v3681
    %v5066 = vpack.c.b16 %v3690, %v3682
    %v5067 = vpack.c.b16 %v3699, %v3691
    %v5068 = vpack.c.b16 %v3700, %v3692
    %v5069 = vpack.c.b16 %v3701, %v3693
    %v5070 = vpack.c.b16 %v3702, %v3694
    %v5071 = vpack.c.b16 %v3703, %v3695
    %v5072 = vpack.c.b16 %v3704, %v3696
    %v5073 = vpack.c.b16 %v3705, %v3697
    %v5074 = vpack.c.b16 %v3706, %v3698
    %v5075 = vpack.c.b16 %v3715, %v3707
    %v5076 = vpack.c.b16 %v3716, %v3708
    %v5077 = vpack.c.b16 %v3717, %v3709
    %v5078 = vpack.c.b16 %v3718, %v3710
    %v5079 = vpack.c.b16 %v3719, %v3711
    %v5080 = vpack.c.b16 %v3720, %v3712
    %v5081 = vpack.c.b16 %v3721, %v3713
    %v5082 = vpack.c.b16 %v3722, %v3714
    %v5083 = vpack.c.b16 %v3731, %v3723
    %v5084 = vpack.c.b16 %v3732, %v3724
    %v5085 = vpack.c.b16 %v3733, %v3725
    %v5086 = vpack.c.b16 %v3734, %v3726
    %v5087 = vpack.c.b16 %v3735, %v3727
    %v5088 = vpack.c.b16 %v3736, %v3728
    %v5089 = vpack.c.b16 %v3737, %v3729
    %v5090 = vpack.c.b16 %v3738, %v3730
    %v5091 = vpack.c.b16 %v3747, %v3739
    %v5092 = vpack.c.b16 %v3748, %v3740
    %v5093 = vpack.c.b16 %v3749, %v3741
    %v5094 = vpack.c.b16 %v3750, %v3742
    %v5095 = vpack.c.b16 %v3751, %v3743
    %v5096 = vpack.c.b16 %v3752, %v3744
    %v5097 = vpack.c.b16 %v3753, %v3745
    %v5098 = vpack.c.b16 %v3754, %v3746
    %v5099 = vpack.c.b16 %v3763, %v3755
    %v5100 = vpack.c.b16 %v3764, %v3756
    %v5101 = vpack.c.b16 %v3765, %v3757
    %v5102 = vpack.c.b16 %v3766, %v3758
    %v5103 = vpack.c.b16 %v3767, %v3759
    %v5104 = vpack.c.b16 %v3768, %v3760
    %v5105 = vpack.c.b16 %v3769, %v3761
    %v5106 = vpack.c.b16 %v3770, %v3762
    %v5107 = vpack.c.b16 %v3779, %v3771
    %v5108 = vpack.c.b16 %v3780, %v3772
    %v5109 = vpack.c.b16 %v3781, %v3773
    %v5110 = vpack.c.b16 %v3782, %v3774
    %v5111 = vpack.c.b16 %v3783, %v3775
    %v5112 = vpack.c.b16 %v3784, %v3776
    %v5113 = vpack.c.b16 %v3785, %v3777
    %v5114 = vpack.c.b16 %v3786, %v3778
    %v5115 = vpack.c.b16 %v3795, %v3787
    %v5116 = vpack.c.b16 %v3796, %v3788
    %v5117 = vpack.c.b16 %v3797, %v3789
    %v5118 = vpack.c.b16 %v3798, %v3790
    %v5119 = vpack.c.b16 %v3799, %v3791
    %v5120 = vpack.c.b16 %v3800, %v3792
    %v5121 = vpack.c.b16 %v3801, %v3793
    %v5122 = vpack.c.b16 %v3802, %v3794
    %v5123 = vpack.c.b16 %v3811, %v3803
    %v5124 = vpack.c.b16 %v3812, %v3804
    %v5125 = vpack.c.b16 %v3813, %v3805
    %v5126 = vpack.c.b16 %v3814, %v3806
    %v5127 = vpack.c.b16 %v3815, %v3807
    %v5128 = vpack.c.b16 %v3816, %v3808
    %v5129 = vpack.c.b16 %v3817, %v3809
    %v5130 = vpack.c.b16 %v3818, %v3810
    %v5131 = vpack.c.b16 %v3827, %v3819
    %v5132 = vpack.c.b16 %v3828, %v3820
    %v5133 = vpack.c.b16 %v3829, %v3821
    %v5134 = vpack.c.b16 %v3830, %v3822
    %v5135 = vpack.c.b16 %v3831, %v3823
    %v5136 = vpack.c.b16 %v3832, %v3824
    %v5137 = vpack.c.b16 %v3833, %v3825
    %v5138 = vpack.c.b16 %v3834, %v3826
    %v5139 = vpack.c.b16 %v3843, %v3835
    %v5140 = vpack.c.b16 %v3844, %v3836
    %v5141 = vpack.c.b16 %v3845, %v3837
    %v5142 = vpack.c.b16 %v3846, %v3838
    %v5143 = vpack.c.b16 %v3847, %v3839
    %v5144 = vpack.c.b16 %v3848, %v3840
    %v5145 = vpack.c.b16 %v3849, %v3841
    %v5146 = vpack.c.b16 %v3850, %v3842
    %v5147 = vpack.c.b16 %v3859, %v3851
    %v5148 = vpack.c.b16 %v3860, %v3852
    %v5149 = vpack.c.b16 %v3861, %v3853
    %v5150 = vpack.c.b16 %v3862, %v3854
    %v5151 = vpack.c.b16 %v3863, %v3855
    %v5152 = vpack.c.b16 %v3864, %v3856
    %v5153 = vpack.c.b16 %v3865, %v3857
    %v5154 = vpack.c.b16 %v3866, %v3858
    %v5155 = vpack.c.b16 %v3875, %v3867
    %v5156 = vpack.c.b16 %v3876, %v3868
    %v5157 = vpack.c.b16 %v3877, %v3869
    %v5158 = vpack.c.b16 %v3878, %v3870
    %v5159 = vpack.c.b16 %v3879, %v3871
    %v5160 = vpack.c.b16 %v3880, %v3872
    %v5161 = vpack.c.b16 %v3881, %v3873
    %v5162 = vpack.c.b16 %v3882, %v3874
    %v5163 = vpack.c.b16 %v3891, %v3883
    %v5164 = vpack.c.b16 %v3892, %v3884
    %v5165 = vpack.c.b16 %v3893, %v3885
    %v5166 = vpack.c.b16 %v3894, %v3886
    %v5167 = vpack.c.b16 %v3895, %v3887
    %v5168 = vpack.c.b16 %v3896, %v3888
    %v5169 = vpack.c.b16 %v3897, %v3889
    %v5170 = vpack.c.b16 %v3898, %v3890
    %v5171 = vpack.c.b16 %v3907, %v3899
    %v5172 = vpack.c.b16 %v3908, %v3900
    %v5173 = vpack.c.b16 %v3909, %v3901
    %v5174 = vpack.c.b16 %v3910, %v3902
    %v5175 = vpack.c.b16 %v3911, %v3903
    %v5176 = vpack.c.b16 %v3912, %v3904
    %v5177 = vpack.c.b16 %v3913, %v3905
    %v5178 = vpack.c.b16 %v3914, %v3906
    %v5179 = vpack.c.b16 %v3923, %v3915
    %v5180 = vpack.c.b16 %v3924, %v3916
    %v5181 = vpack.c.b16 %v3925, %v3917
    %v5182 = vpack.c.b16 %v3926, %v3918
    %v5183 = vpack.c.b16 %v3927, %v3919
    %v5184 = vpack.c.b16 %v3928, %v3920
    %v5185 = vpack.c.b16 %v3929, %v3921
    %v5186 = vpack.c.b16 %v3930, %v3922
    %v5187 = vpack.c.b16 %v3939, %v3931
    %v5188 = vpack.c.b16 %v3940, %v3932
    %v5189 = vpack.c.b16 %v3941, %v3933
    %v5190 = vpack.c.b16 %v3942, %v3934
    %v5191 = vpack.c.b16 %v3943, %v3935
    %v5192 = vpack.c.b16 %v3944, %v3936
    %v5193 = vpack.c.b16 %v3945, %v3937
    %v5194 = vpack.c.b16 %v3946, %v3938
    %v5195 = vpack.c.b16 %v3955, %v3947
    %v5196 = vpack.c.b16 %v3956, %v3948
    %v5197 = vpack.c.b16 %v3957, %v3949
    %v5198 = vpack.c.b16 %v3958, %v3950
    %v5199 = vpack.c.b16 %v3959, %v3951
    %v5200 = vpack.c.b16 %v3960, %v3952
    %v5201 = vpack.c.b16 %v3961, %v3953
    %v5202 = vpack.c.b16 %v3962, %v3954
    %v5203 = vpack.c.b16 %v3971, %v3963
    %v5204 = vpack.c.b16 %v3972, %v3964
    %v5205 = vpack.c.b16 %v3973, %v3965
    %v5206 = vpack.c.b16 %v3974, %v3966
    %v5207 = vpack.c.b16 %v3975, %v3967
    %v5208 = vpack.c.b16 %v3976, %v3968
    %v5209 = vpack.c.b16 %v3977, %v3969
    %v5210 = vpack.c.b16 %v3978, %v3970
    %v5211 = vpack.c.b16 %v3987, %v3979
    %v5212 = vpack.c.b16 %v3988, %v3980
    %v5213 = vpack.c.b16 %v3989, %v3981
    %v5214 = vpack.c.b16 %v3990, %v3982
    %v5215 = vpack.c.b16 %v3991, %v3983
    %v5216 = vpack.c.b16 %v3992, %v3984
    %v5217 = vpack.c.b16 %v3993, %v3985
    %v5218 = vpack.c.b16 %v3994, %v3986
    %v5219 = vpack.c.b16 %v4003, %v3995
    %v5220 = vpack.c.b16 %v4004, %v3996
    %v5221 = vpack.c.b16 %v4005, %v3997
    %v5222 = vpack.c.b16 %v4006, %v3998
    %v5223 = vpack.c.b16 %v4007, %v3999
    %v5224 = vpack.c.b16 %v4008, %v4000
    %v5225 = vpack.c.b16 %v4009, %v4001
    %v5226 = vpack.c.b16 %v4010, %v4002
    %v5227 = vpack.c.b16 %v4019, %v4011
    %v5228 = vpack.c.b16 %v4020, %v4012
    %v5229 = vpack.c.b16 %v4021, %v4013
    %v5230 = vpack.c.b16 %v4022, %v4014
    %v5231 = vpack.c.b16 %v4023, %v4015
    %v5232 = vpack.c.b16 %v4024, %v4016
    %v5233 = vpack.c.b16 %v4025, %v4017
    %v5234 = vpack.c.b16 %v4026, %v4018
    %v5235 = vpack.c.b16 %v4035, %v4027
    %v5236 = vpack.c.b16 %v4036, %v4028
    %v5237 = vpack.c.b16 %v4037, %v4029
    %v5238 = vpack.c.b16 %v4038, %v4030
    %v5239 = vpack.c.b16 %v4039, %v4031
    %v5240 = vpack.c.b16 %v4040, %v4032
    %v5241 = vpack.c.b16 %v4041, %v4033
    %v5242 = vpack.c.b16 %v4042, %v4034
    %v5243 = vpack.c.b16 %v4051, %v4043
    %v5244 = vpack.c.b16 %v4052, %v4044
    %v5245 = vpack.c.b16 %v4053, %v4045
    %v5246 = vpack.c.b16 %v4054, %v4046
    %v5247 = vpack.c.b16 %v4055, %v4047
    %v5248 = vpack.c.b16 %v4056, %v4048
    %v5249 = vpack.c.b16 %v4057, %v4049
    %v5250 = vpack.c.b16 %v4058, %v4050
    %v5251 = vpack.c.b16 %v4067, %v4059
    %v5252 = vpack.c.b16 %v4068, %v4060
    %v5253 = vpack.c.b16 %v4069, %v4061
    %v5254 = vpack.c.b16 %v4070, %v4062
    %v5255 = vpack.c.b16 %v4071, %v4063
    %v5256 = vpack.c.b16 %v4072, %v4064
    %v5257 = vpack.c.b16 %v4073, %v4065
    %v5258 = vpack.c.b16 %v4074, %v4066
    %v5259 = vpack.c.b16 %v4083, %v4075
    %v5260 = vpack.c.b16 %v4084, %v4076
    %v5261 = vpack.c.b16 %v4085, %v4077
    %v5262 = vpack.c.b16 %v4086, %v4078
    %v5263 = vpack.c.b16 %v4087, %v4079
    %v5264 = vpack.c.b16 %v4088, %v4080
    %v5265 = vpack.c.b16 %v4089, %v4081
    %v5266 = vpack.c.b16 %v4090, %v4082
    %v5267 = vpack.c.b16 %v4099, %v4091
    %v5268 = vpack.c.b16 %v4100, %v4092
    %v5269 = vpack.c.b16 %v4101, %v4093
    %v5270 = vpack.c.b16 %v4102, %v4094
    %v5271 = vpack.c.b16 %v4103, %v4095
    %v5272 = vpack.c.b16 %v4104, %v4096
    %v5273 = vpack.c.b16 %v4105, %v4097
    %v5274 = vpack.c.b16 %v4106, %v4098
    %v5275 = vpack.c.b16 %v4115, %v4107
    %v5276 = vpack.c.b16 %v4116, %v4108
    %v5277 = vpack.c.b16 %v4117, %v4109
    %v5278 = vpack.c.b16 %v4118, %v4110
    %v5279 = vpack.c.b16 %v4119, %v4111
    %v5280 = vpack.c.b16 %v4120, %v4112
    %v5281 = vpack.c.b16 %v4121, %v4113
    %v5282 = vpack.c.b16 %v4122, %v4114
    %v5283 = vpack.c.b16 %v4131, %v4123
    %v5284 = vpack.c.b16 %v4132, %v4124
    %v5285 = vpack.c.b16 %v4133, %v4125
    %v5286 = vpack.c.b16 %v4134, %v4126
    %v5287 = vpack.c.b16 %v4135, %v4127
    %v5288 = vpack.c.b16 %v4136, %v4128
    %v5289 = vpack.c.b16 %v4137, %v4129
    %v5290 = vpack.c.b16 %v4138, %v4130
    %v5291 = vpack.c.b16 %v4147, %v4139
    %v5292 = vpack.c.b16 %v4148, %v4140
    %v5293 = vpack.c.b16 %v4149, %v4141
    %v5294 = vpack.c.b16 %v4150, %v4142
    %v5295 = vpack.c.b16 %v4151, %v4143
    %v5296 = vpack.c.b16 %v4152, %v4144
    %v5297 = vpack.c.b16 %v4153, %v4145
    %v5298 = vpack.c.b16 %v4154, %v4146
    %v5299 = vpack.c.b16 %v4163, %v4155
    %v5300 = vpack.c.b16 %v4164, %v4156
    %v5301 = vpack.c.b16 %v4165, %v4157
    %v5302 = vpack.c.b16 %v4166, %v4158
    %v5303 = vpack.c.b16 %v4167, %v4159
    %v5304 = vpack.c.b16 %v4168, %v4160
    %v5305 = vpack.c.b16 %v4169, %v4161
    %v5306 = vpack.c.b16 %v4170, %v4162
    %v5307 = vpack.c.b16 %v4179, %v4171
    %v5308 = vpack.c.b16 %v4180, %v4172
    %v5309 = vpack.c.b16 %v4181, %v4173
    %v5310 = vpack.c.b16 %v4182, %v4174
    %v5311 = vpack.c.b16 %v4183, %v4175
    %v5312 = vpack.c.b16 %v4184, %v4176
    %v5313 = vpack.c.b16 %v4185, %v4177
    %v5314 = vpack.c.b16 %v4186, %v4178
    %v5315 = vpack.c.b16 %v4195, %v4187
    %v5316 = vpack.c.b16 %v4196, %v4188
    %v5317 = vpack.c.b16 %v4197, %v4189
    %v5318 = vpack.c.b16 %v4198, %v4190
    %v5319 = vpack.c.b16 %v4199, %v4191
    %v5320 = vpack.c.b16 %v4200, %v4192
    %v5321 = vpack.c.b16 %v4201, %v4193
    %v5322 = vpack.c.b16 %v4202, %v4194
    %v5323 = vpack.c.b16 %v4211, %v4203
    %v5324 = vpack.c.b16 %v4212, %v4204
    %v5325 = vpack.c.b16 %v4213, %v4205
    %v5326 = vpack.c.b16 %v4214, %v4206
    %v5327 = vpack.c.b16 %v4215, %v4207
    %v5328 = vpack.c.b16 %v4216, %v4208
    %v5329 = vpack.c.b16 %v4217, %v4209
    %v5330 = vpack.c.b16 %v4218, %v4210
    %v5331 = vpack.c.b16 %v4227, %v4219
    %v5332 = vpack.c.b16 %v4228, %v4220
    %v5333 = vpack.c.b16 %v4229, %v4221
    %v5334 = vpack.c.b16 %v4230, %v4222
    %v5335 = vpack.c.b16 %v4231, %v4223
    %v5336 = vpack.c.b16 %v4232, %v4224
    %v5337 = vpack.c.b16 %v4233, %v4225
    %v5338 = vpack.c.b16 %v4234, %v4226
    %v5339 = vpack.c.b16 %v4243, %v4235
    %v5340 = vpack.c.b16 %v4244, %v4236
    %v5341 = vpack.c.b16 %v4245, %v4237
    %v5342 = vpack.c.b16 %v4246, %v4238
    %v5343 = vpack.c.b16 %v4247, %v4239
    %v5344 = vpack.c.b16 %v4248, %v4240
    %v5345 = vpack.c.b16 %v4249, %v4241
    %v5346 = vpack.c.b16 %v4250, %v4242
    %v5347 = vpack.c.b16 %v4259, %v4251
    %v5348 = vpack.c.b16 %v4260, %v4252
    %v5349 = vpack.c.b16 %v4261, %v4253
    %v5350 = vpack.c.b16 %v4262, %v4254
    %v5351 = vpack.c.b16 %v4263, %v4255
    %v5352 = vpack.c.b16 %v4264, %v4256
    %v5353 = vpack.c.b16 %v4265, %v4257
    %v5354 = vpack.c.b16 %v4266, %v4258
    %v5355 = vpack.c.b16 %v4275, %v4267
    %v5356 = vpack.c.b16 %v4276, %v4268
    %v5357 = vpack.c.b16 %v4277, %v4269
    %v5358 = vpack.c.b16 %v4278, %v4270
    %v5359 = vpack.c.b16 %v4279, %v4271
    %v5360 = vpack.c.b16 %v4280, %v4272
    %v5361 = vpack.c.b16 %v4281, %v4273
    %v5362 = vpack.c.b16 %v4282, %v4274
    %v5363 = vpack.c.b16 %v4291, %v4283
    %v5364 = vpack.c.b16 %v4292, %v4284
    %v5365 = vpack.c.b16 %v4293, %v4285
    %v5366 = vpack.c.b16 %v4294, %v4286
    %v5367 = vpack.c.b16 %v4295, %v4287
    %v5368 = vpack.c.b16 %v4296, %v4288
    %v5369 = vpack.c.b16 %v4297, %v4289
    %v5370 = vpack.c.b16 %v4298, %v4290
    %v5371 = vpack.c.b16 %v4307, %v4299
    %v5372 = vpack.c.b16 %v4308, %v4300
    %v5373 = vpack.c.b16 %v4309, %v4301
    %v5374 = vpack.c.b16 %v4310, %v4302
    %v5375 = vpack.c.b16 %v4311, %v4303
    %v5376 = vpack.c.b16 %v4312, %v4304
    %v5377 = vpack.c.b16 %v4313, %v4305
    %v5378 = vpack.c.b16 %v4314, %v4306
    %v5379 = vpack.c.b16 %v4323, %v4315
    %v5380 = vpack.c.b16 %v4324, %v4316
    %v5381 = vpack.c.b16 %v4325, %v4317
    %v5382 = vpack.c.b16 %v4326, %v4318
    %v5383 = vpack.c.b16 %v4327, %v4319
    %v5384 = vpack.c.b16 %v4328, %v4320
    %v5385 = vpack.c.b16 %v4329, %v4321
    %v5386 = vpack.c.b16 %v4330, %v4322
    %v5387 = vpack.c.b16 %v4339, %v4331
    %v5388 = vpack.c.b16 %v4340, %v4332
    %v5389 = vpack.c.b16 %v4341, %v4333
    %v5390 = vpack.c.b16 %v4342, %v4334
    %v5391 = vpack.c.b16 %v4343, %v4335
    %v5392 = vpack.c.b16 %v4344, %v4336
    %v5393 = vpack.c.b16 %v4345, %v4337
    %v5394 = vpack.c.b16 %v4346, %v4338
    %v5395 = vpack.c.b16 %v4355, %v4347
    %v5396 = vpack.c.b16 %v4356, %v4348
    %v5397 = vpack.c.b16 %v4357, %v4349
    %v5398 = vpack.c.b16 %v4358, %v4350
    %v5399 = vpack.c.b16 %v4359, %v4351
    %v5400 = vpack.c.b16 %v4360, %v4352
    %v5401 = vpack.c.b16 %v4361, %v4353
    %v5402 = vpack.c.b16 %v4362, %v4354
    %v5403 = vpack.c.b16 %v4371, %v4363
    %v5404 = vpack.c.b16 %v4372, %v4364
    %v5405 = vpack.c.b16 %v4373, %v4365
    %v5406 = vpack.c.b16 %v4374, %v4366
    %v5407 = vpack.c.b16 %v4375, %v4367
    %v5408 = vpack.c.b16 %v4376, %v4368
    %v5409 = vpack.c.b16 %v4377, %v4369
    %v5410 = vpack.c.b16 %v4378, %v4370
    %v5411 = vpack.c.b16 %v4387, %v4379
    %v5412 = vpack.c.b16 %v4388, %v4380
    %v5413 = vpack.c.b16 %v4389, %v4381
    %v5414 = vpack.c.b16 %v4390, %v4382
    %v5415 = vpack.c.b16 %v4391, %v4383
    %v5416 = vpack.c.b16 %v4392, %v4384
    %v5417 = vpack.c.b16 %v4393, %v4385
    %v5418 = vpack.c.b16 %v4394, %v4386
    %6443 = vmatprep.subr.bf16.mxu0 %v4396
    %6444 = vmatpush1.bf16.msra.mxu0 %v4395
    %6445 = vmatprep.subr.bf16.mxu0 %v4404
    %6446 = vmatpush1.bf16.msra.mxu0 %v4403
    %6447 = vmatprep.subr.bf16.mxu0 %v4412
    %6448 = vmatpush1.bf16.msra.mxu0 %v4411
    %6449 = vmatprep.subr.bf16.mxu0 %v4420
    %6450 = vmatpush1.bf16.msra.mxu0 %v4419
    %6451 = vmatprep.subr.bf16.mxu0 %v4428
    %6452 = vmatpush1.bf16.msra.mxu0 %v4427
    %6453 = vmatprep.subr.bf16.mxu0 %v4436
    %6454 = vmatpush1.bf16.msra.mxu0 %v4435
    %6455 = vmatprep.subr.bf16.mxu0 %v4444
    %6456 = vmatpush1.bf16.msra.mxu0 %v4443
    %6457 = vmatprep.subr.bf16.mxu0 %v4452
    %6458 = vmatpush1.bf16.msra.mxu0 %v4451
    %6459 = vmatprep.subr.bf16.mxu0 %v4460
    %6460 = vmatpush1.bf16.msra.mxu0 %v4459
    %6461 = vmatprep.subr.bf16.mxu0 %v4468
    %6462 = vmatpush1.bf16.msra.mxu0 %v4467
    %6463 = vmatprep.subr.bf16.mxu0 %v4476
    %6464 = vmatpush1.bf16.msra.mxu0 %v4475
    %6465 = vmatprep.subr.bf16.mxu0 %v4484
    %6466 = vmatpush1.bf16.msra.mxu0 %v4483
    %6467 = vmatprep.subr.bf16.mxu0 %v4492
    %6468 = vmatpush1.bf16.msra.mxu0 %v4491
    %6469 = vmatprep.subr.bf16.mxu0 %v4500
    %6470 = vmatpush1.bf16.msra.mxu0 %v4499
    %6471 = vmatprep.subr.bf16.mxu0 %v4508
    %6472 = vmatpush1.bf16.msra.mxu0 %v4507
    %6473 = vmatprep.subr.bf16.mxu0 %v4516
    %6474 = vmatpush1.bf16.msra.mxu0 %v4515
    %6475 = vmatprep.mubr.bf16.mxu0 %v1292
    %6476 = vmatmul.mubr.bf16.gmra.mrb[0].mxu0 %v1291
    %v6477 = vpop.f32.mrb[0].mxu0
    %v6478 = vadd.f32 0.0, %v6477
    %v6479 = vpop.f32.mrb[0].mxu0
    %v6480 = vadd.f32 0.0, %v6479
    %v6481 = vpop.f32.mrb[0].mxu0
    %v6482 = vadd.f32 0.0, %v6481
    %v6483 = vpop.f32.mrb[0].mxu0
    %v6484 = vadd.f32 0.0, %v6483
    %6485 = vdwg.mxu0
    %6486 = vmatprep.subr.bf16.mxu0 %v4524
    %6487 = vmatpush1.bf16.msra.mxu0 %v4523
    %6488 = vmatprep.subr.bf16.mxu0 %v4532
    %6489 = vmatpush1.bf16.msra.mxu0 %v4531
    %6490 = vmatprep.subr.bf16.mxu0 %v4540
    %6491 = vmatpush1.bf16.msra.mxu0 %v4539
    %6492 = vmatprep.subr.bf16.mxu0 %v4548
    %6493 = vmatpush1.bf16.msra.mxu0 %v4547
    %6494 = vmatprep.subr.bf16.mxu0 %v4556
    %6495 = vmatpush1.bf16.msra.mxu0 %v4555
    %6496 = vmatprep.subr.bf16.mxu0 %v4564
    %6497 = vmatpush1.bf16.msra.mxu0 %v4563
    %6498 = vmatprep.subr.bf16.mxu0 %v4572
    %6499 = vmatpush1.bf16.msra.mxu0 %v4571
    %6500 = vmatprep.subr.bf16.mxu0 %v4580
    %6501 = vmatpush1.bf16.msra.mxu0 %v4579
    %6502 = vmatprep.subr.bf16.mxu0 %v4588
    %6503 = vmatpush1.bf16.msra.mxu0 %v4587
    %6504 = vmatprep.subr.bf16.mxu0 %v4596
    %6505 = vmatpush1.bf16.msra.mxu0 %v4595
    %6506 = vmatprep.subr.bf16.mxu0 %v4604
    %6507 = vmatpush1.bf16.msra.mxu0 %v4603
    %6508 = vmatprep.subr.bf16.mxu0 %v4612
    %6509 = vmatpush1.bf16.msra.mxu0 %v4611
    %6510 = vmatprep.subr.bf16.mxu0 %v4620
    %6511 = vmatpush1.bf16.msra.mxu0 %v4619
    %6512 = vmatprep.subr.bf16.mxu0 %v4628
    %6513 = vmatpush1.bf16.msra.mxu0 %v4627
    %6514 = vmatprep.subr.bf16.mxu0 %v4636
    %6515 = vmatpush1.bf16.msra.mxu0 %v4635
    %6516 = vmatprep.subr.bf16.mxu0 %v4644
    %6517 = vmatpush1.bf16.msra.mxu0 %v4643
    %6518 = vmatprep.mubr.bf16.mxu0 %v1294
    %6519 = vmatmul.mubr.bf16.gmra.mrb[0].mxu0 %v1293
    %v6520 = vpop.f32.mrb[0].mxu0
    %v6521 = vadd.f32 %v6478, %v6520
    %v6522 = vpop.f32.mrb[0].mxu0
    %v6523 = vadd.f32 %v6480, %v6522
    %v6524 = vpop.f32.mrb[0].mxu0
    %v6525 = vadd.f32 %v6482, %v6524
    %v6526 = vpop.f32.mrb[0].mxu0
    %v6527 = vadd.f32 %v6484, %v6526
    %6528 = vdwg.mxu0
    %6529 = vmatprep.subr.bf16.mxu0 %v4652
    %6530 = vmatpush1.bf16.msra.mxu0 %v4651
    %6531 = vmatprep.subr.bf16.mxu0 %v4660
    %6532 = vmatpush1.bf16.msra.mxu0 %v4659
    %6533 = vmatprep.subr.bf16.mxu0 %v4668
    %6534 = vmatpush1.bf16.msra.mxu0 %v4667
    %6535 = vmatprep.subr.bf16.mxu0 %v4676
    %6536 = vmatpush1.bf16.msra.mxu0 %v4675
    %6537 = vmatprep.subr.bf16.mxu0 %v4684
    %6538 = vmatpush1.bf16.msra.mxu0 %v4683
    %6539 = vmatprep.subr.bf16.mxu0 %v4692
    %6540 = vmatpush1.bf16.msra.mxu0 %v4691
    %6541 = vmatprep.subr.bf16.mxu0 %v4700
    %6542 = vmatpush1.bf16.msra.mxu0 %v4699
    %6543 = vmatprep.subr.bf16.mxu0 %v4708
    %6544 = vmatpush1.bf16.msra.mxu0 %v4707
    %6545 = vmatprep.subr.bf16.mxu0 %v4716
    %6546 = vmatpush1.bf16.msra.mxu0 %v4715
    %6547 = vmatprep.subr.bf16.mxu0 %v4724
    %6548 = vmatpush1.bf16.msra.mxu0 %v4723
    %6549 = vmatprep.subr.bf16.mxu0 %v4732
    %6550 = vmatpush1.bf16.msra.mxu0 %v4731
    %6551 = vmatprep.subr.bf16.mxu0 %v4740
    %6552 = vmatpush1.bf16.msra.mxu0 %v4739
    %6553 = vmatprep.subr.bf16.mxu0 %v4748
    %6554 = vmatpush1.bf16.msra.mxu0 %v4747
    %6555 = vmatprep.subr.bf16.mxu0 %v4756
    %6556 = vmatpush1.bf16.msra.mxu0 %v4755
    %6557 = vmatprep.subr.bf16.mxu0 %v4764
    %6558 = vmatpush1.bf16.msra.mxu0 %v4763
    %6559 = vmatprep.subr.bf16.mxu0 %v4772
    %6560 = vmatpush1.bf16.msra.mxu0 %v4771
    %6561 = vmatprep.mubr.bf16.mxu0 %v1296
    %6562 = vmatmul.mubr.bf16.gmra.mrb[0].mxu0 %v1295
    %v6563 = vpop.f32.mrb[0].mxu0
    %v6564 = vadd.f32 %v6521, %v6563
    %v6565 = vpop.f32.mrb[0].mxu0
    %v6566 = vadd.f32 %v6523, %v6565
    %v6567 = vpop.f32.mrb[0].mxu0
    %v6568 = vadd.f32 %v6525, %v6567
    %v6569 = vpop.f32.mrb[0].mxu0
    %v6570 = vadd.f32 %v6527, %v6569
    %6571 = vdwg.mxu0
    %6572 = vmatprep.subr.bf16.mxu0 %v4780
    %6573 = vmatpush1.bf16.msra.mxu0 %v4779
    %6574 = vmatprep.subr.bf16.mxu0 %v4788
    %6575 = vmatpush1.bf16.msra.mxu0 %v4787
    %6576 = vmatprep.subr.bf16.mxu0 %v4796
    %6577 = vmatpush1.bf16.msra.mxu0 %v4795
    %6578 = vmatprep.subr.bf16.mxu0 %v4804
    %6579 = vmatpush1.bf16.msra.mxu0 %v4803
    %6580 = vmatprep.subr.bf16.mxu0 %v4812
    %6581 = vmatpush1.bf16.msra.mxu0 %v4811
    %6582 = vmatprep.subr.bf16.mxu0 %v4820
    %6583 = vmatpush1.bf16.msra.mxu0 %v4819
    %6584 = vmatprep.subr.bf16.mxu0 %v4828
    %6585 = vmatpush1.bf16.msra.mxu0 %v4827
    %6586 = vmatprep.subr.bf16.mxu0 %v4836
    %6587 = vmatpush1.bf16.msra.mxu0 %v4835
    %6588 = vmatprep.subr.bf16.mxu0 %v4844
    %6589 = vmatpush1.bf16.msra.mxu0 %v4843
    %6590 = vmatprep.subr.bf16.mxu0 %v4852
    %6591 = vmatpush1.bf16.msra.mxu0 %v4851
    %6592 = vmatprep.subr.bf16.mxu0 %v4860
    %6593 = vmatpush1.bf16.msra.mxu0 %v4859
    %6594 = vmatprep.subr.bf16.mxu0 %v4868
    %6595 = vmatpush1.bf16.msra.mxu0 %v4867
    %6596 = vmatprep.subr.bf16.mxu0 %v4876
    %6597 = vmatpush1.bf16.msra.mxu0 %v4875
    %6598 = vmatprep.subr.bf16.mxu0 %v4884
    %6599 = vmatpush1.bf16.msra.mxu0 %v4883
    %6600 = vmatprep.subr.bf16.mxu0 %v4892
    %6601 = vmatpush1.bf16.msra.mxu0 %v4891
    %6602 = vmatprep.subr.bf16.mxu0 %v4900
    %6603 = vmatpush1.bf16.msra.mxu0 %v4899
    %6604 = vmatprep.mubr.bf16.mxu0 %v1298
    %6605 = vmatmul.mubr.bf16.gmra.mrb[0].mxu0 %v1297
    %v6606 = vpop.f32.mrb[0].mxu0
    %v6607 = vadd.f32 %v6564, %v6606
    %v6608 = vpop.f32.mrb[0].mxu0
    %v6609 = vadd.f32 %v6566, %v6608
    %v6610 = vpop.f32.mrb[0].mxu0
    %v6611 = vadd.f32 %v6568, %v6610
    %v6612 = vpop.f32.mrb[0].mxu0
    %v6613 = vadd.f32 %v6570, %v6612
    %6614 = vdwg.mxu0
    %6615 = vmatprep.subr.bf16.mxu0 %v4908
    %6616 = vmatpush1.bf16.msra.mxu0 %v4907
    %6617 = vmatprep.subr.bf16.mxu0 %v4916
    %6618 = vmatpush1.bf16.msra.mxu0 %v4915
    %6619 = vmatprep.subr.bf16.mxu0 %v4924
    %6620 = vmatpush1.bf16.msra.mxu0 %v4923
    %6621 = vmatprep.subr.bf16.mxu0 %v4932
    %6622 = vmatpush1.bf16.msra.mxu0 %v4931
    %6623 = vmatprep.subr.bf16.mxu0 %v4940
    %6624 = vmatpush1.bf16.msra.mxu0 %v4939
    %6625 = vmatprep.subr.bf16.mxu0 %v4948
    %6626 = vmatpush1.bf16.msra.mxu0 %v4947
    %6627 = vmatprep.subr.bf16.mxu0 %v4956
    %6628 = vmatpush1.bf16.msra.mxu0 %v4955
    %6629 = vmatprep.subr.bf16.mxu0 %v4964
    %6630 = vmatpush1.bf16.msra.mxu0 %v4963
    %6631 = vmatprep.subr.bf16.mxu0 %v4972
    %6632 = vmatpush1.bf16.msra.mxu0 %v4971
    %6633 = vmatprep.subr.bf16.mxu0 %v4980
    %6634 = vmatpush1.bf16.msra.mxu0 %v4979
    %6635 = vmatprep.subr.bf16.mxu0 %v4988
    %6636 = vmatpush1.bf16.msra.mxu0 %v4987
    %6637 = vmatprep.subr.bf16.mxu0 %v4996
    %6638 = vmatpush1.bf16.msra.mxu0 %v4995
    %6639 = vmatprep.subr.bf16.mxu0 %v5004
    %6640 = vmatpush1.bf16.msra.mxu0 %v5003
    %6641 = vmatprep.subr.bf16.mxu0 %v5012
    %6642 = vmatpush1.bf16.msra.mxu0 %v5011
    %6643 = vmatprep.subr.bf16.mxu0 %v5020
    %6644 = vmatpush1.bf16.msra.mxu0 %v5019
    %6645 = vmatprep.subr.bf16.mxu0 %v5028
    %6646 = vmatpush1.bf16.msra.mxu0 %v5027
    %6647 = vmatprep.mubr.bf16.mxu0 %v1300
    %6648 = vmatmul.mubr.bf16.gmra.mrb[0].mxu0 %v1299
    %v6649 = vpop.f32.mrb[0].mxu0
    %v6650 = vadd.f32 %v6607, %v6649
    %v6651 = vpop.f32.mrb[0].mxu0
    %v6652 = vadd.f32 %v6609, %v6651
    %v6653 = vpop.f32.mrb[0].mxu0
    %v6654 = vadd.f32 %v6611, %v6653
    %v6655 = vpop.f32.mrb[0].mxu0
    %v6656 = vadd.f32 %v6613, %v6655
    %6657 = vdwg.mxu0
    %6658 = vmatprep.subr.bf16.mxu0 %v5036
    %6659 = vmatpush1.bf16.msra.mxu0 %v5035
    %6660 = vmatprep.subr.bf16.mxu0 %v5044
    %6661 = vmatpush1.bf16.msra.mxu0 %v5043
    %6662 = vmatprep.subr.bf16.mxu0 %v5052
    %6663 = vmatpush1.bf16.msra.mxu0 %v5051
    %6664 = vmatprep.subr.bf16.mxu0 %v5060
    %6665 = vmatpush1.bf16.msra.mxu0 %v5059
    %6666 = vmatprep.subr.bf16.mxu0 %v5068
    %6667 = vmatpush1.bf16.msra.mxu0 %v5067
    %6668 = vmatprep.subr.bf16.mxu0 %v5076
    %6669 = vmatpush1.bf16.msra.mxu0 %v5075
    %6670 = vmatprep.subr.bf16.mxu0 %v5084
    %6671 = vmatpush1.bf16.msra.mxu0 %v5083
    %6672 = vmatprep.subr.bf16.mxu0 %v5092
    %6673 = vmatpush1.bf16.msra.mxu0 %v5091
    %6674 = vmatprep.subr.bf16.mxu0 %v5100
    %6675 = vmatpush1.bf16.msra.mxu0 %v5099
    %6676 = vmatprep.subr.bf16.mxu0 %v5108
    %6677 = vmatpush1.bf16.msra.mxu0 %v5107
    %6678 = vmatprep.subr.bf16.mxu0 %v5116
    %6679 = vmatpush1.bf16.msra.mxu0 %v5115
    %6680 = vmatprep.subr.bf16.mxu0 %v5124
    %6681 = vmatpush1.bf16.msra.mxu0 %v5123
    %6682 = vmatprep.subr.bf16.mxu0 %v5132
    %6683 = vmatpush1.bf16.msra.mxu0 %v5131
    %6684 = vmatprep.subr.bf16.mxu0 %v5140
    %6685 = vmatpush1.bf16.msra.mxu0 %v5139
    %6686 = vmatprep.subr.bf16.mxu0 %v5148
    %6687 = vmatpush1.bf16.msra.mxu0 %v5147
    %6688 = vmatprep.subr.bf16.mxu0 %v5156
    %6689 = vmatpush1.bf16.msra.mxu0 %v5155
    %6690 = vmatprep.mubr.bf16.mxu0 %v1302
    %6691 = vmatmul.mubr.bf16.gmra.mrb[0].mxu0 %v1301
    %v6692 = vpop.f32.mrb[0].mxu0
    %v6693 = vadd.f32 %v6650, %v6692
    %v6694 = vpop.f32.mrb[0].mxu0
    %v6695 = vadd.f32 %v6652, %v6694
    %v6696 = vpop.f32.mrb[0].mxu0
    %v6697 = vadd.f32 %v6654, %v6696
    %v6698 = vpop.f32.mrb[0].mxu0
    %v6699 = vadd.f32 %v6656, %v6698
    %6700 = vdwg.mxu0
    %6701 = vmatprep.subr.bf16.mxu0 %v5164
    %6702 = vmatpush1.bf16.msra.mxu0 %v5163
    %6703 = vmatprep.subr.bf16.mxu0 %v5172
    %6704 = vmatpush1.bf16.msra.mxu0 %v5171
    %6705 = vmatprep.subr.bf16.mxu0 %v5180
    %6706 = vmatpush1.bf16.msra.mxu0 %v5179
    %6707 = vmatprep.subr.bf16.mxu0 %v5188
    %6708 = vmatpush1.bf16.msra.mxu0 %v5187
    %6709 = vmatprep.subr.bf16.mxu0 %v5196
    %6710 = vmatpush1.bf16.msra.mxu0 %v5195
    %6711 = vmatprep.subr.bf16.mxu0 %v5204
    %6712 = vmatpush1.bf16.msra.mxu0 %v5203
    %6713 = vmatprep.subr.bf16.mxu0 %v5212
    %6714 = vmatpush1.bf16.msra.mxu0 %v5211
    %6715 = vmatprep.subr.bf16.mxu0 %v5220
    %6716 = vmatpush1.bf16.msra.mxu0 %v5219
    %6717 = vmatprep.subr.bf16.mxu0 %v5228
    %6718 = vmatpush1.bf16.msra.mxu0 %v5227
    %6719 = vmatprep.subr.bf16.mxu0 %v5236
    %6720 = vmatpush1.bf16.msra.mxu0 %v5235
    %6721 = vmatprep.subr.bf16.mxu0 %v5244
    %6722 = vmatpush1.bf16.msra.mxu0 %v5243
    %6723 = vmatprep.subr.bf16.mxu0 %v5252
    %6724 = vmatpush1.bf16.msra.mxu0 %v5251
    %6725 = vmatprep.subr.bf16.mxu0 %v5260
    %6726 = vmatpush1.bf16.msra.mxu0 %v5259
    %6727 = vmatprep.subr.bf16.mxu0 %v5268
    %6728 = vmatpush1.bf16.msra.mxu0 %v5267
    %6729 = vmatprep.subr.bf16.mxu0 %v5276
    %6730 = vmatpush1.bf16.msra.mxu0 %v5275
    %6731 = vmatprep.subr.bf16.mxu0 %v5284
    %6732 = vmatpush1.bf16.msra.mxu0 %v5283
    %6733 = vmatprep.mubr.bf16.mxu0 %v1304
    %6734 = vmatmul.mubr.bf16.gmra.mrb[0].mxu0 %v1303
    %v6735 = vpop.f32.mrb[0].mxu0
    %v6736 = vadd.f32 %v6693, %v6735
    %v6737 = vpop.f32.mrb[0].mxu0
    %v6738 = vadd.f32 %v6695, %v6737
    %v6739 = vpop.f32.mrb[0].mxu0
    %v6740 = vadd.f32 %v6697, %v6739
    %v6741 = vpop.f32.mrb[0].mxu0
    %v6742 = vadd.f32 %v6699, %v6741
    %6743 = vdwg.mxu0
    %6744 = vmatprep.subr.bf16.mxu0 %v5292
    %6745 = vmatpush1.bf16.msra.mxu0 %v5291
    %6746 = vmatprep.subr.bf16.mxu0 %v5300
    %6747 = vmatpush1.bf16.msra.mxu0 %v5299
    %6748 = vmatprep.subr.bf16.mxu0 %v5308
    %6749 = vmatpush1.bf16.msra.mxu0 %v5307
    %6750 = vmatprep.subr.bf16.mxu0 %v5316
    %6751 = vmatpush1.bf16.msra.mxu0 %v5315
    %6752 = vmatprep.subr.bf16.mxu0 %v5324
    %6753 = vmatpush1.bf16.msra.mxu0 %v5323
    %6754 = vmatprep.subr.bf16.mxu0 %v5332
    %6755 = vmatpush1.bf16.msra.mxu0 %v5331
    %6756 = vmatprep.subr.bf16.mxu0 %v5340
    %6757 = vmatpush1.bf16.msra.mxu0 %v5339
    %6758 = vmatprep.subr.bf16.mxu0 %v5348
    %6759 = vmatpush1.bf16.msra.mxu0 %v5347
    %6760 = vmatprep.subr.bf16.mxu0 %v5356
    %6761 = vmatpush1.bf16.msra.mxu0 %v5355
    %6762 = vmatprep.subr.bf16.mxu0 %v5364
    %6763 = vmatpush1.bf16.msra.mxu0 %v5363
    %6764 = vmatprep.subr.bf16.mxu0 %v5372
    %6765 = vmatpush1.bf16.msra.mxu0 %v5371
    %6766 = vmatprep.subr.bf16.mxu0 %v5380
    %6767 = vmatpush1.bf16.msra.mxu0 %v5379
    %6768 = vmatprep.subr.bf16.mxu0 %v5388
    %6769 = vmatpush1.bf16.msra.mxu0 %v5387
    %6770 = vmatprep.subr.bf16.mxu0 %v5396
    %6771 = vmatpush1.bf16.msra.mxu0 %v5395
    %6772 = vmatprep.subr.bf16.mxu0 %v5404
    %6773 = vmatpush1.bf16.msra.mxu0 %v5403
    %6774 = vmatprep.subr.bf16.mxu0 %v5412
    %6775 = vmatpush1.bf16.msra.mxu0 %v5411
    %6776 = vmatprep.mubr.bf16.mxu0 %v1306
    %6777 = vmatmul.mubr.bf16.gmra.mrb[0].mxu0 %v1305
    %v6778 = vpop.f32.mrb[0].mxu0
    %v6779 = vadd.f32 %v6736, %v6778
    %v6780 = vpop.f32.mrb[0].mxu0
    %v6781 = vadd.f32 %v6738, %v6780
    %v6782 = vpop.f32.mrb[0].mxu0
    %v6783 = vadd.f32 %v6740, %v6782
    %v6784 = vpop.f32.mrb[0].mxu0
    %v6785 = vadd.f32 %v6742, %v6784
    %6786 = vdwg.mxu0
    %6787 = vmatprep.subr.bf16.mxu0 %v4398
    %6788 = vmatpush1.bf16.msra.mxu0 %v4397
    %6789 = vmatprep.subr.bf16.mxu0 %v4406
    %6790 = vmatpush1.bf16.msra.mxu0 %v4405
    %6791 = vmatprep.subr.bf16.mxu0 %v4414
    %6792 = vmatpush1.bf16.msra.mxu0 %v4413
    %6793 = vmatprep.subr.bf16.mxu0 %v4422
    %6794 = vmatpush1.bf16.msra.mxu0 %v4421
    %6795 = vmatprep.subr.bf16.mxu0 %v4430
    %6796 = vmatpush1.bf16.msra.mxu0 %v4429
    %6797 = vmatprep.subr.bf16.mxu0 %v4438
    %6798 = vmatpush1.bf16.msra.mxu0 %v4437
    %6799 = vmatprep.subr.bf16.mxu0 %v4446
    %6800 = vmatpush1.bf16.msra.mxu0 %v4445
    %6801 = vmatprep.subr.bf16.mxu0 %v4454
    %6802 = vmatpush1.bf16.msra.mxu0 %v4453
    %6803 = vmatprep.subr.bf16.mxu0 %v4462
    %6804 = vmatpush1.bf16.msra.mxu0 %v4461
    %6805 = vmatprep.subr.bf16.mxu0 %v4470
    %6806 = vmatpush1.bf16.msra.mxu0 %v4469
    %6807 = vmatprep.subr.bf16.mxu0 %v4478
    %6808 = vmatpush1.bf16.msra.mxu0 %v4477
    %6809 = vmatprep.subr.bf16.mxu0 %v4486
    %6810 = vmatpush1.bf16.msra.mxu0 %v4485
    %6811 = vmatprep.subr.bf16.mxu0 %v4494
    %6812 = vmatpush1.bf16.msra.mxu0 %v4493
    %6813 = vmatprep.subr.bf16.mxu0 %v4502
    %6814 = vmatpush1.bf16.msra.mxu0 %v4501
    %6815 = vmatprep.subr.bf16.mxu0 %v4510
    %6816 = vmatpush1.bf16.msra.mxu0 %v4509
    %6817 = vmatprep.subr.bf16.mxu0 %v4518
    %6818 = vmatpush1.bf16.msra.mxu0 %v4517
    %6819 = vmatprep.mubr.bf16.mxu0 %v1292
    %6820 = vmatmul.mubr.bf16.gmra.mrb[0].mxu0 %v1291
    %v6821 = vpop.f32.mrb[0].mxu0
    %v6822 = vadd.f32 0.0, %v6821
    %v6823 = vpop.f32.mrb[0].mxu0
    %v6824 = vadd.f32 0.0, %v6823
    %v6825 = vpop.f32.mrb[0].mxu0
    %v6826 = vadd.f32 0.0, %v6825
    %v6827 = vpop.f32.mrb[0].mxu0
    %v6828 = vadd.f32 0.0, %v6827
    %6829 = vdwg.mxu0
    %6830 = vmatprep.subr.bf16.mxu0 %v4526
    %6831 = vmatpush1.bf16.msra.mxu0 %v4525
    %6832 = vmatprep.subr.bf16.mxu0 %v4534
    %6833 = vmatpush1.bf16.msra.mxu0 %v4533
    %6834 = vmatprep.subr.bf16.mxu0 %v4542
    %6835 = vmatpush1.bf16.msra.mxu0 %v4541
    %6836 = vmatprep.subr.bf16.mxu0 %v4550
    %6837 = vmatpush1.bf16.msra.mxu0 %v4549
    %6838 = vmatprep.subr.bf16.mxu0 %v4558
    %6839 = vmatpush1.bf16.msra.mxu0 %v4557
    %6840 = vmatprep.subr.bf16.mxu0 %v4566
    %6841 = vmatpush1.bf16.msra.mxu0 %v4565
    %6842 = vmatprep.subr.bf16.mxu0 %v4574
    %6843 = vmatpush1.bf16.msra.mxu0 %v4573
    %6844 = vmatprep.subr.bf16.mxu0 %v4582
    %6845 = vmatpush1.bf16.msra.mxu0 %v4581
    %6846 = vmatprep.subr.bf16.mxu0 %v4590
    %6847 = vmatpush1.bf16.msra.mxu0 %v4589
    %6848 = vmatprep.subr.bf16.mxu0 %v4598
    %6849 = vmatpush1.bf16.msra.mxu0 %v4597
    %6850 = vmatprep.subr.bf16.mxu0 %v4606
    %6851 = vmatpush1.bf16.msra.mxu0 %v4605
    %6852 = vmatprep.subr.bf16.mxu0 %v4614
    %6853 = vmatpush1.bf16.msra.mxu0 %v4613
    %6854 = vmatprep.subr.bf16.mxu0 %v4622
    %6855 = vmatpush1.bf16.msra.mxu0 %v4621
    %6856 = vmatprep.subr.bf16.mxu0 %v4630
    %6857 = vmatpush1.bf16.msra.mxu0 %v4629
    %6858 = vmatprep.subr.bf16.mxu0 %v4638
    %6859 = vmatpush1.bf16.msra.mxu0 %v4637
    %6860 = vmatprep.subr.bf16.mxu0 %v4646
    %6861 = vmatpush1.bf16.msra.mxu0 %v4645
    %6862 = vmatprep.mubr.bf16.mxu0 %v1294
    %6863 = vmatmul.mubr.bf16.gmra.mrb[0].mxu0 %v1293
    %v6864 = vpop.f32.mrb[0].mxu0
    %v6865 = vadd.f32 %v6822, %v6864
    %v6866 = vpop.f32.mrb[0].mxu0
    %v6867 = vadd.f32 %v6824, %v6866
    %v6868 = vpop.f32.mrb[0].mxu0
    %v6869 = vadd.f32 %v6826, %v6868
    %v6870 = vpop.f32.mrb[0].mxu0
    %v6871 = vadd.f32 %v6828, %v6870
    %6872 = vdwg.mxu0
    %6873 = vmatprep.subr.bf16.mxu0 %v4654
    %6874 = vmatpush1.bf16.msra.mxu0 %v4653
    %6875 = vmatprep.subr.bf16.mxu0 %v4662
    %6876 = vmatpush1.bf16.msra.mxu0 %v4661
    %6877 = vmatprep.subr.bf16.mxu0 %v4670
    %6878 = vmatpush1.bf16.msra.mxu0 %v4669
    %6879 = vmatprep.subr.bf16.mxu0 %v4678
    %6880 = vmatpush1.bf16.msra.mxu0 %v4677
    %6881 = vmatprep.subr.bf16.mxu0 %v4686
    %6882 = vmatpush1.bf16.msra.mxu0 %v4685
    %6883 = vmatprep.subr.bf16.mxu0 %v4694
    %6884 = vmatpush1.bf16.msra.mxu0 %v4693
    %6885 = vmatprep.subr.bf16.mxu0 %v4702
    %6886 = vmatpush1.bf16.msra.mxu0 %v4701
    %6887 = vmatprep.subr.bf16.mxu0 %v4710
    %6888 = vmatpush1.bf16.msra.mxu0 %v4709
    %6889 = vmatprep.subr.bf16.mxu0 %v4718
    %6890 = vmatpush1.bf16.msra.mxu0 %v4717
    %6891 = vmatprep.subr.bf16.mxu0 %v4726
    %6892 = vmatpush1.bf16.msra.mxu0 %v4725
    %6893 = vmatprep.subr.bf16.mxu0 %v4734
    %6894 = vmatpush1.bf16.msra.mxu0 %v4733
    %6895 = vmatprep.subr.bf16.mxu0 %v4742
    %6896 = vmatpush1.bf16.msra.mxu0 %v4741
    %6897 = vmatprep.subr.bf16.mxu0 %v4750
    %6898 = vmatpush1.bf16.msra.mxu0 %v4749
    %6899 = vmatprep.subr.bf16.mxu0 %v4758
    %6900 = vmatpush1.bf16.msra.mxu0 %v4757
    %6901 = vmatprep.subr.bf16.mxu0 %v4766
    %6902 = vmatpush1.bf16.msra.mxu0 %v4765
    %6903 = vmatprep.subr.bf16.mxu0 %v4774
    %6904 = vmatpush1.bf16.msra.mxu0 %v4773
    %6905 = vmatprep.mubr.bf16.mxu0 %v1296
    %6906 = vmatmul.mubr.bf16.gmra.mrb[0].mxu0 %v1295
    %v6907 = vpop.f32.mrb[0].mxu0
    %v6908 = vadd.f32 %v6865, %v6907
    %v6909 = vpop.f32.mrb[0].mxu0
    %v6910 = vadd.f32 %v6867, %v6909
    %v6911 = vpop.f32.mrb[0].mxu0
    %v6912 = vadd.f32 %v6869, %v6911
    %v6913 = vpop.f32.mrb[0].mxu0
    %v6914 = vadd.f32 %v6871, %v6913
    %6915 = vdwg.mxu0
    %6916 = vmatprep.subr.bf16.mxu0 %v4782
    %6917 = vmatpush1.bf16.msra.mxu0 %v4781
    %6918 = vmatprep.subr.bf16.mxu0 %v4790
    %6919 = vmatpush1.bf16.msra.mxu0 %v4789
    %6920 = vmatprep.subr.bf16.mxu0 %v4798
    %6921 = vmatpush1.bf16.msra.mxu0 %v4797
    %6922 = vmatprep.subr.bf16.mxu0 %v4806
    %6923 = vmatpush1.bf16.msra.mxu0 %v4805
    %6924 = vmatprep.subr.bf16.mxu0 %v4814
    %6925 = vmatpush1.bf16.msra.mxu0 %v4813
    %6926 = vmatprep.subr.bf16.mxu0 %v4822
    %6927 = vmatpush1.bf16.msra.mxu0 %v4821
    %6928 = vmatprep.subr.bf16.mxu0 %v4830
    %6929 = vmatpush1.bf16.msra.mxu0 %v4829
    %6930 = vmatprep.subr.bf16.mxu0 %v4838
    %6931 = vmatpush1.bf16.msra.mxu0 %v4837
    %6932 = vmatprep.subr.bf16.mxu0 %v4846
    %6933 = vmatpush1.bf16.msra.mxu0 %v4845
    %6934 = vmatprep.subr.bf16.mxu0 %v4854
    %6935 = vmatpush1.bf16.msra.mxu0 %v4853
    %6936 = vmatprep.subr.bf16.mxu0 %v4862
    %6937 = vmatpush1.bf16.msra.mxu0 %v4861
    %6938 = vmatprep.subr.bf16.mxu0 %v4870
    %6939 = vmatpush1.bf16.msra.mxu0 %v4869
    %6940 = vmatprep.subr.bf16.mxu0 %v4878
    %6941 = vmatpush1.bf16.msra.mxu0 %v4877
    %6942 = vmatprep.subr.bf16.mxu0 %v4886
    %6943 = vmatpush1.bf16.msra.mxu0 %v4885
    %6944 = vmatprep.subr.bf16.mxu0 %v4894
    %6945 = vmatpush1.bf16.msra.mxu0 %v4893
    %6946 = vmatprep.subr.bf16.mxu0 %v4902
    %6947 = vmatpush1.bf16.msra.mxu0 %v4901
    %6948 = vmatprep.mubr.bf16.mxu0 %v1298
    %6949 = vmatmul.mubr.bf16.gmra.mrb[0].mxu0 %v1297
    %v6950 = vpop.f32.mrb[0].mxu0
    %v6951 = vadd.f32 %v6908, %v6950
    %v6952 = vpop.f32.mrb[0].mxu0
    %v6953 = vadd.f32 %v6910, %v6952
    %v6954 = vpop.f32.mrb[0].mxu0
    %v6955 = vadd.f32 %v6912, %v6954
    %v6956 = vpop.f32.mrb[0].mxu0
    %v6957 = vadd.f32 %v6914, %v6956
    %6958 = vdwg.mxu0
    %6959 = vmatprep.subr.bf16.mxu0 %v4910
    %6960 = vmatpush1.bf16.msra.mxu0 %v4909
    %6961 = vmatprep.subr.bf16.mxu0 %v4918
    %6962 = vmatpush1.bf16.msra.mxu0 %v4917
    %6963 = vmatprep.subr.bf16.mxu0 %v4926
    %6964 = vmatpush1.bf16.msra.mxu0 %v4925
    %6965 = vmatprep.subr.bf16.mxu0 %v4934
    %6966 = vmatpush1.bf16.msra.mxu0 %v4933
    %6967 = vmatprep.subr.bf16.mxu0 %v4942
    %6968 = vmatpush1.bf16.msra.mxu0 %v4941
    %6969 = vmatprep.subr.bf16.mxu0 %v4950
    %6970 = vmatpush1.bf16.msra.mxu0 %v4949
    %6971 = vmatprep.subr.bf16.mxu0 %v4958
    %6972 = vmatpush1.bf16.msra.mxu0 %v4957
    %6973 = vmatprep.subr.bf16.mxu0 %v4966
    %6974 = vmatpush1.bf16.msra.mxu0 %v4965
    %6975 = vmatprep.subr.bf16.mxu0 %v4974
    %6976 = vmatpush1.bf16.msra.mxu0 %v4973
    %6977 = vmatprep.subr.bf16.mxu0 %v4982
    %6978 = vmatpush1.bf16.msra.mxu0 %v4981
    %6979 = vmatprep.subr.bf16.mxu0 %v4990
    %6980 = vmatpush1.bf16.msra.mxu0 %v4989
    %6981 = vmatprep.subr.bf16.mxu0 %v4998
    %6982 = vmatpush1.bf16.msra.mxu0 %v4997
    %6983 = vmatprep.subr.bf16.mxu0 %v5006
    %6984 = vmatpush1.bf16.msra.mxu0 %v5005
    %6985 = vmatprep.subr.bf16.mxu0 %v5014
    %6986 = vmatpush1.bf16.msra.mxu0 %v5013
    %6987 = vmatprep.subr.bf16.mxu0 %v5022
    %6988 = vmatpush1.bf16.msra.mxu0 %v5021
    %6989 = vmatprep.subr.bf16.mxu0 %v5030
    %6990 = vmatpush1.bf16.msra.mxu0 %v5029
    %6991 = vmatprep.mubr.bf16.mxu0 %v1300
    %6992 = vmatmul.mubr.bf16.gmra.mrb[0].mxu0 %v1299
    %v6993 = vpop.f32.mrb[0].mxu0
    %v6994 = vadd.f32 %v6951, %v6993
    %v6995 = vpop.f32.mrb[0].mxu0
    %v6996 = vadd.f32 %v6953, %v6995
    %v6997 = vpop.f32.mrb[0].mxu0
    %v6998 = vadd.f32 %v6955, %v6997
    %v6999 = vpop.f32.mrb[0].mxu0
    %v7000 = vadd.f32 %v6957, %v6999
    %7001 = vdwg.mxu0
    %7002 = vmatprep.subr.bf16.mxu0 %v5038
    %7003 = vmatpush1.bf16.msra.mxu0 %v5037
    %7004 = vmatprep.subr.bf16.mxu0 %v5046
    %7005 = vmatpush1.bf16.msra.mxu0 %v5045
    %7006 = vmatprep.subr.bf16.mxu0 %v5054
    %7007 = vmatpush1.bf16.msra.mxu0 %v5053
    %7008 = vmatprep.subr.bf16.mxu0 %v5062
    %7009 = vmatpush1.bf16.msra.mxu0 %v5061
    %7010 = vmatprep.subr.bf16.mxu0 %v5070
    %7011 = vmatpush1.bf16.msra.mxu0 %v5069
    %7012 = vmatprep.subr.bf16.mxu0 %v5078
    %7013 = vmatpush1.bf16.msra.mxu0 %v5077
    %7014 = vmatprep.subr.bf16.mxu0 %v5086
    %7015 = vmatpush1.bf16.msra.mxu0 %v5085
    %7016 = vmatprep.subr.bf16.mxu0 %v5094
    %7017 = vmatpush1.bf16.msra.mxu0 %v5093
    %7018 = vmatprep.subr.bf16.mxu0 %v5102
    %7019 = vmatpush1.bf16.msra.mxu0 %v5101
    %7020 = vmatprep.subr.bf16.mxu0 %v5110
    %7021 = vmatpush1.bf16.msra.mxu0 %v5109
    %7022 = vmatprep.subr.bf16.mxu0 %v5118
    %7023 = vmatpush1.bf16.msra.mxu0 %v5117
    %7024 = vmatprep.subr.bf16.mxu0 %v5126
    %7025 = vmatpush1.bf16.msra.mxu0 %v5125
    %7026 = vmatprep.subr.bf16.mxu0 %v5134
    %7027 = vmatpush1.bf16.msra.mxu0 %v5133
    %7028 = vmatprep.subr.bf16.mxu0 %v5142
    %7029 = vmatpush1.bf16.msra.mxu0 %v5141
    %7030 = vmatprep.subr.bf16.mxu0 %v5150
    %7031 = vmatpush1.bf16.msra.mxu0 %v5149
    %7032 = vmatprep.subr.bf16.mxu0 %v5158
    %7033 = vmatpush1.bf16.msra.mxu0 %v5157
    %7034 = vmatprep.mubr.bf16.mxu0 %v1302
    %7035 = vmatmul.mubr.bf16.gmra.mrb[0].mxu0 %v1301
    %v7036 = vpop.f32.mrb[0].mxu0
    %v7037 = vadd.f32 %v6994, %v7036
    %v7038 = vpop.f32.mrb[0].mxu0
    %v7039 = vadd.f32 %v6996, %v7038
    %v7040 = vpop.f32.mrb[0].mxu0
    %v7041 = vadd.f32 %v6998, %v7040
    %v7042 = vpop.f32.mrb[0].mxu0
    %v7043 = vadd.f32 %v7000, %v7042
    %7044 = vdwg.mxu0
    %7045 = vmatprep.subr.bf16.mxu0 %v5166
    %7046 = vmatpush1.bf16.msra.mxu0 %v5165
    %7047 = vmatprep.subr.bf16.mxu0 %v5174
    %7048 = vmatpush1.bf16.msra.mxu0 %v5173
    %7049 = vmatprep.subr.bf16.mxu0 %v5182
    %7050 = vmatpush1.bf16.msra.mxu0 %v5181
    %7051 = vmatprep.subr.bf16.mxu0 %v5190
    %7052 = vmatpush1.bf16.msra.mxu0 %v5189
    %7053 = vmatprep.subr.bf16.mxu0 %v5198
    %7054 = vmatpush1.bf16.msra.mxu0 %v5197
    %7055 = vmatprep.subr.bf16.mxu0 %v5206
    %7056 = vmatpush1.bf16.msra.mxu0 %v5205
    %7057 = vmatprep.subr.bf16.mxu0 %v5214
    %7058 = vmatpush1.bf16.msra.mxu0 %v5213
    %7059 = vmatprep.subr.bf16.mxu0 %v5222
    %7060 = vmatpush1.bf16.msra.mxu0 %v5221
    %7061 = vmatprep.subr.bf16.mxu0 %v5230
    %7062 = vmatpush1.bf16.msra.mxu0 %v5229
    %7063 = vmatprep.subr.bf16.mxu0 %v5238
    %7064 = vmatpush1.bf16.msra.mxu0 %v5237
    %7065 = vmatprep.subr.bf16.mxu0 %v5246
    %7066 = vmatpush1.bf16.msra.mxu0 %v5245
    %7067 = vmatprep.subr.bf16.mxu0 %v5254
    %7068 = vmatpush1.bf16.msra.mxu0 %v5253
    %7069 = vmatprep.subr.bf16.mxu0 %v5262
    %7070 = vmatpush1.bf16.msra.mxu0 %v5261
    %7071 = vmatprep.subr.bf16.mxu0 %v5270
    %7072 = vmatpush1.bf16.msra.mxu0 %v5269
    %7073 = vmatprep.subr.bf16.mxu0 %v5278
    %7074 = vmatpush1.bf16.msra.mxu0 %v5277
    %7075 = vmatprep.subr.bf16.mxu0 %v5286
    %7076 = vmatpush1.bf16.msra.mxu0 %v5285
    %7077 = vmatprep.mubr.bf16.mxu0 %v1304
    %7078 = vmatmul.mubr.bf16.gmra.mrb[0].mxu0 %v1303
    %v7079 = vpop.f32.mrb[0].mxu0
    %v7080 = vadd.f32 %v7037, %v7079
    %v7081 = vpop.f32.mrb[0].mxu0
    %v7082 = vadd.f32 %v7039, %v7081
    %v7083 = vpop.f32.mrb[0].mxu0
    %v7084 = vadd.f32 %v7041, %v7083
    %v7085 = vpop.f32.mrb[0].mxu0
    %v7086 = vadd.f32 %v7043, %v7085
    %7087 = vdwg.mxu0
    %7088 = vmatprep.subr.bf16.mxu0 %v5294
    %7089 = vmatpush1.bf16.msra.mxu0 %v5293
    %7090 = vmatprep.subr.bf16.mxu0 %v5302
    %7091 = vmatpush1.bf16.msra.mxu0 %v5301
    %7092 = vmatprep.subr.bf16.mxu0 %v5310
    %7093 = vmatpush1.bf16.msra.mxu0 %v5309
    %7094 = vmatprep.subr.bf16.mxu0 %v5318
    %7095 = vmatpush1.bf16.msra.mxu0 %v5317
    %7096 = vmatprep.subr.bf16.mxu0 %v5326
    %7097 = vmatpush1.bf16.msra.mxu0 %v5325
    %7098 = vmatprep.subr.bf16.mxu0 %v5334
    %7099 = vmatpush1.bf16.msra.mxu0 %v5333
    %7100 = vmatprep.subr.bf16.mxu0 %v5342
    %7101 = vmatpush1.bf16.msra.mxu0 %v5341
    %7102 = vmatprep.subr.bf16.mxu0 %v5350
    %7103 = vmatpush1.bf16.msra.mxu0 %v5349
    %7104 = vmatprep.subr.bf16.mxu0 %v5358
    %7105 = vmatpush1.bf16.msra.mxu0 %v5357
    %7106 = vmatprep.subr.bf16.mxu0 %v5366
    %7107 = vmatpush1.bf16.msra.mxu0 %v5365
    %7108 = vmatprep.subr.bf16.mxu0 %v5374
    %7109 = vmatpush1.bf16.msra.mxu0 %v5373
    %7110 = vmatprep.subr.bf16.mxu0 %v5382
    %7111 = vmatpush1.bf16.msra.mxu0 %v5381
    %7112 = vmatprep.subr.bf16.mxu0 %v5390
    %7113 = vmatpush1.bf16.msra.mxu0 %v5389
    %7114 = vmatprep.subr.bf16.mxu0 %v5398
    %7115 = vmatpush1.bf16.msra.mxu0 %v5397
    %7116 = vmatprep.subr.bf16.mxu0 %v5406
    %7117 = vmatpush1.bf16.msra.mxu0 %v5405
    %7118 = vmatprep.subr.bf16.mxu0 %v5414
    %7119 = vmatpush1.bf16.msra.mxu0 %v5413
    %7120 = vmatprep.mubr.bf16.mxu0 %v1306
    %7121 = vmatmul.mubr.bf16.gmra.mrb[0].mxu0 %v1305
    %v7122 = vpop.f32.mrb[0].mxu0
    %v7123 = vadd.f32 %v7080, %v7122
    %v7124 = vpop.f32.mrb[0].mxu0
    %v7125 = vadd.f32 %v7082, %v7124
    %v7126 = vpop.f32.mrb[0].mxu0
    %v7127 = vadd.f32 %v7084, %v7126
    %v7128 = vpop.f32.mrb[0].mxu0
    %v7129 = vadd.f32 %v7086, %v7128
    %7130 = vdwg.mxu0
    %7131 = vmatprep.subr.bf16.mxu0 %v4400
    %7132 = vmatpush1.bf16.msra.mxu0 %v4399
    %7133 = vmatprep.subr.bf16.mxu0 %v4408
    %7134 = vmatpush1.bf16.msra.mxu0 %v4407
    %7135 = vmatprep.subr.bf16.mxu0 %v4416
    %7136 = vmatpush1.bf16.msra.mxu0 %v4415
    %7137 = vmatprep.subr.bf16.mxu0 %v4424
    %7138 = vmatpush1.bf16.msra.mxu0 %v4423
    %7139 = vmatprep.subr.bf16.mxu0 %v4432
    %7140 = vmatpush1.bf16.msra.mxu0 %v4431
    %7141 = vmatprep.subr.bf16.mxu0 %v4440
    %7142 = vmatpush1.bf16.msra.mxu0 %v4439
    %7143 = vmatprep.subr.bf16.mxu0 %v4448
    %7144 = vmatpush1.bf16.msra.mxu0 %v4447
    %7145 = vmatprep.subr.bf16.mxu0 %v4456
    %7146 = vmatpush1.bf16.msra.mxu0 %v4455
    %7147 = vmatprep.subr.bf16.mxu0 %v4464
    %7148 = vmatpush1.bf16.msra.mxu0 %v4463
    %7149 = vmatprep.subr.bf16.mxu0 %v4472
    %7150 = vmatpush1.bf16.msra.mxu0 %v4471
    %7151 = vmatprep.subr.bf16.mxu0 %v4480
    %7152 = vmatpush1.bf16.msra.mxu0 %v4479
    %7153 = vmatprep.subr.bf16.mxu0 %v4488
    %7154 = vmatpush1.bf16.msra.mxu0 %v4487
    %7155 = vmatprep.subr.bf16.mxu0 %v4496
    %7156 = vmatpush1.bf16.msra.mxu0 %v4495
    %7157 = vmatprep.subr.bf16.mxu0 %v4504
    %7158 = vmatpush1.bf16.msra.mxu0 %v4503
    %7159 = vmatprep.subr.bf16.mxu0 %v4512
    %7160 = vmatpush1.bf16.msra.mxu0 %v4511
    %7161 = vmatprep.subr.bf16.mxu0 %v4520
    %7162 = vmatpush1.bf16.msra.mxu0 %v4519
    %7163 = vmatprep.mubr.bf16.mxu0 %v1292
    %7164 = vmatmul.mubr.bf16.gmra.mrb[0].mxu0 %v1291
    %v7165 = vpop.f32.mrb[0].mxu0
    %v7166 = vadd.f32 0.0, %v7165
    %v7167 = vpop.f32.mrb[0].mxu0
    %v7168 = vadd.f32 0.0, %v7167
    %v7169 = vpop.f32.mrb[0].mxu0
    %v7170 = vadd.f32 0.0, %v7169
    %v7171 = vpop.f32.mrb[0].mxu0
    %v7172 = vadd.f32 0.0, %v7171
    %7173 = vdwg.mxu0
    %7174 = vmatprep.subr.bf16.mxu0 %v4528
    %7175 = vmatpush1.bf16.msra.mxu0 %v4527
    %7176 = vmatprep.subr.bf16.mxu0 %v4536
    %7177 = vmatpush1.bf16.msra.mxu0 %v4535
    %7178 = vmatprep.subr.bf16.mxu0 %v4544
    %7179 = vmatpush1.bf16.msra.mxu0 %v4543
    %7180 = vmatprep.subr.bf16.mxu0 %v4552
    %7181 = vmatpush1.bf16.msra.mxu0 %v4551
    %7182 = vmatprep.subr.bf16.mxu0 %v4560
    %7183 = vmatpush1.bf16.msra.mxu0 %v4559
    %7184 = vmatprep.subr.bf16.mxu0 %v4568
    %7185 = vmatpush1.bf16.msra.mxu0 %v4567
    %7186 = vmatprep.subr.bf16.mxu0 %v4576
    %7187 = vmatpush1.bf16.msra.mxu0 %v4575
    %7188 = vmatprep.subr.bf16.mxu0 %v4584
    %7189 = vmatpush1.bf16.msra.mxu0 %v4583
    %7190 = vmatprep.subr.bf16.mxu0 %v4592
    %7191 = vmatpush1.bf16.msra.mxu0 %v4591
    %7192 = vmatprep.subr.bf16.mxu0 %v4600
    %7193 = vmatpush1.bf16.msra.mxu0 %v4599
    %7194 = vmatprep.subr.bf16.mxu0 %v4608
    %7195 = vmatpush1.bf16.msra.mxu0 %v4607
    %7196 = vmatprep.subr.bf16.mxu0 %v4616
    %7197 = vmatpush1.bf16.msra.mxu0 %v4615
    %7198 = vmatprep.subr.bf16.mxu0 %v4624
    %7199 = vmatpush1.bf16.msra.mxu0 %v4623
    %7200 = vmatprep.subr.bf16.mxu0 %v4632
    %7201 = vmatpush1.bf16.msra.mxu0 %v4631
    %7202 = vmatprep.subr.bf16.mxu0 %v4640
    %7203 = vmatpush1.bf16.msra.mxu0 %v4639
    %7204 = vmatprep.subr.bf16.mxu0 %v4648
    %7205 = vmatpush1.bf16.msra.mxu0 %v4647
    %7206 = vmatprep.mubr.bf16.mxu0 %v1294
    %7207 = vmatmul.mubr.bf16.gmra.mrb[0].mxu0 %v1293
    %v7208 = vpop.f32.mrb[0].mxu0
    %v7209 = vadd.f32 %v7166, %v7208
    %v7210 = vpop.f32.mrb[0].mxu0
    %v7211 = vadd.f32 %v7168, %v7210
    %v7212 = vpop.f32.mrb[0].mxu0
    %v7213 = vadd.f32 %v7170, %v7212
    %v7214 = vpop.f32.mrb[0].mxu0
    %v7215 = vadd.f32 %v7172, %v7214
    %7216 = vdwg.mxu0
    %7217 = vmatprep.subr.bf16.mxu0 %v4656
    %7218 = vmatpush1.bf16.msra.mxu0 %v4655
    %7219 = vmatprep.subr.bf16.mxu0 %v4664
    %7220 = vmatpush1.bf16.msra.mxu0 %v4663
    %7221 = vmatprep.subr.bf16.mxu0 %v4672
    %7222 = vmatpush1.bf16.msra.mxu0 %v4671
    %7223 = vmatprep.subr.bf16.mxu0 %v4680
    %7224 = vmatpush1.bf16.msra.mxu0 %v4679
    %7225 = vmatprep.subr.bf16.mxu0 %v4688
    %7226 = vmatpush1.bf16.msra.mxu0 %v4687
    %7227 = vmatprep.subr.bf16.mxu0 %v4696
    %7228 = vmatpush1.bf16.msra.mxu0 %v4695
    %7229 = vmatprep.subr.bf16.mxu0 %v4704
    %7230 = vmatpush1.bf16.msra.mxu0 %v4703
    %7231 = vmatprep.subr.bf16.mxu0 %v4712
    %7232 = vmatpush1.bf16.msra.mxu0 %v4711
    %7233 = vmatprep.subr.bf16.mxu0 %v4720
    %7234 = vmatpush1.bf16.msra.mxu0 %v4719
    %7235 = vmatprep.subr.bf16.mxu0 %v4728
    %7236 = vmatpush1.bf16.msra.mxu0 %v4727
    %7237 = vmatprep.subr.bf16.mxu0 %v4736
    %7238 = vmatpush1.bf16.msra.mxu0 %v4735
    %7239 = vmatprep.subr.bf16.mxu0 %v4744
    %7240 = vmatpush1.bf16.msra.mxu0 %v4743
    %7241 = vmatprep.subr.bf16.mxu0 %v4752
    %7242 = vmatpush1.bf16.msra.mxu0 %v4751
    %7243 = vmatprep.subr.bf16.mxu0 %v4760
    %7244 = vmatpush1.bf16.msra.mxu0 %v4759
    %7245 = vmatprep.subr.bf16.mxu0 %v4768
    %7246 = vmatpush1.bf16.msra.mxu0 %v4767
    %7247 = vmatprep.subr.bf16.mxu0 %v4776
    %7248 = vmatpush1.bf16.msra.mxu0 %v4775
    %7249 = vmatprep.mubr.bf16.mxu0 %v1296
    %7250 = vmatmul.mubr.bf16.gmra.mrb[0].mxu0 %v1295
    %v7251 = vpop.f32.mrb[0].mxu0
    %v7252 = vadd.f32 %v7209, %v7251
    %v7253 = vpop.f32.mrb[0].mxu0
    %v7254 = vadd.f32 %v7211, %v7253
    %v7255 = vpop.f32.mrb[0].mxu0
    %v7256 = vadd.f32 %v7213, %v7255
    %v7257 = vpop.f32.mrb[0].mxu0
    %v7258 = vadd.f32 %v7215, %v7257
    %7259 = vdwg.mxu0
    %7260 = vmatprep.subr.bf16.mxu0 %v4784
    %7261 = vmatpush1.bf16.msra.mxu0 %v4783
    %7262 = vmatprep.subr.bf16.mxu0 %v4792
    %7263 = vmatpush1.bf16.msra.mxu0 %v4791
    %7264 = vmatprep.subr.bf16.mxu0 %v4800
    %7265 = vmatpush1.bf16.msra.mxu0 %v4799
    %7266 = vmatprep.subr.bf16.mxu0 %v4808
    %7267 = vmatpush1.bf16.msra.mxu0 %v4807
    %7268 = vmatprep.subr.bf16.mxu0 %v4816
    %7269 = vmatpush1.bf16.msra.mxu0 %v4815
    %7270 = vmatprep.subr.bf16.mxu0 %v4824
    %7271 = vmatpush1.bf16.msra.mxu0 %v4823
    %7272 = vmatprep.subr.bf16.mxu0 %v4832
    %7273 = vmatpush1.bf16.msra.mxu0 %v4831
    %7274 = vmatprep.subr.bf16.mxu0 %v4840
    %7275 = vmatpush1.bf16.msra.mxu0 %v4839
    %7276 = vmatprep.subr.bf16.mxu0 %v4848
    %7277 = vmatpush1.bf16.msra.mxu0 %v4847
    %7278 = vmatprep.subr.bf16.mxu0 %v4856
    %7279 = vmatpush1.bf16.msra.mxu0 %v4855
    %7280 = vmatprep.subr.bf16.mxu0 %v4864
    %7281 = vmatpush1.bf16.msra.mxu0 %v4863
    %7282 = vmatprep.subr.bf16.mxu0 %v4872
    %7283 = vmatpush1.bf16.msra.mxu0 %v4871
    %7284 = vmatprep.subr.bf16.mxu0 %v4880
    %7285 = vmatpush1.bf16.msra.mxu0 %v4879
    %7286 = vmatprep.subr.bf16.mxu0 %v4888
    %7287 = vmatpush1.bf16.msra.mxu0 %v4887
    %7288 = vmatprep.subr.bf16.mxu0 %v4896
    %7289 = vmatpush1.bf16.msra.mxu0 %v4895
    %7290 = vmatprep.subr.bf16.mxu0 %v4904
    %7291 = vmatpush1.bf16.msra.mxu0 %v4903
    %7292 = vmatprep.mubr.bf16.mxu0 %v1298
    %7293 = vmatmul.mubr.bf16.gmra.mrb[0].mxu0 %v1297
    %v7294 = vpop.f32.mrb[0].mxu0
    %v7295 = vadd.f32 %v7252, %v7294
    %v7296 = vpop.f32.mrb[0].mxu0
    %v7297 = vadd.f32 %v7254, %v7296
    %v7298 = vpop.f32.mrb[0].mxu0
    %v7299 = vadd.f32 %v7256, %v7298
    %v7300 = vpop.f32.mrb[0].mxu0
    %v7301 = vadd.f32 %v7258, %v7300
    %7302 = vdwg.mxu0
    %7303 = vmatprep.subr.bf16.mxu0 %v4912
    %7304 = vmatpush1.bf16.msra.mxu0 %v4911
    %7305 = vmatprep.subr.bf16.mxu0 %v4920
    %7306 = vmatpush1.bf16.msra.mxu0 %v4919
    %7307 = vmatprep.subr.bf16.mxu0 %v4928
    %7308 = vmatpush1.bf16.msra.mxu0 %v4927
    %7309 = vmatprep.subr.bf16.mxu0 %v4936
    %7310 = vmatpush1.bf16.msra.mxu0 %v4935
    %7311 = vmatprep.subr.bf16.mxu0 %v4944
    %7312 = vmatpush1.bf16.msra.mxu0 %v4943
    %7313 = vmatprep.subr.bf16.mxu0 %v4952
    %7314 = vmatpush1.bf16.msra.mxu0 %v4951
    %7315 = vmatprep.subr.bf16.mxu0 %v4960
    %7316 = vmatpush1.bf16.msra.mxu0 %v4959
    %7317 = vmatprep.subr.bf16.mxu0 %v4968
    %7318 = vmatpush1.bf16.msra.mxu0 %v4967
    %7319 = vmatprep.subr.bf16.mxu0 %v4976
    %7320 = vmatpush1.bf16.msra.mxu0 %v4975
    %7321 = vmatprep.subr.bf16.mxu0 %v4984
    %7322 = vmatpush1.bf16.msra.mxu0 %v4983
    %7323 = vmatprep.subr.bf16.mxu0 %v4992
    %7324 = vmatpush1.bf16.msra.mxu0 %v4991
    %7325 = vmatprep.subr.bf16.mxu0 %v5000
    %7326 = vmatpush1.bf16.msra.mxu0 %v4999
    %7327 = vmatprep.subr.bf16.mxu0 %v5008
    %7328 = vmatpush1.bf16.msra.mxu0 %v5007
    %7329 = vmatprep.subr.bf16.mxu0 %v5016
    %7330 = vmatpush1.bf16.msra.mxu0 %v5015
    %7331 = vmatprep.subr.bf16.mxu0 %v5024
    %7332 = vmatpush1.bf16.msra.mxu0 %v5023
    %7333 = vmatprep.subr.bf16.mxu0 %v5032
    %7334 = vmatpush1.bf16.msra.mxu0 %v5031
    %7335 = vmatprep.mubr.bf16.mxu0 %v1300
    %7336 = vmatmul.mubr.bf16.gmra.mrb[0].mxu0 %v1299
    %v7337 = vpop.f32.mrb[0].mxu0
    %v7338 = vadd.f32 %v7295, %v7337
    %v7339 = vpop.f32.mrb[0].mxu0
    %v7340 = vadd.f32 %v7297, %v7339
    %v7341 = vpop.f32.mrb[0].mxu0
    %v7342 = vadd.f32 %v7299, %v7341
    %v7343 = vpop.f32.mrb[0].mxu0
    %v7344 = vadd.f32 %v7301, %v7343
    %7345 = vdwg.mxu0
    %7346 = vmatprep.subr.bf16.mxu0 %v5040
    %7347 = vmatpush1.bf16.msra.mxu0 %v5039
    %7348 = vmatprep.subr.bf16.mxu0 %v5048
    %7349 = vmatpush1.bf16.msra.mxu0 %v5047
    %7350 = vmatprep.subr.bf16.mxu0 %v5056
    %7351 = vmatpush1.bf16.msra.mxu0 %v5055
    %7352 = vmatprep.subr.bf16.mxu0 %v5064
    %7353 = vmatpush1.bf16.msra.mxu0 %v5063
    %7354 = vmatprep.subr.bf16.mxu0 %v5072
    %7355 = vmatpush1.bf16.msra.mxu0 %v5071
    %7356 = vmatprep.subr.bf16.mxu0 %v5080
    %7357 = vmatpush1.bf16.msra.mxu0 %v5079
    %7358 = vmatprep.subr.bf16.mxu0 %v5088
    %7359 = vmatpush1.bf16.msra.mxu0 %v5087
    %7360 = vmatprep.subr.bf16.mxu0 %v5096
    %7361 = vmatpush1.bf16.msra.mxu0 %v5095
    %7362 = vmatprep.subr.bf16.mxu0 %v5104
    %7363 = vmatpush1.bf16.msra.mxu0 %v5103
    %7364 = vmatprep.subr.bf16.mxu0 %v5112
    %7365 = vmatpush1.bf16.msra.mxu0 %v5111
    %7366 = vmatprep.subr.bf16.mxu0 %v5120
    %7367 = vmatpush1.bf16.msra.mxu0 %v5119
    %7368 = vmatprep.subr.bf16.mxu0 %v5128
    %7369 = vmatpush1.bf16.msra.mxu0 %v5127
    %7370 = vmatprep.subr.bf16.mxu0 %v5136
    %7371 = vmatpush1.bf16.msra.mxu0 %v5135
    %7372 = vmatprep.subr.bf16.mxu0 %v5144
    %7373 = vmatpush1.bf16.msra.mxu0 %v5143
    %7374 = vmatprep.subr.bf16.mxu0 %v5152
    %7375 = vmatpush1.bf16.msra.mxu0 %v5151
    %7376 = vmatprep.subr.bf16.mxu0 %v5160
    %7377 = vmatpush1.bf16.msra.mxu0 %v5159
    %7378 = vmatprep.mubr.bf16.mxu0 %v1302
    %7379 = vmatmul.mubr.bf16.gmra.mrb[0].mxu0 %v1301
    %v7380 = vpop.f32.mrb[0].mxu0
    %v7381 = vadd.f32 %v7338, %v7380
    %v7382 = vpop.f32.mrb[0].mxu0
    %v7383 = vadd.f32 %v7340, %v7382
    %v7384 = vpop.f32.mrb[0].mxu0
    %v7385 = vadd.f32 %v7342, %v7384
    %v7386 = vpop.f32.mrb[0].mxu0
    %v7387 = vadd.f32 %v7344, %v7386
    %7388 = vdwg.mxu0
    %7389 = vmatprep.subr.bf16.mxu0 %v5168
    %7390 = vmatpush1.bf16.msra.mxu0 %v5167
    %7391 = vmatprep.subr.bf16.mxu0 %v5176
    %7392 = vmatpush1.bf16.msra.mxu0 %v5175
    %7393 = vmatprep.subr.bf16.mxu0 %v5184
    %7394 = vmatpush1.bf16.msra.mxu0 %v5183
    %7395 = vmatprep.subr.bf16.mxu0 %v5192
    %7396 = vmatpush1.bf16.msra.mxu0 %v5191
    %7397 = vmatprep.subr.bf16.mxu0 %v5200
    %7398 = vmatpush1.bf16.msra.mxu0 %v5199
    %7399 = vmatprep.subr.bf16.mxu0 %v5208
    %7400 = vmatpush1.bf16.msra.mxu0 %v5207
    %7401 = vmatprep.subr.bf16.mxu0 %v5216
    %7402 = vmatpush1.bf16.msra.mxu0 %v5215
    %7403 = vmatprep.subr.bf16.mxu0 %v5224
    %7404 = vmatpush1.bf16.msra.mxu0 %v5223
    %7405 = vmatprep.subr.bf16.mxu0 %v5232
    %7406 = vmatpush1.bf16.msra.mxu0 %v5231
    %7407 = vmatprep.subr.bf16.mxu0 %v5240
    %7408 = vmatpush1.bf16.msra.mxu0 %v5239
    %7409 = vmatprep.subr.bf16.mxu0 %v5248
    %7410 = vmatpush1.bf16.msra.mxu0 %v5247
    %7411 = vmatprep.subr.bf16.mxu0 %v5256
    %7412 = vmatpush1.bf16.msra.mxu0 %v5255
    %7413 = vmatprep.subr.bf16.mxu0 %v5264
    %7414 = vmatpush1.bf16.msra.mxu0 %v5263
    %7415 = vmatprep.subr.bf16.mxu0 %v5272
    %7416 = vmatpush1.bf16.msra.mxu0 %v5271
    %7417 = vmatprep.subr.bf16.mxu0 %v5280
    %7418 = vmatpush1.bf16.msra.mxu0 %v5279
    %7419 = vmatprep.subr.bf16.mxu0 %v5288
    %7420 = vmatpush1.bf16.msra.mxu0 %v5287
    %7421 = vmatprep.mubr.bf16.mxu0 %v1304
    %7422 = vmatmul.mubr.bf16.gmra.mrb[0].mxu0 %v1303
    %v7423 = vpop.f32.mrb[0].mxu0
    %v7424 = vadd.f32 %v7381, %v7423
    %v7425 = vpop.f32.mrb[0].mxu0
    %v7426 = vadd.f32 %v7383, %v7425
    %v7427 = vpop.f32.mrb[0].mxu0
    %v7428 = vadd.f32 %v7385, %v7427
    %v7429 = vpop.f32.mrb[0].mxu0
    %v7430 = vadd.f32 %v7387, %v7429
    %7431 = vdwg.mxu0
    %7432 = vmatprep.subr.bf16.mxu0 %v5296
    %7433 = vmatpush1.bf16.msra.mxu0 %v5295
    %7434 = vmatprep.subr.bf16.mxu0 %v5304
    %7435 = vmatpush1.bf16.msra.mxu0 %v5303
    %7436 = vmatprep.subr.bf16.mxu0 %v5312
    %7437 = vmatpush1.bf16.msra.mxu0 %v5311
    %7438 = vmatprep.subr.bf16.mxu0 %v5320
    %7439 = vmatpush1.bf16.msra.mxu0 %v5319
    %7440 = vmatprep.subr.bf16.mxu0 %v5328
    %7441 = vmatpush1.bf16.msra.mxu0 %v5327
    %7442 = vmatprep.subr.bf16.mxu0 %v5336
    %7443 = vmatpush1.bf16.msra.mxu0 %v5335
    %7444 = vmatprep.subr.bf16.mxu0 %v5344
    %7445 = vmatpush1.bf16.msra.mxu0 %v5343
    %7446 = vmatprep.subr.bf16.mxu0 %v5352
    %7447 = vmatpush1.bf16.msra.mxu0 %v5351
    %7448 = vmatprep.subr.bf16.mxu0 %v5360
    %7449 = vmatpush1.bf16.msra.mxu0 %v5359
    %7450 = vmatprep.subr.bf16.mxu0 %v5368
    %7451 = vmatpush1.bf16.msra.mxu0 %v5367
    %7452 = vmatprep.subr.bf16.mxu0 %v5376
    %7453 = vmatpush1.bf16.msra.mxu0 %v5375
    %7454 = vmatprep.subr.bf16.mxu0 %v5384
    %7455 = vmatpush1.bf16.msra.mxu0 %v5383
    %7456 = vmatprep.subr.bf16.mxu0 %v5392
    %7457 = vmatpush1.bf16.msra.mxu0 %v5391
    %7458 = vmatprep.subr.bf16.mxu0 %v5400
    %7459 = vmatpush1.bf16.msra.mxu0 %v5399
    %7460 = vmatprep.subr.bf16.mxu0 %v5408
    %7461 = vmatpush1.bf16.msra.mxu0 %v5407
    %7462 = vmatprep.subr.bf16.mxu0 %v5416
    %7463 = vmatpush1.bf16.msra.mxu0 %v5415
    %7464 = vmatprep.mubr.bf16.mxu0 %v1306
    %7465 = vmatmul.mubr.bf16.gmra.mrb[0].mxu0 %v1305
    %v7466 = vpop.f32.mrb[0].mxu0
    %v7467 = vadd.f32 %v7424, %v7466
    %v7468 = vpop.f32.mrb[0].mxu0
    %v7469 = vadd.f32 %v7426, %v7468
    %v7470 = vpop.f32.mrb[0].mxu0
    %v7471 = vadd.f32 %v7428, %v7470
    %v7472 = vpop.f32.mrb[0].mxu0
    %v7473 = vadd.f32 %v7430, %v7472
    %7474 = vdwg.mxu0
    %7475 = vmatprep.subr.bf16.mxu0 %v4402
    %7476 = vmatpush1.bf16.msra.mxu0 %v4401
    %7477 = vmatprep.subr.bf16.mxu0 %v4410
    %7478 = vmatpush1.bf16.msra.mxu0 %v4409
    %7479 = vmatprep.subr.bf16.mxu0 %v4418
    %7480 = vmatpush1.bf16.msra.mxu0 %v4417
    %7481 = vmatprep.subr.bf16.mxu0 %v4426
    %7482 = vmatpush1.bf16.msra.mxu0 %v4425
    %7483 = vmatprep.subr.bf16.mxu0 %v4434
    %7484 = vmatpush1.bf16.msra.mxu0 %v4433
    %7485 = vmatprep.subr.bf16.mxu0 %v4442
    %7486 = vmatpush1.bf16.msra.mxu0 %v4441
    %7487 = vmatprep.subr.bf16.mxu0 %v4450
    %7488 = vmatpush1.bf16.msra.mxu0 %v4449
    %7489 = vmatprep.subr.bf16.mxu0 %v4458
    %7490 = vmatpush1.bf16.msra.mxu0 %v4457
    %7491 = vmatprep.subr.bf16.mxu0 %v4466
    %7492 = vmatpush1.bf16.msra.mxu0 %v4465
    %7493 = vmatprep.subr.bf16.mxu0 %v4474
    %7494 = vmatpush1.bf16.msra.mxu0 %v4473
    %7495 = vmatprep.subr.bf16.mxu0 %v4482
    %7496 = vmatpush1.bf16.msra.mxu0 %v4481
    %7497 = vmatprep.subr.bf16.mxu0 %v4490
    %7498 = vmatpush1.bf16.msra.mxu0 %v4489
    %7499 = vmatprep.subr.bf16.mxu0 %v4498
    %7500 = vmatpush1.bf16.msra.mxu0 %v4497
    %7501 = vmatprep.subr.bf16.mxu0 %v4506
    %7502 = vmatpush1.bf16.msra.mxu0 %v4505
    %7503 = vmatprep.subr.bf16.mxu0 %v4514
    %7504 = vmatpush1.bf16.msra.mxu0 %v4513
    %7505 = vmatprep.subr.bf16.mxu0 %v4522
    %7506 = vmatpush1.bf16.msra.mxu0 %v4521
    %7507 = vmatprep.mubr.bf16.mxu0 %v1292
    %7508 = vmatmul.mubr.bf16.gmra.mrb[0].mxu0 %v1291
    %v7509 = vpop.f32.mrb[0].mxu0
    %v7510 = vadd.f32 0.0, %v7509
    %v7511 = vpop.f32.mrb[0].mxu0
    %v7512 = vadd.f32 0.0, %v7511
    %v7513 = vpop.f32.mrb[0].mxu0
    %v7514 = vadd.f32 0.0, %v7513
    %v7515 = vpop.f32.mrb[0].mxu0
    %v7516 = vadd.f32 0.0, %v7515
    %7517 = vdwg.mxu0
    %7518 = vmatprep.subr.bf16.mxu0 %v4530
    %7519 = vmatpush1.bf16.msra.mxu0 %v4529
    %7520 = vmatprep.subr.bf16.mxu0 %v4538
    %7521 = vmatpush1.bf16.msra.mxu0 %v4537
    %7522 = vmatprep.subr.bf16.mxu0 %v4546
    %7523 = vmatpush1.bf16.msra.mxu0 %v4545
    %7524 = vmatprep.subr.bf16.mxu0 %v4554
    %7525 = vmatpush1.bf16.msra.mxu0 %v4553
    %7526 = vmatprep.subr.bf16.mxu0 %v4562
    %7527 = vmatpush1.bf16.msra.mxu0 %v4561
    %7528 = vmatprep.subr.bf16.mxu0 %v4570
    %7529 = vmatpush1.bf16.msra.mxu0 %v4569
    %7530 = vmatprep.subr.bf16.mxu0 %v4578
    %7531 = vmatpush1.bf16.msra.mxu0 %v4577
    %7532 = vmatprep.subr.bf16.mxu0 %v4586
    %7533 = vmatpush1.bf16.msra.mxu0 %v4585
    %7534 = vmatprep.subr.bf16.mxu0 %v4594
    %7535 = vmatpush1.bf16.msra.mxu0 %v4593
    %7536 = vmatprep.subr.bf16.mxu0 %v4602
    %7537 = vmatpush1.bf16.msra.mxu0 %v4601
    %7538 = vmatprep.subr.bf16.mxu0 %v4610
    %7539 = vmatpush1.bf16.msra.mxu0 %v4609
    %7540 = vmatprep.subr.bf16.mxu0 %v4618
    %7541 = vmatpush1.bf16.msra.mxu0 %v4617
    %7542 = vmatprep.subr.bf16.mxu0 %v4626
    %7543 = vmatpush1.bf16.msra.mxu0 %v4625
    %7544 = vmatprep.subr.bf16.mxu0 %v4634
    %7545 = vmatpush1.bf16.msra.mxu0 %v4633
    %7546 = vmatprep.subr.bf16.mxu0 %v4642
    %7547 = vmatpush1.bf16.msra.mxu0 %v4641
    %7548 = vmatprep.subr.bf16.mxu0 %v4650
    %7549 = vmatpush1.bf16.msra.mxu0 %v4649
    %7550 = vmatprep.mubr.bf16.mxu0 %v1294
    %7551 = vmatmul.mubr.bf16.gmra.mrb[0].mxu0 %v1293
    %v7552 = vpop.f32.mrb[0].mxu0
    %v7553 = vadd.f32 %v7510, %v7552
    %v7554 = vpop.f32.mrb[0].mxu0
    %v7555 = vadd.f32 %v7512, %v7554
    %v7556 = vpop.f32.mrb[0].mxu0
    %v7557 = vadd.f32 %v7514, %v7556
    %v7558 = vpop.f32.mrb[0].mxu0
    %v7559 = vadd.f32 %v7516, %v7558
    %7560 = vdwg.mxu0
    %7561 = vmatprep.subr.bf16.mxu0 %v4658
    %7562 = vmatpush1.bf16.msra.mxu0 %v4657
    %7563 = vmatprep.subr.bf16.mxu0 %v4666
    %7564 = vmatpush1.bf16.msra.mxu0 %v4665
    %7565 = vmatprep.subr.bf16.mxu0 %v4674
    %7566 = vmatpush1.bf16.msra.mxu0 %v4673
    %7567 = vmatprep.subr.bf16.mxu0 %v4682
    %7568 = vmatpush1.bf16.msra.mxu0 %v4681
    %7569 = vmatprep.subr.bf16.mxu0 %v4690
    %7570 = vmatpush1.bf16.msra.mxu0 %v4689
    %7571 = vmatprep.subr.bf16.mxu0 %v4698
    %7572 = vmatpush1.bf16.msra.mxu0 %v4697
    %7573 = vmatprep.subr.bf16.mxu0 %v4706
    %7574 = vmatpush1.bf16.msra.mxu0 %v4705
    %7575 = vmatprep.subr.bf16.mxu0 %v4714
    %7576 = vmatpush1.bf16.msra.mxu0 %v4713
    %7577 = vmatprep.subr.bf16.mxu0 %v4722
    %7578 = vmatpush1.bf16.msra.mxu0 %v4721
    %7579 = vmatprep.subr.bf16.mxu0 %v4730
    %7580 = vmatpush1.bf16.msra.mxu0 %v4729
    %7581 = vmatprep.subr.bf16.mxu0 %v4738
    %7582 = vmatpush1.bf16.msra.mxu0 %v4737
    %7583 = vmatprep.subr.bf16.mxu0 %v4746
    %7584 = vmatpush1.bf16.msra.mxu0 %v4745
    %7585 = vmatprep.subr.bf16.mxu0 %v4754
    %7586 = vmatpush1.bf16.msra.mxu0 %v4753
    %7587 = vmatprep.subr.bf16.mxu0 %v4762
    %7588 = vmatpush1.bf16.msra.mxu0 %v4761
    %7589 = vmatprep.subr.bf16.mxu0 %v4770
    %7590 = vmatpush1.bf16.msra.mxu0 %v4769
    %7591 = vmatprep.subr.bf16.mxu0 %v4778
    %7592 = vmatpush1.bf16.msra.mxu0 %v4777
    %7593 = vmatprep.mubr.bf16.mxu0 %v1296
    %7594 = vmatmul.mubr.bf16.gmra.mrb[0].mxu0 %v1295
    %v7595 = vpop.f32.mrb[0].mxu0
    %v7596 = vadd.f32 %v7553, %v7595
    %v7597 = vpop.f32.mrb[0].mxu0
    %v7598 = vadd.f32 %v7555, %v7597
    %v7599 = vpop.f32.mrb[0].mxu0
    %v7600 = vadd.f32 %v7557, %v7599
    %v7601 = vpop.f32.mrb[0].mxu0
    %v7602 = vadd.f32 %v7559, %v7601
    %7603 = vdwg.mxu0
    %7604 = vmatprep.subr.bf16.mxu0 %v4786
    %7605 = vmatpush1.bf16.msra.mxu0 %v4785
    %7606 = vmatprep.subr.bf16.mxu0 %v4794
    %7607 = vmatpush1.bf16.msra.mxu0 %v4793
    %7608 = vmatprep.subr.bf16.mxu0 %v4802
    %7609 = vmatpush1.bf16.msra.mxu0 %v4801
    %7610 = vmatprep.subr.bf16.mxu0 %v4810
    %7611 = vmatpush1.bf16.msra.mxu0 %v4809
    %7612 = vmatprep.subr.bf16.mxu0 %v4818
    %7613 = vmatpush1.bf16.msra.mxu0 %v4817
    %7614 = vmatprep.subr.bf16.mxu0 %v4826
    %7615 = vmatpush1.bf16.msra.mxu0 %v4825
    %7616 = vmatprep.subr.bf16.mxu0 %v4834
    %7617 = vmatpush1.bf16.msra.mxu0 %v4833
    %7618 = vmatprep.subr.bf16.mxu0 %v4842
    %7619 = vmatpush1.bf16.msra.mxu0 %v4841
    %7620 = vmatprep.subr.bf16.mxu0 %v4850
    %7621 = vmatpush1.bf16.msra.mxu0 %v4849
    %7622 = vmatprep.subr.bf16.mxu0 %v4858
    %7623 = vmatpush1.bf16.msra.mxu0 %v4857
    %7624 = vmatprep.subr.bf16.mxu0 %v4866
    %7625 = vmatpush1.bf16.msra.mxu0 %v4865
    %7626 = vmatprep.subr.bf16.mxu0 %v4874
    %7627 = vmatpush1.bf16.msra.mxu0 %v4873
    %7628 = vmatprep.subr.bf16.mxu0 %v4882
    %7629 = vmatpush1.bf16.msra.mxu0 %v4881
    %7630 = vmatprep.subr.bf16.mxu0 %v4890
    %7631 = vmatpush1.bf16.msra.mxu0 %v4889
    %7632 = vmatprep.subr.bf16.mxu0 %v4898
    %7633 = vmatpush1.bf16.msra.mxu0 %v4897
    %7634 = vmatprep.subr.bf16.mxu0 %v4906
    %7635 = vmatpush1.bf16.msra.mxu0 %v4905
    %7636 = vmatprep.mubr.bf16.mxu0 %v1298
    %7637 = vmatmul.mubr.bf16.gmra.mrb[0].mxu0 %v1297
    %v7638 = vpop.f32.mrb[0].mxu0
    %v7639 = vadd.f32 %v7596, %v7638
    %v7640 = vpop.f32.mrb[0].mxu0
    %v7641 = vadd.f32 %v7598, %v7640
    %v7642 = vpop.f32.mrb[0].mxu0
    %v7643 = vadd.f32 %v7600, %v7642
    %v7644 = vpop.f32.mrb[0].mxu0
    %v7645 = vadd.f32 %v7602, %v7644
    %7646 = vdwg.mxu0
    %7647 = vmatprep.subr.bf16.mxu0 %v4914
    %7648 = vmatpush1.bf16.msra.mxu0 %v4913
    %7649 = vmatprep.subr.bf16.mxu0 %v4922
    %7650 = vmatpush1.bf16.msra.mxu0 %v4921
    %7651 = vmatprep.subr.bf16.mxu0 %v4930
    %7652 = vmatpush1.bf16.msra.mxu0 %v4929
    %7653 = vmatprep.subr.bf16.mxu0 %v4938
    %7654 = vmatpush1.bf16.msra.mxu0 %v4937
    %7655 = vmatprep.subr.bf16.mxu0 %v4946
    %7656 = vmatpush1.bf16.msra.mxu0 %v4945
    %7657 = vmatprep.subr.bf16.mxu0 %v4954
    %7658 = vmatpush1.bf16.msra.mxu0 %v4953
    %7659 = vmatprep.subr.bf16.mxu0 %v4962
    %7660 = vmatpush1.bf16.msra.mxu0 %v4961
    %7661 = vmatprep.subr.bf16.mxu0 %v4970
    %7662 = vmatpush1.bf16.msra.mxu0 %v4969
    %7663 = vmatprep.subr.bf16.mxu0 %v4978
    %7664 = vmatpush1.bf16.msra.mxu0 %v4977
    %7665 = vmatprep.subr.bf16.mxu0 %v4986
    %7666 = vmatpush1.bf16.msra.mxu0 %v4985
    %7667 = vmatprep.subr.bf16.mxu0 %v4994
    %7668 = vmatpush1.bf16.msra.mxu0 %v4993
    %7669 = vmatprep.subr.bf16.mxu0 %v5002
    %7670 = vmatpush1.bf16.msra.mxu0 %v5001
    %7671 = vmatprep.subr.bf16.mxu0 %v5010
    %7672 = vmatpush1.bf16.msra.mxu0 %v5009
    %7673 = vmatprep.subr.bf16.mxu0 %v5018
    %7674 = vmatpush1.bf16.msra.mxu0 %v5017
    %7675 = vmatprep.subr.bf16.mxu0 %v5026
    %7676 = vmatpush1.bf16.msra.mxu0 %v5025
    %7677 = vmatprep.subr.bf16.mxu0 %v5034
    %7678 = vmatpush1.bf16.msra.mxu0 %v5033
    %7679 = vmatprep.mubr.bf16.mxu0 %v1300
    %7680 = vmatmul.mubr.bf16.gmra.mrb[0].mxu0 %v1299
    %v7681 = vpop.f32.mrb[0].mxu0
    %v7682 = vadd.f32 %v7639, %v7681
    %v7683 = vpop.f32.mrb[0].mxu0
    %v7684 = vadd.f32 %v7641, %v7683
    %v7685 = vpop.f32.mrb[0].mxu0
    %v7686 = vadd.f32 %v7643, %v7685
    %v7687 = vpop.f32.mrb[0].mxu0
    %v7688 = vadd.f32 %v7645, %v7687
    %7689 = vdwg.mxu0
    %7690 = vmatprep.subr.bf16.mxu0 %v5042
    %7691 = vmatpush1.bf16.msra.mxu0 %v5041
    %7692 = vmatprep.subr.bf16.mxu0 %v5050
    %7693 = vmatpush1.bf16.msra.mxu0 %v5049
    %7694 = vmatprep.subr.bf16.mxu0 %v5058
    %7695 = vmatpush1.bf16.msra.mxu0 %v5057
    %7696 = vmatprep.subr.bf16.mxu0 %v5066
    %7697 = vmatpush1.bf16.msra.mxu0 %v5065
    %7698 = vmatprep.subr.bf16.mxu0 %v5074
    %7699 = vmatpush1.bf16.msra.mxu0 %v5073
    %7700 = vmatprep.subr.bf16.mxu0 %v5082
    %7701 = vmatpush1.bf16.msra.mxu0 %v5081
    %7702 = vmatprep.subr.bf16.mxu0 %v5090
    %7703 = vmatpush1.bf16.msra.mxu0 %v5089
    %7704 = vmatprep.subr.bf16.mxu0 %v5098
    %7705 = vmatpush1.bf16.msra.mxu0 %v5097
    %7706 = vmatprep.subr.bf16.mxu0 %v5106
    %7707 = vmatpush1.bf16.msra.mxu0 %v5105
    %7708 = vmatprep.subr.bf16.mxu0 %v5114
    %7709 = vmatpush1.bf16.msra.mxu0 %v5113
    %7710 = vmatprep.subr.bf16.mxu0 %v5122
    %7711 = vmatpush1.bf16.msra.mxu0 %v5121
    %7712 = vmatprep.subr.bf16.mxu0 %v5130
    %7713 = vmatpush1.bf16.msra.mxu0 %v5129
    %7714 = vmatprep.subr.bf16.mxu0 %v5138
    %7715 = vmatpush1.bf16.msra.mxu0 %v5137
    %7716 = vmatprep.subr.bf16.mxu0 %v5146
    %7717 = vmatpush1.bf16.msra.mxu0 %v5145
    %7718 = vmatprep.subr.bf16.mxu0 %v5154
    %7719 = vmatpush1.bf16.msra.mxu0 %v5153
    %7720 = vmatprep.subr.bf16.mxu0 %v5162
    %7721 = vmatpush1.bf16.msra.mxu0 %v5161
    %7722 = vmatprep.mubr.bf16.mxu0 %v1302
    %7723 = vmatmul.mubr.bf16.gmra.mrb[0].mxu0 %v1301
    %v7724 = vpop.f32.mrb[0].mxu0
    %v7725 = vadd.f32 %v7682, %v7724
    %v7726 = vpop.f32.mrb[0].mxu0
    %v7727 = vadd.f32 %v7684, %v7726
    %v7728 = vpop.f32.mrb[0].mxu0
    %v7729 = vadd.f32 %v7686, %v7728
    %v7730 = vpop.f32.mrb[0].mxu0
    %v7731 = vadd.f32 %v7688, %v7730
    %7732 = vdwg.mxu0
    %7733 = vmatprep.subr.bf16.mxu0 %v5170
    %7734 = vmatpush1.bf16.msra.mxu0 %v5169
    %7735 = vmatprep.subr.bf16.mxu0 %v5178
    %7736 = vmatpush1.bf16.msra.mxu0 %v5177
    %7737 = vmatprep.subr.bf16.mxu0 %v5186
    %7738 = vmatpush1.bf16.msra.mxu0 %v5185
    %7739 = vmatprep.subr.bf16.mxu0 %v5194
    %7740 = vmatpush1.bf16.msra.mxu0 %v5193
    %7741 = vmatprep.subr.bf16.mxu0 %v5202
    %7742 = vmatpush1.bf16.msra.mxu0 %v5201
    %7743 = vmatprep.subr.bf16.mxu0 %v5210
    %7744 = vmatpush1.bf16.msra.mxu0 %v5209
    %7745 = vmatprep.subr.bf16.mxu0 %v5218
    %7746 = vmatpush1.bf16.msra.mxu0 %v5217
    %7747 = vmatprep.subr.bf16.mxu0 %v5226
    %7748 = vmatpush1.bf16.msra.mxu0 %v5225
    %7749 = vmatprep.subr.bf16.mxu0 %v5234
    %7750 = vmatpush1.bf16.msra.mxu0 %v5233
    %7751 = vmatprep.subr.bf16.mxu0 %v5242
    %7752 = vmatpush1.bf16.msra.mxu0 %v5241
    %7753 = vmatprep.subr.bf16.mxu0 %v5250
    %7754 = vmatpush1.bf16.msra.mxu0 %v5249
    %7755 = vmatprep.subr.bf16.mxu0 %v5258
    %7756 = vmatpush1.bf16.msra.mxu0 %v5257
    %7757 = vmatprep.subr.bf16.mxu0 %v5266
    %7758 = vmatpush1.bf16.msra.mxu0 %v5265
    %7759 = vmatprep.subr.bf16.mxu0 %v5274
    %7760 = vmatpush1.bf16.msra.mxu0 %v5273
    %7761 = vmatprep.subr.bf16.mxu0 %v5282
    %7762 = vmatpush1.bf16.msra.mxu0 %v5281
    %7763 = vmatprep.subr.bf16.mxu0 %v5290
    %7764 = vmatpush1.bf16.msra.mxu0 %v5289
    %7765 = vmatprep.mubr.bf16.mxu0 %v1304
    %7766 = vmatmul.mubr.bf16.gmra.mrb[0].mxu0 %v1303
    %v7767 = vpop.f32.mrb[0].mxu0
    %v7768 = vadd.f32 %v7725, %v7767
    %v7769 = vpop.f32.mrb[0].mxu0
    %v7770 = vadd.f32 %v7727, %v7769
    %v7771 = vpop.f32.mrb[0].mxu0
    %v7772 = vadd.f32 %v7729, %v7771
    %v7773 = vpop.f32.mrb[0].mxu0
    %v7774 = vadd.f32 %v7731, %v7773
    %7775 = vdwg.mxu0
    %7776 = vmatprep.subr.bf16.mxu0 %v5298
    %7777 = vmatpush1.bf16.msra.mxu0 %v5297
    %7778 = vmatprep.subr.bf16.mxu0 %v5306
    %7779 = vmatpush1.bf16.msra.mxu0 %v5305
    %7780 = vmatprep.subr.bf16.mxu0 %v5314
    %7781 = vmatpush1.bf16.msra.mxu0 %v5313
    %7782 = vmatprep.subr.bf16.mxu0 %v5322
    %7783 = vmatpush1.bf16.msra.mxu0 %v5321
    %7784 = vmatprep.subr.bf16.mxu0 %v5330
    %7785 = vmatpush1.bf16.msra.mxu0 %v5329
    %7786 = vmatprep.subr.bf16.mxu0 %v5338
    %7787 = vmatpush1.bf16.msra.mxu0 %v5337
    %7788 = vmatprep.subr.bf16.mxu0 %v5346
    %7789 = vmatpush1.bf16.msra.mxu0 %v5345
    %7790 = vmatprep.subr.bf16.mxu0 %v5354
    %7791 = vmatpush1.bf16.msra.mxu0 %v5353
    %7792 = vmatprep.subr.bf16.mxu0 %v5362
    %7793 = vmatpush1.bf16.msra.mxu0 %v5361
    %7794 = vmatprep.subr.bf16.mxu0 %v5370
    %7795 = vmatpush1.bf16.msra.mxu0 %v5369
    %7796 = vmatprep.subr.bf16.mxu0 %v5378
    %7797 = vmatpush1.bf16.msra.mxu0 %v5377
    %7798 = vmatprep.subr.bf16.mxu0 %v5386
    %7799 = vmatpush1.bf16.msra.mxu0 %v5385
    %7800 = vmatprep.subr.bf16.mxu0 %v5394
    %7801 = vmatpush1.bf16.msra.mxu0 %v5393
    %7802 = vmatprep.subr.bf16.mxu0 %v5402
    %7803 = vmatpush1.bf16.msra.mxu0 %v5401
    %7804 = vmatprep.subr.bf16.mxu0 %v5410
    %7805 = vmatpush1.bf16.msra.mxu0 %v5409
    %7806 = vmatprep.subr.bf16.mxu0 %v5418
    %7807 = vmatpush1.bf16.msra.mxu0 %v5417
    %7808 = vmatprep.mubr.bf16.mxu0 %v1306
    %7809 = vmatmul.mubr.bf16.gmra.mrb[0].mxu0 %v1305
    %v7810 = vpop.f32.mrb[0].mxu0
    %v7811 = vadd.f32 %v7768, %v7810
    %v7812 = vpop.f32.mrb[0].mxu0
    %v7813 = vadd.f32 %v7770, %v7812
    %v7814 = vpop.f32.mrb[0].mxu0
    %v7815 = vadd.f32 %v7772, %v7814
    %v7816 = vpop.f32.mrb[0].mxu0
    %v7817 = vadd.f32 %v7774, %v7816
    %7818 = vdwg.mxu0
    %v7819 = vadd.f32 %v187, %v6779
    %v7820 = vadd.f32 %v188, %v6781
    %v7821 = vadd.f32 %v189, %v7123
    %v7822 = vadd.f32 %v190, %v7125
    %v7823 = vadd.f32 %v191, %v7467
    %v7824 = vadd.f32 %v192, %v7469
    %v7825 = vadd.f32 %v193, %v7811
    %v7826 = vadd.f32 %v194, %v7813
    %v7827 = vadd.f32 %v195, %v6783
    %v7828 = vadd.f32 %v196, %v6785
    %v7829 = vadd.f32 %v197, %v7127
    %v7830 = vadd.f32 %v198, %v7129
    %v7831 = vadd.f32 %v199, %v7471
    %v7832 = vadd.f32 %v200, %v7473
    %v7833 = vadd.f32 %v201, %v7815
    %v7834 = vadd.f32 %v202, %v7817
    %7835 = vst [vmem:[#allocation2] sm:$0xff] %v7819
    %7836 = vst [vmem:[#allocation2 + $0x8] sm:$0xff] %v7820
    %7837 = vst [vmem:[#allocation2 + $0x10] sm:$0xff] %v7821
    %7838 = vst [vmem:[#allocation2 + $0x18] sm:$0xff] %v7822
    %7839 = vst [vmem:[#allocation2 + $0x20] sm:$0xff] %v7823
    %7840 = vst [vmem:[#allocation2 + $0x28] sm:$0xff] %v7824
    %7841 = vst [vmem:[#allocation2 + $0x30] sm:$0xff] %v7825
    %7842 = vst [vmem:[#allocation2 + $0x38] sm:$0xff] %v7826
    %7843 = vst [vmem:[#allocation2 + $0x40] sm:$0xff] %v7827
    %7844 = vst [vmem:[#allocation2 + $0x48] sm:$0xff] %v7828
    %7845 = vst [vmem:[#allocation2 + $0x50] sm:$0xff] %v7829
    %7846 = vst [vmem:[#allocation2 + $0x58] sm:$0xff] %v7830
    %7847 = vst [vmem:[#allocation2 + $0x60] sm:$0xff] %v7831
    %7848 = vst [vmem:[#allocation2 + $0x68] sm:$0xff] %v7832
    %7849 = vst [vmem:[#allocation2 + $0x70] sm:$0xff] %v7833
    %7850 = vst [vmem:[#allocation2 + $0x78] sm:$0xff] %v7834
    // Predicated region
    $region90: #{transfer_au_forward.1} parent=1 // pred_check
      %p7851 = pneg %p167
    $region91: #{transfer_au_forward.1} parent=1 // pred_check_branch
      %7853 = sbr.rel (%p7851) target = $region93
    $region92: #{transfer_au_forward.1} parent=1 // pred_region
      %v7854 = vld [vmem:[#allocation2] sm:$0xff]
      %v7855 = vld [vmem:[#allocation2 + $0x8] sm:$0xff]
      %v7856 = vld [vmem:[#allocation2 + $0x10] sm:$0xff]
      %v7857 = vld [vmem:[#allocation2 + $0x18] sm:$0xff]
      %v7858 = vld [vmem:[#allocation2 + $0x20] sm:$0xff]
      %v7859 = vld [vmem:[#allocation2 + $0x28] sm:$0xff]
      %v7860 = vld [vmem:[#allocation2 + $0x30] sm:$0xff]
      %v7861 = vld [vmem:[#allocation2 + $0x38] sm:$0xff]
      %v7862 = vld [vmem:[#allocation2 + $0x40] sm:$0xff]
      %v7863 = vld [vmem:[#allocation2 + $0x48] sm:$0xff]
      %v7864 = vld [vmem:[#allocation2 + $0x50] sm:$0xff]
      %v7865 = vld [vmem:[#allocation2 + $0x58] sm:$0xff]
      %v7866 = vld [vmem:[#allocation2 + $0x60] sm:$0xff]
      %v7867 = vld [vmem:[#allocation2 + $0x68] sm:$0xff]
      %v7868 = vld [vmem:[#allocation2 + $0x70] sm:$0xff]
      %v7869 = vld [vmem:[#allocation2 + $0x78] sm:$0xff]
      %v7870 = vld [vmem:[#allocation7] sm:$0xff]
      %v7872 = vlaneseq
      %v7873 = vshrl.u32 %v7872, 7
      %v7874 = vsub.s32 0, %v7873
      %v7875 = vrot.slane %v7870, %v7874
      %v7876 = vlaneseq
      %v7877 = vshrl.u32 %v7876, 7
      %v7878 = vsub.s32 1, %v7877
      %v7879 = vrot.slane %v7870, %v7878
      %v7880 = vlaneseq
      %v7881 = vshrl.u32 %v7880, 7
      %v7882 = vsub.s32 2, %v7881
      %v7883 = vrot.slane %v7870, %v7882
      %v7884 = vlaneseq
      %v7885 = vshrl.u32 %v7884, 7
      %v7886 = vsub.s32 3, %v7885
      %v7887 = vrot.slane %v7870, %v7886
      %v7888 = vlaneseq
      %v7889 = vshrl.u32 %v7888, 7
      %v7890 = vsub.s32 4, %v7889
      %v7891 = vrot.slane %v7870, %v7890
      %v7892 = vlaneseq
      %v7893 = vshrl.u32 %v7892, 7
      %v7894 = vsub.s32 5, %v7893
      %v7895 = vrot.slane %v7870, %v7894
      %v7896 = vlaneseq
      %v7897 = vshrl.u32 %v7896, 7
      %v7898 = vsub.s32 6, %v7897
      %v7899 = vrot.slane %v7870, %v7898
      %v7900 = vlaneseq
      %v7901 = vshrl.u32 %v7900, 7
      %v7902 = vsub.s32 7, %v7901
      %v7903 = vrot.slane %v7870, %v7902
      %v7912 = vadd.f32 %v7854, %v7875
      %v7913 = vadd.f32 %v7855, %v7879
      %v7914 = vadd.f32 %v7856, %v7883
      %v7915 = vadd.f32 %v7857, %v7887
      %v7916 = vadd.f32 %v7858, %v7891
      %v7917 = vadd.f32 %v7859, %v7895
      %v7918 = vadd.f32 %v7860, %v7899
      %v7919 = vadd.f32 %v7861, %v7903
      %v7920 = vadd.f32 %v7862, %v7875
      %v7921 = vadd.f32 %v7863, %v7879
      %v7922 = vadd.f32 %v7864, %v7883
      %v7923 = vadd.f32 %v7865, %v7887
      %v7924 = vadd.f32 %v7866, %v7891
      %v7925 = vadd.f32 %v7867, %v7895
      %v7926 = vadd.f32 %v7868, %v7899
      %v7927 = vadd.f32 %v7869, %v7903
      %v7928 = vpack.c.bf16 %v7912, %v7912
      %v7929 = vpack.c.bf16 %v7913, %v7913
      %v7930 = vpack.c.bf16 %v7914, %v7914
      %v7931 = vpack.c.bf16 %v7915, %v7915
      %v7932 = vpack.c.bf16 %v7916, %v7916
      %v7933 = vpack.c.bf16 %v7917, %v7917
      %v7934 = vpack.c.bf16 %v7918, %v7918
      %v7935 = vpack.c.bf16 %v7919, %v7919
      %v7936 = vld [vmem:[#allocation9] sm:$0xff]
      %v7937 = vld [vmem:[#allocation9 + $0x8] sm:$0xff]
      %v7938 = vld [vmem:[#allocation9 + $0x10] sm:$0xff]
      %v7939 = vld [vmem:[#allocation9 + $0x18] sm:$0xff]
      %v7940 = vld [vmem:[#allocation9 + $0x20] sm:$0xff]
      %v7941 = vld [vmem:[#allocation9 + $0x28] sm:$0xff]
      %v7942 = vld [vmem:[#allocation9 + $0x30] sm:$0xff]
      %v7943 = vld [vmem:[#allocation9 + $0x38] sm:$0xff]
      %v7944 = vld [vmem:[#allocation9 + $0x40] sm:$0xff]
      %v7945 = vld [vmem:[#allocation9 + $0x48] sm:$0xff]
      %v7946 = vld [vmem:[#allocation9 + $0x50] sm:$0xff]
      %v7947 = vld [vmem:[#allocation9 + $0x58] sm:$0xff]
      %v7948 = vld [vmem:[#allocation9 + $0x60] sm:$0xff]
      %v7949 = vld [vmem:[#allocation9 + $0x68] sm:$0xff]
      %v7950 = vld [vmem:[#allocation9 + $0x70] sm:$0xff]
      %v7951 = vld [vmem:[#allocation9 + $0x78] sm:$0xff]
      %v7952 = vld [vmem:[#allocation9 + $0x80] sm:$0xff]
      %v7953 = vld [vmem:[#allocation9 + $0x88] sm:$0xff]
      %v7954 = vld [vmem:[#allocation9 + $0x90] sm:$0xff]
      %v7955 = vld [vmem:[#allocation9 + $0x98] sm:$0xff]
      %v7956 = vld [vmem:[#allocation9 + $0xa0] sm:$0xff]
      %v7957 = vld [vmem:[#allocation9 + $0xa8] sm:$0xff]
      %v7958 = vld [vmem:[#allocation9 + $0xb0] sm:$0xff]
      %v7959 = vld [vmem:[#allocation9 + $0xb8] sm:$0xff]
      %v7960 = vld [vmem:[#allocation9 + $0xc0] sm:$0xff]
      %v7961 = vld [vmem:[#allocation9 + $0xc8] sm:$0xff]
      %v7962 = vld [vmem:[#allocation9 + $0xd0] sm:$0xff]
      %v7963 = vld [vmem:[#allocation9 + $0xd8] sm:$0xff]
      %v7964 = vld [vmem:[#allocation9 + $0xe0] sm:$0xff]
      %v7965 = vld [vmem:[#allocation9 + $0xe8] sm:$0xff]
      %v7966 = vld [vmem:[#allocation9 + $0xf0] sm:$0xff]
      %v7967 = vld [vmem:[#allocation9 + $0xf8] sm:$0xff]
      %v7968 = vld [vmem:[#allocation9 + $0x100] sm:$0xff]
      %v7969 = vld [vmem:[#allocation9 + $0x108] sm:$0xff]
      %v7970 = vld [vmem:[#allocation9 + $0x110] sm:$0xff]
      %v7971 = vld [vmem:[#allocation9 + $0x118] sm:$0xff]
      %v7972 = vld [vmem:[#allocation9 + $0x120] sm:$0xff]
      %v7973 = vld [vmem:[#allocation9 + $0x128] sm:$0xff]
      %v7974 = vld [vmem:[#allocation9 + $0x130] sm:$0xff]
      %v7975 = vld [vmem:[#allocation9 + $0x138] sm:$0xff]
      %v7976 = vld [vmem:[#allocation9 + $0x140] sm:$0xff]
      %v7977 = vld [vmem:[#allocation9 + $0x148] sm:$0xff]
      %v7978 = vld [vmem:[#allocation9 + $0x150] sm:$0xff]
      %v7979 = vld [vmem:[#allocation9 + $0x158] sm:$0xff]
      %v7980 = vld [vmem:[#allocation9 + $0x160] sm:$0xff]
      %v7981 = vld [vmem:[#allocation9 + $0x168] sm:$0xff]
      %v7982 = vld [vmem:[#allocation9 + $0x170] sm:$0xff]
      %v7983 = vld [vmem:[#allocation9 + $0x178] sm:$0xff]
      %v7984 = vld [vmem:[#allocation9 + $0x180] sm:$0xff]
      %v7985 = vld [vmem:[#allocation9 + $0x188] sm:$0xff]
      %v7986 = vld [vmem:[#allocation9 + $0x190] sm:$0xff]
      %v7987 = vld [vmem:[#allocation9 + $0x198] sm:$0xff]
      %v7988 = vld [vmem:[#allocation9 + $0x1a0] sm:$0xff]
      %v7989 = vld [vmem:[#allocation9 + $0x1a8] sm:$0xff]
      %v7990 = vld [vmem:[#allocation9 + $0x1b0] sm:$0xff]
      %v7991 = vld [vmem:[#allocation9 + $0x1b8] sm:$0xff]
      %v7992 = vld [vmem:[#allocation9 + $0x1c0] sm:$0xff]
      %v7993 = vld [vmem:[#allocation9 + $0x1c8] sm:$0xff]
      %v7994 = vld [vmem:[#allocation9 + $0x1d0] sm:$0xff]
      %v7995 = vld [vmem:[#allocation9 + $0x1d8] sm:$0xff]
      %v7996 = vld [vmem:[#allocation9 + $0x1e0] sm:$0xff]
      %v7997 = vld [vmem:[#allocation9 + $0x1e8] sm:$0xff]
      %v7998 = vld [vmem:[#allocation9 + $0x1f0] sm:$0xff]
      %v7999 = vld [vmem:[#allocation9 + $0x1f8] sm:$0xff]
      %v8000 = vld [vmem:[#allocation9 + $0x200] sm:$0xff]
      %v8001 = vld [vmem:[#allocation9 + $0x208] sm:$0xff]
      %v8002 = vld [vmem:[#allocation9 + $0x210] sm:$0xff]
      %v8003 = vld [vmem:[#allocation9 + $0x218] sm:$0xff]
      %v8004 = vld [vmem:[#allocation9 + $0x220] sm:$0xff]
      %v8005 = vld [vmem:[#allocation9 + $0x228] sm:$0xff]
      %v8006 = vld [vmem:[#allocation9 + $0x230] sm:$0xff]
      %v8007 = vld [vmem:[#allocation9 + $0x238] sm:$0xff]
      %v8008 = vld [vmem:[#allocation9 + $0x240] sm:$0xff]
      %v8009 = vld [vmem:[#allocation9 + $0x248] sm:$0xff]
      %v8010 = vld [vmem:[#allocation9 + $0x250] sm:$0xff]
      %v8011 = vld [vmem:[#allocation9 + $0x258] sm:$0xff]
      %v8012 = vld [vmem:[#allocation9 + $0x260] sm:$0xff]
      %v8013 = vld [vmem:[#allocation9 + $0x268] sm:$0xff]
      %v8014 = vld [vmem:[#allocation9 + $0x270] sm:$0xff]
      %v8015 = vld [vmem:[#allocation9 + $0x278] sm:$0xff]
      %v8016 = vld [vmem:[#allocation9 + $0x280] sm:$0xff]
      %v8017 = vld [vmem:[#allocation9 + $0x288] sm:$0xff]
      %v8018 = vld [vmem:[#allocation9 + $0x290] sm:$0xff]
      %v8019 = vld [vmem:[#allocation9 + $0x298] sm:$0xff]
      %v8020 = vld [vmem:[#allocation9 + $0x2a0] sm:$0xff]
      %v8021 = vld [vmem:[#allocation9 + $0x2a8] sm:$0xff]
      %v8022 = vld [vmem:[#allocation9 + $0x2b0] sm:$0xff]
      %v8023 = vld [vmem:[#allocation9 + $0x2b8] sm:$0xff]
      %v8024 = vld [vmem:[#allocation9 + $0x2c0] sm:$0xff]
      %v8025 = vld [vmem:[#allocation9 + $0x2c8] sm:$0xff]
      %v8026 = vld [vmem:[#allocation9 + $0x2d0] sm:$0xff]
      %v8027 = vld [vmem:[#allocation9 + $0x2d8] sm:$0xff]
      %v8028 = vld [vmem:[#allocation9 + $0x2e0] sm:$0xff]
      %v8029 = vld [vmem:[#allocation9 + $0x2e8] sm:$0xff]
      %v8030 = vld [vmem:[#allocation9 + $0x2f0] sm:$0xff]
      %v8031 = vld [vmem:[#allocation9 + $0x2f8] sm:$0xff]
      %v8032 = vld [vmem:[#allocation9 + $0x300] sm:$0xff]
      %v8033 = vld [vmem:[#allocation9 + $0x308] sm:$0xff]
      %v8034 = vld [vmem:[#allocation9 + $0x310] sm:$0xff]
      %v8035 = vld [vmem:[#allocation9 + $0x318] sm:$0xff]
      %v8036 = vld [vmem:[#allocation9 + $0x320] sm:$0xff]
      %v8037 = vld [vmem:[#allocation9 + $0x328] sm:$0xff]
      %v8038 = vld [vmem:[#allocation9 + $0x330] sm:$0xff]
      %v8039 = vld [vmem:[#allocation9 + $0x338] sm:$0xff]
      %v8040 = vld [vmem:[#allocation9 + $0x340] sm:$0xff]
      %v8041 = vld [vmem:[#allocation9 + $0x348] sm:$0xff]
      %v8042 = vld [vmem:[#allocation9 + $0x350] sm:$0xff]
      %v8043 = vld [vmem:[#allocation9 + $0x358] sm:$0xff]
      %v8044 = vld [vmem:[#allocation9 + $0x360] sm:$0xff]
      %v8045 = vld [vmem:[#allocation9 + $0x368] sm:$0xff]
      %v8046 = vld [vmem:[#allocation9 + $0x370] sm:$0xff]
      %v8047 = vld [vmem:[#allocation9 + $0x378] sm:$0xff]
      %v8048 = vld [vmem:[#allocation9 + $0x380] sm:$0xff]
      %v8049 = vld [vmem:[#allocation9 + $0x388] sm:$0xff]
      %v8050 = vld [vmem:[#allocation9 + $0x390] sm:$0xff]
      %v8051 = vld [vmem:[#allocation9 + $0x398] sm:$0xff]
      %v8052 = vld [vmem:[#allocation9 + $0x3a0] sm:$0xff]
      %v8053 = vld [vmem:[#allocation9 + $0x3a8] sm:$0xff]
      %v8054 = vld [vmem:[#allocation9 + $0x3b0] sm:$0xff]
      %v8055 = vld [vmem:[#allocation9 + $0x3b8] sm:$0xff]
      %v8056 = vld [vmem:[#allocation9 + $0x3c0] sm:$0xff]
      %v8057 = vld [vmem:[#allocation9 + $0x3c8] sm:$0xff]
      %v8058 = vld [vmem:[#allocation9 + $0x3d0] sm:$0xff]
      %v8059 = vld [vmem:[#allocation9 + $0x3d8] sm:$0xff]
      %v8060 = vld [vmem:[#allocation9 + $0x3e0] sm:$0xff]
      %v8061 = vld [vmem:[#allocation9 + $0x3e8] sm:$0xff]
      %v8062 = vld [vmem:[#allocation9 + $0x3f0] sm:$0xff]
      %v8063 = vld [vmem:[#allocation9 + $0x3f8] sm:$0xff]
      %v8064 = vld [vmem:[#allocation9 + $0x400] sm:$0xff]
      %v8065 = vld [vmem:[#allocation9 + $0x408] sm:$0xff]
      %v8066 = vld [vmem:[#allocation9 + $0x410] sm:$0xff]
      %v8067 = vld [vmem:[#allocation9 + $0x418] sm:$0xff]
      %v8068 = vld [vmem:[#allocation9 + $0x420] sm:$0xff]
      %v8069 = vld [vmem:[#allocation9 + $0x428] sm:$0xff]
      %v8070 = vld [vmem:[#allocation9 + $0x430] sm:$0xff]
      %v8071 = vld [vmem:[#allocation9 + $0x438] sm:$0xff]
      %v8072 = vld [vmem:[#allocation9 + $0x440] sm:$0xff]
      %v8073 = vld [vmem:[#allocation9 + $0x448] sm:$0xff]
      %v8074 = vld [vmem:[#allocation9 + $0x450] sm:$0xff]
      %v8075 = vld [vmem:[#allocation9 + $0x458] sm:$0xff]
      %v8076 = vld [vmem:[#allocation9 + $0x460] sm:$0xff]
      %v8077 = vld [vmem:[#allocation9 + $0x468] sm:$0xff]
      %v8078 = vld [vmem:[#allocation9 + $0x470] sm:$0xff]
      %v8079 = vld [vmem:[#allocation9 + $0x478] sm:$0xff]
      %v8080 = vld [vmem:[#allocation9 + $0x480] sm:$0xff]
      %v8081 = vld [vmem:[#allocation9 + $0x488] sm:$0xff]
      %v8082 = vld [vmem:[#allocation9 + $0x490] sm:$0xff]
      %v8083 = vld [vmem:[#allocation9 + $0x498] sm:$0xff]
      %v8084 = vld [vmem:[#allocation9 + $0x4a0] sm:$0xff]
      %v8085 = vld [vmem:[#allocation9 + $0x4a8] sm:$0xff]
      %v8086 = vld [vmem:[#allocation9 + $0x4b0] sm:$0xff]
      %v8087 = vld [vmem:[#allocation9 + $0x4b8] sm:$0xff]
      %v8088 = vld [vmem:[#allocation9 + $0x4c0] sm:$0xff]
      %v8089 = vld [vmem:[#allocation9 + $0x4c8] sm:$0xff]
      %v8090 = vld [vmem:[#allocation9 + $0x4d0] sm:$0xff]
      %v8091 = vld [vmem:[#allocation9 + $0x4d8] sm:$0xff]
      %v8092 = vld [vmem:[#allocation9 + $0x4e0] sm:$0xff]
      %v8093 = vld [vmem:[#allocation9 + $0x4e8] sm:$0xff]
      %v8094 = vld [vmem:[#allocation9 + $0x4f0] sm:$0xff]
      %v8095 = vld [vmem:[#allocation9 + $0x4f8] sm:$0xff]
      %v8096 = vld [vmem:[#allocation9 + $0x500] sm:$0xff]
      %v8097 = vld [vmem:[#allocation9 + $0x508] sm:$0xff]
      %v8098 = vld [vmem:[#allocation9 + $0x510] sm:$0xff]
      %v8099 = vld [vmem:[#allocation9 + $0x518] sm:$0xff]
      %v8100 = vld [vmem:[#allocation9 + $0x520] sm:$0xff]
      %v8101 = vld [vmem:[#allocation9 + $0x528] sm:$0xff]
      %v8102 = vld [vmem:[#allocation9 + $0x530] sm:$0xff]
      %v8103 = vld [vmem:[#allocation9 + $0x538] sm:$0xff]
      %v8104 = vld [vmem:[#allocation9 + $0x540] sm:$0xff]
      %v8105 = vld [vmem:[#allocation9 + $0x548] sm:$0xff]
      %v8106 = vld [vmem:[#allocation9 + $0x550] sm:$0xff]
      %v8107 = vld [vmem:[#allocation9 + $0x558] sm:$0xff]
      %v8108 = vld [vmem:[#allocation9 + $0x560] sm:$0xff]
      %v8109 = vld [vmem:[#allocation9 + $0x568] sm:$0xff]
      %v8110 = vld [vmem:[#allocation9 + $0x570] sm:$0xff]
      %v8111 = vld [vmem:[#allocation9 + $0x578] sm:$0xff]
      %v8112 = vld [vmem:[#allocation9 + $0x580] sm:$0xff]
      %v8113 = vld [vmem:[#allocation9 + $0x588] sm:$0xff]
      %v8114 = vld [vmem:[#allocation9 + $0x590] sm:$0xff]
      %v8115 = vld [vmem:[#allocation9 + $0x598] sm:$0xff]
      %v8116 = vld [vmem:[#allocation9 + $0x5a0] sm:$0xff]
      %v8117 = vld [vmem:[#allocation9 + $0x5a8] sm:$0xff]
      %v8118 = vld [vmem:[#allocation9 + $0x5b0] sm:$0xff]
      %v8119 = vld [vmem:[#allocation9 + $0x5b8] sm:$0xff]
      %v8120 = vld [vmem:[#allocation9 + $0x5c0] sm:$0xff]
      %v8121 = vld [vmem:[#allocation9 + $0x5c8] sm:$0xff]
      %v8122 = vld [vmem:[#allocation9 + $0x5d0] sm:$0xff]
      %v8123 = vld [vmem:[#allocation9 + $0x5d8] sm:$0xff]
      %v8124 = vld [vmem:[#allocation9 + $0x5e0] sm:$0xff]
      %v8125 = vld [vmem:[#allocation9 + $0x5e8] sm:$0xff]
      %v8126 = vld [vmem:[#allocation9 + $0x5f0] sm:$0xff]
      %v8127 = vld [vmem:[#allocation9 + $0x5f8] sm:$0xff]
      %v8128 = vld [vmem:[#allocation9 + $0x600] sm:$0xff]
      %v8129 = vld [vmem:[#allocation9 + $0x608] sm:$0xff]
      %v8130 = vld [vmem:[#allocation9 + $0x610] sm:$0xff]
      %v8131 = vld [vmem:[#allocation9 + $0x618] sm:$0xff]
      %v8132 = vld [vmem:[#allocation9 + $0x620] sm:$0xff]
      %v8133 = vld [vmem:[#allocation9 + $0x628] sm:$0xff]
      %v8134 = vld [vmem:[#allocation9 + $0x630] sm:$0xff]
      %v8135 = vld [vmem:[#allocation9 + $0x638] sm:$0xff]
      %v8136 = vld [vmem:[#allocation9 + $0x640] sm:$0xff]
      %v8137 = vld [vmem:[#allocation9 + $0x648] sm:$0xff]
      %v8138 = vld [vmem:[#allocation9 + $0x650] sm:$0xff]
      %v8139 = vld [vmem:[#allocation9 + $0x658] sm:$0xff]
      %v8140 = vld [vmem:[#allocation9 + $0x660] sm:$0xff]
      %v8141 = vld [vmem:[#allocation9 + $0x668] sm:$0xff]
      %v8142 = vld [vmem:[#allocation9 + $0x670] sm:$0xff]
      %v8143 = vld [vmem:[#allocation9 + $0x678] sm:$0xff]
      %v8144 = vld [vmem:[#allocation9 + $0x680] sm:$0xff]
      %v8145 = vld [vmem:[#allocation9 + $0x688] sm:$0xff]
      %v8146 = vld [vmem:[#allocation9 + $0x690] sm:$0xff]
      %v8147 = vld [vmem:[#allocation9 + $0x698] sm:$0xff]
      %v8148 = vld [vmem:[#allocation9 + $0x6a0] sm:$0xff]
      %v8149 = vld [vmem:[#allocation9 + $0x6a8] sm:$0xff]
      %v8150 = vld [vmem:[#allocation9 + $0x6b0] sm:$0xff]
      %v8151 = vld [vmem:[#allocation9 + $0x6b8] sm:$0xff]
      %v8152 = vld [vmem:[#allocation9 + $0x6c0] sm:$0xff]
      %v8153 = vld [vmem:[#allocation9 + $0x6c8] sm:$0xff]
      %v8154 = vld [vmem:[#allocation9 + $0x6d0] sm:$0xff]
      %v8155 = vld [vmem:[#allocation9 + $0x6d8] sm:$0xff]
      %v8156 = vld [vmem:[#allocation9 + $0x6e0] sm:$0xff]
      %v8157 = vld [vmem:[#allocation9 + $0x6e8] sm:$0xff]
      %v8158 = vld [vmem:[#allocation9 + $0x6f0] sm:$0xff]
      %v8159 = vld [vmem:[#allocation9 + $0x6f8] sm:$0xff]
      %v8160 = vld [vmem:[#allocation9 + $0x700] sm:$0xff]
      %v8161 = vld [vmem:[#allocation9 + $0x708] sm:$0xff]
      %v8162 = vld [vmem:[#allocation9 + $0x710] sm:$0xff]
      %v8163 = vld [vmem:[#allocation9 + $0x718] sm:$0xff]
      %v8164 = vld [vmem:[#allocation9 + $0x720] sm:$0xff]
      %v8165 = vld [vmem:[#allocation9 + $0x728] sm:$0xff]
      %v8166 = vld [vmem:[#allocation9 + $0x730] sm:$0xff]
      %v8167 = vld [vmem:[#allocation9 + $0x738] sm:$0xff]
      %v8168 = vld [vmem:[#allocation9 + $0x740] sm:$0xff]
      %v8169 = vld [vmem:[#allocation9 + $0x748] sm:$0xff]
      %v8170 = vld [vmem:[#allocation9 + $0x750] sm:$0xff]
      %v8171 = vld [vmem:[#allocation9 + $0x758] sm:$0xff]
      %v8172 = vld [vmem:[#allocation9 + $0x760] sm:$0xff]
      %v8173 = vld [vmem:[#allocation9 + $0x768] sm:$0xff]
      %v8174 = vld [vmem:[#allocation9 + $0x770] sm:$0xff]
      %v8175 = vld [vmem:[#allocation9 + $0x778] sm:$0xff]
      %v8176 = vld [vmem:[#allocation9 + $0x780] sm:$0xff]
      %v8177 = vld [vmem:[#allocation9 + $0x788] sm:$0xff]
      %v8178 = vld [vmem:[#allocation9 + $0x790] sm:$0xff]
      %v8179 = vld [vmem:[#allocation9 + $0x798] sm:$0xff]
      %v8180 = vld [vmem:[#allocation9 + $0x7a0] sm:$0xff]
      %v8181 = vld [vmem:[#allocation9 + $0x7a8] sm:$0xff]
      %v8182 = vld [vmem:[#allocation9 + $0x7b0] sm:$0xff]
      %v8183 = vld [vmem:[#allocation9 + $0x7b8] sm:$0xff]
      %v8184 = vld [vmem:[#allocation9 + $0x7c0] sm:$0xff]
      %v8185 = vld [vmem:[#allocation9 + $0x7c8] sm:$0xff]
      %v8186 = vld [vmem:[#allocation9 + $0x7d0] sm:$0xff]
      %v8187 = vld [vmem:[#allocation9 + $0x7d8] sm:$0xff]
      %v8188 = vld [vmem:[#allocation9 + $0x7e0] sm:$0xff]
      %v8189 = vld [vmem:[#allocation9 + $0x7e8] sm:$0xff]
      %v8190 = vld [vmem:[#allocation9 + $0x7f0] sm:$0xff]
      %v8191 = vld [vmem:[#allocation9 + $0x7f8] sm:$0xff]
      %v8192 = vld [vmem:[#allocation10] sm:$0xf]
      %v8194 = vlaneseq
      %v8195 = vshrl.u32 %v8194, 7
      %v8196 = vsub.s32 0, %v8195
      %v8197 = vrot.slane %v8192, %v8196
      %v8198 = vlaneseq
      %v8199 = vshrl.u32 %v8198, 7
      %v8200 = vsub.s32 1, %v8199
      %v8201 = vrot.slane %v8192, %v8200
      %v8202 = vlaneseq
      %v8203 = vshrl.u32 %v8202, 7
      %v8204 = vsub.s32 2, %v8203
      %v8205 = vrot.slane %v8192, %v8204
      %v8206 = vlaneseq
      %v8207 = vshrl.u32 %v8206, 7
      %v8208 = vsub.s32 3, %v8207
      %v8209 = vrot.slane %v8192, %v8208
      %v8470 = vunpack.c.l.b16 %v7936
      %v8471 = vunpack.c.h.b16 %v7936
      %v8472 = vunpack.c.l.b16 %v7937
      %v8473 = vunpack.c.h.b16 %v7937
      %v8474 = vunpack.c.l.b16 %v7938
      %v8475 = vunpack.c.h.b16 %v7938
      %v8476 = vunpack.c.l.b16 %v7939
      %v8477 = vunpack.c.h.b16 %v7939
      %v8478 = vunpack.c.l.b16 %v7940
      %v8479 = vunpack.c.h.b16 %v7940
      %v8480 = vunpack.c.l.b16 %v7941
      %v8481 = vunpack.c.h.b16 %v7941
      %v8482 = vunpack.c.l.b16 %v7942
      %v8483 = vunpack.c.h.b16 %v7942
      %v8484 = vunpack.c.l.b16 %v7943
      %v8485 = vunpack.c.h.b16 %v7943
      %v8486 = vunpack.c.l.b16 %v7944
      %v8487 = vunpack.c.h.b16 %v7944
      %v8488 = vunpack.c.l.b16 %v7945
      %v8489 = vunpack.c.h.b16 %v7945
      %v8490 = vunpack.c.l.b16 %v7946
      %v8491 = vunpack.c.h.b16 %v7946
      %v8492 = vunpack.c.l.b16 %v7947
      %v8493 = vunpack.c.h.b16 %v7947
      %v8494 = vunpack.c.l.b16 %v7948
      %v8495 = vunpack.c.h.b16 %v7948
      %v8496 = vunpack.c.l.b16 %v7949
      %v8497 = vunpack.c.h.b16 %v7949
      %v8498 = vunpack.c.l.b16 %v7950
      %v8499 = vunpack.c.h.b16 %v7950
      %v8500 = vunpack.c.l.b16 %v7951
      %v8501 = vunpack.c.h.b16 %v7951
      %v8502 = vunpack.c.l.b16 %v7952
      %v8503 = vunpack.c.h.b16 %v7952
      %v8504 = vunpack.c.l.b16 %v7953
      %v8505 = vunpack.c.h.b16 %v7953
      %v8506 = vunpack.c.l.b16 %v7954
      %v8507 = vunpack.c.h.b16 %v7954
      %v8508 = vunpack.c.l.b16 %v7955
      %v8509 = vunpack.c.h.b16 %v7955
      %v8510 = vunpack.c.l.b16 %v7956
      %v8511 = vunpack.c.h.b16 %v7956
      %v8512 = vunpack.c.l.b16 %v7957
      %v8513 = vunpack.c.h.b16 %v7957
      %v8514 = vunpack.c.l.b16 %v7958
      %v8515 = vunpack.c.h.b16 %v7958
      %v8516 = vunpack.c.l.b16 %v7959
      %v8517 = vunpack.c.h.b16 %v7959
      %v8518 = vunpack.c.l.b16 %v7960
      %v8519 = vunpack.c.h.b16 %v7960
      %v8520 = vunpack.c.l.b16 %v7961
      %v8521 = vunpack.c.h.b16 %v7961
      %v8522 = vunpack.c.l.b16 %v7962
      %v8523 = vunpack.c.h.b16 %v7962
      %v8524 = vunpack.c.l.b16 %v7963
      %v8525 = vunpack.c.h.b16 %v7963
      %v8526 = vunpack.c.l.b16 %v7964
      %v8527 = vunpack.c.h.b16 %v7964
      %v8528 = vunpack.c.l.b16 %v7965
      %v8529 = vunpack.c.h.b16 %v7965
      %v8530 = vunpack.c.l.b16 %v7966
      %v8531 = vunpack.c.h.b16 %v7966
      %v8532 = vunpack.c.l.b16 %v7967
      %v8533 = vunpack.c.h.b16 %v7967
      %v8534 = vunpack.c.l.b16 %v7968
      %v8535 = vunpack.c.h.b16 %v7968
      %v8536 = vunpack.c.l.b16 %v7969
      %v8537 = vunpack.c.h.b16 %v7969
      %v8538 = vunpack.c.l.b16 %v7970
      %v8539 = vunpack.c.h.b16 %v7970
      %v8540 = vunpack.c.l.b16 %v7971
      %v8541 = vunpack.c.h.b16 %v7971
      %v8542 = vunpack.c.l.b16 %v7972
      %v8543 = vunpack.c.h.b16 %v7972
      %v8544 = vunpack.c.l.b16 %v7973
      %v8545 = vunpack.c.h.b16 %v7973
      %v8546 = vunpack.c.l.b16 %v7974
      %v8547 = vunpack.c.h.b16 %v7974
      %v8548 = vunpack.c.l.b16 %v7975
      %v8549 = vunpack.c.h.b16 %v7975
      %v8550 = vunpack.c.l.b16 %v7976
      %v8551 = vunpack.c.h.b16 %v7976
      %v8552 = vunpack.c.l.b16 %v7977
      %v8553 = vunpack.c.h.b16 %v7977
      %v8554 = vunpack.c.l.b16 %v7978
      %v8555 = vunpack.c.h.b16 %v7978
      %v8556 = vunpack.c.l.b16 %v7979
      %v8557 = vunpack.c.h.b16 %v7979
      %v8558 = vunpack.c.l.b16 %v7980
      %v8559 = vunpack.c.h.b16 %v7980
      %v8560 = vunpack.c.l.b16 %v7981
      %v8561 = vunpack.c.h.b16 %v7981
      %v8562 = vunpack.c.l.b16 %v7982
      %v8563 = vunpack.c.h.b16 %v7982
      %v8564 = vunpack.c.l.b16 %v7983
      %v8565 = vunpack.c.h.b16 %v7983
      %v8566 = vunpack.c.l.b16 %v7984
      %v8567 = vunpack.c.h.b16 %v7984
      %v8568 = vunpack.c.l.b16 %v7985
      %v8569 = vunpack.c.h.b16 %v7985
      %v8570 = vunpack.c.l.b16 %v7986
      %v8571 = vunpack.c.h.b16 %v7986
      %v8572 = vunpack.c.l.b16 %v7987
      %v8573 = vunpack.c.h.b16 %v7987
      %v8574 = vunpack.c.l.b16 %v7988
      %v8575 = vunpack.c.h.b16 %v7988
      %v8576 = vunpack.c.l.b16 %v7989
      %v8577 = vunpack.c.h.b16 %v7989
      %v8578 = vunpack.c.l.b16 %v7990
      %v8579 = vunpack.c.h.b16 %v7990
      %v8580 = vunpack.c.l.b16 %v7991
      %v8581 = vunpack.c.h.b16 %v7991
      %v8582 = vunpack.c.l.b16 %v7992
      %v8583 = vunpack.c.h.b16 %v7992
      %v8584 = vunpack.c.l.b16 %v7993
      %v8585 = vunpack.c.h.b16 %v7993
      %v8586 = vunpack.c.l.b16 %v7994
      %v8587 = vunpack.c.h.b16 %v7994
      %v8588 = vunpack.c.l.b16 %v7995
      %v8589 = vunpack.c.h.b16 %v7995
      %v8590 = vunpack.c.l.b16 %v7996
      %v8591 = vunpack.c.h.b16 %v7996
      %v8592 = vunpack.c.l.b16 %v7997
      %v8593 = vunpack.c.h.b16 %v7997
      %v8594 = vunpack.c.l.b16 %v7998
      %v8595 = vunpack.c.h.b16 %v7998
      %v8596 = vunpack.c.l.b16 %v7999
      %v8597 = vunpack.c.h.b16 %v7999
      %v8598 = vunpack.c.l.b16 %v8000
      %v8599 = vunpack.c.h.b16 %v8000
      %v8600 = vunpack.c.l.b16 %v8001
      %v8601 = vunpack.c.h.b16 %v8001
      %v8602 = vunpack.c.l.b16 %v8002
      %v8603 = vunpack.c.h.b16 %v8002
      %v8604 = vunpack.c.l.b16 %v8003
      %v8605 = vunpack.c.h.b16 %v8003
      %v8606 = vunpack.c.l.b16 %v8004
      %v8607 = vunpack.c.h.b16 %v8004
      %v8608 = vunpack.c.l.b16 %v8005
      %v8609 = vunpack.c.h.b16 %v8005
      %v8610 = vunpack.c.l.b16 %v8006
      %v8611 = vunpack.c.h.b16 %v8006
      %v8612 = vunpack.c.l.b16 %v8007
      %v8613 = vunpack.c.h.b16 %v8007
      %v8614 = vunpack.c.l.b16 %v8008
      %v8615 = vunpack.c.h.b16 %v8008
      %v8616 = vunpack.c.l.b16 %v8009
      %v8617 = vunpack.c.h.b16 %v8009
      %v8618 = vunpack.c.l.b16 %v8010
      %v8619 = vunpack.c.h.b16 %v8010
      %v8620 = vunpack.c.l.b16 %v8011
      %v8621 = vunpack.c.h.b16 %v8011
      %v8622 = vunpack.c.l.b16 %v8012
      %v8623 = vunpack.c.h.b16 %v8012
      %v8624 = vunpack.c.l.b16 %v8013
      %v8625 = vunpack.c.h.b16 %v8013
      %v8626 = vunpack.c.l.b16 %v8014
      %v8627 = vunpack.c.h.b16 %v8014
      %v8628 = vunpack.c.l.b16 %v8015
      %v8629 = vunpack.c.h.b16 %v8015
      %v8630 = vunpack.c.l.b16 %v8016
      %v8631 = vunpack.c.h.b16 %v8016
      %v8632 = vunpack.c.l.b16 %v8017
      %v8633 = vunpack.c.h.b16 %v8017
      %v8634 = vunpack.c.l.b16 %v8018
      %v8635 = vunpack.c.h.b16 %v8018
      %v8636 = vunpack.c.l.b16 %v8019
      %v8637 = vunpack.c.h.b16 %v8019
      %v8638 = vunpack.c.l.b16 %v8020
      %v8639 = vunpack.c.h.b16 %v8020
      %v8640 = vunpack.c.l.b16 %v8021
      %v8641 = vunpack.c.h.b16 %v8021
      %v8642 = vunpack.c.l.b16 %v8022
      %v8643 = vunpack.c.h.b16 %v8022
      %v8644 = vunpack.c.l.b16 %v8023
      %v8645 = vunpack.c.h.b16 %v8023
      %v8646 = vunpack.c.l.b16 %v8024
      %v8647 = vunpack.c.h.b16 %v8024
      %v8648 = vunpack.c.l.b16 %v8025
      %v8649 = vunpack.c.h.b16 %v8025
      %v8650 = vunpack.c.l.b16 %v8026
      %v8651 = vunpack.c.h.b16 %v8026
      %v8652 = vunpack.c.l.b16 %v8027
      %v8653 = vunpack.c.h.b16 %v8027
      %v8654 = vunpack.c.l.b16 %v8028
      %v8655 = vunpack.c.h.b16 %v8028
      %v8656 = vunpack.c.l.b16 %v8029
      %v8657 = vunpack.c.h.b16 %v8029
      %v8658 = vunpack.c.l.b16 %v8030
      %v8659 = vunpack.c.h.b16 %v8030
      %v8660 = vunpack.c.l.b16 %v8031
      %v8661 = vunpack.c.h.b16 %v8031
      %v8662 = vunpack.c.l.b16 %v8032
      %v8663 = vunpack.c.h.b16 %v8032
      %v8664 = vunpack.c.l.b16 %v8033
      %v8665 = vunpack.c.h.b16 %v8033
      %v8666 = vunpack.c.l.b16 %v8034
      %v8667 = vunpack.c.h.b16 %v8034
      %v8668 = vunpack.c.l.b16 %v8035
      %v8669 = vunpack.c.h.b16 %v8035
      %v8670 = vunpack.c.l.b16 %v8036
      %v8671 = vunpack.c.h.b16 %v8036
      %v8672 = vunpack.c.l.b16 %v8037
      %v8673 = vunpack.c.h.b16 %v8037
      %v8674 = vunpack.c.l.b16 %v8038
      %v8675 = vunpack.c.h.b16 %v8038
      %v8676 = vunpack.c.l.b16 %v8039
      %v8677 = vunpack.c.h.b16 %v8039
      %v8678 = vunpack.c.l.b16 %v8040
      %v8679 = vunpack.c.h.b16 %v8040
      %v8680 = vunpack.c.l.b16 %v8041
      %v8681 = vunpack.c.h.b16 %v8041
      %v8682 = vunpack.c.l.b16 %v8042
      %v8683 = vunpack.c.h.b16 %v8042
      %v8684 = vunpack.c.l.b16 %v8043
      %v8685 = vunpack.c.h.b16 %v8043
      %v8686 = vunpack.c.l.b16 %v8044
      %v8687 = vunpack.c.h.b16 %v8044
      %v8688 = vunpack.c.l.b16 %v8045
      %v8689 = vunpack.c.h.b16 %v8045
      %v8690 = vunpack.c.l.b16 %v8046
      %v8691 = vunpack.c.h.b16 %v8046
      %v8692 = vunpack.c.l.b16 %v8047
      %v8693 = vunpack.c.h.b16 %v8047
      %v8694 = vunpack.c.l.b16 %v8048
      %v8695 = vunpack.c.h.b16 %v8048
      %v8696 = vunpack.c.l.b16 %v8049
      %v8697 = vunpack.c.h.b16 %v8049
      %v8698 = vunpack.c.l.b16 %v8050
      %v8699 = vunpack.c.h.b16 %v8050
      %v8700 = vunpack.c.l.b16 %v8051
      %v8701 = vunpack.c.h.b16 %v8051
      %v8702 = vunpack.c.l.b16 %v8052
      %v8703 = vunpack.c.h.b16 %v8052
      %v8704 = vunpack.c.l.b16 %v8053
      %v8705 = vunpack.c.h.b16 %v8053
      %v8706 = vunpack.c.l.b16 %v8054
      %v8707 = vunpack.c.h.b16 %v8054
      %v8708 = vunpack.c.l.b16 %v8055
      %v8709 = vunpack.c.h.b16 %v8055
      %v8710 = vunpack.c.l.b16 %v8056
      %v8711 = vunpack.c.h.b16 %v8056
      %v8712 = vunpack.c.l.b16 %v8057
      %v8713 = vunpack.c.h.b16 %v8057
      %v8714 = vunpack.c.l.b16 %v8058
      %v8715 = vunpack.c.h.b16 %v8058
      %v8716 = vunpack.c.l.b16 %v8059
      %v8717 = vunpack.c.h.b16 %v8059
      %v8718 = vunpack.c.l.b16 %v8060
      %v8719 = vunpack.c.h.b16 %v8060
      %v8720 = vunpack.c.l.b16 %v8061
      %v8721 = vunpack.c.h.b16 %v8061
      %v8722 = vunpack.c.l.b16 %v8062
      %v8723 = vunpack.c.h.b16 %v8062
      %v8724 = vunpack.c.l.b16 %v8063
      %v8725 = vunpack.c.h.b16 %v8063
      %v8726 = vunpack.c.l.b16 %v8064
      %v8727 = vunpack.c.h.b16 %v8064
      %v8728 = vunpack.c.l.b16 %v8065
      %v8729 = vunpack.c.h.b16 %v8065
      %v8730 = vunpack.c.l.b16 %v8066
      %v8731 = vunpack.c.h.b16 %v8066
      %v8732 = vunpack.c.l.b16 %v8067
      %v8733 = vunpack.c.h.b16 %v8067
      %v8734 = vunpack.c.l.b16 %v8068
      %v8735 = vunpack.c.h.b16 %v8068
      %v8736 = vunpack.c.l.b16 %v8069
      %v8737 = vunpack.c.h.b16 %v8069
      %v8738 = vunpack.c.l.b16 %v8070
      %v8739 = vunpack.c.h.b16 %v8070
      %v8740 = vunpack.c.l.b16 %v8071
      %v8741 = vunpack.c.h.b16 %v8071
      %v8742 = vunpack.c.l.b16 %v8072
      %v8743 = vunpack.c.h.b16 %v8072
      %v8744 = vunpack.c.l.b16 %v8073
      %v8745 = vunpack.c.h.b16 %v8073
      %v8746 = vunpack.c.l.b16 %v8074
      %v8747 = vunpack.c.h.b16 %v8074
      %v8748 = vunpack.c.l.b16 %v8075
      %v8749 = vunpack.c.h.b16 %v8075
      %v8750 = vunpack.c.l.b16 %v8076
      %v8751 = vunpack.c.h.b16 %v8076
      %v8752 = vunpack.c.l.b16 %v8077
      %v8753 = vunpack.c.h.b16 %v8077
      %v8754 = vunpack.c.l.b16 %v8078
      %v8755 = vunpack.c.h.b16 %v8078
      %v8756 = vunpack.c.l.b16 %v8079
      %v8757 = vunpack.c.h.b16 %v8079
      %v8758 = vunpack.c.l.b16 %v8080
      %v8759 = vunpack.c.h.b16 %v8080
      %v8760 = vunpack.c.l.b16 %v8081
      %v8761 = vunpack.c.h.b16 %v8081
      %v8762 = vunpack.c.l.b16 %v8082
      %v8763 = vunpack.c.h.b16 %v8082
      %v8764 = vunpack.c.l.b16 %v8083
      %v8765 = vunpack.c.h.b16 %v8083
      %v8766 = vunpack.c.l.b16 %v8084
      %v8767 = vunpack.c.h.b16 %v8084
      %v8768 = vunpack.c.l.b16 %v8085
      %v8769 = vunpack.c.h.b16 %v8085
      %v8770 = vunpack.c.l.b16 %v8086
      %v8771 = vunpack.c.h.b16 %v8086
      %v8772 = vunpack.c.l.b16 %v8087
      %v8773 = vunpack.c.h.b16 %v8087
      %v8774 = vunpack.c.l.b16 %v8088
      %v8775 = vunpack.c.h.b16 %v8088
      %v8776 = vunpack.c.l.b16 %v8089
      %v8777 = vunpack.c.h.b16 %v8089
      %v8778 = vunpack.c.l.b16 %v8090
      %v8779 = vunpack.c.h.b16 %v8090
      %v8780 = vunpack.c.l.b16 %v8091
      %v8781 = vunpack.c.h.b16 %v8091
      %v8782 = vunpack.c.l.b16 %v8092
      %v8783 = vunpack.c.h.b16 %v8092
      %v8784 = vunpack.c.l.b16 %v8093
      %v8785 = vunpack.c.h.b16 %v8093
      %v8786 = vunpack.c.l.b16 %v8094
      %v8787 = vunpack.c.h.b16 %v8094
      %v8788 = vunpack.c.l.b16 %v8095
      %v8789 = vunpack.c.h.b16 %v8095
      %v8790 = vunpack.c.l.b16 %v8096
      %v8791 = vunpack.c.h.b16 %v8096
      %v8792 = vunpack.c.l.b16 %v8097
      %v8793 = vunpack.c.h.b16 %v8097
      %v8794 = vunpack.c.l.b16 %v8098
      %v8795 = vunpack.c.h.b16 %v8098
      %v8796 = vunpack.c.l.b16 %v8099
      %v8797 = vunpack.c.h.b16 %v8099
      %v8798 = vunpack.c.l.b16 %v8100
      %v8799 = vunpack.c.h.b16 %v8100
      %v8800 = vunpack.c.l.b16 %v8101
      %v8801 = vunpack.c.h.b16 %v8101
      %v8802 = vunpack.c.l.b16 %v8102
      %v8803 = vunpack.c.h.b16 %v8102
      %v8804 = vunpack.c.l.b16 %v8103
      %v8805 = vunpack.c.h.b16 %v8103
      %v8806 = vunpack.c.l.b16 %v8104
      %v8807 = vunpack.c.h.b16 %v8104
      %v8808 = vunpack.c.l.b16 %v8105
      %v8809 = vunpack.c.h.b16 %v8105
      %v8810 = vunpack.c.l.b16 %v8106
      %v8811 = vunpack.c.h.b16 %v8106
      %v8812 = vunpack.c.l.b16 %v8107
      %v8813 = vunpack.c.h.b16 %v8107
      %v8814 = vunpack.c.l.b16 %v8108
      %v8815 = vunpack.c.h.b16 %v8108
      %v8816 = vunpack.c.l.b16 %v8109
      %v8817 = vunpack.c.h.b16 %v8109
      %v8818 = vunpack.c.l.b16 %v8110
      %v8819 = vunpack.c.h.b16 %v8110
      %v8820 = vunpack.c.l.b16 %v8111
      %v8821 = vunpack.c.h.b16 %v8111
      %v8822 = vunpack.c.l.b16 %v8112
      %v8823 = vunpack.c.h.b16 %v8112
      %v8824 = vunpack.c.l.b16 %v8113
      %v8825 = vunpack.c.h.b16 %v8113
      %v8826 = vunpack.c.l.b16 %v8114
      %v8827 = vunpack.c.h.b16 %v8114
      %v8828 = vunpack.c.l.b16 %v8115
      %v8829 = vunpack.c.h.b16 %v8115
      %v8830 = vunpack.c.l.b16 %v8116
      %v8831 = vunpack.c.h.b16 %v8116
      %v8832 = vunpack.c.l.b16 %v8117
      %v8833 = vunpack.c.h.b16 %v8117
      %v8834 = vunpack.c.l.b16 %v8118
      %v8835 = vunpack.c.h.b16 %v8118
      %v8836 = vunpack.c.l.b16 %v8119
      %v8837 = vunpack.c.h.b16 %v8119
      %v8838 = vunpack.c.l.b16 %v8120
      %v8839 = vunpack.c.h.b16 %v8120
      %v8840 = vunpack.c.l.b16 %v8121
      %v8841 = vunpack.c.h.b16 %v8121
      %v8842 = vunpack.c.l.b16 %v8122
      %v8843 = vunpack.c.h.b16 %v8122
      %v8844 = vunpack.c.l.b16 %v8123
      %v8845 = vunpack.c.h.b16 %v8123
      %v8846 = vunpack.c.l.b16 %v8124
      %v8847 = vunpack.c.h.b16 %v8124
      %v8848 = vunpack.c.l.b16 %v8125
      %v8849 = vunpack.c.h.b16 %v8125
      %v8850 = vunpack.c.l.b16 %v8126
      %v8851 = vunpack.c.h.b16 %v8126
      %v8852 = vunpack.c.l.b16 %v8127
      %v8853 = vunpack.c.h.b16 %v8127
      %v8854 = vunpack.c.l.b16 %v8128
      %v8855 = vunpack.c.h.b16 %v8128
      %v8856 = vunpack.c.l.b16 %v8129
      %v8857 = vunpack.c.h.b16 %v8129
      %v8858 = vunpack.c.l.b16 %v8130
      %v8859 = vunpack.c.h.b16 %v8130
      %v8860 = vunpack.c.l.b16 %v8131
      %v8861 = vunpack.c.h.b16 %v8131
      %v8862 = vunpack.c.l.b16 %v8132
      %v8863 = vunpack.c.h.b16 %v8132
      %v8864 = vunpack.c.l.b16 %v8133
      %v8865 = vunpack.c.h.b16 %v8133
      %v8866 = vunpack.c.l.b16 %v8134
      %v8867 = vunpack.c.h.b16 %v8134
      %v8868 = vunpack.c.l.b16 %v8135
      %v8869 = vunpack.c.h.b16 %v8135
      %v8870 = vunpack.c.l.b16 %v8136
      %v8871 = vunpack.c.h.b16 %v8136
      %v8872 = vunpack.c.l.b16 %v8137
      %v8873 = vunpack.c.h.b16 %v8137
      %v8874 = vunpack.c.l.b16 %v8138
      %v8875 = vunpack.c.h.b16 %v8138
      %v8876 = vunpack.c.l.b16 %v8139
      %v8877 = vunpack.c.h.b16 %v8139
      %v8878 = vunpack.c.l.b16 %v8140
      %v8879 = vunpack.c.h.b16 %v8140
      %v8880 = vunpack.c.l.b16 %v8141
      %v8881 = vunpack.c.h.b16 %v8141
      %v8882 = vunpack.c.l.b16 %v8142
      %v8883 = vunpack.c.h.b16 %v8142
      %v8884 = vunpack.c.l.b16 %v8143
      %v8885 = vunpack.c.h.b16 %v8143
      %v8886 = vunpack.c.l.b16 %v8144
      %v8887 = vunpack.c.h.b16 %v8144
      %v8888 = vunpack.c.l.b16 %v8145
      %v8889 = vunpack.c.h.b16 %v8145
      %v8890 = vunpack.c.l.b16 %v8146
      %v8891 = vunpack.c.h.b16 %v8146
      %v8892 = vunpack.c.l.b16 %v8147
      %v8893 = vunpack.c.h.b16 %v8147
      %v8894 = vunpack.c.l.b16 %v8148
      %v8895 = vunpack.c.h.b16 %v8148
      %v8896 = vunpack.c.l.b16 %v8149
      %v8897 = vunpack.c.h.b16 %v8149
      %v8898 = vunpack.c.l.b16 %v8150
      %v8899 = vunpack.c.h.b16 %v8150
      %v8900 = vunpack.c.l.b16 %v8151
      %v8901 = vunpack.c.h.b16 %v8151
      %v8902 = vunpack.c.l.b16 %v8152
      %v8903 = vunpack.c.h.b16 %v8152
      %v8904 = vunpack.c.l.b16 %v8153
      %v8905 = vunpack.c.h.b16 %v8153
      %v8906 = vunpack.c.l.b16 %v8154
      %v8907 = vunpack.c.h.b16 %v8154
      %v8908 = vunpack.c.l.b16 %v8155
      %v8909 = vunpack.c.h.b16 %v8155
      %v8910 = vunpack.c.l.b16 %v8156
      %v8911 = vunpack.c.h.b16 %v8156
      %v8912 = vunpack.c.l.b16 %v8157
      %v8913 = vunpack.c.h.b16 %v8157
      %v8914 = vunpack.c.l.b16 %v8158
      %v8915 = vunpack.c.h.b16 %v8158
      %v8916 = vunpack.c.l.b16 %v8159
      %v8917 = vunpack.c.h.b16 %v8159
      %v8918 = vunpack.c.l.b16 %v8160
      %v8919 = vunpack.c.h.b16 %v8160
      %v8920 = vunpack.c.l.b16 %v8161
      %v8921 = vunpack.c.h.b16 %v8161
      %v8922 = vunpack.c.l.b16 %v8162
      %v8923 = vunpack.c.h.b16 %v8162
      %v8924 = vunpack.c.l.b16 %v8163
      %v8925 = vunpack.c.h.b16 %v8163
      %v8926 = vunpack.c.l.b16 %v8164
      %v8927 = vunpack.c.h.b16 %v8164
      %v8928 = vunpack.c.l.b16 %v8165
      %v8929 = vunpack.c.h.b16 %v8165
      %v8930 = vunpack.c.l.b16 %v8166
      %v8931 = vunpack.c.h.b16 %v8166
      %v8932 = vunpack.c.l.b16 %v8167
      %v8933 = vunpack.c.h.b16 %v8167
      %v8934 = vunpack.c.l.b16 %v8168
      %v8935 = vunpack.c.h.b16 %v8168
      %v8936 = vunpack.c.l.b16 %v8169
      %v8937 = vunpack.c.h.b16 %v8169
      %v8938 = vunpack.c.l.b16 %v8170
      %v8939 = vunpack.c.h.b16 %v8170
      %v8940 = vunpack.c.l.b16 %v8171
      %v8941 = vunpack.c.h.b16 %v8171
      %v8942 = vunpack.c.l.b16 %v8172
      %v8943 = vunpack.c.h.b16 %v8172
      %v8944 = vunpack.c.l.b16 %v8173
      %v8945 = vunpack.c.h.b16 %v8173
      %v8946 = vunpack.c.l.b16 %v8174
      %v8947 = vunpack.c.h.b16 %v8174
      %v8948 = vunpack.c.l.b16 %v8175
      %v8949 = vunpack.c.h.b16 %v8175
      %v8950 = vunpack.c.l.b16 %v8176
      %v8951 = vunpack.c.h.b16 %v8176
      %v8952 = vunpack.c.l.b16 %v8177
      %v8953 = vunpack.c.h.b16 %v8177
      %v8954 = vunpack.c.l.b16 %v8178
      %v8955 = vunpack.c.h.b16 %v8178
      %v8956 = vunpack.c.l.b16 %v8179
      %v8957 = vunpack.c.h.b16 %v8179
      %v8958 = vunpack.c.l.b16 %v8180
      %v8959 = vunpack.c.h.b16 %v8180
      %v8960 = vunpack.c.l.b16 %v8181
      %v8961 = vunpack.c.h.b16 %v8181
      %v8962 = vunpack.c.l.b16 %v8182
      %v8963 = vunpack.c.h.b16 %v8182
      %v8964 = vunpack.c.l.b16 %v8183
      %v8965 = vunpack.c.h.b16 %v8183
      %v8966 = vunpack.c.l.b16 %v8184
      %v8967 = vunpack.c.h.b16 %v8184
      %v8968 = vunpack.c.l.b16 %v8185
      %v8969 = vunpack.c.h.b16 %v8185
      %v8970 = vunpack.c.l.b16 %v8186
      %v8971 = vunpack.c.h.b16 %v8186
      %v8972 = vunpack.c.l.b16 %v8187
      %v8973 = vunpack.c.h.b16 %v8187
      %v8974 = vunpack.c.l.b16 %v8188
      %v8975 = vunpack.c.h.b16 %v8188
      %v8976 = vunpack.c.l.b16 %v8189
      %v8977 = vunpack.c.h.b16 %v8189
      %v8978 = vunpack.c.l.b16 %v8190
      %v8979 = vunpack.c.h.b16 %v8190
      %v8980 = vunpack.c.l.b16 %v8191
      %v8981 = vunpack.c.h.b16 %v8191
      %v8982 = vpack.c.b16 %v8474, %v8470
      %v8983 = vpack.c.b16 %v8475, %v8471
      %v8984 = vpack.c.b16 %v8476, %v8472
      %v8985 = vpack.c.b16 %v8477, %v8473
      %v8986 = vpack.c.b16 %v8482, %v8478
      %v8987 = vpack.c.b16 %v8483, %v8479
      %v8988 = vpack.c.b16 %v8484, %v8480
      %v8989 = vpack.c.b16 %v8485, %v8481
      %v8990 = vpack.c.b16 %v8490, %v8486
      %v8991 = vpack.c.b16 %v8491, %v8487
      %v8992 = vpack.c.b16 %v8492, %v8488
      %v8993 = vpack.c.b16 %v8493, %v8489
      %v8994 = vpack.c.b16 %v8498, %v8494
      %v8995 = vpack.c.b16 %v8499, %v8495
      %v8996 = vpack.c.b16 %v8500, %v8496
      %v8997 = vpack.c.b16 %v8501, %v8497
      %v8998 = vpack.c.b16 %v8506, %v8502
      %v8999 = vpack.c.b16 %v8507, %v8503
      %v9000 = vpack.c.b16 %v8508, %v8504
      %v9001 = vpack.c.b16 %v8509, %v8505
      %v9002 = vpack.c.b16 %v8514, %v8510
      %v9003 = vpack.c.b16 %v8515, %v8511
      %v9004 = vpack.c.b16 %v8516, %v8512
      %v9005 = vpack.c.b16 %v8517, %v8513
      %v9006 = vpack.c.b16 %v8522, %v8518
      %v9007 = vpack.c.b16 %v8523, %v8519
      %v9008 = vpack.c.b16 %v8524, %v8520
      %v9009 = vpack.c.b16 %v8525, %v8521
      %v9010 = vpack.c.b16 %v8530, %v8526
      %v9011 = vpack.c.b16 %v8531, %v8527
      %v9012 = vpack.c.b16 %v8532, %v8528
      %v9013 = vpack.c.b16 %v8533, %v8529
      %v9014 = vpack.c.b16 %v8538, %v8534
      %v9015 = vpack.c.b16 %v8539, %v8535
      %v9016 = vpack.c.b16 %v8540, %v8536
      %v9017 = vpack.c.b16 %v8541, %v8537
      %v9018 = vpack.c.b16 %v8546, %v8542
      %v9019 = vpack.c.b16 %v8547, %v8543
      %v9020 = vpack.c.b16 %v8548, %v8544
      %v9021 = vpack.c.b16 %v8549, %v8545
      %v9022 = vpack.c.b16 %v8554, %v8550
      %v9023 = vpack.c.b16 %v8555, %v8551
      %v9024 = vpack.c.b16 %v8556, %v8552
      %v9025 = vpack.c.b16 %v8557, %v8553
      %v9026 = vpack.c.b16 %v8562, %v8558
      %v9027 = vpack.c.b16 %v8563, %v8559
      %v9028 = vpack.c.b16 %v8564, %v8560
      %v9029 = vpack.c.b16 %v8565, %v8561
      %v9030 = vpack.c.b16 %v8570, %v8566
      %v9031 = vpack.c.b16 %v8571, %v8567
      %v9032 = vpack.c.b16 %v8572, %v8568
      %v9033 = vpack.c.b16 %v8573, %v8569
      %v9034 = vpack.c.b16 %v8578, %v8574
      %v9035 = vpack.c.b16 %v8579, %v8575
      %v9036 = vpack.c.b16 %v8580, %v8576
      %v9037 = vpack.c.b16 %v8581, %v8577
      %v9038 = vpack.c.b16 %v8586, %v8582
      %v9039 = vpack.c.b16 %v8587, %v8583
      %v9040 = vpack.c.b16 %v8588, %v8584
      %v9041 = vpack.c.b16 %v8589, %v8585
      %v9042 = vpack.c.b16 %v8594, %v8590
      %v9043 = vpack.c.b16 %v8595, %v8591
      %v9044 = vpack.c.b16 %v8596, %v8592
      %v9045 = vpack.c.b16 %v8597, %v8593
      %v9046 = vpack.c.b16 %v8602, %v8598
      %v9047 = vpack.c.b16 %v8603, %v8599
      %v9048 = vpack.c.b16 %v8604, %v8600
      %v9049 = vpack.c.b16 %v8605, %v8601
      %v9050 = vpack.c.b16 %v8610, %v8606
      %v9051 = vpack.c.b16 %v8611, %v8607
      %v9052 = vpack.c.b16 %v8612, %v8608
      %v9053 = vpack.c.b16 %v8613, %v8609
      %v9054 = vpack.c.b16 %v8618, %v8614
      %v9055 = vpack.c.b16 %v8619, %v8615
      %v9056 = vpack.c.b16 %v8620, %v8616
      %v9057 = vpack.c.b16 %v8621, %v8617
      %v9058 = vpack.c.b16 %v8626, %v8622
      %v9059 = vpack.c.b16 %v8627, %v8623
      %v9060 = vpack.c.b16 %v8628, %v8624
      %v9061 = vpack.c.b16 %v8629, %v8625
      %v9062 = vpack.c.b16 %v8634, %v8630
      %v9063 = vpack.c.b16 %v8635, %v8631
      %v9064 = vpack.c.b16 %v8636, %v8632
      %v9065 = vpack.c.b16 %v8637, %v8633
      %v9066 = vpack.c.b16 %v8642, %v8638
      %v9067 = vpack.c.b16 %v8643, %v8639
      %v9068 = vpack.c.b16 %v8644, %v8640
      %v9069 = vpack.c.b16 %v8645, %v8641
      %v9070 = vpack.c.b16 %v8650, %v8646
      %v9071 = vpack.c.b16 %v8651, %v8647
      %v9072 = vpack.c.b16 %v8652, %v8648
      %v9073 = vpack.c.b16 %v8653, %v8649
      %v9074 = vpack.c.b16 %v8658, %v8654
      %v9075 = vpack.c.b16 %v8659, %v8655
      %v9076 = vpack.c.b16 %v8660, %v8656
      %v9077 = vpack.c.b16 %v8661, %v8657
      %v9078 = vpack.c.b16 %v8666, %v8662
      %v9079 = vpack.c.b16 %v8667, %v8663
      %v9080 = vpack.c.b16 %v8668, %v8664
      %v9081 = vpack.c.b16 %v8669, %v8665
      %v9082 = vpack.c.b16 %v8674, %v8670
      %v9083 = vpack.c.b16 %v8675, %v8671
      %v9084 = vpack.c.b16 %v8676, %v8672
      %v9085 = vpack.c.b16 %v8677, %v8673
      %v9086 = vpack.c.b16 %v8682, %v8678
      %v9087 = vpack.c.b16 %v8683, %v8679
      %v9088 = vpack.c.b16 %v8684, %v8680
      %v9089 = vpack.c.b16 %v8685, %v8681
      %v9090 = vpack.c.b16 %v8690, %v8686
      %v9091 = vpack.c.b16 %v8691, %v8687
      %v9092 = vpack.c.b16 %v8692, %v8688
      %v9093 = vpack.c.b16 %v8693, %v8689
      %v9094 = vpack.c.b16 %v8698, %v8694
      %v9095 = vpack.c.b16 %v8699, %v8695
      %v9096 = vpack.c.b16 %v8700, %v8696
      %v9097 = vpack.c.b16 %v8701, %v8697
      %v9098 = vpack.c.b16 %v8706, %v8702
      %v9099 = vpack.c.b16 %v8707, %v8703
      %v9100 = vpack.c.b16 %v8708, %v8704
      %v9101 = vpack.c.b16 %v8709, %v8705
      %v9102 = vpack.c.b16 %v8714, %v8710
      %v9103 = vpack.c.b16 %v8715, %v8711
      %v9104 = vpack.c.b16 %v8716, %v8712
      %v9105 = vpack.c.b16 %v8717, %v8713
      %v9106 = vpack.c.b16 %v8722, %v8718
      %v9107 = vpack.c.b16 %v8723, %v8719
      %v9108 = vpack.c.b16 %v8724, %v8720
      %v9109 = vpack.c.b16 %v8725, %v8721
      %v9110 = vpack.c.b16 %v8730, %v8726
      %v9111 = vpack.c.b16 %v8731, %v8727
      %v9112 = vpack.c.b16 %v8732, %v8728
      %v9113 = vpack.c.b16 %v8733, %v8729
      %v9114 = vpack.c.b16 %v8738, %v8734
      %v9115 = vpack.c.b16 %v8739, %v8735
      %v9116 = vpack.c.b16 %v8740, %v8736
      %v9117 = vpack.c.b16 %v8741, %v8737
      %v9118 = vpack.c.b16 %v8746, %v8742
      %v9119 = vpack.c.b16 %v8747, %v8743
      %v9120 = vpack.c.b16 %v8748, %v8744
      %v9121 = vpack.c.b16 %v8749, %v8745
      %v9122 = vpack.c.b16 %v8754, %v8750
      %v9123 = vpack.c.b16 %v8755, %v8751
      %v9124 = vpack.c.b16 %v8756, %v8752
      %v9125 = vpack.c.b16 %v8757, %v8753
      %v9126 = vpack.c.b16 %v8762, %v8758
      %v9127 = vpack.c.b16 %v8763, %v8759
      %v9128 = vpack.c.b16 %v8764, %v8760
      %v9129 = vpack.c.b16 %v8765, %v8761
      %v9130 = vpack.c.b16 %v8770, %v8766
      %v9131 = vpack.c.b16 %v8771, %v8767
      %v9132 = vpack.c.b16 %v8772, %v8768
      %v9133 = vpack.c.b16 %v8773, %v8769
      %v9134 = vpack.c.b16 %v8778, %v8774
      %v9135 = vpack.c.b16 %v8779, %v8775
      %v9136 = vpack.c.b16 %v8780, %v8776
      %v9137 = vpack.c.b16 %v8781, %v8777
      %v9138 = vpack.c.b16 %v8786, %v8782
      %v9139 = vpack.c.b16 %v8787, %v8783
      %v9140 = vpack.c.b16 %v8788, %v8784
      %v9141 = vpack.c.b16 %v8789, %v8785
      %v9142 = vpack.c.b16 %v8794, %v8790
      %v9143 = vpack.c.b16 %v8795, %v8791
      %v9144 = vpack.c.b16 %v8796, %v8792
      %v9145 = vpack.c.b16 %v8797, %v8793
      %v9146 = vpack.c.b16 %v8802, %v8798
      %v9147 = vpack.c.b16 %v8803, %v8799
      %v9148 = vpack.c.b16 %v8804, %v8800
      %v9149 = vpack.c.b16 %v8805, %v8801
      %v9150 = vpack.c.b16 %v8810, %v8806
      %v9151 = vpack.c.b16 %v8811, %v8807
      %v9152 = vpack.c.b16 %v8812, %v8808
      %v9153 = vpack.c.b16 %v8813, %v8809
      %v9154 = vpack.c.b16 %v8818, %v8814
      %v9155 = vpack.c.b16 %v8819, %v8815
      %v9156 = vpack.c.b16 %v8820, %v8816
      %v9157 = vpack.c.b16 %v8821, %v8817
      %v9158 = vpack.c.b16 %v8826, %v8822
      %v9159 = vpack.c.b16 %v8827, %v8823
      %v9160 = vpack.c.b16 %v8828, %v8824
      %v9161 = vpack.c.b16 %v8829, %v8825
      %v9162 = vpack.c.b16 %v8834, %v8830
      %v9163 = vpack.c.b16 %v8835, %v8831
      %v9164 = vpack.c.b16 %v8836, %v8832
      %v9165 = vpack.c.b16 %v8837, %v8833
      %v9166 = vpack.c.b16 %v8842, %v8838
      %v9167 = vpack.c.b16 %v8843, %v8839
      %v9168 = vpack.c.b16 %v8844, %v8840
      %v9169 = vpack.c.b16 %v8845, %v8841
      %v9170 = vpack.c.b16 %v8850, %v8846
      %v9171 = vpack.c.b16 %v8851, %v8847
      %v9172 = vpack.c.b16 %v8852, %v8848
      %v9173 = vpack.c.b16 %v8853, %v8849
      %v9174 = vpack.c.b16 %v8858, %v8854
      %v9175 = vpack.c.b16 %v8859, %v8855
      %v9176 = vpack.c.b16 %v8860, %v8856
      %v9177 = vpack.c.b16 %v8861, %v8857
      %v9178 = vpack.c.b16 %v8866, %v8862
      %v9179 = vpack.c.b16 %v8867, %v8863
      %v9180 = vpack.c.b16 %v8868, %v8864
      %v9181 = vpack.c.b16 %v8869, %v8865
      %v9182 = vpack.c.b16 %v8874, %v8870
      %v9183 = vpack.c.b16 %v8875, %v8871
      %v9184 = vpack.c.b16 %v8876, %v8872
      %v9185 = vpack.c.b16 %v8877, %v8873
      %v9186 = vpack.c.b16 %v8882, %v8878
      %v9187 = vpack.c.b16 %v8883, %v8879
      %v9188 = vpack.c.b16 %v8884, %v8880
      %v9189 = vpack.c.b16 %v8885, %v8881
      %v9190 = vpack.c.b16 %v8890, %v8886
      %v9191 = vpack.c.b16 %v8891, %v8887
      %v9192 = vpack.c.b16 %v8892, %v8888
      %v9193 = vpack.c.b16 %v8893, %v8889
      %v9194 = vpack.c.b16 %v8898, %v8894
      %v9195 = vpack.c.b16 %v8899, %v8895
      %v9196 = vpack.c.b16 %v8900, %v8896
      %v9197 = vpack.c.b16 %v8901, %v8897
      %v9198 = vpack.c.b16 %v8906, %v8902
      %v9199 = vpack.c.b16 %v8907, %v8903
      %v9200 = vpack.c.b16 %v8908, %v8904
      %v9201 = vpack.c.b16 %v8909, %v8905
      %v9202 = vpack.c.b16 %v8914, %v8910
      %v9203 = vpack.c.b16 %v8915, %v8911
      %v9204 = vpack.c.b16 %v8916, %v8912
      %v9205 = vpack.c.b16 %v8917, %v8913
      %v9206 = vpack.c.b16 %v8922, %v8918
      %v9207 = vpack.c.b16 %v8923, %v8919
      %v9208 = vpack.c.b16 %v8924, %v8920
      %v9209 = vpack.c.b16 %v8925, %v8921
      %v9210 = vpack.c.b16 %v8930, %v8926
      %v9211 = vpack.c.b16 %v8931, %v8927
      %v9212 = vpack.c.b16 %v8932, %v8928
      %v9213 = vpack.c.b16 %v8933, %v8929
      %v9214 = vpack.c.b16 %v8938, %v8934
      %v9215 = vpack.c.b16 %v8939, %v8935
      %v9216 = vpack.c.b16 %v8940, %v8936
      %v9217 = vpack.c.b16 %v8941, %v8937
      %v9218 = vpack.c.b16 %v8946, %v8942
      %v9219 = vpack.c.b16 %v8947, %v8943
      %v9220 = vpack.c.b16 %v8948, %v8944
      %v9221 = vpack.c.b16 %v8949, %v8945
      %v9222 = vpack.c.b16 %v8954, %v8950
      %v9223 = vpack.c.b16 %v8955, %v8951
      %v9224 = vpack.c.b16 %v8956, %v8952
      %v9225 = vpack.c.b16 %v8957, %v8953
      %v9226 = vpack.c.b16 %v8962, %v8958
      %v9227 = vpack.c.b16 %v8963, %v8959
      %v9228 = vpack.c.b16 %v8964, %v8960
      %v9229 = vpack.c.b16 %v8965, %v8961
      %v9230 = vpack.c.b16 %v8970, %v8966
      %v9231 = vpack.c.b16 %v8971, %v8967
      %v9232 = vpack.c.b16 %v8972, %v8968
      %v9233 = vpack.c.b16 %v8973, %v8969
      %v9234 = vpack.c.b16 %v8978, %v8974
      %v9235 = vpack.c.b16 %v8979, %v8975
      %v9236 = vpack.c.b16 %v8980, %v8976
      %v9237 = vpack.c.b16 %v8981, %v8977
      %9494 = vmatprep.subr.bf16.mxu0 %v8983
      %9495 = vmatpush1.bf16.msra.mxu0 %v8982
      %9496 = vmatprep.subr.bf16.mxu0 %v8987
      %9497 = vmatpush1.bf16.msra.mxu0 %v8986
      %9498 = vmatprep.subr.bf16.mxu0 %v8991
      %9499 = vmatpush1.bf16.msra.mxu0 %v8990
      %9500 = vmatprep.subr.bf16.mxu0 %v8995
      %9501 = vmatpush1.bf16.msra.mxu0 %v8994
      %9502 = vmatprep.subr.bf16.mxu0 %v8999
      %9503 = vmatpush1.bf16.msra.mxu0 %v8998
      %9504 = vmatprep.subr.bf16.mxu0 %v9003
      %9505 = vmatpush1.bf16.msra.mxu0 %v9002
      %9506 = vmatprep.subr.bf16.mxu0 %v9007
      %9507 = vmatpush1.bf16.msra.mxu0 %v9006
      %9508 = vmatprep.subr.bf16.mxu0 %v9011
      %9509 = vmatpush1.bf16.msra.mxu0 %v9010
      %9510 = vmatprep.subr.bf16.mxu0 %v9015
      %9511 = vmatpush1.bf16.msra.mxu0 %v9014
      %9512 = vmatprep.subr.bf16.mxu0 %v9019
      %9513 = vmatpush1.bf16.msra.mxu0 %v9018
      %9514 = vmatprep.subr.bf16.mxu0 %v9023
      %9515 = vmatpush1.bf16.msra.mxu0 %v9022
      %9516 = vmatprep.subr.bf16.mxu0 %v9027
      %9517 = vmatpush1.bf16.msra.mxu0 %v9026
      %9518 = vmatprep.subr.bf16.mxu0 %v9031
      %9519 = vmatpush1.bf16.msra.mxu0 %v9030
      %9520 = vmatprep.subr.bf16.mxu0 %v9035
      %9521 = vmatpush1.bf16.msra.mxu0 %v9034
      %9522 = vmatprep.subr.bf16.mxu0 %v9039
      %9523 = vmatpush1.bf16.msra.mxu0 %v9038
      %9524 = vmatprep.subr.bf16.mxu0 %v9043
      %9525 = vmatpush1.bf16.msra.mxu0 %v9042
      %9526 = vmatprep.mubr.bf16.mxu0 %v7929
      %9527 = vmatmul.mubr.bf16.gmra.mrb[0].mxu0 %v7928
      %v9528 = vpop.f32.mrb[0].mxu0
      %v9529 = vadd.f32 %v8197, %v9528
      %v9530 = vpop.f32.mrb[0].mxu0
      %v9531 = vadd.f32 %v8201, %v9530
      %v9532 = vpop.f32.mrb[0].mxu0
      %v9533 = vpop.f32.mrb[0].mxu0
      %9534 = vdwg.mxu0
      %9535 = vmatprep.subr.bf16.mxu0 %v9047
      %9536 = vmatpush1.bf16.msra.mxu0 %v9046
      %9537 = vmatprep.subr.bf16.mxu0 %v9051
      %9538 = vmatpush1.bf16.msra.mxu0 %v9050
      %9539 = vmatprep.subr.bf16.mxu0 %v9055
      %9540 = vmatpush1.bf16.msra.mxu0 %v9054
      %9541 = vmatprep.subr.bf16.mxu0 %v9059
      %9542 = vmatpush1.bf16.msra.mxu0 %v9058
      %9543 = vmatprep.subr.bf16.mxu0 %v9063
      %9544 = vmatpush1.bf16.msra.mxu0 %v9062
      %9545 = vmatprep.subr.bf16.mxu0 %v9067
      %9546 = vmatpush1.bf16.msra.mxu0 %v9066
      %9547 = vmatprep.subr.bf16.mxu0 %v9071
      %9548 = vmatpush1.bf16.msra.mxu0 %v9070
      %9549 = vmatprep.subr.bf16.mxu0 %v9075
      %9550 = vmatpush1.bf16.msra.mxu0 %v9074
      %9551 = vmatprep.subr.bf16.mxu0 %v9079
      %9552 = vmatpush1.bf16.msra.mxu0 %v9078
      %9553 = vmatprep.subr.bf16.mxu0 %v9083
      %9554 = vmatpush1.bf16.msra.mxu0 %v9082
      %9555 = vmatprep.subr.bf16.mxu0 %v9087
      %9556 = vmatpush1.bf16.msra.mxu0 %v9086
      %9557 = vmatprep.subr.bf16.mxu0 %v9091
      %9558 = vmatpush1.bf16.msra.mxu0 %v9090
      %9559 = vmatprep.subr.bf16.mxu0 %v9095
      %9560 = vmatpush1.bf16.msra.mxu0 %v9094
      %9561 = vmatprep.subr.bf16.mxu0 %v9099
      %9562 = vmatpush1.bf16.msra.mxu0 %v9098
      %9563 = vmatprep.subr.bf16.mxu0 %v9103
      %9564 = vmatpush1.bf16.msra.mxu0 %v9102
      %9565 = vmatprep.subr.bf16.mxu0 %v9107
      %9566 = vmatpush1.bf16.msra.mxu0 %v9106
      %9567 = vmatprep.mubr.bf16.mxu0 %v7931
      %9568 = vmatmul.mubr.bf16.gmra.mrb[0].mxu0 %v7930
      %v9569 = vpop.f32.mrb[0].mxu0
      %v9570 = vadd.f32 %v9529, %v9569
      %v9571 = vpop.f32.mrb[0].mxu0
      %v9572 = vadd.f32 %v9531, %v9571
      %v9573 = vpop.f32.mrb[0].mxu0
      %v9574 = vpop.f32.mrb[0].mxu0
      %9575 = vdwg.mxu0
      %9576 = vmatprep.subr.bf16.mxu0 %v9111
      %9577 = vmatpush1.bf16.msra.mxu0 %v9110
      %9578 = vmatprep.subr.bf16.mxu0 %v9115
      %9579 = vmatpush1.bf16.msra.mxu0 %v9114
      %9580 = vmatprep.subr.bf16.mxu0 %v9119
      %9581 = vmatpush1.bf16.msra.mxu0 %v9118
      %9582 = vmatprep.subr.bf16.mxu0 %v9123
      %9583 = vmatpush1.bf16.msra.mxu0 %v9122
      %9584 = vmatprep.subr.bf16.mxu0 %v9127
      %9585 = vmatpush1.bf16.msra.mxu0 %v9126
      %9586 = vmatprep.subr.bf16.mxu0 %v9131
      %9587 = vmatpush1.bf16.msra.mxu0 %v9130
      %9588 = vmatprep.subr.bf16.mxu0 %v9135
      %9589 = vmatpush1.bf16.msra.mxu0 %v9134
      %9590 = vmatprep.subr.bf16.mxu0 %v9139
      %9591 = vmatpush1.bf16.msra.mxu0 %v9138
      %9592 = vmatprep.subr.bf16.mxu0 %v9143
      %9593 = vmatpush1.bf16.msra.mxu0 %v9142
      %9594 = vmatprep.subr.bf16.mxu0 %v9147
      %9595 = vmatpush1.bf16.msra.mxu0 %v9146
      %9596 = vmatprep.subr.bf16.mxu0 %v9151
      %9597 = vmatpush1.bf16.msra.mxu0 %v9150
      %9598 = vmatprep.subr.bf16.mxu0 %v9155
      %9599 = vmatpush1.bf16.msra.mxu0 %v9154
      %9600 = vmatprep.subr.bf16.mxu0 %v9159
      %9601 = vmatpush1.bf16.msra.mxu0 %v9158
      %9602 = vmatprep.subr.bf16.mxu0 %v9163
      %9603 = vmatpush1.bf16.msra.mxu0 %v9162
      %9604 = vmatprep.subr.bf16.mxu0 %v9167
      %9605 = vmatpush1.bf16.msra.mxu0 %v9166
      %9606 = vmatprep.subr.bf16.mxu0 %v9171
      %9607 = vmatpush1.bf16.msra.mxu0 %v9170
      %9608 = vmatprep.mubr.bf16.mxu0 %v7933
      %9609 = vmatmul.mubr.bf16.gmra.mrb[0].mxu0 %v7932
      %v9610 = vpop.f32.mrb[0].mxu0
      %v9611 = vadd.f32 %v9570, %v9610
      %v9612 = vpop.f32.mrb[0].mxu0
      %v9613 = vadd.f32 %v9572, %v9612
      %v9614 = vpop.f32.mrb[0].mxu0
      %v9615 = vpop.f32.mrb[0].mxu0
      %9616 = vdwg.mxu0
      %9617 = vmatprep.subr.bf16.mxu0 %v9175
      %9618 = vmatpush1.bf16.msra.mxu0 %v9174
      %9619 = vmatprep.subr.bf16.mxu0 %v9179
      %9620 = vmatpush1.bf16.msra.mxu0 %v9178
      %9621 = vmatprep.subr.bf16.mxu0 %v9183
      %9622 = vmatpush1.bf16.msra.mxu0 %v9182
      %9623 = vmatprep.subr.bf16.mxu0 %v9187
      %9624 = vmatpush1.bf16.msra.mxu0 %v9186
      %9625 = vmatprep.subr.bf16.mxu0 %v9191
      %9626 = vmatpush1.bf16.msra.mxu0 %v9190
      %9627 = vmatprep.subr.bf16.mxu0 %v9195
      %9628 = vmatpush1.bf16.msra.mxu0 %v9194
      %9629 = vmatprep.subr.bf16.mxu0 %v9199
      %9630 = vmatpush1.bf16.msra.mxu0 %v9198
      %9631 = vmatprep.subr.bf16.mxu0 %v9203
      %9632 = vmatpush1.bf16.msra.mxu0 %v9202
      %9633 = vmatprep.subr.bf16.mxu0 %v9207
      %9634 = vmatpush1.bf16.msra.mxu0 %v9206
      %9635 = vmatprep.subr.bf16.mxu0 %v9211
      %9636 = vmatpush1.bf16.msra.mxu0 %v9210
      %9637 = vmatprep.subr.bf16.mxu0 %v9215
      %9638 = vmatpush1.bf16.msra.mxu0 %v9214
      %9639 = vmatprep.subr.bf16.mxu0 %v9219
      %9640 = vmatpush1.bf16.msra.mxu0 %v9218
      %9641 = vmatprep.subr.bf16.mxu0 %v9223
      %9642 = vmatpush1.bf16.msra.mxu0 %v9222
      %9643 = vmatprep.subr.bf16.mxu0 %v9227
      %9644 = vmatpush1.bf16.msra.mxu0 %v9226
      %9645 = vmatprep.subr.bf16.mxu0 %v9231
      %9646 = vmatpush1.bf16.msra.mxu0 %v9230
      %9647 = vmatprep.subr.bf16.mxu0 %v9235
      %9648 = vmatpush1.bf16.msra.mxu0 %v9234
      %9649 = vmatprep.mubr.bf16.mxu0 %v7935
      %9650 = vmatmul.mubr.bf16.gmra.mrb[0].mxu0 %v7934
      %v9651 = vpop.f32.mrb[0].mxu0
      %v9652 = vadd.f32 %v9611, %v9651
      %v9653 = vpop.f32.mrb[0].mxu0
      %v9654 = vadd.f32 %v9613, %v9653
      %v9655 = vpop.f32.mrb[0].mxu0
      %v9656 = vpop.f32.mrb[0].mxu0
      %9657 = vdwg.mxu0
      %9658 = vmatprep.subr.bf16.mxu0 %v8985
      %9659 = vmatpush1.bf16.msra.mxu0 %v8984
      %9660 = vmatprep.subr.bf16.mxu0 %v8989
      %9661 = vmatpush1.bf16.msra.mxu0 %v8988
      %9662 = vmatprep.subr.bf16.mxu0 %v8993
      %9663 = vmatpush1.bf16.msra.mxu0 %v8992
      %9664 = vmatprep.subr.bf16.mxu0 %v8997
      %9665 = vmatpush1.bf16.msra.mxu0 %v8996
      %9666 = vmatprep.subr.bf16.mxu0 %v9001
      %9667 = vmatpush1.bf16.msra.mxu0 %v9000
      %9668 = vmatprep.subr.bf16.mxu0 %v9005
      %9669 = vmatpush1.bf16.msra.mxu0 %v9004
      %9670 = vmatprep.subr.bf16.mxu0 %v9009
      %9671 = vmatpush1.bf16.msra.mxu0 %v9008
      %9672 = vmatprep.subr.bf16.mxu0 %v9013
      %9673 = vmatpush1.bf16.msra.mxu0 %v9012
      %9674 = vmatprep.subr.bf16.mxu0 %v9017
      %9675 = vmatpush1.bf16.msra.mxu0 %v9016
      %9676 = vmatprep.subr.bf16.mxu0 %v9021
      %9677 = vmatpush1.bf16.msra.mxu0 %v9020
      %9678 = vmatprep.subr.bf16.mxu0 %v9025
      %9679 = vmatpush1.bf16.msra.mxu0 %v9024
      %9680 = vmatprep.subr.bf16.mxu0 %v9029
      %9681 = vmatpush1.bf16.msra.mxu0 %v9028
      %9682 = vmatprep.subr.bf16.mxu0 %v9033
      %9683 = vmatpush1.bf16.msra.mxu0 %v9032
      %9684 = vmatprep.subr.bf16.mxu0 %v9037
      %9685 = vmatpush1.bf16.msra.mxu0 %v9036
      %9686 = vmatprep.subr.bf16.mxu0 %v9041
      %9687 = vmatpush1.bf16.msra.mxu0 %v9040
      %9688 = vmatprep.subr.bf16.mxu0 %v9045
      %9689 = vmatpush1.bf16.msra.mxu0 %v9044
      %9690 = vmatprep.mubr.bf16.mxu0 %v7929
      %9691 = vmatmul.mubr.bf16.gmra.mrb[0].mxu0 %v7928
      %v9692 = vpop.f32.mrb[0].mxu0
      %v9693 = vadd.f32 %v8205, %v9692
      %v9694 = vpop.f32.mrb[0].mxu0
      %v9695 = vadd.f32 %v8209, %v9694
      %v9696 = vpop.f32.mrb[0].mxu0
      %v9697 = vpop.f32.mrb[0].mxu0
      %9698 = vdwg.mxu0
      %9699 = vmatprep.subr.bf16.mxu0 %v9049
      %9700 = vmatpush1.bf16.msra.mxu0 %v9048
      %9701 = vmatprep.subr.bf16.mxu0 %v9053
      %9702 = vmatpush1.bf16.msra.mxu0 %v9052
      %9703 = vmatprep.subr.bf16.mxu0 %v9057
      %9704 = vmatpush1.bf16.msra.mxu0 %v9056
      %9705 = vmatprep.subr.bf16.mxu0 %v9061
      %9706 = vmatpush1.bf16.msra.mxu0 %v9060
      %9707 = vmatprep.subr.bf16.mxu0 %v9065
      %9708 = vmatpush1.bf16.msra.mxu0 %v9064
      %9709 = vmatprep.subr.bf16.mxu0 %v9069
      %9710 = vmatpush1.bf16.msra.mxu0 %v9068
      %9711 = vmatprep.subr.bf16.mxu0 %v9073
      %9712 = vmatpush1.bf16.msra.mxu0 %v9072
      %9713 = vmatprep.subr.bf16.mxu0 %v9077
      %9714 = vmatpush1.bf16.msra.mxu0 %v9076
      %9715 = vmatprep.subr.bf16.mxu0 %v9081
      %9716 = vmatpush1.bf16.msra.mxu0 %v9080
      %9717 = vmatprep.subr.bf16.mxu0 %v9085
      %9718 = vmatpush1.bf16.msra.mxu0 %v9084
      %9719 = vmatprep.subr.bf16.mxu0 %v9089
      %9720 = vmatpush1.bf16.msra.mxu0 %v9088
      %9721 = vmatprep.subr.bf16.mxu0 %v9093
      %9722 = vmatpush1.bf16.msra.mxu0 %v9092
      %9723 = vmatprep.subr.bf16.mxu0 %v9097
      %9724 = vmatpush1.bf16.msra.mxu0 %v9096
      %9725 = vmatprep.subr.bf16.mxu0 %v9101
      %9726 = vmatpush1.bf16.msra.mxu0 %v9100
      %9727 = vmatprep.subr.bf16.mxu0 %v9105
      %9728 = vmatpush1.bf16.msra.mxu0 %v9104
      %9729 = vmatprep.subr.bf16.mxu0 %v9109
      %9730 = vmatpush1.bf16.msra.mxu0 %v9108
      %9731 = vmatprep.mubr.bf16.mxu0 %v7931
      %9732 = vmatmul.mubr.bf16.gmra.mrb[0].mxu0 %v7930
      %v9733 = vpop.f32.mrb[0].mxu0
      %v9734 = vadd.f32 %v9693, %v9733
      %v9735 = vpop.f32.mrb[0].mxu0
      %v9736 = vadd.f32 %v9695, %v9735
      %v9737 = vpop.f32.mrb[0].mxu0
      %v9738 = vpop.f32.mrb[0].mxu0
      %9739 = vdwg.mxu0
      %9740 = vmatprep.subr.bf16.mxu0 %v9113
      %9741 = vmatpush1.bf16.msra.mxu0 %v9112
      %9742 = vmatprep.subr.bf16.mxu0 %v9117
      %9743 = vmatpush1.bf16.msra.mxu0 %v9116
      %9744 = vmatprep.subr.bf16.mxu0 %v9121
      %9745 = vmatpush1.bf16.msra.mxu0 %v9120
      %9746 = vmatprep.subr.bf16.mxu0 %v9125
      %9747 = vmatpush1.bf16.msra.mxu0 %v9124
      %9748 = vmatprep.subr.bf16.mxu0 %v9129
      %9749 = vmatpush1.bf16.msra.mxu0 %v9128
      %9750 = vmatprep.subr.bf16.mxu0 %v9133
      %9751 = vmatpush1.bf16.msra.mxu0 %v9132
      %9752 = vmatprep.subr.bf16.mxu0 %v9137
      %9753 = vmatpush1.bf16.msra.mxu0 %v9136
      %9754 = vmatprep.subr.bf16.mxu0 %v9141
      %9755 = vmatpush1.bf16.msra.mxu0 %v9140
      %9756 = vmatprep.subr.bf16.mxu0 %v9145
      %9757 = vmatpush1.bf16.msra.mxu0 %v9144
      %9758 = vmatprep.subr.bf16.mxu0 %v9149
      %9759 = vmatpush1.bf16.msra.mxu0 %v9148
      %9760 = vmatprep.subr.bf16.mxu0 %v9153
      %9761 = vmatpush1.bf16.msra.mxu0 %v9152
      %9762 = vmatprep.subr.bf16.mxu0 %v9157
      %9763 = vmatpush1.bf16.msra.mxu0 %v9156
      %9764 = vmatprep.subr.bf16.mxu0 %v9161
      %9765 = vmatpush1.bf16.msra.mxu0 %v9160
      %9766 = vmatprep.subr.bf16.mxu0 %v9165
      %9767 = vmatpush1.bf16.msra.mxu0 %v9164
      %9768 = vmatprep.subr.bf16.mxu0 %v9169
      %9769 = vmatpush1.bf16.msra.mxu0 %v9168
      %9770 = vmatprep.subr.bf16.mxu0 %v9173
      %9771 = vmatpush1.bf16.msra.mxu0 %v9172
      %9772 = vmatprep.mubr.bf16.mxu0 %v7933
      %9773 = vmatmul.mubr.bf16.gmra.mrb[0].mxu0 %v7932
      %v9774 = vpop.f32.mrb[0].mxu0
      %v9775 = vadd.f32 %v9734, %v9774
      %v9776 = vpop.f32.mrb[0].mxu0
      %v9777 = vadd.f32 %v9736, %v9776
      %v9778 = vpop.f32.mrb[0].mxu0
      %v9779 = vpop.f32.mrb[0].mxu0
      %9780 = vdwg.mxu0
      %9781 = vmatprep.subr.bf16.mxu0 %v9177
      %9782 = vmatpush1.bf16.msra.mxu0 %v9176
      %9783 = vmatprep.subr.bf16.mxu0 %v9181
      %9784 = vmatpush1.bf16.msra.mxu0 %v9180
      %9785 = vmatprep.subr.bf16.mxu0 %v9185
      %9786 = vmatpush1.bf16.msra.mxu0 %v9184
      %9787 = vmatprep.subr.bf16.mxu0 %v9189
      %9788 = vmatpush1.bf16.msra.mxu0 %v9188
      %9789 = vmatprep.subr.bf16.mxu0 %v9193
      %9790 = vmatpush1.bf16.msra.mxu0 %v9192
      %9791 = vmatprep.subr.bf16.mxu0 %v9197
      %9792 = vmatpush1.bf16.msra.mxu0 %v9196
      %9793 = vmatprep.subr.bf16.mxu0 %v9201
      %9794 = vmatpush1.bf16.msra.mxu0 %v9200
      %9795 = vmatprep.subr.bf16.mxu0 %v9205
      %9796 = vmatpush1.bf16.msra.mxu0 %v9204
      %9797 = vmatprep.subr.bf16.mxu0 %v9209
      %9798 = vmatpush1.bf16.msra.mxu0 %v9208
      %9799 = vmatprep.subr.bf16.mxu0 %v9213
      %9800 = vmatpush1.bf16.msra.mxu0 %v9212
      %9801 = vmatprep.subr.bf16.mxu0 %v9217
      %9802 = vmatpush1.bf16.msra.mxu0 %v9216
      %9803 = vmatprep.subr.bf16.mxu0 %v9221
      %9804 = vmatpush1.bf16.msra.mxu0 %v9220
      %9805 = vmatprep.subr.bf16.mxu0 %v9225
      %9806 = vmatpush1.bf16.msra.mxu0 %v9224
      %9807 = vmatprep.subr.bf16.mxu0 %v9229
      %9808 = vmatpush1.bf16.msra.mxu0 %v9228
      %9809 = vmatprep.subr.bf16.mxu0 %v9233
      %9810 = vmatpush1.bf16.msra.mxu0 %v9232
      %9811 = vmatprep.subr.bf16.mxu0 %v9237
      %9812 = vmatpush1.bf16.msra.mxu0 %v9236
      %9813 = vmatprep.mubr.bf16.mxu0 %v7935
      %9814 = vmatmul.mubr.bf16.gmra.mrb[0].mxu0 %v7934
      %v9815 = vpop.f32.mrb[0].mxu0
      %v9816 = vadd.f32 %v9775, %v9815
      %v9817 = vpop.f32.mrb[0].mxu0
      %v9818 = vadd.f32 %v9777, %v9817
      %v9819 = vpop.f32.mrb[0].mxu0
      %v9820 = vpop.f32.mrb[0].mxu0
      %9821 = vdwg.mxu0
      %v9822 = vmax.f32 %v9652, 0.0
      %v9823 = vmax.f32 %v9654, 0.0
      %v9824 = vmax.f32 %v9816, 0.0
      %v9825 = vmax.f32 %v9818, 0.0
      %v9826 = vpack.c.bf16 %v9822, %v9822
      %v9827 = vpack.c.bf16 %v9823, %v9823
      %v9828 = vpack.c.bf16 %v9824, %v9824
      %v9829 = vpack.c.bf16 %v9825, %v9825
      %v9830 = vld [vmem:[#allocation12] sm:$0xf]
      %v9831 = vld [vmem:[#allocation12 + $0x4] sm:$0xf]
      %v9832 = vld [vmem:[#allocation12 + $0x8] sm:$0xf]
      %v9833 = vld [vmem:[#allocation12 + $0xc] sm:$0xf]
      %v9834 = vld [vmem:[#allocation12 + $0x10] sm:$0xf]
      %v9835 = vld [vmem:[#allocation12 + $0x14] sm:$0xf]
      %v9836 = vld [vmem:[#allocation12 + $0x18] sm:$0xf]
      %v9837 = vld [vmem:[#allocation12 + $0x1c] sm:$0xf]
      %v9838 = vld [vmem:[#allocation12 + $0x20] sm:$0xf]
      %v9839 = vld [vmem:[#allocation12 + $0x24] sm:$0xf]
      %v9840 = vld [vmem:[#allocation12 + $0x28] sm:$0xf]
      %v9841 = vld [vmem:[#allocation12 + $0x2c] sm:$0xf]
      %v9842 = vld [vmem:[#allocation12 + $0x30] sm:$0xf]
      %v9843 = vld [vmem:[#allocation12 + $0x34] sm:$0xf]
      %v9844 = vld [vmem:[#allocation12 + $0x38] sm:$0xf]
      %v9845 = vld [vmem:[#allocation12 + $0x3c] sm:$0xf]
      %v9846 = vld [vmem:[#allocation12 + $0x40] sm:$0xf]
      %v9847 = vld [vmem:[#allocation12 + $0x44] sm:$0xf]
      %v9848 = vld [vmem:[#allocation12 + $0x48] sm:$0xf]
      %v9849 = vld [vmem:[#allocation12 + $0x4c] sm:$0xf]
      %v9850 = vld [vmem:[#allocation12 + $0x50] sm:$0xf]
      %v9851 = vld [vmem:[#allocation12 + $0x54] sm:$0xf]
      %v9852 = vld [vmem:[#allocation12 + $0x58] sm:$0xf]
      %v9853 = vld [vmem:[#allocation12 + $0x5c] sm:$0xf]
      %v9854 = vld [vmem:[#allocation12 + $0x60] sm:$0xf]
      %v9855 = vld [vmem:[#allocation12 + $0x64] sm:$0xf]
      %v9856 = vld [vmem:[#allocation12 + $0x68] sm:$0xf]
      %v9857 = vld [vmem:[#allocation12 + $0x6c] sm:$0xf]
      %v9858 = vld [vmem:[#allocation12 + $0x70] sm:$0xf]
      %v9859 = vld [vmem:[#allocation12 + $0x74] sm:$0xf]
      %v9860 = vld [vmem:[#allocation12 + $0x78] sm:$0xf]
      %v9861 = vld [vmem:[#allocation12 + $0x7c] sm:$0xf]
      %v9862 = vld [vmem:[#allocation12 + $0x80] sm:$0xf]
      %v9863 = vld [vmem:[#allocation12 + $0x84] sm:$0xf]
      %v9864 = vld [vmem:[#allocation12 + $0x88] sm:$0xf]
      %v9865 = vld [vmem:[#allocation12 + $0x8c] sm:$0xf]
      %v9866 = vld [vmem:[#allocation12 + $0x90] sm:$0xf]
      %v9867 = vld [vmem:[#allocation12 + $0x94] sm:$0xf]
      %v9868 = vld [vmem:[#allocation12 + $0x98] sm:$0xf]
      %v9869 = vld [vmem:[#allocation12 + $0x9c] sm:$0xf]
      %v9870 = vld [vmem:[#allocation12 + $0xa0] sm:$0xf]
      %v9871 = vld [vmem:[#allocation12 + $0xa4] sm:$0xf]
      %v9872 = vld [vmem:[#allocation12 + $0xa8] sm:$0xf]
      %v9873 = vld [vmem:[#allocation12 + $0xac] sm:$0xf]
      %v9874 = vld [vmem:[#allocation12 + $0xb0] sm:$0xf]
      %v9875 = vld [vmem:[#allocation12 + $0xb4] sm:$0xf]
      %v9876 = vld [vmem:[#allocation12 + $0xb8] sm:$0xf]
      %v9877 = vld [vmem:[#allocation12 + $0xbc] sm:$0xf]
      %v9878 = vld [vmem:[#allocation12 + $0xc0] sm:$0xf]
      %v9879 = vld [vmem:[#allocation12 + $0xc4] sm:$0xf]
      %v9880 = vld [vmem:[#allocation12 + $0xc8] sm:$0xf]
      %v9881 = vld [vmem:[#allocation12 + $0xcc] sm:$0xf]
      %v9882 = vld [vmem:[#allocation12 + $0xd0] sm:$0xf]
      %v9883 = vld [vmem:[#allocation12 + $0xd4] sm:$0xf]
      %v9884 = vld [vmem:[#allocation12 + $0xd8] sm:$0xf]
      %v9885 = vld [vmem:[#allocation12 + $0xdc] sm:$0xf]
      %v9886 = vld [vmem:[#allocation12 + $0xe0] sm:$0xf]
      %v9887 = vld [vmem:[#allocation12 + $0xe4] sm:$0xf]
      %v9888 = vld [vmem:[#allocation12 + $0xe8] sm:$0xf]
      %v9889 = vld [vmem:[#allocation12 + $0xec] sm:$0xf]
      %v9890 = vld [vmem:[#allocation12 + $0xf0] sm:$0xf]
      %v9891 = vld [vmem:[#allocation12 + $0xf4] sm:$0xf]
      %v9892 = vld [vmem:[#allocation12 + $0xf8] sm:$0xf]
      %v9893 = vld [vmem:[#allocation12 + $0xfc] sm:$0xf]
      %v9894 = vld [vmem:[#allocation13] sm:$0x1]
      %v9896 = vlaneseq
      %v9897 = vshrl.u32 %v9896, 7
      %v9898 = vsub.s32 0, %v9897
      %v9899 = vrot.slane %v9894, %v9898
      %v9965 = vunpack.c.l.b16 %v9830
      %v9966 = vunpack.c.l.b16 %v9831
      %v9967 = vunpack.c.l.b16 %v9832
      %v9968 = vunpack.c.l.b16 %v9833
      %v9969 = vunpack.c.l.b16 %v9834
      %v9970 = vunpack.c.l.b16 %v9835
      %v9971 = vunpack.c.l.b16 %v9836
      %v9972 = vunpack.c.l.b16 %v9837
      %v9973 = vunpack.c.l.b16 %v9838
      %v9974 = vunpack.c.l.b16 %v9839
      %v9975 = vunpack.c.l.b16 %v9840
      %v9976 = vunpack.c.l.b16 %v9841
      %v9977 = vunpack.c.l.b16 %v9842
      %v9978 = vunpack.c.l.b16 %v9843
      %v9979 = vunpack.c.l.b16 %v9844
      %v9980 = vunpack.c.l.b16 %v9845
      %v9981 = vunpack.c.l.b16 %v9846
      %v9982 = vunpack.c.l.b16 %v9847
      %v9983 = vunpack.c.l.b16 %v9848
      %v9984 = vunpack.c.l.b16 %v9849
      %v9985 = vunpack.c.l.b16 %v9850
      %v9986 = vunpack.c.l.b16 %v9851
      %v9987 = vunpack.c.l.b16 %v9852
      %v9988 = vunpack.c.l.b16 %v9853
      %v9989 = vunpack.c.l.b16 %v9854
      %v9990 = vunpack.c.l.b16 %v9855
      %v9991 = vunpack.c.l.b16 %v9856
      %v9992 = vunpack.c.l.b16 %v9857
      %v9993 = vunpack.c.l.b16 %v9858
      %v9994 = vunpack.c.l.b16 %v9859
      %v9995 = vunpack.c.l.b16 %v9860
      %v9996 = vunpack.c.l.b16 %v9861
      %v9997 = vunpack.c.l.b16 %v9862
      %v9998 = vunpack.c.l.b16 %v9863
      %v9999 = vunpack.c.l.b16 %v9864
      %v10000 = vunpack.c.l.b16 %v9865
      %v10001 = vunpack.c.l.b16 %v9866
      %v10002 = vunpack.c.l.b16 %v9867
      %v10003 = vunpack.c.l.b16 %v9868
      %v10004 = vunpack.c.l.b16 %v9869
      %v10005 = vunpack.c.l.b16 %v9870
      %v10006 = vunpack.c.l.b16 %v9871
      %v10007 = vunpack.c.l.b16 %v9872
      %v10008 = vunpack.c.l.b16 %v9873
      %v10009 = vunpack.c.l.b16 %v9874
      %v10010 = vunpack.c.l.b16 %v9875
      %v10011 = vunpack.c.l.b16 %v9876
      %v10012 = vunpack.c.l.b16 %v9877
      %v10013 = vunpack.c.l.b16 %v9878
      %v10014 = vunpack.c.l.b16 %v9879
      %v10015 = vunpack.c.l.b16 %v9880
      %v10016 = vunpack.c.l.b16 %v9881
      %v10017 = vunpack.c.l.b16 %v9882
      %v10018 = vunpack.c.l.b16 %v9883
      %v10019 = vunpack.c.l.b16 %v9884
      %v10020 = vunpack.c.l.b16 %v9885
      %v10021 = vunpack.c.l.b16 %v9886
      %v10022 = vunpack.c.l.b16 %v9887
      %v10023 = vunpack.c.l.b16 %v9888
      %v10024 = vunpack.c.l.b16 %v9889
      %v10025 = vunpack.c.l.b16 %v9890
      %v10026 = vunpack.c.l.b16 %v9891
      %v10027 = vunpack.c.l.b16 %v9892
      %v10028 = vunpack.c.l.b16 %v9893
      %v10029 = vpack.c.b16 %v9966, %v9965
      %v10030 = vpack.c.b16 %v9968, %v9967
      %v10031 = vpack.c.b16 %v9970, %v9969
      %v10032 = vpack.c.b16 %v9972, %v9971
      %v10033 = vpack.c.b16 %v9974, %v9973
      %v10034 = vpack.c.b16 %v9976, %v9975
      %v10035 = vpack.c.b16 %v9978, %v9977
      %v10036 = vpack.c.b16 %v9980, %v9979
      %v10037 = vpack.c.b16 %v9982, %v9981
      %v10038 = vpack.c.b16 %v9984, %v9983
      %v10039 = vpack.c.b16 %v9986, %v9985
      %v10040 = vpack.c.b16 %v9988, %v9987
      %v10041 = vpack.c.b16 %v9990, %v9989
      %v10042 = vpack.c.b16 %v9992, %v9991
      %v10043 = vpack.c.b16 %v9994, %v9993
      %v10044 = vpack.c.b16 %v9996, %v9995
      %v10045 = vpack.c.b16 %v9998, %v9997
      %v10046 = vpack.c.b16 %v10000, %v9999
      %v10047 = vpack.c.b16 %v10002, %v10001
      %v10048 = vpack.c.b16 %v10004, %v10003
      %v10049 = vpack.c.b16 %v10006, %v10005
      %v10050 = vpack.c.b16 %v10008, %v10007
      %v10051 = vpack.c.b16 %v10010, %v10009
      %v10052 = vpack.c.b16 %v10012, %v10011
      %v10053 = vpack.c.b16 %v10014, %v10013
      %v10054 = vpack.c.b16 %v10016, %v10015
      %v10055 = vpack.c.b16 %v10018, %v10017
      %v10056 = vpack.c.b16 %v10020, %v10019
      %v10057 = vpack.c.b16 %v10022, %v10021
      %v10058 = vpack.c.b16 %v10024, %v10023
      %v10059 = vpack.c.b16 %v10026, %v10025
      %v10060 = vpack.c.b16 %v10028, %v10027
      %10093 = vmatprep.subr.bf16.mxu0 0
      %10094 = vmatpush1.bf16.msra.mxu0 %v10029
      %10095 = vmatprep.subr.bf16.mxu0 0
      %10096 = vmatpush1.bf16.msra.mxu0 %v10030
      %10097 = vmatprep.subr.bf16.mxu0 0
      %10098 = vmatpush1.bf16.msra.mxu0 %v10031
      %10099 = vmatprep.subr.bf16.mxu0 0
      %10100 = vmatpush1.bf16.msra.mxu0 %v10032
      %10101 = vmatprep.subr.bf16.mxu0 0
      %10102 = vmatpush1.bf16.msra.mxu0 %v10033
      %10103 = vmatprep.subr.bf16.mxu0 0
      %10104 = vmatpush1.bf16.msra.mxu0 %v10034
      %10105 = vmatprep.subr.bf16.mxu0 0
      %10106 = vmatpush1.bf16.msra.mxu0 %v10035
      %10107 = vmatprep.subr.bf16.mxu0 0
      %10108 = vmatpush1.bf16.msra.mxu0 %v10036
      %10109 = vmatprep.subr.bf16.mxu0 0
      %10110 = vmatpush1.bf16.msra.mxu0 %v10037
      %10111 = vmatprep.subr.bf16.mxu0 0
      %10112 = vmatpush1.bf16.msra.mxu0 %v10038
      %10113 = vmatprep.subr.bf16.mxu0 0
      %10114 = vmatpush1.bf16.msra.mxu0 %v10039
      %10115 = vmatprep.subr.bf16.mxu0 0
      %10116 = vmatpush1.bf16.msra.mxu0 %v10040
      %10117 = vmatprep.subr.bf16.mxu0 0
      %10118 = vmatpush1.bf16.msra.mxu0 %v10041
      %10119 = vmatprep.subr.bf16.mxu0 0
      %10120 = vmatpush1.bf16.msra.mxu0 %v10042
      %10121 = vmatprep.subr.bf16.mxu0 0
      %10122 = vmatpush1.bf16.msra.mxu0 %v10043
      %10123 = vmatprep.subr.bf16.mxu0 0
      %10124 = vmatpush1.bf16.msra.mxu0 %v10044
      %10125 = vmatprep.mubr.bf16.mxu0 %v9827
      %10126 = vmatmul.mubr.bf16.gmra.mrb[0].mxu0 %v9826
      %v10127 = vpop.f32.mrb[0].mxu0
      %v10128 = vadd.f32 %v9899, %v10127
      %v10129 = vpop.f32.mrb[0].mxu0
      %v10130 = vpop.f32.mrb[0].mxu0
      %v10131 = vpop.f32.mrb[0].mxu0
      %10132 = vdwg.mxu0
      %10133 = vmatprep.subr.bf16.mxu0 0
      %10134 = vmatpush1.bf16.msra.mxu0 %v10045
      %10135 = vmatprep.subr.bf16.mxu0 0
      %10136 = vmatpush1.bf16.msra.mxu0 %v10046
      %10137 = vmatprep.subr.bf16.mxu0 0
      %10138 = vmatpush1.bf16.msra.mxu0 %v10047
      %10139 = vmatprep.subr.bf16.mxu0 0
      %10140 = vmatpush1.bf16.msra.mxu0 %v10048
      %10141 = vmatprep.subr.bf16.mxu0 0
      %10142 = vmatpush1.bf16.msra.mxu0 %v10049
      %10143 = vmatprep.subr.bf16.mxu0 0
      %10144 = vmatpush1.bf16.msra.mxu0 %v10050
      %10145 = vmatprep.subr.bf16.mxu0 0
      %10146 = vmatpush1.bf16.msra.mxu0 %v10051
      %10147 = vmatprep.subr.bf16.mxu0 0
      %10148 = vmatpush1.bf16.msra.mxu0 %v10052
      %10149 = vmatprep.subr.bf16.mxu0 0
      %10150 = vmatpush1.bf16.msra.mxu0 %v10053
      %10151 = vmatprep.subr.bf16.mxu0 0
      %10152 = vmatpush1.bf16.msra.mxu0 %v10054
      %10153 = vmatprep.subr.bf16.mxu0 0
      %10154 = vmatpush1.bf16.msra.mxu0 %v10055
      %10155 = vmatprep.subr.bf16.mxu0 0
      %10156 = vmatpush1.bf16.msra.mxu0 %v10056
      %10157 = vmatprep.subr.bf16.mxu0 0
      %10158 = vmatpush1.bf16.msra.mxu0 %v10057
      %10159 = vmatprep.subr.bf16.mxu0 0
      %10160 = vmatpush1.bf16.msra.mxu0 %v10058
      %10161 = vmatprep.subr.bf16.mxu0 0
      %10162 = vmatpush1.bf16.msra.mxu0 %v10059
      %10163 = vmatprep.subr.bf16.mxu0 0
      %10164 = vmatpush1.bf16.msra.mxu0 %v10060
      %10165 = vmatprep.mubr.bf16.mxu0 %v9829
      %10166 = vmatmul.mubr.bf16.gmra.mrb[0].mxu0 %v9828
      %v10167 = vpop.f32.mrb[0].mxu0
      %v10168 = vadd.f32 %v10128, %v10167
      %v10169 = vpop.f32.mrb[0].mxu0
      %v10170 = vpop.f32.mrb[0].mxu0
      %v10171 = vpop.f32.mrb[0].mxu0
      %10172 = vdwg.mxu0
      %10173 = vst [vmem:[#allocation21] sm:$0xff] %v10168
      %v10174 = vpack.c.bf16 %v7920, %v7912
      %v10175 = vpack.c.bf16 %v7921, %v7913
      %v10176 = vpack.c.bf16 %v7922, %v7914
      %v10177 = vpack.c.bf16 %v7923, %v7915
      %v10178 = vpack.c.bf16 %v7924, %v7916
      %v10179 = vpack.c.bf16 %v7925, %v7917
      %v10180 = vpack.c.bf16 %v7926, %v7918
      %v10181 = vpack.c.bf16 %v7927, %v7919
      %v10182 = vld [vmem:[#allocation15] sm:$0xff]
      %v10183 = vld [vmem:[#allocation15 + $0x8] sm:$0xff]
      %v10184 = vld [vmem:[#allocation15 + $0x10] sm:$0xff]
      %v10185 = vld [vmem:[#allocation15 + $0x18] sm:$0xff]
      %v10186 = vld [vmem:[#allocation15 + $0x20] sm:$0xff]
      %v10187 = vld [vmem:[#allocation15 + $0x28] sm:$0xff]
      %v10188 = vld [vmem:[#allocation15 + $0x30] sm:$0xff]
      %v10189 = vld [vmem:[#allocation15 + $0x38] sm:$0xff]
      %v10190 = vld [vmem:[#allocation15 + $0x40] sm:$0xff]
      %v10191 = vld [vmem:[#allocation15 + $0x48] sm:$0xff]
      %v10192 = vld [vmem:[#allocation15 + $0x50] sm:$0xff]
      %v10193 = vld [vmem:[#allocation15 + $0x58] sm:$0xff]
      %v10194 = vld [vmem:[#allocation15 + $0x60] sm:$0xff]
      %v10195 = vld [vmem:[#allocation15 + $0x68] sm:$0xff]
      %v10196 = vld [vmem:[#allocation15 + $0x70] sm:$0xff]
      %v10197 = vld [vmem:[#allocation15 + $0x78] sm:$0xff]
      %v10198 = vld [vmem:[#allocation15 + $0x80] sm:$0xff]
      %v10199 = vld [vmem:[#allocation15 + $0x88] sm:$0xff]
      %v10200 = vld [vmem:[#allocation15 + $0x90] sm:$0xff]
      %v10201 = vld [vmem:[#allocation15 + $0x98] sm:$0xff]
      %v10202 = vld [vmem:[#allocation15 + $0xa0] sm:$0xff]
      %v10203 = vld [vmem:[#allocation15 + $0xa8] sm:$0xff]
      %v10204 = vld [vmem:[#allocation15 + $0xb0] sm:$0xff]
      %v10205 = vld [vmem:[#allocation15 + $0xb8] sm:$0xff]
      %v10206 = vld [vmem:[#allocation15 + $0xc0] sm:$0xff]
      %v10207 = vld [vmem:[#allocation15 + $0xc8] sm:$0xff]
      %v10208 = vld [vmem:[#allocation15 + $0xd0] sm:$0xff]
      %v10209 = vld [vmem:[#allocation15 + $0xd8] sm:$0xff]
      %v10210 = vld [vmem:[#allocation15 + $0xe0] sm:$0xff]
      %v10211 = vld [vmem:[#allocation15 + $0xe8] sm:$0xff]
      %v10212 = vld [vmem:[#allocation15 + $0xf0] sm:$0xff]
      %v10213 = vld [vmem:[#allocation15 + $0xf8] sm:$0xff]
      %v10214 = vld [vmem:[#allocation15 + $0x100] sm:$0xff]
      %v10215 = vld [vmem:[#allocation15 + $0x108] sm:$0xff]
      %v10216 = vld [vmem:[#allocation15 + $0x110] sm:$0xff]
      %v10217 = vld [vmem:[#allocation15 + $0x118] sm:$0xff]
      %v10218 = vld [vmem:[#allocation15 + $0x120] sm:$0xff]
      %v10219 = vld [vmem:[#allocation15 + $0x128] sm:$0xff]
      %v10220 = vld [vmem:[#allocation15 + $0x130] sm:$0xff]
      %v10221 = vld [vmem:[#allocation15 + $0x138] sm:$0xff]
      %v10222 = vld [vmem:[#allocation15 + $0x140] sm:$0xff]
      %v10223 = vld [vmem:[#allocation15 + $0x148] sm:$0xff]
      %v10224 = vld [vmem:[#allocation15 + $0x150] sm:$0xff]
      %v10225 = vld [vmem:[#allocation15 + $0x158] sm:$0xff]
      %v10226 = vld [vmem:[#allocation15 + $0x160] sm:$0xff]
      %v10227 = vld [vmem:[#allocation15 + $0x168] sm:$0xff]
      %v10228 = vld [vmem:[#allocation15 + $0x170] sm:$0xff]
      %v10229 = vld [vmem:[#allocation15 + $0x178] sm:$0xff]
      %v10230 = vld [vmem:[#allocation15 + $0x180] sm:$0xff]
      %v10231 = vld [vmem:[#allocation15 + $0x188] sm:$0xff]
      %v10232 = vld [vmem:[#allocation15 + $0x190] sm:$0xff]
      %v10233 = vld [vmem:[#allocation15 + $0x198] sm:$0xff]
      %v10234 = vld [vmem:[#allocation15 + $0x1a0] sm:$0xff]
      %v10235 = vld [vmem:[#allocation15 + $0x1a8] sm:$0xff]
      %v10236 = vld [vmem:[#allocation15 + $0x1b0] sm:$0xff]
      %v10237 = vld [vmem:[#allocation15 + $0x1b8] sm:$0xff]
      %v10238 = vld [vmem:[#allocation15 + $0x1c0] sm:$0xff]
      %v10239 = vld [vmem:[#allocation15 + $0x1c8] sm:$0xff]
      %v10240 = vld [vmem:[#allocation15 + $0x1d0] sm:$0xff]
      %v10241 = vld [vmem:[#allocation15 + $0x1d8] sm:$0xff]
      %v10242 = vld [vmem:[#allocation15 + $0x1e0] sm:$0xff]
      %v10243 = vld [vmem:[#allocation15 + $0x1e8] sm:$0xff]
      %v10244 = vld [vmem:[#allocation15 + $0x1f0] sm:$0xff]
      %v10245 = vld [vmem:[#allocation15 + $0x1f8] sm:$0xff]
      %v10246 = vld [vmem:[#allocation15 + $0x200] sm:$0xff]
      %v10247 = vld [vmem:[#allocation15 + $0x208] sm:$0xff]
      %v10248 = vld [vmem:[#allocation15 + $0x210] sm:$0xff]
      %v10249 = vld [vmem:[#allocation15 + $0x218] sm:$0xff]
      %v10250 = vld [vmem:[#allocation15 + $0x220] sm:$0xff]
      %v10251 = vld [vmem:[#allocation15 + $0x228] sm:$0xff]
      %v10252 = vld [vmem:[#allocation15 + $0x230] sm:$0xff]
      %v10253 = vld [vmem:[#allocation15 + $0x238] sm:$0xff]
      %v10254 = vld [vmem:[#allocation15 + $0x240] sm:$0xff]
      %v10255 = vld [vmem:[#allocation15 + $0x248] sm:$0xff]
      %v10256 = vld [vmem:[#allocation15 + $0x250] sm:$0xff]
      %v10257 = vld [vmem:[#allocation15 + $0x258] sm:$0xff]
      %v10258 = vld [vmem:[#allocation15 + $0x260] sm:$0xff]
      %v10259 = vld [vmem:[#allocation15 + $0x268] sm:$0xff]
      %v10260 = vld [vmem:[#allocation15 + $0x270] sm:$0xff]
      %v10261 = vld [vmem:[#allocation15 + $0x278] sm:$0xff]
      %v10262 = vld [vmem:[#allocation15 + $0x280] sm:$0xff]
      %v10263 = vld [vmem:[#allocation15 + $0x288] sm:$0xff]
      %v10264 = vld [vmem:[#allocation15 + $0x290] sm:$0xff]
      %v10265 = vld [vmem:[#allocation15 + $0x298] sm:$0xff]
      %v10266 = vld [vmem:[#allocation15 + $0x2a0] sm:$0xff]
      %v10267 = vld [vmem:[#allocation15 + $0x2a8] sm:$0xff]
      %v10268 = vld [vmem:[#allocation15 + $0x2b0] sm:$0xff]
      %v10269 = vld [vmem:[#allocation15 + $0x2b8] sm:$0xff]
      %v10270 = vld [vmem:[#allocation15 + $0x2c0] sm:$0xff]
      %v10271 = vld [vmem:[#allocation15 + $0x2c8] sm:$0xff]
      %v10272 = vld [vmem:[#allocation15 + $0x2d0] sm:$0xff]
      %v10273 = vld [vmem:[#allocation15 + $0x2d8] sm:$0xff]
      %v10274 = vld [vmem:[#allocation15 + $0x2e0] sm:$0xff]
      %v10275 = vld [vmem:[#allocation15 + $0x2e8] sm:$0xff]
      %v10276 = vld [vmem:[#allocation15 + $0x2f0] sm:$0xff]
      %v10277 = vld [vmem:[#allocation15 + $0x2f8] sm:$0xff]
      %v10278 = vld [vmem:[#allocation15 + $0x300] sm:$0xff]
      %v10279 = vld [vmem:[#allocation15 + $0x308] sm:$0xff]
      %v10280 = vld [vmem:[#allocation15 + $0x310] sm:$0xff]
      %v10281 = vld [vmem:[#allocation15 + $0x318] sm:$0xff]
      %v10282 = vld [vmem:[#allocation15 + $0x320] sm:$0xff]
      %v10283 = vld [vmem:[#allocation15 + $0x328] sm:$0xff]
      %v10284 = vld [vmem:[#allocation15 + $0x330] sm:$0xff]
      %v10285 = vld [vmem:[#allocation15 + $0x338] sm:$0xff]
      %v10286 = vld [vmem:[#allocation15 + $0x340] sm:$0xff]
      %v10287 = vld [vmem:[#allocation15 + $0x348] sm:$0xff]
      %v10288 = vld [vmem:[#allocation15 + $0x350] sm:$0xff]
      %v10289 = vld [vmem:[#allocation15 + $0x358] sm:$0xff]
      %v10290 = vld [vmem:[#allocation15 + $0x360] sm:$0xff]
      %v10291 = vld [vmem:[#allocation15 + $0x368] sm:$0xff]
      %v10292 = vld [vmem:[#allocation15 + $0x370] sm:$0xff]
      %v10293 = vld [vmem:[#allocation15 + $0x378] sm:$0xff]
      %v10294 = vld [vmem:[#allocation15 + $0x380] sm:$0xff]
      %v10295 = vld [vmem:[#allocation15 + $0x388] sm:$0xff]
      %v10296 = vld [vmem:[#allocation15 + $0x390] sm:$0xff]
      %v10297 = vld [vmem:[#allocation15 + $0x398] sm:$0xff]
      %v10298 = vld [vmem:[#allocation15 + $0x3a0] sm:$0xff]
      %v10299 = vld [vmem:[#allocation15 + $0x3a8] sm:$0xff]
      %v10300 = vld [vmem:[#allocation15 + $0x3b0] sm:$0xff]
      %v10301 = vld [vmem:[#allocation15 + $0x3b8] sm:$0xff]
      %v10302 = vld [vmem:[#allocation15 + $0x3c0] sm:$0xff]
      %v10303 = vld [vmem:[#allocation15 + $0x3c8] sm:$0xff]
      %v10304 = vld [vmem:[#allocation15 + $0x3d0] sm:$0xff]
      %v10305 = vld [vmem:[#allocation15 + $0x3d8] sm:$0xff]
      %v10306 = vld [vmem:[#allocation15 + $0x3e0] sm:$0xff]
      %v10307 = vld [vmem:[#allocation15 + $0x3e8] sm:$0xff]
      %v10308 = vld [vmem:[#allocation15 + $0x3f0] sm:$0xff]
      %v10309 = vld [vmem:[#allocation15 + $0x3f8] sm:$0xff]
      %v10310 = vld [vmem:[#allocation16] sm:$0x3]
      %v10312 = vlaneseq
      %v10313 = vshrl.u32 %v10312, 7
      %v10314 = vsub.s32 0, %v10313
      %v10315 = vrot.slane %v10310, %v10314
      %v10316 = vlaneseq
      %v10317 = vshrl.u32 %v10316, 7
      %v10318 = vsub.s32 1, %v10317
      %v10319 = vrot.slane %v10310, %v10318
      %v10450 = vunpack.c.l.b16 %v10182
      %v10451 = vunpack.c.h.b16 %v10182
      %v10452 = vunpack.c.l.b16 %v10183
      %v10453 = vunpack.c.h.b16 %v10183
      %v10454 = vunpack.c.l.b16 %v10184
      %v10455 = vunpack.c.h.b16 %v10184
      %v10456 = vunpack.c.l.b16 %v10185
      %v10457 = vunpack.c.h.b16 %v10185
      %v10458 = vunpack.c.l.b16 %v10186
      %v10459 = vunpack.c.h.b16 %v10186
      %v10460 = vunpack.c.l.b16 %v10187
      %v10461 = vunpack.c.h.b16 %v10187
      %v10462 = vunpack.c.l.b16 %v10188
      %v10463 = vunpack.c.h.b16 %v10188
      %v10464 = vunpack.c.l.b16 %v10189
      %v10465 = vunpack.c.h.b16 %v10189
      %v10466 = vunpack.c.l.b16 %v10190
      %v10467 = vunpack.c.h.b16 %v10190
      %v10468 = vunpack.c.l.b16 %v10191
      %v10469 = vunpack.c.h.b16 %v10191
      %v10470 = vunpack.c.l.b16 %v10192
      %v10471 = vunpack.c.h.b16 %v10192
      %v10472 = vunpack.c.l.b16 %v10193
      %v10473 = vunpack.c.h.b16 %v10193
      %v10474 = vunpack.c.l.b16 %v10194
      %v10475 = vunpack.c.h.b16 %v10194
      %v10476 = vunpack.c.l.b16 %v10195
      %v10477 = vunpack.c.h.b16 %v10195
      %v10478 = vunpack.c.l.b16 %v10196
      %v10479 = vunpack.c.h.b16 %v10196
      %v10480 = vunpack.c.l.b16 %v10197
      %v10481 = vunpack.c.h.b16 %v10197
      %v10482 = vunpack.c.l.b16 %v10198
      %v10483 = vunpack.c.h.b16 %v10198
      %v10484 = vunpack.c.l.b16 %v10199
      %v10485 = vunpack.c.h.b16 %v10199
      %v10486 = vunpack.c.l.b16 %v10200
      %v10487 = vunpack.c.h.b16 %v10200
      %v10488 = vunpack.c.l.b16 %v10201
      %v10489 = vunpack.c.h.b16 %v10201
      %v10490 = vunpack.c.l.b16 %v10202
      %v10491 = vunpack.c.h.b16 %v10202
      %v10492 = vunpack.c.l.b16 %v10203
      %v10493 = vunpack.c.h.b16 %v10203
      %v10494 = vunpack.c.l.b16 %v10204
      %v10495 = vunpack.c.h.b16 %v10204
      %v10496 = vunpack.c.l.b16 %v10205
      %v10497 = vunpack.c.h.b16 %v10205
      %v10498 = vunpack.c.l.b16 %v10206
      %v10499 = vunpack.c.h.b16 %v10206
      %v10500 = vunpack.c.l.b16 %v10207
      %v10501 = vunpack.c.h.b16 %v10207
      %v10502 = vunpack.c.l.b16 %v10208
      %v10503 = vunpack.c.h.b16 %v10208
      %v10504 = vunpack.c.l.b16 %v10209
      %v10505 = vunpack.c.h.b16 %v10209
      %v10506 = vunpack.c.l.b16 %v10210
      %v10507 = vunpack.c.h.b16 %v10210
      %v10508 = vunpack.c.l.b16 %v10211
      %v10509 = vunpack.c.h.b16 %v10211
      %v10510 = vunpack.c.l.b16 %v10212
      %v10511 = vunpack.c.h.b16 %v10212
      %v10512 = vunpack.c.l.b16 %v10213
      %v10513 = vunpack.c.h.b16 %v10213
      %v10514 = vunpack.c.l.b16 %v10214
      %v10515 = vunpack.c.h.b16 %v10214
      %v10516 = vunpack.c.l.b16 %v10215
      %v10517 = vunpack.c.h.b16 %v10215
      %v10518 = vunpack.c.l.b16 %v10216
      %v10519 = vunpack.c.h.b16 %v10216
      %v10520 = vunpack.c.l.b16 %v10217
      %v10521 = vunpack.c.h.b16 %v10217
      %v10522 = vunpack.c.l.b16 %v10218
      %v10523 = vunpack.c.h.b16 %v10218
      %v10524 = vunpack.c.l.b16 %v10219
      %v10525 = vunpack.c.h.b16 %v10219
      %v10526 = vunpack.c.l.b16 %v10220
      %v10527 = vunpack.c.h.b16 %v10220
      %v10528 = vunpack.c.l.b16 %v10221
      %v10529 = vunpack.c.h.b16 %v10221
      %v10530 = vunpack.c.l.b16 %v10222
      %v10531 = vunpack.c.h.b16 %v10222
      %v10532 = vunpack.c.l.b16 %v10223
      %v10533 = vunpack.c.h.b16 %v10223
      %v10534 = vunpack.c.l.b16 %v10224
      %v10535 = vunpack.c.h.b16 %v10224
      %v10536 = vunpack.c.l.b16 %v10225
      %v10537 = vunpack.c.h.b16 %v10225
      %v10538 = vunpack.c.l.b16 %v10226
      %v10539 = vunpack.c.h.b16 %v10226
      %v10540 = vunpack.c.l.b16 %v10227
      %v10541 = vunpack.c.h.b16 %v10227
      %v10542 = vunpack.c.l.b16 %v10228
      %v10543 = vunpack.c.h.b16 %v10228
      %v10544 = vunpack.c.l.b16 %v10229
      %v10545 = vunpack.c.h.b16 %v10229
      %v10546 = vunpack.c.l.b16 %v10230
      %v10547 = vunpack.c.h.b16 %v10230
      %v10548 = vunpack.c.l.b16 %v10231
      %v10549 = vunpack.c.h.b16 %v10231
      %v10550 = vunpack.c.l.b16 %v10232
      %v10551 = vunpack.c.h.b16 %v10232
      %v10552 = vunpack.c.l.b16 %v10233
      %v10553 = vunpack.c.h.b16 %v10233
      %v10554 = vunpack.c.l.b16 %v10234
      %v10555 = vunpack.c.h.b16 %v10234
      %v10556 = vunpack.c.l.b16 %v10235
      %v10557 = vunpack.c.h.b16 %v10235
      %v10558 = vunpack.c.l.b16 %v10236
      %v10559 = vunpack.c.h.b16 %v10236
      %v10560 = vunpack.c.l.b16 %v10237
      %v10561 = vunpack.c.h.b16 %v10237
      %v10562 = vunpack.c.l.b16 %v10238
      %v10563 = vunpack.c.h.b16 %v10238
      %v10564 = vunpack.c.l.b16 %v10239
      %v10565 = vunpack.c.h.b16 %v10239
      %v10566 = vunpack.c.l.b16 %v10240
      %v10567 = vunpack.c.h.b16 %v10240
      %v10568 = vunpack.c.l.b16 %v10241
      %v10569 = vunpack.c.h.b16 %v10241
      %v10570 = vunpack.c.l.b16 %v10242
      %v10571 = vunpack.c.h.b16 %v10242
      %v10572 = vunpack.c.l.b16 %v10243
      %v10573 = vunpack.c.h.b16 %v10243
      %v10574 = vunpack.c.l.b16 %v10244
      %v10575 = vunpack.c.h.b16 %v10244
      %v10576 = vunpack.c.l.b16 %v10245
      %v10577 = vunpack.c.h.b16 %v10245
      %v10578 = vunpack.c.l.b16 %v10246
      %v10579 = vunpack.c.h.b16 %v10246
      %v10580 = vunpack.c.l.b16 %v10247
      %v10581 = vunpack.c.h.b16 %v10247
      %v10582 = vunpack.c.l.b16 %v10248
      %v10583 = vunpack.c.h.b16 %v10248
      %v10584 = vunpack.c.l.b16 %v10249
      %v10585 = vunpack.c.h.b16 %v10249
      %v10586 = vunpack.c.l.b16 %v10250
      %v10587 = vunpack.c.h.b16 %v10250
      %v10588 = vunpack.c.l.b16 %v10251
      %v10589 = vunpack.c.h.b16 %v10251
      %v10590 = vunpack.c.l.b16 %v10252
      %v10591 = vunpack.c.h.b16 %v10252
      %v10592 = vunpack.c.l.b16 %v10253
      %v10593 = vunpack.c.h.b16 %v10253
      %v10594 = vunpack.c.l.b16 %v10254
      %v10595 = vunpack.c.h.b16 %v10254
      %v10596 = vunpack.c.l.b16 %v10255
      %v10597 = vunpack.c.h.b16 %v10255
      %v10598 = vunpack.c.l.b16 %v10256
      %v10599 = vunpack.c.h.b16 %v10256
      %v10600 = vunpack.c.l.b16 %v10257
      %v10601 = vunpack.c.h.b16 %v10257
      %v10602 = vunpack.c.l.b16 %v10258
      %v10603 = vunpack.c.h.b16 %v10258
      %v10604 = vunpack.c.l.b16 %v10259
      %v10605 = vunpack.c.h.b16 %v10259
      %v10606 = vunpack.c.l.b16 %v10260
      %v10607 = vunpack.c.h.b16 %v10260
      %v10608 = vunpack.c.l.b16 %v10261
      %v10609 = vunpack.c.h.b16 %v10261
      %v10610 = vunpack.c.l.b16 %v10262
      %v10611 = vunpack.c.h.b16 %v10262
      %v10612 = vunpack.c.l.b16 %v10263
      %v10613 = vunpack.c.h.b16 %v10263
      %v10614 = vunpack.c.l.b16 %v10264
      %v10615 = vunpack.c.h.b16 %v10264
      %v10616 = vunpack.c.l.b16 %v10265
      %v10617 = vunpack.c.h.b16 %v10265
      %v10618 = vunpack.c.l.b16 %v10266
      %v10619 = vunpack.c.h.b16 %v10266
      %v10620 = vunpack.c.l.b16 %v10267
      %v10621 = vunpack.c.h.b16 %v10267
      %v10622 = vunpack.c.l.b16 %v10268
      %v10623 = vunpack.c.h.b16 %v10268
      %v10624 = vunpack.c.l.b16 %v10269
      %v10625 = vunpack.c.h.b16 %v10269
      %v10626 = vunpack.c.l.b16 %v10270
      %v10627 = vunpack.c.h.b16 %v10270
      %v10628 = vunpack.c.l.b16 %v10271
      %v10629 = vunpack.c.h.b16 %v10271
      %v10630 = vunpack.c.l.b16 %v10272
      %v10631 = vunpack.c.h.b16 %v10272
      %v10632 = vunpack.c.l.b16 %v10273
      %v10633 = vunpack.c.h.b16 %v10273
      %v10634 = vunpack.c.l.b16 %v10274
      %v10635 = vunpack.c.h.b16 %v10274
      %v10636 = vunpack.c.l.b16 %v10275
      %v10637 = vunpack.c.h.b16 %v10275
      %v10638 = vunpack.c.l.b16 %v10276
      %v10639 = vunpack.c.h.b16 %v10276
      %v10640 = vunpack.c.l.b16 %v10277
      %v10641 = vunpack.c.h.b16 %v10277
      %v10642 = vunpack.c.l.b16 %v10278
      %v10643 = vunpack.c.h.b16 %v10278
      %v10644 = vunpack.c.l.b16 %v10279
      %v10645 = vunpack.c.h.b16 %v10279
      %v10646 = vunpack.c.l.b16 %v10280
      %v10647 = vunpack.c.h.b16 %v10280
      %v10648 = vunpack.c.l.b16 %v10281
      %v10649 = vunpack.c.h.b16 %v10281
      %v10650 = vunpack.c.l.b16 %v10282
      %v10651 = vunpack.c.h.b16 %v10282
      %v10652 = vunpack.c.l.b16 %v10283
      %v10653 = vunpack.c.h.b16 %v10283
      %v10654 = vunpack.c.l.b16 %v10284
      %v10655 = vunpack.c.h.b16 %v10284
      %v10656 = vunpack.c.l.b16 %v10285
      %v10657 = vunpack.c.h.b16 %v10285
      %v10658 = vunpack.c.l.b16 %v10286
      %v10659 = vunpack.c.h.b16 %v10286
      %v10660 = vunpack.c.l.b16 %v10287
      %v10661 = vunpack.c.h.b16 %v10287
      %v10662 = vunpack.c.l.b16 %v10288
      %v10663 = vunpack.c.h.b16 %v10288
      %v10664 = vunpack.c.l.b16 %v10289
      %v10665 = vunpack.c.h.b16 %v10289
      %v10666 = vunpack.c.l.b16 %v10290
      %v10667 = vunpack.c.h.b16 %v10290
      %v10668 = vunpack.c.l.b16 %v10291
      %v10669 = vunpack.c.h.b16 %v10291
      %v10670 = vunpack.c.l.b16 %v10292
      %v10671 = vunpack.c.h.b16 %v10292
      %v10672 = vunpack.c.l.b16 %v10293
      %v10673 = vunpack.c.h.b16 %v10293
      %v10674 = vunpack.c.l.b16 %v10294
      %v10675 = vunpack.c.h.b16 %v10294
      %v10676 = vunpack.c.l.b16 %v10295
      %v10677 = vunpack.c.h.b16 %v10295
      %v10678 = vunpack.c.l.b16 %v10296
      %v10679 = vunpack.c.h.b16 %v10296
      %v10680 = vunpack.c.l.b16 %v10297
      %v10681 = vunpack.c.h.b16 %v10297
      %v10682 = vunpack.c.l.b16 %v10298
      %v10683 = vunpack.c.h.b16 %v10298
      %v10684 = vunpack.c.l.b16 %v10299
      %v10685 = vunpack.c.h.b16 %v10299
      %v10686 = vunpack.c.l.b16 %v10300
      %v10687 = vunpack.c.h.b16 %v10300
      %v10688 = vunpack.c.l.b16 %v10301
      %v10689 = vunpack.c.h.b16 %v10301
      %v10690 = vunpack.c.l.b16 %v10302
      %v10691 = vunpack.c.h.b16 %v10302
      %v10692 = vunpack.c.l.b16 %v10303
      %v10693 = vunpack.c.h.b16 %v10303
      %v10694 = vunpack.c.l.b16 %v10304
      %v10695 = vunpack.c.h.b16 %v10304
      %v10696 = vunpack.c.l.b16 %v10305
      %v10697 = vunpack.c.h.b16 %v10305
      %v10698 = vunpack.c.l.b16 %v10306
      %v10699 = vunpack.c.h.b16 %v10306
      %v10700 = vunpack.c.l.b16 %v10307
      %v10701 = vunpack.c.h.b16 %v10307
      %v10702 = vunpack.c.l.b16 %v10308
      %v10703 = vunpack.c.h.b16 %v10308
      %v10704 = vunpack.c.l.b16 %v10309
      %v10705 = vunpack.c.h.b16 %v10309
      %v10706 = vpack.c.b16 %v10452, %v10450
      %v10707 = vpack.c.b16 %v10453, %v10451
      %v10708 = vpack.c.b16 %v10456, %v10454
      %v10709 = vpack.c.b16 %v10457, %v10455
      %v10710 = vpack.c.b16 %v10460, %v10458
      %v10711 = vpack.c.b16 %v10461, %v10459
      %v10712 = vpack.c.b16 %v10464, %v10462
      %v10713 = vpack.c.b16 %v10465, %v10463
      %v10714 = vpack.c.b16 %v10468, %v10466
      %v10715 = vpack.c.b16 %v10469, %v10467
      %v10716 = vpack.c.b16 %v10472, %v10470
      %v10717 = vpack.c.b16 %v10473, %v10471
      %v10718 = vpack.c.b16 %v10476, %v10474
      %v10719 = vpack.c.b16 %v10477, %v10475
      %v10720 = vpack.c.b16 %v10480, %v10478
      %v10721 = vpack.c.b16 %v10481, %v10479
      %v10722 = vpack.c.b16 %v10484, %v10482
      %v10723 = vpack.c.b16 %v10485, %v10483
      %v10724 = vpack.c.b16 %v10488, %v10486
      %v10725 = vpack.c.b16 %v10489, %v10487
      %v10726 = vpack.c.b16 %v10492, %v10490
      %v10727 = vpack.c.b16 %v10493, %v10491
      %v10728 = vpack.c.b16 %v10496, %v10494
      %v10729 = vpack.c.b16 %v10497, %v10495
      %v10730 = vpack.c.b16 %v10500, %v10498
      %v10731 = vpack.c.b16 %v10501, %v10499
      %v10732 = vpack.c.b16 %v10504, %v10502
      %v10733 = vpack.c.b16 %v10505, %v10503
      %v10734 = vpack.c.b16 %v10508, %v10506
      %v10735 = vpack.c.b16 %v10509, %v10507
      %v10736 = vpack.c.b16 %v10512, %v10510
      %v10737 = vpack.c.b16 %v10513, %v10511
      %v10738 = vpack.c.b16 %v10516, %v10514
      %v10739 = vpack.c.b16 %v10517, %v10515
      %v10740 = vpack.c.b16 %v10520, %v10518
      %v10741 = vpack.c.b16 %v10521, %v10519
      %v10742 = vpack.c.b16 %v10524, %v10522
      %v10743 = vpack.c.b16 %v10525, %v10523
      %v10744 = vpack.c.b16 %v10528, %v10526
      %v10745 = vpack.c.b16 %v10529, %v10527
      %v10746 = vpack.c.b16 %v10532, %v10530
      %v10747 = vpack.c.b16 %v10533, %v10531
      %v10748 = vpack.c.b16 %v10536, %v10534
      %v10749 = vpack.c.b16 %v10537, %v10535
      %v10750 = vpack.c.b16 %v10540, %v10538
      %v10751 = vpack.c.b16 %v10541, %v10539
      %v10752 = vpack.c.b16 %v10544, %v10542
      %v10753 = vpack.c.b16 %v10545, %v10543
      %v10754 = vpack.c.b16 %v10548, %v10546
      %v10755 = vpack.c.b16 %v10549, %v10547
      %v10756 = vpack.c.b16 %v10552, %v10550
      %v10757 = vpack.c.b16 %v10553, %v10551
      %v10758 = vpack.c.b16 %v10556, %v10554
      %v10759 = vpack.c.b16 %v10557, %v10555
      %v10760 = vpack.c.b16 %v10560, %v10558
      %v10761 = vpack.c.b16 %v10561, %v10559
      %v10762 = vpack.c.b16 %v10564, %v10562
      %v10763 = vpack.c.b16 %v10565, %v10563
      %v10764 = vpack.c.b16 %v10568, %v10566
      %v10765 = vpack.c.b16 %v10569, %v10567
      %v10766 = vpack.c.b16 %v10572, %v10570
      %v10767 = vpack.c.b16 %v10573, %v10571
      %v10768 = vpack.c.b16 %v10576, %v10574
      %v10769 = vpack.c.b16 %v10577, %v10575
      %v10770 = vpack.c.b16 %v10580, %v10578
      %v10771 = vpack.c.b16 %v10581, %v10579
      %v10772 = vpack.c.b16 %v10584, %v10582
      %v10773 = vpack.c.b16 %v10585, %v10583
      %v10774 = vpack.c.b16 %v10588, %v10586
      %v10775 = vpack.c.b16 %v10589, %v10587
      %v10776 = vpack.c.b16 %v10592, %v10590
      %v10777 = vpack.c.b16 %v10593, %v10591
      %v10778 = vpack.c.b16 %v10596, %v10594
      %v10779 = vpack.c.b16 %v10597, %v10595
      %v10780 = vpack.c.b16 %v10600, %v10598
      %v10781 = vpack.c.b16 %v10601, %v10599
      %v10782 = vpack.c.b16 %v10604, %v10602
      %v10783 = vpack.c.b16 %v10605, %v10603
      %v10784 = vpack.c.b16 %v10608, %v10606
      %v10785 = vpack.c.b16 %v10609, %v10607
      %v10786 = vpack.c.b16 %v10612, %v10610
      %v10787 = vpack.c.b16 %v10613, %v10611
      %v10788 = vpack.c.b16 %v10616, %v10614
      %v10789 = vpack.c.b16 %v10617, %v10615
      %v10790 = vpack.c.b16 %v10620, %v10618
      %v10791 = vpack.c.b16 %v10621, %v10619
      %v10792 = vpack.c.b16 %v10624, %v10622
      %v10793 = vpack.c.b16 %v10625, %v10623
      %v10794 = vpack.c.b16 %v10628, %v10626
      %v10795 = vpack.c.b16 %v10629, %v10627
      %v10796 = vpack.c.b16 %v10632, %v10630
      %v10797 = vpack.c.b16 %v10633, %v10631
      %v10798 = vpack.c.b16 %v10636, %v10634
      %v10799 = vpack.c.b16 %v10637, %v10635
      %v10800 = vpack.c.b16 %v10640, %v10638
      %v10801 = vpack.c.b16 %v10641, %v10639
      %v10802 = vpack.c.b16 %v10644, %v10642
      %v10803 = vpack.c.b16 %v10645, %v10643
      %v10804 = vpack.c.b16 %v10648, %v10646
      %v10805 = vpack.c.b16 %v10649, %v10647
      %v10806 = vpack.c.b16 %v10652, %v10650
      %v10807 = vpack.c.b16 %v10653, %v10651
      %v10808 = vpack.c.b16 %v10656, %v10654
      %v10809 = vpack.c.b16 %v10657, %v10655
      %v10810 = vpack.c.b16 %v10660, %v10658
      %v10811 = vpack.c.b16 %v10661, %v10659
      %v10812 = vpack.c.b16 %v10664, %v10662
      %v10813 = vpack.c.b16 %v10665, %v10663
      %v10814 = vpack.c.b16 %v10668, %v10666
      %v10815 = vpack.c.b16 %v10669, %v10667
      %v10816 = vpack.c.b16 %v10672, %v10670
      %v10817 = vpack.c.b16 %v10673, %v10671
      %v10818 = vpack.c.b16 %v10676, %v10674
      %v10819 = vpack.c.b16 %v10677, %v10675
      %v10820 = vpack.c.b16 %v10680, %v10678
      %v10821 = vpack.c.b16 %v10681, %v10679
      %v10822 = vpack.c.b16 %v10684, %v10682
      %v10823 = vpack.c.b16 %v10685, %v10683
      %v10824 = vpack.c.b16 %v10688, %v10686
      %v10825 = vpack.c.b16 %v10689, %v10687
      %v10826 = vpack.c.b16 %v10692, %v10690
      %v10827 = vpack.c.b16 %v10693, %v10691
      %v10828 = vpack.c.b16 %v10696, %v10694
      %v10829 = vpack.c.b16 %v10697, %v10695
      %v10830 = vpack.c.b16 %v10700, %v10698
      %v10831 = vpack.c.b16 %v10701, %v10699
      %v10832 = vpack.c.b16 %v10704, %v10702
      %v10833 = vpack.c.b16 %v10705, %v10703
      %10962 = vmatprep.subr.bf16.mxu0 %v10707
      %10963 = vmatpush1.bf16.msra.mxu0 %v10706
      %10964 = vmatprep.subr.bf16.mxu0 %v10709
      %10965 = vmatpush1.bf16.msra.mxu0 %v10708
      %10966 = vmatprep.subr.bf16.mxu0 %v10711
      %10967 = vmatpush1.bf16.msra.mxu0 %v10710
      %10968 = vmatprep.subr.bf16.mxu0 %v10713
      %10969 = vmatpush1.bf16.msra.mxu0 %v10712
      %10970 = vmatprep.subr.bf16.mxu0 %v10715
      %10971 = vmatpush1.bf16.msra.mxu0 %v10714
      %10972 = vmatprep.subr.bf16.mxu0 %v10717
      %10973 = vmatpush1.bf16.msra.mxu0 %v10716
      %10974 = vmatprep.subr.bf16.mxu0 %v10719
      %10975 = vmatpush1.bf16.msra.mxu0 %v10718
      %10976 = vmatprep.subr.bf16.mxu0 %v10721
      %10977 = vmatpush1.bf16.msra.mxu0 %v10720
      %10978 = vmatprep.subr.bf16.mxu0 %v10723
      %10979 = vmatpush1.bf16.msra.mxu0 %v10722
      %10980 = vmatprep.subr.bf16.mxu0 %v10725
      %10981 = vmatpush1.bf16.msra.mxu0 %v10724
      %10982 = vmatprep.subr.bf16.mxu0 %v10727
      %10983 = vmatpush1.bf16.msra.mxu0 %v10726
      %10984 = vmatprep.subr.bf16.mxu0 %v10729
      %10985 = vmatpush1.bf16.msra.mxu0 %v10728
      %10986 = vmatprep.subr.bf16.mxu0 %v10731
      %10987 = vmatpush1.bf16.msra.mxu0 %v10730
      %10988 = vmatprep.subr.bf16.mxu0 %v10733
      %10989 = vmatpush1.bf16.msra.mxu0 %v10732
      %10990 = vmatprep.subr.bf16.mxu0 %v10735
      %10991 = vmatpush1.bf16.msra.mxu0 %v10734
      %10992 = vmatprep.subr.bf16.mxu0 %v10737
      %10993 = vmatpush1.bf16.msra.mxu0 %v10736
      %10994 = vmatprep.mubr.bf16.mxu0 %v10175
      %10995 = vmatmul.mubr.bf16.gmra.mrb[0].mxu0 %v10174
      %v10996 = vpop.f32.mrb[0].mxu0
      %v10997 = vadd.f32 %v10315, %v10996
      %v10998 = vpop.f32.mrb[0].mxu0
      %v10999 = vadd.f32 %v10319, %v10998
      %v11000 = vpop.f32.mrb[0].mxu0
      %v11001 = vadd.f32 %v10315, %v11000
      %v11002 = vpop.f32.mrb[0].mxu0
      %v11003 = vadd.f32 %v10319, %v11002
      %11004 = vdwg.mxu0
      %11005 = vmatprep.subr.bf16.mxu0 %v10739
      %11006 = vmatpush1.bf16.msra.mxu0 %v10738
      %11007 = vmatprep.subr.bf16.mxu0 %v10741
      %11008 = vmatpush1.bf16.msra.mxu0 %v10740
      %11009 = vmatprep.subr.bf16.mxu0 %v10743
      %11010 = vmatpush1.bf16.msra.mxu0 %v10742
      %11011 = vmatprep.subr.bf16.mxu0 %v10745
      %11012 = vmatpush1.bf16.msra.mxu0 %v10744
      %11013 = vmatprep.subr.bf16.mxu0 %v10747
      %11014 = vmatpush1.bf16.msra.mxu0 %v10746
      %11015 = vmatprep.subr.bf16.mxu0 %v10749
      %11016 = vmatpush1.bf16.msra.mxu0 %v10748
      %11017 = vmatprep.subr.bf16.mxu0 %v10751
      %11018 = vmatpush1.bf16.msra.mxu0 %v10750
      %11019 = vmatprep.subr.bf16.mxu0 %v10753
      %11020 = vmatpush1.bf16.msra.mxu0 %v10752
      %11021 = vmatprep.subr.bf16.mxu0 %v10755
      %11022 = vmatpush1.bf16.msra.mxu0 %v10754
      %11023 = vmatprep.subr.bf16.mxu0 %v10757
      %11024 = vmatpush1.bf16.msra.mxu0 %v10756
      %11025 = vmatprep.subr.bf16.mxu0 %v10759
      %11026 = vmatpush1.bf16.msra.mxu0 %v10758
      %11027 = vmatprep.subr.bf16.mxu0 %v10761
      %11028 = vmatpush1.bf16.msra.mxu0 %v10760
      %11029 = vmatprep.subr.bf16.mxu0 %v10763
      %11030 = vmatpush1.bf16.msra.mxu0 %v10762
      %11031 = vmatprep.subr.bf16.mxu0 %v10765
      %11032 = vmatpush1.bf16.msra.mxu0 %v10764
      %11033 = vmatprep.subr.bf16.mxu0 %v10767
      %11034 = vmatpush1.bf16.msra.mxu0 %v10766
      %11035 = vmatprep.subr.bf16.mxu0 %v10769
      %11036 = vmatpush1.bf16.msra.mxu0 %v10768
      %11037 = vmatprep.mubr.bf16.mxu0 %v10177
      %11038 = vmatmul.mubr.bf16.gmra.mrb[0].mxu0 %v10176
      %v11039 = vpop.f32.mrb[0].mxu0
      %v11040 = vadd.f32 %v10997, %v11039
      %v11041 = vpop.f32.mrb[0].mxu0
      %v11042 = vadd.f32 %v10999, %v11041
      %v11043 = vpop.f32.mrb[0].mxu0
      %v11044 = vadd.f32 %v11001, %v11043
      %v11045 = vpop.f32.mrb[0].mxu0
      %v11046 = vadd.f32 %v11003, %v11045
      %11047 = vdwg.mxu0
      %11048 = vmatprep.subr.bf16.mxu0 %v10771
      %11049 = vmatpush1.bf16.msra.mxu0 %v10770
      %11050 = vmatprep.subr.bf16.mxu0 %v10773
      %11051 = vmatpush1.bf16.msra.mxu0 %v10772
      %11052 = vmatprep.subr.bf16.mxu0 %v10775
      %11053 = vmatpush1.bf16.msra.mxu0 %v10774
      %11054 = vmatprep.subr.bf16.mxu0 %v10777
      %11055 = vmatpush1.bf16.msra.mxu0 %v10776
      %11056 = vmatprep.subr.bf16.mxu0 %v10779
      %11057 = vmatpush1.bf16.msra.mxu0 %v10778
      %11058 = vmatprep.subr.bf16.mxu0 %v10781
      %11059 = vmatpush1.bf16.msra.mxu0 %v10780
      %11060 = vmatprep.subr.bf16.mxu0 %v10783
      %11061 = vmatpush1.bf16.msra.mxu0 %v10782
      %11062 = vmatprep.subr.bf16.mxu0 %v10785
      %11063 = vmatpush1.bf16.msra.mxu0 %v10784
      %11064 = vmatprep.subr.bf16.mxu0 %v10787
      %11065 = vmatpush1.bf16.msra.mxu0 %v10786
      %11066 = vmatprep.subr.bf16.mxu0 %v10789
      %11067 = vmatpush1.bf16.msra.mxu0 %v10788
      %11068 = vmatprep.subr.bf16.mxu0 %v10791
      %11069 = vmatpush1.bf16.msra.mxu0 %v10790
      %11070 = vmatprep.subr.bf16.mxu0 %v10793
      %11071 = vmatpush1.bf16.msra.mxu0 %v10792
      %11072 = vmatprep.subr.bf16.mxu0 %v10795
      %11073 = vmatpush1.bf16.msra.mxu0 %v10794
      %11074 = vmatprep.subr.bf16.mxu0 %v10797
      %11075 = vmatpush1.bf16.msra.mxu0 %v10796
      %11076 = vmatprep.subr.bf16.mxu0 %v10799
      %11077 = vmatpush1.bf16.msra.mxu0 %v10798
      %11078 = vmatprep.subr.bf16.mxu0 %v10801
      %11079 = vmatpush1.bf16.msra.mxu0 %v10800
      %11080 = vmatprep.mubr.bf16.mxu0 %v10179
      %11081 = vmatmul.mubr.bf16.gmra.mrb[0].mxu0 %v10178
      %v11082 = vpop.f32.mrb[0].mxu0
      %v11083 = vadd.f32 %v11040, %v11082
      %v11084 = vpop.f32.mrb[0].mxu0
      %v11085 = vadd.f32 %v11042, %v11084
      %v11086 = vpop.f32.mrb[0].mxu0
      %v11087 = vadd.f32 %v11044, %v11086
      %v11088 = vpop.f32.mrb[0].mxu0
      %v11089 = vadd.f32 %v11046, %v11088
      %11090 = vdwg.mxu0
      %11091 = vmatprep.subr.bf16.mxu0 %v10803
      %11092 = vmatpush1.bf16.msra.mxu0 %v10802
      %11093 = vmatprep.subr.bf16.mxu0 %v10805
      %11094 = vmatpush1.bf16.msra.mxu0 %v10804
      %11095 = vmatprep.subr.bf16.mxu0 %v10807
      %11096 = vmatpush1.bf16.msra.mxu0 %v10806
      %11097 = vmatprep.subr.bf16.mxu0 %v10809
      %11098 = vmatpush1.bf16.msra.mxu0 %v10808
      %11099 = vmatprep.subr.bf16.mxu0 %v10811
      %11100 = vmatpush1.bf16.msra.mxu0 %v10810
      %11101 = vmatprep.subr.bf16.mxu0 %v10813
      %11102 = vmatpush1.bf16.msra.mxu0 %v10812
      %11103 = vmatprep.subr.bf16.mxu0 %v10815
      %11104 = vmatpush1.bf16.msra.mxu0 %v10814
      %11105 = vmatprep.subr.bf16.mxu0 %v10817
      %11106 = vmatpush1.bf16.msra.mxu0 %v10816
      %11107 = vmatprep.subr.bf16.mxu0 %v10819
      %11108 = vmatpush1.bf16.msra.mxu0 %v10818
      %11109 = vmatprep.subr.bf16.mxu0 %v10821
      %11110 = vmatpush1.bf16.msra.mxu0 %v10820
      %11111 = vmatprep.subr.bf16.mxu0 %v10823
      %11112 = vmatpush1.bf16.msra.mxu0 %v10822
      %11113 = vmatprep.subr.bf16.mxu0 %v10825
      %11114 = vmatpush1.bf16.msra.mxu0 %v10824
      %11115 = vmatprep.subr.bf16.mxu0 %v10827
      %11116 = vmatpush1.bf16.msra.mxu0 %v10826
      %11117 = vmatprep.subr.bf16.mxu0 %v10829
      %11118 = vmatpush1.bf16.msra.mxu0 %v10828
      %11119 = vmatprep.subr.bf16.mxu0 %v10831
      %11120 = vmatpush1.bf16.msra.mxu0 %v10830
      %11121 = vmatprep.subr.bf16.mxu0 %v10833
      %11122 = vmatpush1.bf16.msra.mxu0 %v10832
      %11123 = vmatprep.mubr.bf16.mxu0 %v10181
      %11124 = vmatmul.mubr.bf16.gmra.mrb[0].mxu0 %v10180
      %v11125 = vpop.f32.mrb[0].mxu0
      %v11126 = vadd.f32 %v11083, %v11125
      %v11127 = vpop.f32.mrb[0].mxu0
      %v11128 = vadd.f32 %v11085, %v11127
      %v11129 = vpop.f32.mrb[0].mxu0
      %v11130 = vadd.f32 %v11087, %v11129
      %v11131 = vpop.f32.mrb[0].mxu0
      %v11132 = vadd.f32 %v11089, %v11131
      %11133 = vdwg.mxu0
      %v11134 = vld [vmem:[#allocation18] sm:$0x3]
      %v11136 = vlaneseq
      %v11137 = vshrl.u32 %v11136, 7
      %v11138 = vsub.s32 0, %v11137
      %v11139 = vrot.slane %v11134, %v11138
      %v11140 = vlaneseq
      %v11141 = vshrl.u32 %v11140, 7
      %v11142 = vsub.s32 1, %v11141
      %v11143 = vrot.slane %v11134, %v11142
      %v11146 = vmul.f32 %v11126, %v11139
      %v11147 = vmul.f32 %v11128, %v11143
      %v11148 = vmul.f32 %v11130, %v11139
      %v11149 = vmul.f32 %v11132, %v11143
      %v11150 = vld [vmem:[#allocation19] sm:$0x3]
      %v11152 = vlaneseq
      %v11153 = vshrl.u32 %v11152, 7
      %v11154 = vsub.s32 0, %v11153
      %v11155 = vrot.slane %v11150, %v11154
      %v11156 = vlaneseq
      %v11157 = vshrl.u32 %v11156, 7
      %v11158 = vsub.s32 1, %v11157
      %v11159 = vrot.slane %v11150, %v11158
      %v11162 = vadd.f32 %v11146, %v11155
      %v11163 = vadd.f32 %v11147, %v11159
      %v11164 = vadd.f32 %v11148, %v11155
      %v11165 = vadd.f32 %v11149, %v11159
      %v11166 = vmax.f32 %v11162, 0.0
      %v11167 = vmax.f32 %v11163, 0.0
      %v11168 = vmax.f32 %v11164, 0.0
      %v11169 = vmax.f32 %v11165, 0.0
      %11170 = vmatprep.subr.mxu0 %v11167
      %11171 = vmatpush1.xpose.msra.mxu0 %v11166
      %11172 = vmatprep.subr.mxu0 %v11169
      %11173 = vmatpush1.xpose.msra.mxu0 %v11168
      %11174 = vmatprep.subr.mxu0 0.0
      %11175 = vmatpush1.xpose.msra.mxu0 0.0
      %11176 = vmatprep.subr.mxu0 0.0
      %11177 = vmatpush1.xpose.msra.mxu0 0.0
      %11178 = vmatprep.subr.mxu0 0.0
      %11179 = vmatpush1.xpose.msra.mxu0 0.0
      %11180 = vmatprep.subr.mxu0 0.0
      %11181 = vmatpush1.xpose.msra.mxu0 0.0
      %11182 = vmatprep.subr.mxu0 0.0
      %11183 = vmatpush1.xpose.msra.mxu0 0.0
      %11184 = vmatprep.subr.mxu0 0.0
      %11185 = vmatpush1.xpose.msra.mxu0 0.0
      %11186 = vmatprep.subr.mxu0 0.0
      %11187 = vmatpush1.xpose.msra.mxu0 0.0
      %11188 = vmatprep.subr.mxu0 0.0
      %11189 = vmatpush1.xpose.msra.mxu0 0.0
      %11190 = vmatprep.subr.mxu0 0.0
      %11191 = vmatpush1.xpose.msra.mxu0 0.0
      %11192 = vmatprep.subr.mxu0 0.0
      %11193 = vmatpush1.xpose.msra.mxu0 0.0
      %11194 = vmatprep.subr.mxu0 0.0
      %11195 = vmatpush1.xpose.msra.mxu0 0.0
      %11196 = vmatprep.subr.mxu0 0.0
      %11197 = vmatpush1.xpose.msra.mxu0 0.0
      %11198 = vmatprep.subr.mxu0 0.0
      %11199 = vmatpush1.xpose.msra.mxu0 0.0
      %11200 = vmatprep.subr.mxu0 0.0
      %11201 = vmatpush1.xpose.msra.mxu0 0.0
      %11202 = vmatprep.subr.mxu0 0.0
      %11203 = vmatpush1.xpose.msra.mxu0 0.0
      %11204 = vmatprep.subr.mxu0 0.0
      %11205 = vmatpush1.xpose.msra.mxu0 0.0
      %11206 = vmatprep.subr.mxu0 0.0
      %11207 = vmatpush1.xpose.msra.mxu0 0.0
      %11208 = vmatprep.subr.mxu0 0.0
      %11209 = vmatpush1.xpose.msra.mxu0 0.0
      %11210 = vmatprep.subr.mxu0 0.0
      %11211 = vmatpush1.xpose.msra.mxu0 0.0
      %11212 = vmatprep.subr.mxu0 0.0
      %11213 = vmatpush1.xpose.msra.mxu0 0.0
      %11214 = vmatprep.subr.mxu0 0.0
      %11215 = vmatpush1.xpose.msra.mxu0 0.0
      %11216 = vmatprep.subr.mxu0 0.0
      %11217 = vmatpush1.xpose.msra.mxu0 0.0
      %11218 = vmatprep.subr.mxu0 0.0
      %11219 = vmatpush1.xpose.msra.mxu0 0.0
      %11220 = vmatprep.subr.mxu0 0.0
      %11221 = vmatpush1.xpose.msra.mxu0 0.0
      %11222 = vmatprep.subr.mxu0 0.0
      %11223 = vmatpush1.xpose.msra.mxu0 0.0
      %11224 = vmatprep.subr.mxu0 0.0
      %11225 = vmatpush1.xpose.msra.mxu0 0.0
      %11226 = vmatprep.subr.mxu0 0.0
      %11227 = vmatpush1.xpose.msra.mxu0 0.0
      %11228 = vmatprep.subr.mxu0 0.0
      %11229 = vmatpush1.xpose.msra.mxu0 0.0
      %11230 = vmatprep.subr.mxu0 0.0
      %11231 = vmatpush1.xpose.msra.mxu0 0.0
      %11232 = vmatprep.subr.mxu0 0.0
      %11233 = vmatpush1.xpose.msra.mxu0 0.0
      %11234 = vmatprep.mubr.f32.mxu0 %v11167
      %11235 = vmatmul.mubr.f32.gmra.mrb[0].mxu0 %v11166
      %v11236 = vpop.f32.mrb[0].mxu0
      %v11237 = vadd.f32 0.0, %v11236
      %v11238 = vpop.f32.mrb[0].mxu0
      %11239 = vmatprep.mubr.f32.mxu0 %v11169
      %11240 = vmatmul.mubr.f32.gmra.mrb[0].mxu0 %v11168
      %v11241 = vpop.f32.mrb[0].mxu0
      %v11242 = vadd.f32 0.0, %v11241
      %v11243 = vpop.f32.mrb[0].mxu0
      %11244 = vdwg.mxu0
      %v11245 = vlaneseq
      %v11246 = vshrl.u32 %v11245, 7
      %v11247 = vadd.s32 %v11246, 8
      %v11248 = vlaneseq
      %v11249 = vand.u32 %v11248, 127
      %vm11250 = vcmp.eq.s32.totalorder %v11246, %v11249
      %vm11251 = vcmp.eq.s32.totalorder %v11247, %v11249
      %v11252 = vsel %vm11250, %v11237, 0.0
      %v11253 = vsel %vm11251, %v11242, 0.0
      %vm11254 = vcmask 130048
      %v11255 = vsel %vm11254, %v11252, 0.0
      %11256 = vadd.xlane.f32.xlu0 %v11255
      %v11257 = vpop.xlane.xlu0 %11256
      %v11258 = vsel %vm11254, %v11253, 0.0
      %11259 = vadd.xlane.f32.xlu0 %v11258
      %v11260 = vpop.xlane.xlu0 %11259
      %v11261 = vadd.f32 %v11255, %v11258
      %v11262 = vrot.slane %v11261, 4
      %v11263 = vadd.f32 %v11261, %v11262
      %v11264 = vrot.slane %v11263, 2
      %v11265 = vadd.f32 %v11263, %v11264
      %v11266 = vrot.slane %v11265, 1
      %v11267 = vadd.f32 %v11265, %v11266
      %v11268 = vadd.f32 %v11257, %v11267
      %v11269 = vadd.f32 %v11260, %v11267
      %v11270 = vmul.f32 %v11237, 2.0
      %v11271 = vmul.f32 %v11242, 2.0
      %v11272 = vsub.f32 %v11268, %v11270
      %v11273 = vsub.f32 %v11269, %v11271
      %v11274 = vmax.f32 %v11272, 0.0
      %v11275 = vmax.f32 %v11273, 0.0
      %v11276 = vsel %vm11254, %v11274, 0.0
      %v11277 = vsel %vm11254, %v11275, 0.0
      %v11278 = vadd.f32 %v11276, %v11277
      %11279 = vadd.xlane.f32.xlu0 %v11278
      %v11280 = vpop.xlane.xlu0 %11279
      %v11281 = vrot.slane %v11280, 4
      %v11282 = vadd.f32 %v11280, %v11281
      %v11283 = vrot.slane %v11282, 2
      %v11284 = vadd.f32 %v11282, %v11283
      %v11285 = vrot.slane %v11284, 1
      %v11286 = vadd.f32 %v11284, %v11285
      %s11287 = vtos %v11286
      %v11288 = vrcp.pop 240.0
      %s11289 = vtos %v11288
      %s11290 = smul.f32 %s11287, %s11289
      %s11291 = smax.f32 %s11290, 1e-12
      %v11292 = vrcp.pop 4.0
      %s11293 = vtos %v11292
      %s11294 = smul.f32 %s11291, %s11293
      %s11295 = smul.f32 %s11294, 16.0
      %v11296 = vstv %s11295
      %v11297 = vrcp.pop %v11296
      %s11298 = vtos %v11297
      %v11299 = vsub.f32 0.0, %v11274
      %v11300 = vsub.f32 0.0, %v11275
      %v11301 = vstv %s11298
      %v11302 = vmul.f32 %v11299, %v11301
      %v11303 = vmul.f32 %v11300, %v11301
      %v11304 = vmul.f32 %v11302, 1.442695
      %v11305 = vpow.pop %v11304
      %v11306 = vmul.f32 %v11303, 1.442695
      %v11307 = vpow.pop %v11306
      %v11308 = vmul.f32 %v11305, %v11305
      %v11309 = vmul.f32 %v11307, %v11307
      %v11310 = vadd.f32 %v11305, %v11308
      %v11311 = vadd.f32 %v11307, %v11309
      %v11312 = vmul.f32 %v11308, %v11308
      %v11313 = vmul.f32 %v11309, %v11309
      %v11314 = vadd.f32 %v11310, %v11312
      %v11315 = vadd.f32 %v11311, %v11313
      %v11316 = vmul.f32 %v11312, %v11312
      %v11317 = vmul.f32 %v11313, %v11313
      %v11318 = vadd.f32 %v11314, %v11316
      %v11319 = vadd.f32 %v11315, %v11317
      %v11320 = vmul.f32 %v11316, %v11316
      %v11321 = vmul.f32 %v11317, %v11317
      %v11322 = vadd.f32 %v11318, %v11320
      %v11323 = vadd.f32 %v11319, %v11321
      %vm11324 = vcmp.lt.s32.totalorder %v11246, 8
      %vm11325 = vcmp.lt.s32.totalorder %v11247, 8
      %vm11326 = vcmp.lt.s32.totalorder %v11249, 8
      %vm11327 = vmxor %vm11324, %vm11326
      %vm11328 = vmxor %vm11325, %vm11326
      %vm11329 = vmxor %vm11327, 1
      %vm11330 = vmxor %vm11328, 1
      %v11331 = vsel %vm11329, 1.0, -1.0
      %v11332 = vsel %vm11330, 1.0, -1.0
      %v11333 = vmul.f32 %v11322, %v11331
      %v11334 = vmul.f32 %v11323, %v11332
      %v11335 = vsel %vm11254, %v11333, 0.0
      %v11336 = vsel %vm11254, %v11334, 0.0
      %v11337 = vadd.f32 %v11335, %v11336
      %11338 = vadd.xlane.f32.xlu0 %v11337
      %v11339 = vpop.xlane.xlu0 %11338
      %v11340 = vrot.slane %v11339, 4
      %v11341 = vadd.f32 %v11339, %v11340
      %v11342 = vrot.slane %v11341, 2
      %v11343 = vadd.f32 %v11341, %v11342
      %v11344 = vrot.slane %v11343, 1
      %v11345 = vadd.f32 %v11343, %v11344
      %s11346 = vtos %v11345
      %v11347 = vrcp.pop 64.0
      %s11348 = vtos %v11347
      %s11349 = smul.f32 %s11346, %s11348
      %s11350 = scalar_lea.smem [#allocation22], 0
      %11351 = sst [smem:[%s11350]] %s11349
    $region93: #{transfer_au_forward.1} parent=1 // pred_fallthru
      _
    // Predicated region
    $region94: #{transfer_au_forward.1} parent=1 // pred_check
      _
    $region95: #{transfer_au_forward.1} parent=1 // pred_check_branch
      %11353 = sbr.rel (0) target = $region97
    $region96: #{transfer_au_forward.1} parent=1 // pred_region
      %s11355 = ssub.s32 128, 128
      %11356 = vsyncadd [#allocation5], %s11355
      %s11358 = sshll.u32 [#allocation21], 4
      %s11359 = int_to_ptr.vmem [resolvable:$true] %s11358
      %11361 = dma.vmem_to_hbm [thread:$0]  %s11359, 128, %s11, [#allocation5]
    $region97: #{transfer_au_forward.1} parent=1 // pred_fallthru
      _
    // Predicated region
    $region98: #{transfer_au_forward.1} parent=1 // pred_check
      _
    $region99: #{transfer_au_forward.1} parent=1 // pred_check_branch
      %11363 = sbr.rel (0) target = $region101
    $region100: #{transfer_au_forward.1} parent=1 // pred_region
      %s11365 = ssub.s32 16, 16
      %11366 = vsyncadd [#allocation6], %s11365
      %11369 = dma.smem_to_hbm [#allocation22], 16, %s12, [#allocation6]
    $region101: #{transfer_au_forward.1} parent=1 // pred_fallthru
      _
    // Predicated region
    $region102: #{transfer_au_forward.1} parent=1 // pred_check
      _
    $region103: #{transfer_au_forward.1} parent=1 // pred_check_branch
      %11371 = sbr.rel (0) target = $region105
    $region104: #{transfer_au_forward.1} parent=1 // pred_region
      %11372 = dma.done [#allocation5], 128
    $region105: #{transfer_au_forward.1} parent=1 // pred_fallthru
      _
    // Predicated region
    $region106: #{transfer_au_forward.1} parent=1 // pred_check
      _
    $region107: #{transfer_au_forward.1} parent=1 // pred_check_branch
      %11374 = sbr.rel (0) target = $region109
    $region108: #{transfer_au_forward.1} parent=1 // pred_region
      %11375 = dma.done [#allocation6], 16
    $region109: #{transfer_au_forward.1} parent=1 // pred_fallthru
      _
    %11376 = sfence
    %11377 = vsyncpa [#allocation4], 1
    %11378 = vsyncpa [#allocation8], 1
    %11379 = vsyncpa [#allocation11], 1
    %11380 = vsyncpa [#allocation14], 1
    %11381 = vsyncpa [#allocation17], 1
    %11382 = vsyncpa [#allocation20], 1
    %11383 = vsyncpa [#allocation5], 1
    %11384 = vsyncpa [#allocation6], 1

</llo_original>
